<compile_context>
chip_gen: v7x
topology: tpu7x:2x2x1
jax: 0.10.0
libtpu: 0.0.40
codegen_flags: <defaults>
</compile_context>

<pallas_src>
import functools

import jax
import jax.numpy as jnp
from jax.experimental import pallas as pl
from jax.experimental.pallas import tpu as pltpu


# ----------------------------- Pallas kernel --------------------------------


def _conv_bn_kernel(*refs, K, stride, pad, Hout, Wout, relu, fuse_residual):
  """Fused KxK conv (bias=False) + folded-BN affine + ReLU (+ residual add).

  Refs (in order):
    x_ref:     (1, H, W, Cin)            input tile (one image), f32
    w_ref:     (K*K*Cin, Cout_t)         conv weights, bf16, taps stacked
    scale_ref: (1, Cout_t)               gamma / sqrt(var + eps), f32
    bias_ref:  (1, Cout_t)               beta - mean * scale, f32
    [res_ref:  (1, Hout, Wout, Cout_t)]  residual / shortcut tile, f32
    o_ref:     (1, Hout, Wout, Cout_t)   output tile
    xpad_ref:  (1, H+2p, W+2p, Cin)      VMEM scratch (in-kernel zero padding)
    acc_ref:   (Hout*Wout, Cout_t)       VMEM scratch, f32 accumulator
  """
  if fuse_residual:
    x_ref, w_ref, scale_ref, bias_ref, res_ref, o_ref, xpad_ref, acc_ref = refs
  else:
    x_ref, w_ref, scale_ref, bias_ref, o_ref, xpad_ref, acc_ref = refs
    res_ref = None

  H, W, Cin = x_ref.shape[1], x_ref.shape[2], x_ref.shape[3]
  cout_t = o_ref.shape[3]

  # Stage the input tile into a zero-padded VMEM scratch: padding handled
  # on-chip instead of a wrapper-side jnp.pad (which would cost a full HBM
  # read+write of the activation).
  xpad_ref[...] = jnp.zeros(xpad_ref.shape, xpad_ref.dtype)
  xpad_ref[:, pad:pad + H, pad:pad + W, :] = x_ref[...]

  acc_ref[...] = jnp.zeros(acc_ref.shape, acc_ref.dtype)

  # K*K shifted taps, each a (Hout*Wout, Cin) x (Cin, Cout_t) MXU matmul with
  # bf16 operands and f32 accumulation into the VMEM accumulator.
  for dy in range(K):
    for dx in range(K):
      if stride == 1:
        patch = xpad_ref[0, dy:dy + Hout, dx:dx + Wout, :]
      else:
        patch = xpad_ref[0, pl.ds(dy, Hout, stride), pl.ds(dx, Wout, stride), :]
      lhs = patch.reshape(Hout * Wout, Cin).astype(jnp.bfloat16)
      t = dy * K + dx
      rhs = w_ref[t * Cin:(t + 1) * Cin, :]          # (Cin, Cout_t), bf16
      acc_ref[...] += jnp.dot(lhs, rhs, preferred_element_type=jnp.float32)

  # Folded-BN affine + ReLU epilogue in f32 (VPU); optional fused residual
  # add + final ReLU (the BasicBlock tail).
  y = acc_ref[...] * scale_ref[...] + bias_ref[...]
  if relu:
    y = jnp.maximum(y, 0.0)
  if fuse_residual:
    res = res_ref[...].reshape(Hout * Wout, cout_t).astype(jnp.float32)
    y = jnp.maximum(y + res, 0.0)
  o_ref[...] = y.reshape(1, Hout, Wout, cout_t).astype(o_ref.dtype)


# ------------------------------ JAX wrapper ----------------------------------


def conv_bn_act(x, w, scale, bias, *, stride, pad, relu, residual=None,
                cout_tile=128):
  """One ConvBlock: conv(KxK, stride, pad, bias=False) + BN(inference) + ReLU.

  x: (N, H, W, Cin) NHWC f32.  w: (K, K, Cin, Cout) HWIO f32.
  If `residual` is given (shaped like the output), the kernel epilogue also
  performs `relu(out + residual)`, fused (no separate elementwise kernel).
  """
  n, h, wd, cin = x.shape
  k = w.shape[0]
  cout = w.shape[3]
  hout = (h + 2 * pad - k) // stride + 1
  wout = (wd + 2 * pad - k) // stride + 1
  ct = min(cout_tile, cout)
  assert cout % ct == 0, "Cout must be divisible by the Cout tile"
  grid = (n, cout // ct)

  # Taps stacked along the contraction dim; bf16 operands for the MXU
  # (f32 accumulation stays inside the kernel).
  w2 = w.reshape(k * k * cin, cout).astype(jnp.bfloat16)

  in_specs = [
      pl.BlockSpec((1, h, wd, cin), lambda i, j: (i, 0, 0, 0)),
      pl.BlockSpec((k * k * cin, ct), lambda i, j: (0, j)),
      pl.BlockSpec((1, ct), lambda i, j: (0, j)),
      pl.BlockSpec((1, ct), lambda i, j: (0, j)),
  ]
  args = [x, w2, scale.reshape(1, cout), bias.reshape(1, cout)]
  if residual is not None:
    in_specs.append(
        pl.BlockSpec((1, hout, wout, ct), lambda i, j: (i, 0, 0, j)))
    args.append(residual)

  kernel = functools.partial(
      _conv_bn_kernel, K=k, stride=stride, pad=pad, Hout=hout, Wout=wout,
      relu=relu, fuse_residual=residual is not None)

  return pl.pallas_call(
      kernel,
      out_shape=jax.ShapeDtypeStruct((n, hout, wout, cout), x.dtype),
      grid=grid,
      in_specs=in_specs,
      out_specs=pl.BlockSpec((1, hout, wout, ct), lambda i, j: (i, 0, 0, j)),
      scratch_shapes=[
          pltpu.VMEM((1, h + 2 * pad, wd + 2 * pad, cin), jnp.float32),
          pltpu.VMEM((hout * wout, ct), jnp.float32),
      ],
      compiler_params=pltpu.CompilerParams(
          dimension_semantics=("parallel", "parallel"),
          vmem_limit_bytes=32 * 1024 * 1024),
  )(*args)


def basic_block_forward(x_nhwc, params, *, in_planes, planes, stride):
  """BasicBlock.forward in NHWC.  x_nhwc: (N, H, W, Cin) f32 -> NHWC output."""
  out = conv_bn_act(x_nhwc, params['conv1']['w'], params['conv1']['scale'],
                    params['conv1']['bias'], stride=stride, pad=1, relu=True)
  if stride != 1 or in_planes != planes:
    sc = conv_bn_act(x_nhwc, params['shortcut']['w'],
                     params['shortcut']['scale'], params['shortcut']['bias'],
                     stride=stride, pad=0, relu=True)
  else:
    sc = x_nhwc
  # conv2 + BN + ReLU, then residual add + final ReLU, all fused into one
  # Pallas kernel epilogue (no extra HBM pass over `out`).
  out = conv_bn_act(out, params['conv2']['w'], params['conv2']['scale'],
                    params['conv2']['bias'], stride=1, pad=1, relu=True,
                    residual=sc)
  return out


# ------------------------- deterministic parameters -------------------------


def init_convblock_params(key, cin, cout, k, eps=1e-5):
  """Conv weight (HWIO) + BatchNorm2d folded into per-channel scale/bias."""
  kw, kg, kb, km, kv = jax.random.split(key, 5)
  w = 0.1 * jax.random.normal(kw, (k, k, cin, cout), jnp.float32)
  gamma = 1.0 + 0.1 * jax.random.normal(kg, (cout,), jnp.float32)
  beta = 0.1 * jax.random.normal(kb, (cout,), jnp.float32)
  running_mean = 0.1 * jax.random.normal(km, (cout,), jnp.float32)
  running_var = 1.0 + jnp.abs(jax.random.normal(kv, (cout,), jnp.float32))
  scale = gamma / jnp.sqrt(running_var + eps)
  bias = beta - running_mean * scale
  return dict(w=w, scale=scale, bias=bias)


def init_basic_block_params(key, in_planes, planes, stride):
  k1, k2, k3 = jax.random.split(key, 3)
  params = {
      'conv1': init_convblock_params(k1, in_planes, planes, 3),
      'conv2': init_convblock_params(k2, planes, planes, 3),
  }
  if stride != 1 or in_planes != planes:
    params['shortcut'] = init_convblock_params(k3, in_planes, planes, 1)
  return params


# ------------------------------ pure-JAX reference ---------------------------


def _ref_conv_bn_act(x, w, scale, bias, stride, pad, relu):
  # Mirrors the kernel's precision policy: bf16 MXU operands, f32 accumulate,
  # f32 BN/ReLU epilogue.
  y = jax.lax.conv_general_dilated(
      x.astype(jnp.bfloat16), w.astype(jnp.bfloat16), (stride, stride),
      [(pad, pad), (pad, pad)],
      dimension_numbers=('NHWC', 'HWIO', 'NHWC'),
      preferred_element_type=jnp.float32)
  y = y * scale + bias
  return jnp.maximum(y, 0.0) if relu else y


def _ref_basic_block(x, params, *, in_planes, planes, stride):
  out = _ref_conv_bn_act(x, params['conv1']['w'], params['conv1']['scale'],
                         params['conv1']['bias'], stride, 1, True)
  out = _ref_conv_bn_act(out, params['conv2']['w'], params['conv2']['scale'],
                         params['conv2']['bias'], 1, 1, True)
  if stride != 1 or in_planes != planes:
    sc = _ref_conv_bn_act(x, params['shortcut']['w'],
                          params['shortcut']['scale'],
                          params['shortcut']['bias'], stride, 0, True)
  else:
    sc = x
  return jnp.maximum(out + sc, 0.0)


# ----------------------------------- main ------------------------------------

if __name__ == "__main__":
  N, IN_PLANES, PLANES, H, W, STRIDE = 2, 4, 8, 16, 16, 1

  key = jax.random.PRNGKey(0)
  kx, kp = jax.random.split(key)
  # Logical PyTorch input is NCHW; convert ONCE at the network boundary
  # (per-block NCHW<->NHWC transposes removed per the perf review).
  x_nchw = jax.random.normal(kx, (N, IN_PLANES, H, W), jnp.float32)
  x = jnp.transpose(x_nchw, (0, 2, 3, 1))  # NCHW -> NHWC, once
  params = init_basic_block_params(kp, IN_PLANES, PLANES, STRIDE)

  fwd = jax.jit(functools.partial(basic_block_forward, in_planes=IN_PLANES,
                                  planes=PLANES, stride=STRIDE))
  out = jax.block_until_ready(fwd(x, params))

  ref = _ref_basic_block(x, params, in_planes=IN_PLANES, planes=PLANES,
                         stride=STRIDE)
  assert out.shape == (N, H // STRIDE, W // STRIDE, PLANES)
  assert jnp.allclose(out, ref, atol=1e-2, rtol=1e-2), (
      "mismatch vs reference: max abs err "
      f"{float(jnp.max(jnp.abs(out - ref)))}")

  # TODO(synk): train-mode BatchNorm (batch-statistics update) is not
  # implemented; BN is folded into inference-mode per-channel scale/bias.
  print("KERNEL_OK")
</pallas_src>

<mosaic_0001>
module attributes {stable_mosaic.version = 11 : i64} {
  func.func @_conv_bn_kernel(%arg0: i32, %arg1: i32, %arg2: memref<1x16x16x4xf32, #tpu.memory_space<vmem>>, %arg3: memref<36x8xbf16, #tpu.memory_space<vmem>>, %arg4: memref<1x8xf32, #tpu.memory_space<vmem>>, %arg5: memref<1x8xf32, #tpu.memory_space<vmem>>, %arg6: memref<1x16x16x8xf32, #tpu.memory_space<vmem>>, %arg7: memref<1x18x18x4xf32, #tpu.memory_space<vmem>>, %arg8: memref<256x8xf32, #tpu.memory_space<vmem>>) attributes {dimension_semantics = [#tpu.dimension_semantics<parallel>, #tpu.dimension_semantics<parallel>], iteration_bounds = array<i64: 2, 1>, scalar_prefetch = 0 : i64, scratch_operands = 2 : i64, tpu.core_type = #tpu.core_type<tc>, window_params = [{transform_indices = @transform_0, window_bounds = array<i64: 1, 16, 16, 4>}, {transform_indices = @transform_1, window_bounds = array<i64: 36, 8>}, {transform_indices = @transform_2, window_bounds = array<i64: 1, 8>}, {transform_indices = @transform_3, window_bounds = array<i64: 1, 8>}, {transform_indices = @transform_4, window_bounds = array<i64: 1, 16, 16, 8>}]} {
    %cst = arith.constant 0.000000e+00 : f32
    %0 = vector.broadcast %cst : f32 to vector<1x18x18x4xf32>
    %c0 = arith.constant 0 : index
    %c0_0 = arith.constant 0 : index
    %c0_1 = arith.constant 0 : index
    %c0_2 = arith.constant 0 : index
    %1 = vector.load %arg7[%c0, %c0_0, %c0_1, %c0_2] : memref<1x18x18x4xf32, #tpu.memory_space<vmem>>, vector<1x18x18x4xf32>
    tpu.vector_store %arg7[%c0, %c0_0, %c0_1, %c0_2], %0 {strides = array<i32>} : memref<1x18x18x4xf32, #tpu.memory_space<vmem>>, vector<1x18x18x4xf32>,
    %c0_3 = arith.constant 0 : index
    %c0_4 = arith.constant 0 : index
    %c0_5 = arith.constant 0 : index
    %c0_6 = arith.constant 0 : index
    %2 = vector.load %arg2[%c0_3, %c0_4, %c0_5, %c0_6] : memref<1x16x16x4xf32, #tpu.memory_space<vmem>>, vector<1x16x16x4xf32>
    %c0_7 = arith.constant 0 : index
    %c1 = arith.constant 1 : index
    %c1_8 = arith.constant 1 : index
    %c0_9 = arith.constant 0 : index
    %3 = vector.load %arg7[%c0_7, %c1, %c1_8, %c0_9] : memref<1x18x18x4xf32, #tpu.memory_space<vmem>>, vector<1x16x16x4xf32>
    tpu.vector_store %arg7[%c0_7, %c1, %c1_8, %c0_9], %2 {strides = array<i32>} : memref<1x18x18x4xf32, #tpu.memory_space<vmem>>, vector<1x16x16x4xf32>,
    %cst_10 = arith.constant 0.000000e+00 : f32
    %4 = vector.broadcast %cst_10 : f32 to vector<256x8xf32>
    %c0_11 = arith.constant 0 : index
    %c0_12 = arith.constant 0 : index
    %5 = vector.load %arg8[%c0_11, %c0_12] : memref<256x8xf32, #tpu.memory_space<vmem>>, vector<256x8xf32>
    tpu.vector_store %arg8[%c0_11, %c0_12], %4 {strides = array<i32>} : memref<256x8xf32, #tpu.memory_space<vmem>>, vector<256x8xf32>,
    %c0_13 = arith.constant 0 : index
    %c0_14 = arith.constant 0 : index
    %c0_15 = arith.constant 0 : index
    %c0_16 = arith.constant 0 : index
    %6 = vector.load %arg7[%c0_13, %c0_14, %c0_15, %c0_16] : memref<1x18x18x4xf32, #tpu.memory_space<vmem>>, vector<1x16x16x4xf32>
    %7 = vector.shape_cast %6 : vector<1x16x16x4xf32> to vector<16x16x4xf32>
    %8 = vector.shape_cast %7 : vector<16x16x4xf32> to vector<256x4xf32>
    %9 = arith.truncf %8 : vector<256x4xf32> to vector<256x4xbf16>
    %c0_17 = arith.constant 0 : index
    %c0_18 = arith.constant 0 : index
    %10 = vector.load %arg3[%c0_17, %c0_18] : memref<36x8xbf16, #tpu.memory_space<vmem>>, vector<4x8xbf16>
    %c0_19 = arith.constant 0 : index
    %c0_20 = arith.constant 0 : index
    %11 = vector.load %arg8[%c0_19, %c0_20] : memref<256x8xf32, #tpu.memory_space<vmem>>, vector<256x8xf32>
    %cst_21 = arith.constant dense<0.000000e+00> : vector<256x8xf32>
    %12 = tpu.matmul %9, %10, %cst_21 {dimension_numbers = #tpu.dot_dimension_numbers<[1], [0], [0], [1], [0, 0, 1, 1], [], []>} : vector<256x4xbf16>, vector<4x8xbf16>, vector<256x8xf32> -> vector<256x8xf32>
    %13 = arith.addf %11, %12 : vector<256x8xf32>
    %c0_22 = arith.constant 0 : index
    %c0_23 = arith.constant 0 : index
    %14 = vector.load %arg8[%c0_22, %c0_23] : memref<256x8xf32, #tpu.memory_space<vmem>>, vector<256x8xf32>
    tpu.vector_store %arg8[%c0_22, %c0_23], %13 {strides = array<i32>} : memref<256x8xf32, #tpu.memory_space<vmem>>, vector<256x8xf32>,
    %c0_24 = arith.constant 0 : index
    %c0_25 = arith.constant 0 : index
    %c1_26 = arith.constant 1 : index
    %c0_27 = arith.constant 0 : index
    %15 = vector.load %arg7[%c0_24, %c0_25, %c1_26, %c0_27] : memref<1x18x18x4xf32, #tpu.memory_space<vmem>>, vector<1x16x16x4xf32>
    %16 = vector.shape_cast %15 : vector<1x16x16x4xf32> to vector<16x16x4xf32>
    %17 = vector.shape_cast %16 : vector<16x16x4xf32> to vector<256x4xf32>
    %18 = arith.truncf %17 : vector<256x4xf32> to vector<256x4xbf16>
    %c4 = arith.constant 4 : index
    %c0_28 = arith.constant 0 : index
    %19 = vector.load %arg3[%c4, %c0_28] : memref<36x8xbf16, #tpu.memory_space<vmem>>, vector<4x8xbf16>
    %c0_29 = arith.constant 0 : index
    %c0_30 = arith.constant 0 : index
    %20 = vector.load %arg8[%c0_29, %c0_30] : memref<256x8xf32, #tpu.memory_space<vmem>>, vector<256x8xf32>
    %cst_31 = arith.constant dense<0.000000e+00> : vector<256x8xf32>
    %21 = tpu.matmul %18, %19, %cst_31 {dimension_numbers = #tpu.dot_dimension_numbers<[1], [0], [0], [1], [0, 0, 1, 1], [], []>} : vector<256x4xbf16>, vector<4x8xbf16>, vector<256x8xf32> -> vector<256x8xf32>
    %22 = arith.addf %20, %21 : vector<256x8xf32>
    %c0_32 = arith.constant 0 : index
    %c0_33 = arith.constant 0 : index
    %23 = vector.load %arg8[%c0_32, %c0_33] : memref<256x8xf32, #tpu.memory_space<vmem>>, vector<256x8xf32>
    tpu.vector_store %arg8[%c0_32, %c0_33], %22 {strides = array<i32>} : memref<256x8xf32, #tpu.memory_space<vmem>>, vector<256x8xf32>,
    %c0_34 = arith.constant 0 : index
    %c0_35 = arith.constant 0 : index
    %c2 = arith.constant 2 : index
    %c0_36 = arith.constant 0 : index
    %24 = vector.load %arg7[%c0_34, %c0_35, %c2, %c0_36] : memref<1x18x18x4xf32, #tpu.memory_space<vmem>>, vector<1x16x16x4xf32>
    %25 = vector.shape_cast %24 : vector<1x16x16x4xf32> to vector<16x16x4xf32>
    %26 = vector.shape_cast %25 : vector<16x16x4xf32> to vector<256x4xf32>
    %27 = arith.truncf %26 : vector<256x4xf32> to vector<256x4xbf16>
    %c8 = arith.constant 8 : index
    %c0_37 = arith.constant 0 : index
    %28 = vector.load %arg3[%c8, %c0_37] : memref<36x8xbf16, #tpu.memory_space<vmem>>, vector<4x8xbf16>
    %c0_38 = arith.constant 0 : index
    %c0_39 = arith.constant 0 : index
    %29 = vector.load %arg8[%c0_38, %c0_39] : memref<256x8xf32, #tpu.memory_space<vmem>>, vector<256x8xf32>
    %cst_40 = arith.constant dense<0.000000e+00> : vector<256x8xf32>
    %30 = tpu.matmul %27, %28, %cst_40 {dimension_numbers = #tpu.dot_dimension_numbers<[1], [0], [0], [1], [0, 0, 1, 1], [], []>} : vector<256x4xbf16>, vector<4x8xbf16>, vector<256x8xf32> -> vector<256x8xf32>
    %31 = arith.addf %29, %30 : vector<256x8xf32>
    %c0_41 = arith.constant 0 : index
    %c0_42 = arith.constant 0 : index
    %32 = vector.load %arg8[%c0_41, %c0_42] : memref<256x8xf32, #tpu.memory_space<vmem>>, vector<256x8xf32>
    tpu.vector_store %arg8[%c0_41, %c0_42], %31 {strides = array<i32>} : memref<256x8xf32, #tpu.memory_space<vmem>>, vector<256x8xf32>,
    %c0_43 = arith.constant 0 : index
    %c1_44 = arith.constant 1 : index
    %c0_45 = arith.constant 0 : index
    %c0_46 = arith.constant 0 : index
    %33 = vector.load %arg7[%c0_43, %c1_44, %c0_45, %c0_46] : memref<1x18x18x4xf32, #tpu.memory_space<vmem>>, vector<1x16x16x4xf32>
    %34 = vector.shape_cast %33 : vector<1x16x16x4xf32> to vector<16x16x4xf32>
    %35 = vector.shape_cast %34 : vector<16x16x4xf32> to vector<256x4xf32>
    %36 = arith.truncf %35 : vector<256x4xf32> to vector<256x4xbf16>
    %c12 = arith.constant 12 : index
    %c0_47 = arith.constant 0 : index
    %37 = vector.load %arg3[%c12, %c0_47] : memref<36x8xbf16, #tpu.memory_space<vmem>>, vector<4x8xbf16>
    %c0_48 = arith.constant 0 : index
    %c0_49 = arith.constant 0 : index
    %38 = vector.load %arg8[%c0_48, %c0_49] : memref<256x8xf32, #tpu.memory_space<vmem>>, vector<256x8xf32>
    %cst_50 = arith.constant dense<0.000000e+00> : vector<256x8xf32>
    %39 = tpu.matmul %36, %37, %cst_50 {dimension_numbers = #tpu.dot_dimension_numbers<[1], [0], [0], [1], [0, 0, 1, 1], [], []>} : vector<256x4xbf16>, vector<4x8xbf16>, vector<256x8xf32> -> vector<256x8xf32>
    %40 = arith.addf %38, %39 : vector<256x8xf32>
    %c0_51 = arith.constant 0 : index
    %c0_52 = arith.constant 0 : index
    %41 = vector.load %arg8[%c0_51, %c0_52] : memref<256x8xf32, #tpu.memory_space<vmem>>, vector<256x8xf32>
    tpu.vector_store %arg8[%c0_51, %c0_52], %40 {strides = array<i32>} : memref<256x8xf32, #tpu.memory_space<vmem>>, vector<256x8xf32>,
    %c0_53 = arith.constant 0 : index
    %c1_54 = arith.constant 1 : index
    %c1_55 = arith.constant 1 : index
    %c0_56 = arith.constant 0 : index
    %42 = vector.load %arg7[%c0_53, %c1_54, %c1_55, %c0_56] : memref<1x18x18x4xf32, #tpu.memory_space<vmem>>, vector<1x16x16x4xf32>
    %43 = vector.shape_cast %42 : vector<1x16x16x4xf32> to vector<16x16x4xf32>
    %44 = vector.shape_cast %43 : vector<16x16x4xf32> to vector<256x4xf32>
    %45 = arith.truncf %44 : vector<256x4xf32> to vector<256x4xbf16>
    %c16 = arith.constant 16 : index
    %c0_57 = arith.constant 0 : index
    %46 = vector.load %arg3[%c16, %c0_57] : memref<36x8xbf16, #tpu.memory_space<vmem>>, vector<4x8xbf16>
    %c0_58 = arith.constant 0 : index
    %c0_59 = arith.constant 0 : index
    %47 = vector.load %arg8[%c0_58, %c0_59] : memref<256x8xf32, #tpu.memory_space<vmem>>, vector<256x8xf32>
    %cst_60 = arith.constant dense<0.000000e+00> : vector<256x8xf32>
    %48 = tpu.matmul %45, %46, %cst_60 {dimension_numbers = #tpu.dot_dimension_numbers<[1], [0], [0], [1], [0, 0, 1, 1], [], []>} : vector<256x4xbf16>, vector<4x8xbf16>, vector<256x8xf32> -> vector<256x8xf32>
    %49 = arith.addf %47, %48 : vector<256x8xf32>
    %c0_61 = arith.constant 0 : index
    %c0_62 = arith.constant 0 : index
    %50 = vector.load %arg8[%c0_61, %c0_62] : memref<256x8xf32, #tpu.memory_space<vmem>>, vector<256x8xf32>
    tpu.vector_store %arg8[%c0_61, %c0_62], %49 {strides = array<i32>} : memref<256x8xf32, #tpu.memory_space<vmem>>, vector<256x8xf32>,
    %c0_63 = arith.constant 0 : index
    %c1_64 = arith.constant 1 : index
    %c2_65 = arith.constant 2 : index
    %c0_66 = arith.constant 0 : index
    %51 = vector.load %arg7[%c0_63, %c1_64, %c2_65, %c0_66] : memref<1x18x18x4xf32, #tpu.memory_space<vmem>>, vector<1x16x16x4xf32>
    %52 = vector.shape_cast %51 : vector<1x16x16x4xf32> to vector<16x16x4xf32>
    %53 = vector.shape_cast %52 : vector<16x16x4xf32> to vector<256x4xf32>
    %54 = arith.truncf %53 : vector<256x4xf32> to vector<256x4xbf16>
    %c20 = arith.constant 20 : index
    %c0_67 = arith.constant 0 : index
    %55 = vector.load %arg3[%c20, %c0_67] : memref<36x8xbf16, #tpu.memory_space<vmem>>, vector<4x8xbf16>
    %c0_68 = arith.constant 0 : index
    %c0_69 = arith.constant 0 : index
    %56 = vector.load %arg8[%c0_68, %c0_69] : memref<256x8xf32, #tpu.memory_space<vmem>>, vector<256x8xf32>
    %cst_70 = arith.constant dense<0.000000e+00> : vector<256x8xf32>
    %57 = tpu.matmul %54, %55, %cst_70 {dimension_numbers = #tpu.dot_dimension_numbers<[1], [0], [0], [1], [0, 0, 1, 1], [], []>} : vector<256x4xbf16>, vector<4x8xbf16>, vector<256x8xf32> -> vector<256x8xf32>
    %58 = arith.addf %56, %57 : vector<256x8xf32>
    %c0_71 = arith.constant 0 : index
    %c0_72 = arith.constant 0 : index
    %59 = vector.load %arg8[%c0_71, %c0_72] : memref<256x8xf32, #tpu.memory_space<vmem>>, vector<256x8xf32>
    tpu.vector_store %arg8[%c0_71, %c0_72], %58 {strides = array<i32>} : memref<256x8xf32, #tpu.memory_space<vmem>>, vector<256x8xf32>,
    %c0_73 = arith.constant 0 : index
    %c2_74 = arith.constant 2 : index
    %c0_75 = arith.constant 0 : index
    %c0_76 = arith.constant 0 : index
    %60 = vector.load %arg7[%c0_73, %c2_74, %c0_75, %c0_76] : memref<1x18x18x4xf32, #tpu.memory_space<vmem>>, vector<1x16x16x4xf32>
    %61 = vector.shape_cast %60 : vector<1x16x16x4xf32> to vector<16x16x4xf32>
    %62 = vector.shape_cast %61 : vector<16x16x4xf32> to vector<256x4xf32>
    %63 = arith.truncf %62 : vector<256x4xf32> to vector<256x4xbf16>
    %c24 = arith.constant 24 : index
    %c0_77 = arith.constant 0 : index
    %64 = vector.load %arg3[%c24, %c0_77] : memref<36x8xbf16, #tpu.memory_space<vmem>>, vector<4x8xbf16>
    %c0_78 = arith.constant 0 : index
    %c0_79 = arith.constant 0 : index
    %65 = vector.load %arg8[%c0_78, %c0_79] : memref<256x8xf32, #tpu.memory_space<vmem>>, vector<256x8xf32>
    %cst_80 = arith.constant dense<0.000000e+00> : vector<256x8xf32>
    %66 = tpu.matmul %63, %64, %cst_80 {dimension_numbers = #tpu.dot_dimension_numbers<[1], [0], [0], [1], [0, 0, 1, 1], [], []>} : vector<256x4xbf16>, vector<4x8xbf16>, vector<256x8xf32> -> vector<256x8xf32>
    %67 = arith.addf %65, %66 : vector<256x8xf32>
    %c0_81 = arith.constant 0 : index
    %c0_82 = arith.constant 0 : index
    %68 = vector.load %arg8[%c0_81, %c0_82] : memref<256x8xf32, #tpu.memory_space<vmem>>, vector<256x8xf32>
    tpu.vector_store %arg8[%c0_81, %c0_82], %67 {strides = array<i32>} : memref<256x8xf32, #tpu.memory_space<vmem>>, vector<256x8xf32>,
    %c0_83 = arith.constant 0 : index
    %c2_84 = arith.constant 2 : index
    %c1_85 = arith.constant 1 : index
    %c0_86 = arith.constant 0 : index
    %69 = vector.load %arg7[%c0_83, %c2_84, %c1_85, %c0_86] : memref<1x18x18x4xf32, #tpu.memory_space<vmem>>, vector<1x16x16x4xf32>
    %70 = vector.shape_cast %69 : vector<1x16x16x4xf32> to vector<16x16x4xf32>
    %71 = vector.shape_cast %70 : vector<16x16x4xf32> to vector<256x4xf32>
    %72 = arith.truncf %71 : vector<256x4xf32> to vector<256x4xbf16>
    %c28 = arith.constant 28 : index
    %c0_87 = arith.constant 0 : index
    %73 = vector.load %arg3[%c28, %c0_87] : memref<36x8xbf16, #tpu.memory_space<vmem>>, vector<4x8xbf16>
    %c0_88 = arith.constant 0 : index
    %c0_89 = arith.constant 0 : index
    %74 = vector.load %arg8[%c0_88, %c0_89] : memref<256x8xf32, #tpu.memory_space<vmem>>, vector<256x8xf32>
    %cst_90 = arith.constant dense<0.000000e+00> : vector<256x8xf32>
    %75 = tpu.matmul %72, %73, %cst_90 {dimension_numbers = #tpu.dot_dimension_numbers<[1], [0], [0], [1], [0, 0, 1, 1], [], []>} : vector<256x4xbf16>, vector<4x8xbf16>, vector<256x8xf32> -> vector<256x8xf32>
    %76 = arith.addf %74, %75 : vector<256x8xf32>
    %c0_91 = arith.constant 0 : index
    %c0_92 = arith.constant 0 : index
    %77 = vector.load %arg8[%c0_91, %c0_92] : memref<256x8xf32, #tpu.memory_space<vmem>>, vector<256x8xf32>
    tpu.vector_store %arg8[%c0_91, %c0_92], %76 {strides = array<i32>} : memref<256x8xf32, #tpu.memory_space<vmem>>, vector<256x8xf32>,
    %c0_93 = arith.constant 0 : index
    %c2_94 = arith.constant 2 : index
    %c2_95 = arith.constant 2 : index
    %c0_96 = arith.constant 0 : index
    %78 = vector.load %arg7[%c0_93, %c2_94, %c2_95, %c0_96] : memref<1x18x18x4xf32, #tpu.memory_space<vmem>>, vector<1x16x16x4xf32>
    %79 = vector.shape_cast %78 : vector<1x16x16x4xf32> to vector<16x16x4xf32>
    %80 = vector.shape_cast %79 : vector<16x16x4xf32> to vector<256x4xf32>
    %81 = arith.truncf %80 : vector<256x4xf32> to vector<256x4xbf16>
    %c32 = arith.constant 32 : index
    %c0_97 = arith.constant 0 : index
    %82 = vector.load %arg3[%c32, %c0_97] : memref<36x8xbf16, #tpu.memory_space<vmem>>, vector<4x8xbf16>
    %c0_98 = arith.constant 0 : index
    %c0_99 = arith.constant 0 : index
    %83 = vector.load %arg8[%c0_98, %c0_99] : memref<256x8xf32, #tpu.memory_space<vmem>>, vector<256x8xf32>
    %cst_100 = arith.constant dense<0.000000e+00> : vector<256x8xf32>
    %84 = tpu.matmul %81, %82, %cst_100 {dimension_numbers = #tpu.dot_dimension_numbers<[1], [0], [0], [1], [0, 0, 1, 1], [], []>} : vector<256x4xbf16>, vector<4x8xbf16>, vector<256x8xf32> -> vector<256x8xf32>
    %85 = arith.addf %83, %84 : vector<256x8xf32>
    %c0_101 = arith.constant 0 : index
    %c0_102 = arith.constant 0 : index
    %86 = vector.load %arg8[%c0_101, %c0_102] : memref<256x8xf32, #tpu.memory_space<vmem>>, vector<256x8xf32>
    tpu.vector_store %arg8[%c0_101, %c0_102], %85 {strides = array<i32>} : memref<256x8xf32, #tpu.memory_space<vmem>>, vector<256x8xf32>,
    %c0_103 = arith.constant 0 : index
    %c0_104 = arith.constant 0 : index
    %87 = vector.load %arg8[%c0_103, %c0_104] : memref<256x8xf32, #tpu.memory_space<vmem>>, vector<256x8xf32>
    %c0_105 = arith.constant 0 : index
    %c0_106 = arith.constant 0 : index
    %88 = vector.load %arg4[%c0_105, %c0_106] : memref<1x8xf32, #tpu.memory_space<vmem>>, vector<1x8xf32>
    %89 = vector.broadcast %88 : vector<1x8xf32> to vector<256x8xf32>
    %90 = arith.mulf %87, %89 : vector<256x8xf32>
    %c0_107 = arith.constant 0 : index
    %c0_108 = arith.constant 0 : index
    %91 = vector.load %arg5[%c0_107, %c0_108] : memref<1x8xf32, #tpu.memory_space<vmem>>, vector<1x8xf32>
    %92 = vector.broadcast %91 : vector<1x8xf32> to vector<256x8xf32>
    %93 = arith.addf %90, %92 : vector<256x8xf32>
    %cst_109 = arith.constant 0.000000e+00 : f32
    %94 = vector.broadcast %cst_109 : f32 to vector<256x8xf32>
    %95 = arith.maximumf %93, %94 : vector<256x8xf32>
    %96 = vector.shape_cast %95 : vector<256x8xf32> to vector<1x16x16x8xf32>
    %c0_110 = arith.constant 0 : index
    %c0_111 = arith.constant 0 : index
    %c0_112 = arith.constant 0 : index
    %c0_113 = arith.constant 0 : index
    %97 = vector.load %arg6[%c0_110, %c0_111, %c0_112, %c0_113] : memref<1x16x16x8xf32, #tpu.memory_space<vmem>>, vector<1x16x16x8xf32>
    tpu.vector_store %arg6[%c0_110, %c0_111, %c0_112, %c0_113], %96 {strides = array<i32>} : memref<1x16x16x8xf32, #tpu.memory_space<vmem>>, vector<1x16x16x8xf32>,
    return
  }
  func.func @transform_0(%arg0: i32, %arg1: i32) -> (i32, i32, i32, i32) {
    %c0_i32 = arith.constant 0 : i32
    %c0_i32_0 = arith.constant 0 : i32
    %c0_i32_1 = arith.constant 0 : i32
    %c0_i32_2 = arith.constant 0 : i32
    return %arg0, %c0_i32, %c0_i32_0, %c0_i32_1 : i32, i32, i32, i32
  }
  func.func @transform_1(%arg0: i32, %arg1: i32) -> (i32, i32) {
    %c0_i32 = arith.constant 0 : i32
    %c0_i32_0 = arith.constant 0 : i32
    return %c0_i32, %arg1 : i32, i32
  }
  func.func @transform_2(%arg0: i32, %arg1: i32) -> (i32, i32) {
    %c0_i32 = arith.constant 0 : i32
    %c0_i32_0 = arith.constant 0 : i32
    return %c0_i32, %arg1 : i32, i32
  }
  func.func @transform_3(%arg0: i32, %arg1: i32) -> (i32, i32) {
    %c0_i32 = arith.constant 0 : i32
    %c0_i32_0 = arith.constant 0 : i32
    return %c0_i32, %arg1 : i32, i32
  }
  func.func @transform_4(%arg0: i32, %arg1: i32) -> (i32, i32, i32, i32) {
    %c0_i32 = arith.constant 0 : i32
    %c0_i32_0 = arith.constant 0 : i32
    %c0_i32_1 = arith.constant 0 : i32
    return %arg0, %c0_i32, %c0_i32_0, %arg1 : i32, i32, i32, i32
  }
}

module attributes {stable_mosaic.version = 11 : i64} {
  func.func @_conv_bn_kernel(%arg0: i32, %arg1: i32, %arg2: memref<1x16x16x4xf32, #tpu.memory_space<vmem>>, %arg3: memref<4x8xbf16, #tpu.memory_space<vmem>>, %arg4: memref<1x8xf32, #tpu.memory_space<vmem>>, %arg5: memref<1x8xf32, #tpu.memory_space<vmem>>, %arg6: memref<1x16x16x8xf32, #tpu.memory_space<vmem>>, %arg7: memref<1x16x16x4xf32, #tpu.memory_space<vmem>>, %arg8: memref<256x8xf32, #tpu.memory_space<vmem>>) attributes {dimension_semantics = [#tpu.dimension_semantics<parallel>, #tpu.dimension_semantics<parallel>], iteration_bounds = array<i64: 2, 1>, scalar_prefetch = 0 : i64, scratch_operands = 2 : i64, tpu.core_type = #tpu.core_type<tc>, window_params = [{transform_indices = @transform_0, window_bounds = array<i64: 1, 16, 16, 4>}, {transform_indices = @transform_1, window_bounds = array<i64: 4, 8>}, {transform_indices = @transform_2, window_bounds = array<i64: 1, 8>}, {transform_indices = @transform_3, window_bounds = array<i64: 1, 8>}, {transform_indices = @transform_4, window_bounds = array<i64: 1, 16, 16, 8>}]} {
    %cst = arith.constant 0.000000e+00 : f32
    %0 = vector.broadcast %cst : f32 to vector<1x16x16x4xf32>
    %c0 = arith.constant 0 : index
    %c0_0 = arith.constant 0 : index
    %c0_1 = arith.constant 0 : index
    %c0_2 = arith.constant 0 : index
    %1 = vector.load %arg7[%c0, %c0_0, %c0_1, %c0_2] : memref<1x16x16x4xf32, #tpu.memory_space<vmem>>, vector<1x16x16x4xf32>
    tpu.vector_store %arg7[%c0, %c0_0, %c0_1, %c0_2], %0 {strides = array<i32>} : memref<1x16x16x4xf32, #tpu.memory_space<vmem>>, vector<1x16x16x4xf32>,
    %c0_3 = arith.constant 0 : index
    %c0_4 = arith.constant 0 : index
    %c0_5 = arith.constant 0 : index
    %c0_6 = arith.constant 0 : index
    %2 = vector.load %arg2[%c0_3, %c0_4, %c0_5, %c0_6] : memref<1x16x16x4xf32, #tpu.memory_space<vmem>>, vector<1x16x16x4xf32>
    %c0_7 = arith.constant 0 : index
    %c0_8 = arith.constant 0 : index
    %c0_9 = arith.constant 0 : index
    %c0_10 = arith.constant 0 : index
    %3 = vector.load %arg7[%c0_7, %c0_8, %c0_9, %c0_10] : memref<1x16x16x4xf32, #tpu.memory_space<vmem>>, vector<1x16x16x4xf32>
    tpu.vector_store %arg7[%c0_7, %c0_8, %c0_9, %c0_10], %2 {strides = array<i32>} : memref<1x16x16x4xf32, #tpu.memory_space<vmem>>, vector<1x16x16x4xf32>,
    %cst_11 = arith.constant 0.000000e+00 : f32
    %4 = vector.broadcast %cst_11 : f32 to vector<256x8xf32>
    %c0_12 = arith.constant 0 : index
    %c0_13 = arith.constant 0 : index
    %5 = vector.load %arg8[%c0_12, %c0_13] : memref<256x8xf32, #tpu.memory_space<vmem>>, vector<256x8xf32>
    tpu.vector_store %arg8[%c0_12, %c0_13], %4 {strides = array<i32>} : memref<256x8xf32, #tpu.memory_space<vmem>>, vector<256x8xf32>,
    %c0_14 = arith.constant 0 : index
    %c0_15 = arith.constant 0 : index
    %c0_16 = arith.constant 0 : index
    %c0_17 = arith.constant 0 : index
    %6 = vector.load %arg7[%c0_14, %c0_15, %c0_16, %c0_17] : memref<1x16x16x4xf32, #tpu.memory_space<vmem>>, vector<1x16x16x4xf32>
    %7 = vector.shape_cast %6 : vector<1x16x16x4xf32> to vector<16x16x4xf32>
    %8 = vector.shape_cast %7 : vector<16x16x4xf32> to vector<256x4xf32>
    %9 = arith.truncf %8 : vector<256x4xf32> to vector<256x4xbf16>
    %c0_18 = arith.constant 0 : index
    %c0_19 = arith.constant 0 : index
    %10 = vector.load %arg3[%c0_18, %c0_19] : memref<4x8xbf16, #tpu.memory_space<vmem>>, vector<4x8xbf16>
    %c0_20 = arith.constant 0 : index
    %c0_21 = arith.constant 0 : index
    %11 = vector.load %arg8[%c0_20, %c0_21] : memref<256x8xf32, #tpu.memory_space<vmem>>, vector<256x8xf32>
    %cst_22 = arith.constant dense<0.000000e+00> : vector<256x8xf32>
    %12 = tpu.matmul %9, %10, %cst_22 {dimension_numbers = #tpu.dot_dimension_numbers<[1], [0], [0], [1], [0, 0, 1, 1], [], []>} : vector<256x4xbf16>, vector<4x8xbf16>, vector<256x8xf32> -> vector<256x8xf32>
    %13 = arith.addf %11, %12 : vector<256x8xf32>
    %c0_23 = arith.constant 0 : index
    %c0_24 = arith.constant 0 : index
    %14 = vector.load %arg8[%c0_23, %c0_24] : memref<256x8xf32, #tpu.memory_space<vmem>>, vector<256x8xf32>
    tpu.vector_store %arg8[%c0_23, %c0_24], %13 {strides = array<i32>} : memref<256x8xf32, #tpu.memory_space<vmem>>, vector<256x8xf32>,
    %c0_25 = arith.constant 0 : index
    %c0_26 = arith.constant 0 : index
    %15 = vector.load %arg8[%c0_25, %c0_26] : memref<256x8xf32, #tpu.memory_space<vmem>>, vector<256x8xf32>
    %c0_27 = arith.constant 0 : index
    %c0_28 = arith.constant 0 : index
    %16 = vector.load %arg4[%c0_27, %c0_28] : memref<1x8xf32, #tpu.memory_space<vmem>>, vector<1x8xf32>
    %17 = vector.broadcast %16 : vector<1x8xf32> to vector<256x8xf32>
    %18 = arith.mulf %15, %17 : vector<256x8xf32>
    %c0_29 = arith.constant 0 : index
    %c0_30 = arith.constant 0 : index
    %19 = vector.load %arg5[%c0_29, %c0_30] : memref<1x8xf32, #tpu.memory_space<vmem>>, vector<1x8xf32>
    %20 = vector.broadcast %19 : vector<1x8xf32> to vector<256x8xf32>
    %21 = arith.addf %18, %20 : vector<256x8xf32>
    %cst_31 = arith.constant 0.000000e+00 : f32
    %22 = vector.broadcast %cst_31 : f32 to vector<256x8xf32>
    %23 = arith.maximumf %21, %22 : vector<256x8xf32>
    %24 = vector.shape_cast %23 : vector<256x8xf32> to vector<1x16x16x8xf32>
    %c0_32 = arith.constant 0 : index
    %c0_33 = arith.constant 0 : index
    %c0_34 = arith.constant 0 : index
    %c0_35 = arith.constant 0 : index
    %25 = vector.load %arg6[%c0_32, %c0_33, %c0_34, %c0_35] : memref<1x16x16x8xf32, #tpu.memory_space<vmem>>, vector<1x16x16x8xf32>
    tpu.vector_store %arg6[%c0_32, %c0_33, %c0_34, %c0_35], %24 {strides = array<i32>} : memref<1x16x16x8xf32, #tpu.memory_space<vmem>>, vector<1x16x16x8xf32>,
    return
  }
  func.func @transform_0(%arg0: i32, %arg1: i32) -> (i32, i32, i32, i32) {
    %c0_i32 = arith.constant 0 : i32
    %c0_i32_0 = arith.constant 0 : i32
    %c0_i32_1 = arith.constant 0 : i32
    %c0_i32_2 = arith.constant 0 : i32
    return %arg0, %c0_i32, %c0_i32_0, %c0_i32_1 : i32, i32, i32, i32
  }
  func.func @transform_1(%arg0: i32, %arg1: i32) -> (i32, i32) {
    %c0_i32 = arith.constant 0 : i32
    %c0_i32_0 = arith.constant 0 : i32
    return %c0_i32, %arg1 : i32, i32
  }
  func.func @transform_2(%arg0: i32, %arg1: i32) -> (i32, i32) {
    %c0_i32 = arith.constant 0 : i32
    %c0_i32_0 = arith.constant 0 : i32
    return %c0_i32, %arg1 : i32, i32
  }
  func.func @transform_3(%arg0: i32, %arg1: i32) -> (i32, i32) {
    %c0_i32 = arith.constant 0 : i32
    %c0_i32_0 = arith.constant 0 : i32
    return %c0_i32, %arg1 : i32, i32
  }
  func.func @transform_4(%arg0: i32, %arg1: i32) -> (i32, i32, i32, i32) {
    %c0_i32 = arith.constant 0 : i32
    %c0_i32_0 = arith.constant 0 : i32
    %c0_i32_1 = arith.constant 0 : i32
    return %arg0, %c0_i32, %c0_i32_0, %arg1 : i32, i32, i32, i32
  }
}

module attributes {stable_mosaic.version = 11 : i64} {
  func.func @_conv_bn_kernel(%arg0: i32, %arg1: i32, %arg2: memref<1x16x16x8xf32, #tpu.memory_space<vmem>>, %arg3: memref<72x8xbf16, #tpu.memory_space<vmem>>, %arg4: memref<1x8xf32, #tpu.memory_space<vmem>>, %arg5: memref<1x8xf32, #tpu.memory_space<vmem>>, %arg6: memref<1x16x16x8xf32, #tpu.memory_space<vmem>>, %arg7: memref<1x16x16x8xf32, #tpu.memory_space<vmem>>, %arg8: memref<1x18x18x8xf32, #tpu.memory_space<vmem>>, %arg9: memref<256x8xf32, #tpu.memory_space<vmem>>) attributes {dimension_semantics = [#tpu.dimension_semantics<parallel>, #tpu.dimension_semantics<parallel>], iteration_bounds = array<i64: 2, 1>, scalar_prefetch = 0 : i64, scratch_operands = 2 : i64, tpu.core_type = #tpu.core_type<tc>, window_params = [{transform_indices = @transform_0, window_bounds = array<i64: 1, 16, 16, 8>}, {transform_indices = @transform_1, window_bounds = array<i64: 72, 8>}, {transform_indices = @transform_2, window_bounds = array<i64: 1, 8>}, {transform_indices = @transform_3, window_bounds = array<i64: 1, 8>}, {transform_indices = @transform_4, window_bounds = array<i64: 1, 16, 16, 8>}, {transform_indices = @transform_5, window_bounds = array<i64: 1, 16, 16, 8>}]} {
    %cst = arith.constant 0.000000e+00 : f32
    %0 = vector.broadcast %cst : f32 to vector<1x18x18x8xf32>
    %c0 = arith.constant 0 : index
    %c0_0 = arith.constant 0 : index
    %c0_1 = arith.constant 0 : index
    %c0_2 = arith.constant 0 : index
    %1 = vector.load %arg8[%c0, %c0_0, %c0_1, %c0_2] : memref<1x18x18x8xf32, #tpu.memory_space<vmem>>, vector<1x18x18x8xf32>
    tpu.vector_store %arg8[%c0, %c0_0, %c0_1, %c0_2], %0 {strides = array<i32>} : memref<1x18x18x8xf32, #tpu.memory_space<vmem>>, vector<1x18x18x8xf32>,
    %c0_3 = arith.constant 0 : index
    %c0_4 = arith.constant 0 : index
    %c0_5 = arith.constant 0 : index
    %c0_6 = arith.constant 0 : index
    %2 = vector.load %arg2[%c0_3, %c0_4, %c0_5, %c0_6] : memref<1x16x16x8xf32, #tpu.memory_space<vmem>>, vector<1x16x16x8xf32>
    %c0_7 = arith.constant 0 : index
    %c1 = arith.constant 1 : index
    %c1_8 = arith.constant 1 : index
    %c0_9 = arith.constant 0 : index
    %3 = vector.load %arg8[%c0_7, %c1, %c1_8, %c0_9] : memref<1x18x18x8xf32, #tpu.memory_space<vmem>>, vector<1x16x16x8xf32>
    tpu.vector_store %arg8[%c0_7, %c1, %c1_8, %c0_9], %2 {strides = array<i32>} : memref<1x18x18x8xf32, #tpu.memory_space<vmem>>, vector<1x16x16x8xf32>,
    %cst_10 = arith.constant 0.000000e+00 : f32
    %4 = vector.broadcast %cst_10 : f32 to vector<256x8xf32>
    %c0_11 = arith.constant 0 : index
    %c0_12 = arith.constant 0 : index
    %5 = vector.load %arg9[%c0_11, %c0_12] : memref<256x8xf32, #tpu.memory_space<vmem>>, vector<256x8xf32>
    tpu.vector_store %arg9[%c0_11, %c0_12], %4 {strides = array<i32>} : memref<256x8xf32, #tpu.memory_space<vmem>>, vector<256x8xf32>,
    %c0_13 = arith.constant 0 : index
    %c0_14 = arith.constant 0 : index
    %c0_15 = arith.constant 0 : index
    %c0_16 = arith.constant 0 : index
    %6 = vector.load %arg8[%c0_13, %c0_14, %c0_15, %c0_16] : memref<1x18x18x8xf32, #tpu.memory_space<vmem>>, vector<1x16x16x8xf32>
    %7 = vector.shape_cast %6 : vector<1x16x16x8xf32> to vector<16x16x8xf32>
    %8 = vector.shape_cast %7 : vector<16x16x8xf32> to vector<256x8xf32>
    %9 = arith.truncf %8 : vector<256x8xf32> to vector<256x8xbf16>
    %c0_17 = arith.constant 0 : index
    %c0_18 = arith.constant 0 : index
    %10 = vector.load %arg3[%c0_17, %c0_18] : memref<72x8xbf16, #tpu.memory_space<vmem>>, vector<8x8xbf16>
    %c0_19 = arith.constant 0 : index
    %c0_20 = arith.constant 0 : index
    %11 = vector.load %arg9[%c0_19, %c0_20] : memref<256x8xf32, #tpu.memory_space<vmem>>, vector<256x8xf32>
    %cst_21 = arith.constant dense<0.000000e+00> : vector<256x8xf32>
    %12 = tpu.matmul %9, %10, %cst_21 {dimension_numbers = #tpu.dot_dimension_numbers<[1], [0], [0], [1], [0, 0, 1, 1], [], []>} : vector<256x8xbf16>, vector<8x8xbf16>, vector<256x8xf32> -> vector<256x8xf32>
    %13 = arith.addf %11, %12 : vector<256x8xf32>
    %c0_22 = arith.constant 0 : index
    %c0_23 = arith.constant 0 : index
    %14 = vector.load %arg9[%c0_22, %c0_23] : memref<256x8xf32, #tpu.memory_space<vmem>>, vector<256x8xf32>
    tpu.vector_store %arg9[%c0_22, %c0_23], %13 {strides = array<i32>} : memref<256x8xf32, #tpu.memory_space<vmem>>, vector<256x8xf32>,
    %c0_24 = arith.constant 0 : index
    %c0_25 = arith.constant 0 : index
    %c1_26 = arith.constant 1 : index
    %c0_27 = arith.constant 0 : index
    %15 = vector.load %arg8[%c0_24, %c0_25, %c1_26, %c0_27] : memref<1x18x18x8xf32, #tpu.memory_space<vmem>>, vector<1x16x16x8xf32>
    %16 = vector.shape_cast %15 : vector<1x16x16x8xf32> to vector<16x16x8xf32>
    %17 = vector.shape_cast %16 : vector<16x16x8xf32> to vector<256x8xf32>
    %18 = arith.truncf %17 : vector<256x8xf32> to vector<256x8xbf16>
    %c8 = arith.constant 8 : index
    %c0_28 = arith.constant 0 : index
    %19 = vector.load %arg3[%c8, %c0_28] : memref<72x8xbf16, #tpu.memory_space<vmem>>, vector<8x8xbf16>
    %c0_29 = arith.constant 0 : index
    %c0_30 = arith.constant 0 : index
    %20 = vector.load %arg9[%c0_29, %c0_30] : memref<256x8xf32, #tpu.memory_space<vmem>>, vector<256x8xf32>
    %cst_31 = arith.constant dense<0.000000e+00> : vector<256x8xf32>
    %21 = tpu.matmul %18, %19, %cst_31 {dimension_numbers = #tpu.dot_dimension_numbers<[1], [0], [0], [1], [0, 0, 1, 1], [], []>} : vector<256x8xbf16>, vector<8x8xbf16>, vector<256x8xf32> -> vector<256x8xf32>
    %22 = arith.addf %20, %21 : vector<256x8xf32>
    %c0_32 = arith.constant 0 : index
    %c0_33 = arith.constant 0 : index
    %23 = vector.load %arg9[%c0_32, %c0_33] : memref<256x8xf32, #tpu.memory_space<vmem>>, vector<256x8xf32>
    tpu.vector_store %arg9[%c0_32, %c0_33], %22 {strides = array<i32>} : memref<256x8xf32, #tpu.memory_space<vmem>>, vector<256x8xf32>,
    %c0_34 = arith.constant 0 : index
    %c0_35 = arith.constant 0 : index
    %c2 = arith.constant 2 : index
    %c0_36 = arith.constant 0 : index
    %24 = vector.load %arg8[%c0_34, %c0_35, %c2, %c0_36] : memref<1x18x18x8xf32, #tpu.memory_space<vmem>>, vector<1x16x16x8xf32>
    %25 = vector.shape_cast %24 : vector<1x16x16x8xf32> to vector<16x16x8xf32>
    %26 = vector.shape_cast %25 : vector<16x16x8xf32> to vector<256x8xf32>
    %27 = arith.truncf %26 : vector<256x8xf32> to vector<256x8xbf16>
    %c16 = arith.constant 16 : index
    %c0_37 = arith.constant 0 : index
    %28 = vector.load %arg3[%c16, %c0_37] : memref<72x8xbf16, #tpu.memory_space<vmem>>, vector<8x8xbf16>
    %c0_38 = arith.constant 0 : index
    %c0_39 = arith.constant 0 : index
    %29 = vector.load %arg9[%c0_38, %c0_39] : memref<256x8xf32, #tpu.memory_space<vmem>>, vector<256x8xf32>
    %cst_40 = arith.constant dense<0.000000e+00> : vector<256x8xf32>
    %30 = tpu.matmul %27, %28, %cst_40 {dimension_numbers = #tpu.dot_dimension_numbers<[1], [0], [0], [1], [0, 0, 1, 1], [], []>} : vector<256x8xbf16>, vector<8x8xbf16>, vector<256x8xf32> -> vector<256x8xf32>
    %31 = arith.addf %29, %30 : vector<256x8xf32>
    %c0_41 = arith.constant 0 : index
    %c0_42 = arith.constant 0 : index
    %32 = vector.load %arg9[%c0_41, %c0_42] : memref<256x8xf32, #tpu.memory_space<vmem>>, vector<256x8xf32>
    tpu.vector_store %arg9[%c0_41, %c0_42], %31 {strides = array<i32>} : memref<256x8xf32, #tpu.memory_space<vmem>>, vector<256x8xf32>,
    %c0_43 = arith.constant 0 : index
    %c1_44 = arith.constant 1 : index
    %c0_45 = arith.constant 0 : index
    %c0_46 = arith.constant 0 : index
    %33 = vector.load %arg8[%c0_43, %c1_44, %c0_45, %c0_46] : memref<1x18x18x8xf32, #tpu.memory_space<vmem>>, vector<1x16x16x8xf32>
    %34 = vector.shape_cast %33 : vector<1x16x16x8xf32> to vector<16x16x8xf32>
    %35 = vector.shape_cast %34 : vector<16x16x8xf32> to vector<256x8xf32>
    %36 = arith.truncf %35 : vector<256x8xf32> to vector<256x8xbf16>
    %c24 = arith.constant 24 : index
    %c0_47 = arith.constant 0 : index
    %37 = vector.load %arg3[%c24, %c0_47] : memref<72x8xbf16, #tpu.memory_space<vmem>>, vector<8x8xbf16>
    %c0_48 = arith.constant 0 : index
    %c0_49 = arith.constant 0 : index
    %38 = vector.load %arg9[%c0_48, %c0_49] : memref<256x8xf32, #tpu.memory_space<vmem>>, vector<256x8xf32>
    %cst_50 = arith.constant dense<0.000000e+00> : vector<256x8xf32>
    %39 = tpu.matmul %36, %37, %cst_50 {dimension_numbers = #tpu.dot_dimension_numbers<[1], [0], [0], [1], [0, 0, 1, 1], [], []>} : vector<256x8xbf16>, vector<8x8xbf16>, vector<256x8xf32> -> vector<256x8xf32>
    %40 = arith.addf %38, %39 : vector<256x8xf32>
    %c0_51 = arith.constant 0 : index
    %c0_52 = arith.constant 0 : index
    %41 = vector.load %arg9[%c0_51, %c0_52] : memref<256x8xf32, #tpu.memory_space<vmem>>, vector<256x8xf32>
    tpu.vector_store %arg9[%c0_51, %c0_52], %40 {strides = array<i32>} : memref<256x8xf32, #tpu.memory_space<vmem>>, vector<256x8xf32>,
    %c0_53 = arith.constant 0 : index
    %c1_54 = arith.constant 1 : index
    %c1_55 = arith.constant 1 : index
    %c0_56 = arith.constant 0 : index
    %42 = vector.load %arg8[%c0_53, %c1_54, %c1_55, %c0_56] : memref<1x18x18x8xf32, #tpu.memory_space<vmem>>, vector<1x16x16x8xf32>
    %43 = vector.shape_cast %42 : vector<1x16x16x8xf32> to vector<16x16x8xf32>
    %44 = vector.shape_cast %43 : vector<16x16x8xf32> to vector<256x8xf32>
    %45 = arith.truncf %44 : vector<256x8xf32> to vector<256x8xbf16>
    %c32 = arith.constant 32 : index
    %c0_57 = arith.constant 0 : index
    %46 = vector.load %arg3[%c32, %c0_57] : memref<72x8xbf16, #tpu.memory_space<vmem>>, vector<8x8xbf16>
    %c0_58 = arith.constant 0 : index
    %c0_59 = arith.constant 0 : index
    %47 = vector.load %arg9[%c0_58, %c0_59] : memref<256x8xf32, #tpu.memory_space<vmem>>, vector<256x8xf32>
    %cst_60 = arith.constant dense<0.000000e+00> : vector<256x8xf32>
    %48 = tpu.matmul %45, %46, %cst_60 {dimension_numbers = #tpu.dot_dimension_numbers<[1], [0], [0], [1], [0, 0, 1, 1], [], []>} : vector<256x8xbf16>, vector<8x8xbf16>, vector<256x8xf32> -> vector<256x8xf32>
    %49 = arith.addf %47, %48 : vector<256x8xf32>
    %c0_61 = arith.constant 0 : index
    %c0_62 = arith.constant 0 : index
    %50 = vector.load %arg9[%c0_61, %c0_62] : memref<256x8xf32, #tpu.memory_space<vmem>>, vector<256x8xf32>
    tpu.vector_store %arg9[%c0_61, %c0_62], %49 {strides = array<i32>} : memref<256x8xf32, #tpu.memory_space<vmem>>, vector<256x8xf32>,
    %c0_63 = arith.constant 0 : index
    %c1_64 = arith.constant 1 : index
    %c2_65 = arith.constant 2 : index
    %c0_66 = arith.constant 0 : index
    %51 = vector.load %arg8[%c0_63, %c1_64, %c2_65, %c0_66] : memref<1x18x18x8xf32, #tpu.memory_space<vmem>>, vector<1x16x16x8xf32>
    %52 = vector.shape_cast %51 : vector<1x16x16x8xf32> to vector<16x16x8xf32>
    %53 = vector.shape_cast %52 : vector<16x16x8xf32> to vector<256x8xf32>
    %54 = arith.truncf %53 : vector<256x8xf32> to vector<256x8xbf16>
    %c40 = arith.constant 40 : index
    %c0_67 = arith.constant 0 : index
    %55 = vector.load %arg3[%c40, %c0_67] : memref<72x8xbf16, #tpu.memory_space<vmem>>, vector<8x8xbf16>
    %c0_68 = arith.constant 0 : index
    %c0_69 = arith.constant 0 : index
    %56 = vector.load %arg9[%c0_68, %c0_69] : memref<256x8xf32, #tpu.memory_space<vmem>>, vector<256x8xf32>
    %cst_70 = arith.constant dense<0.000000e+00> : vector<256x8xf32>
    %57 = tpu.matmul %54, %55, %cst_70 {dimension_numbers = #tpu.dot_dimension_numbers<[1], [0], [0], [1], [0, 0, 1, 1], [], []>} : vector<256x8xbf16>, vector<8x8xbf16>, vector<256x8xf32> -> vector<256x8xf32>
    %58 = arith.addf %56, %57 : vector<256x8xf32>
    %c0_71 = arith.constant 0 : index
    %c0_72 = arith.constant 0 : index
    %59 = vector.load %arg9[%c0_71, %c0_72] : memref<256x8xf32, #tpu.memory_space<vmem>>, vector<256x8xf32>
    tpu.vector_store %arg9[%c0_71, %c0_72], %58 {strides = array<i32>} : memref<256x8xf32, #tpu.memory_space<vmem>>, vector<256x8xf32>,
    %c0_73 = arith.constant 0 : index
    %c2_74 = arith.constant 2 : index
    %c0_75 = arith.constant 0 : index
    %c0_76 = arith.constant 0 : index
    %60 = vector.load %arg8[%c0_73, %c2_74, %c0_75, %c0_76] : memref<1x18x18x8xf32, #tpu.memory_space<vmem>>, vector<1x16x16x8xf32>
    %61 = vector.shape_cast %60 : vector<1x16x16x8xf32> to vector<16x16x8xf32>
    %62 = vector.shape_cast %61 : vector<16x16x8xf32> to vector<256x8xf32>
    %63 = arith.truncf %62 : vector<256x8xf32> to vector<256x8xbf16>
    %c48 = arith.constant 48 : index
    %c0_77 = arith.constant 0 : index
    %64 = vector.load %arg3[%c48, %c0_77] : memref<72x8xbf16, #tpu.memory_space<vmem>>, vector<8x8xbf16>
    %c0_78 = arith.constant 0 : index
    %c0_79 = arith.constant 0 : index
    %65 = vector.load %arg9[%c0_78, %c0_79] : memref<256x8xf32, #tpu.memory_space<vmem>>, vector<256x8xf32>
    %cst_80 = arith.constant dense<0.000000e+00> : vector<256x8xf32>
    %66 = tpu.matmul %63, %64, %cst_80 {dimension_numbers = #tpu.dot_dimension_numbers<[1], [0], [0], [1], [0, 0, 1, 1], [], []>} : vector<256x8xbf16>, vector<8x8xbf16>, vector<256x8xf32> -> vector<256x8xf32>
    %67 = arith.addf %65, %66 : vector<256x8xf32>
    %c0_81 = arith.constant 0 : index
    %c0_82 = arith.constant 0 : index
    %68 = vector.load %arg9[%c0_81, %c0_82] : memref<256x8xf32, #tpu.memory_space<vmem>>, vector<256x8xf32>
    tpu.vector_store %arg9[%c0_81, %c0_82], %67 {strides = array<i32>} : memref<256x8xf32, #tpu.memory_space<vmem>>, vector<256x8xf32>,
    %c0_83 = arith.constant 0 : index
    %c2_84 = arith.constant 2 : index
    %c1_85 = arith.constant 1 : index
    %c0_86 = arith.constant 0 : index
    %69 = vector.load %arg8[%c0_83, %c2_84, %c1_85, %c0_86] : memref<1x18x18x8xf32, #tpu.memory_space<vmem>>, vector<1x16x16x8xf32>
    %70 = vector.shape_cast %69 : vector<1x16x16x8xf32> to vector<16x16x8xf32>
    %71 = vector.shape_cast %70 : vector<16x16x8xf32> to vector<256x8xf32>
    %72 = arith.truncf %71 : vector<256x8xf32> to vector<256x8xbf16>
    %c56 = arith.constant 56 : index
    %c0_87 = arith.constant 0 : index
    %73 = vector.load %arg3[%c56, %c0_87] : memref<72x8xbf16, #tpu.memory_space<vmem>>, vector<8x8xbf16>
    %c0_88 = arith.constant 0 : index
    %c0_89 = arith.constant 0 : index
    %74 = vector.load %arg9[%c0_88, %c0_89] : memref<256x8xf32, #tpu.memory_space<vmem>>, vector<256x8xf32>
    %cst_90 = arith.constant dense<0.000000e+00> : vector<256x8xf32>
    %75 = tpu.matmul %72, %73, %cst_90 {dimension_numbers = #tpu.dot_dimension_numbers<[1], [0], [0], [1], [0, 0, 1, 1], [], []>} : vector<256x8xbf16>, vector<8x8xbf16>, vector<256x8xf32> -> vector<256x8xf32>
    %76 = arith.addf %74, %75 : vector<256x8xf32>
    %c0_91 = arith.constant 0 : index
    %c0_92 = arith.constant 0 : index
    %77 = vector.load %arg9[%c0_91, %c0_92] : memref<256x8xf32, #tpu.memory_space<vmem>>, vector<256x8xf32>
    tpu.vector_store %arg9[%c0_91, %c0_92], %76 {strides = array<i32>} : memref<256x8xf32, #tpu.memory_space<vmem>>, vector<256x8xf32>,
    %c0_93 = arith.constant 0 : index
    %c2_94 = arith.constant 2 : index
    %c2_95 = arith.constant 2 : index
    %c0_96 = arith.constant 0 : index
    %78 = vector.load %arg8[%c0_93, %c2_94, %c2_95, %c0_96] : memref<1x18x18x8xf32, #tpu.memory_space<vmem>>, vector<1x16x16x8xf32>
    %79 = vector.shape_cast %78 : vector<1x16x16x8xf32> to vector<16x16x8xf32>
    %80 = vector.shape_cast %79 : vector<16x16x8xf32> to vector<256x8xf32>
    %81 = arith.truncf %80 : vector<256x8xf32> to vector<256x8xbf16>
    %c64 = arith.constant 64 : index
    %c0_97 = arith.constant 0 : index
    %82 = vector.load %arg3[%c64, %c0_97] : memref<72x8xbf16, #tpu.memory_space<vmem>>, vector<8x8xbf16>
    %c0_98 = arith.constant 0 : index
    %c0_99 = arith.constant 0 : index
    %83 = vector.load %arg9[%c0_98, %c0_99] : memref<256x8xf32, #tpu.memory_space<vmem>>, vector<256x8xf32>
    %cst_100 = arith.constant dense<0.000000e+00> : vector<256x8xf32>
    %84 = tpu.matmul %81, %82, %cst_100 {dimension_numbers = #tpu.dot_dimension_numbers<[1], [0], [0], [1], [0, 0, 1, 1], [], []>} : vector<256x8xbf16>, vector<8x8xbf16>, vector<256x8xf32> -> vector<256x8xf32>
    %85 = arith.addf %83, %84 : vector<256x8xf32>
    %c0_101 = arith.constant 0 : index
    %c0_102 = arith.constant 0 : index
    %86 = vector.load %arg9[%c0_101, %c0_102] : memref<256x8xf32, #tpu.memory_space<vmem>>, vector<256x8xf32>
    tpu.vector_store %arg9[%c0_101, %c0_102], %85 {strides = array<i32>} : memref<256x8xf32, #tpu.memory_space<vmem>>, vector<256x8xf32>,
    %c0_103 = arith.constant 0 : index
    %c0_104 = arith.constant 0 : index
    %87 = vector.load %arg9[%c0_103, %c0_104] : memref<256x8xf32, #tpu.memory_space<vmem>>, vector<256x8xf32>
    %c0_105 = arith.constant 0 : index
    %c0_106 = arith.constant 0 : index
    %88 = vector.load %arg4[%c0_105, %c0_106] : memref<1x8xf32, #tpu.memory_space<vmem>>, vector<1x8xf32>
    %89 = vector.broadcast %88 : vector<1x8xf32> to vector<256x8xf32>
    %90 = arith.mulf %87, %89 : vector<256x8xf32>
    %c0_107 = arith.constant 0 : index
    %c0_108 = arith.constant 0 : index
    %91 = vector.load %arg5[%c0_107, %c0_108] : memref<1x8xf32, #tpu.memory_space<vmem>>, vector<1x8xf32>
    %92 = vector.broadcast %91 : vector<1x8xf32> to vector<256x8xf32>
    %93 = arith.addf %90, %92 : vector<256x8xf32>
    %cst_109 = arith.constant 0.000000e+00 : f32
    %94 = vector.broadcast %cst_109 : f32 to vector<256x8xf32>
    %95 = arith.maximumf %93, %94 : vector<256x8xf32>
    %c0_110 = arith.constant 0 : index
    %c0_111 = arith.constant 0 : index
    %c0_112 = arith.constant 0 : index
    %c0_113 = arith.constant 0 : index
    %96 = vector.load %arg6[%c0_110, %c0_111, %c0_112, %c0_113] : memref<1x16x16x8xf32, #tpu.memory_space<vmem>>, vector<1x16x16x8xf32>
    %97 = vector.shape_cast %96 : vector<1x16x16x8xf32> to vector<256x8xf32>
    %98 = arith.addf %95, %97 : vector<256x8xf32>
    %cst_114 = arith.constant 0.000000e+00 : f32
    %99 = vector.broadcast %cst_114 : f32 to vector<256x8xf32>
    %100 = arith.maximumf %98, %99 : vector<256x8xf32>
    %101 = vector.shape_cast %100 : vector<256x8xf32> to vector<1x16x16x8xf32>
    %c0_115 = arith.constant 0 : index
    %c0_116 = arith.constant 0 : index
    %c0_117 = arith.constant 0 : index
    %c0_118 = arith.constant 0 : index
    %102 = vector.load %arg7[%c0_115, %c0_116, %c0_117, %c0_118] : memref<1x16x16x8xf32, #tpu.memory_space<vmem>>, vector<1x16x16x8xf32>
    tpu.vector_store %arg7[%c0_115, %c0_116, %c0_117, %c0_118], %101 {strides = array<i32>} : memref<1x16x16x8xf32, #tpu.memory_space<vmem>>, vector<1x16x16x8xf32>,
    return
  }
  func.func @transform_0(%arg0: i32, %arg1: i32) -> (i32, i32, i32, i32) {
    %c0_i32 = arith.constant 0 : i32
    %c0_i32_0 = arith.constant 0 : i32
    %c0_i32_1 = arith.constant 0 : i32
    %c0_i32_2 = arith.constant 0 : i32
    return %arg0, %c0_i32, %c0_i32_0, %c0_i32_1 : i32, i32, i32, i32
  }
  func.func @transform_1(%arg0: i32, %arg1: i32) -> (i32, i32) {
    %c0_i32 = arith.constant 0 : i32
    %c0_i32_0 = arith.constant 0 : i32
    return %c0_i32, %arg1 : i32, i32
  }
  func.func @transform_2(%arg0: i32, %arg1: i32) -> (i32, i32) {
    %c0_i32 = arith.constant 0 : i32
    %c0_i32_0 = arith.constant 0 : i32
    return %c0_i32, %arg1 : i32, i32
  }
  func.func @transform_3(%arg0: i32, %arg1: i32) -> (i32, i32) {
    %c0_i32 = arith.constant 0 : i32
    %c0_i32_0 = arith.constant 0 : i32
    return %c0_i32, %arg1 : i32, i32
  }
  func.func @transform_4(%arg0: i32, %arg1: i32) -> (i32, i32, i32, i32) {
    %c0_i32 = arith.constant 0 : i32
    %c0_i32_0 = arith.constant 0 : i32
    %c0_i32_1 = arith.constant 0 : i32
    return %arg0, %c0_i32, %c0_i32_0, %arg1 : i32, i32, i32, i32
  }
  func.func @transform_5(%arg0: i32, %arg1: i32) -> (i32, i32, i32, i32) {
    %c0_i32 = arith.constant 0 : i32
    %c0_i32_0 = arith.constant 0 : i32
    %c0_i32_1 = arith.constant 0 : i32
    return %arg0, %c0_i32, %c0_i32_0, %arg1 : i32, i32, i32, i32
  }
}

</mosaic_0001>

<llo_original>
// kernel: basic_block_forward.4
$region0: #{basic_block_forward.4}
  #allocation0 [shape = 'u32[]', space=smem, size = 0x4, offset = 0x4, fixed_abs, tag = 'smem constant byte address 0x4 - core index']
  #allocation1 [shape = 'u32[144,128]{1,0:T(1,128)}', space=vmem, size = 0x12000, scoped, tag = 'internal scratch']
  #allocation2 [shape = 'f32[1,16,16,4]{3,2,1,0:T(8,128)}', space=vmem, size = 0x20000, scoped, tag = 'scratch operand']
  #allocation3 [shape = 'f32[256,8]{1,0:T(8,128)}', space=vmem, size = 0x20000, scoped, tag = 'scratch operand']
  %s0 = inlined_call_operand.vmem [shape: f32[2,16,16,4], index: 0, kind: input, shape index: {}]
  %s1 = inlined_call_operand.vmem [shape: bf16[4,8], index: 1, kind: input, shape index: {}]
  %s2 = inlined_call_operand.vmem [shape: f32[1,8], index: 2, kind: input, shape index: {}]
  %s3 = inlined_call_operand.vmem [shape: f32[1,8], index: 3, kind: input, shape index: {}]
  %s4 = inlined_call_operand.vmem [shape: f32[2,16,16,8], index: 4, kind: output, shape index: {}]
  %s5 = sld [smem:[#allocation0]]
  $region49: #{basic_block_forward.4} parent=0
    _
  %s7 = ssub.s32 1, %s5
  %s8 = scalar_select 0, %s7, %s5
  loop: start=0, step=1, limit=4
  $region2: #{basic_block_forward.4} parent=0 // loop_pre_header
    _
  $region3: #{basic_block_forward.4} parent=0 // loop_header
    %s10 = sphi 0, %s14
    %p11 = scmp.ge.s32.totalorder %s10, 4
    %s17 = sphi 0, %s29
    %s18 = sphi 0, %s25
    %s19 = sphi 0, %s17
    %s20 = sphi 0, %s18
    %s21 = sphi 0, %s19
    %s22 = sphi 0, %s20
    %s32 = sphi 0, %s34
    %s35 = sphi 0, %s32
    %s36 = sphi 0, %s35
    %s52 = sphi 0, %s36
    %s58 = sphi 0, %s60
    %s61 = sphi 0, %s58
    %s62 = sphi 0, %s61
    %s78 = sphi 0, %s62
    %s84 = sphi 0, %s86
    %s87 = sphi 0, %s84
    %s88 = sphi 0, %s87
    %s104 = sphi 0, %s88
    %s110 = sphi 0, %s112
    %s113 = sphi 0, %s110
    %s114 = sphi 0, %s113
    %s130 = sphi 0, %s114
    %s138 = sphi 0, %s140
    %s141 = sphi 0, %s138
    %s142 = sphi 0, %s141
    %s158 = sphi 0, %s142
  $region4: #{basic_block_forward.4} parent=0 // loop_header_branch
    %13 = sbr.rel (%p11) target = $region8
  $region5: #{basic_block_forward.4} parent=0 // loop_body
    %s15 = ssub.s32 %s10, 1
    %s16 = ssub.s32 %s10, 2
    %s23 = sadd.s32 1, %s18
    %p24 = scmp.ge.s32.totalorder %s23, 1
    %s25 = scalar_select %p24, 0, %s23
    %s26 = sadd.s32 1, %s17
    %s27 = scalar_select %p24, %s26, %s17
    %p28 = scmp.ge.s32.totalorder %s27, 2
    %s29 = scalar_select %p28, 0, %s27
    %s30 = ssub.s32 %s17, %s29
    %p31 = scmp.eq.s32.totalorder %s30, 0
    %s33 = sadd.s32 %s32, 1
    %s34 = scalar_select %p31, %s32, %s33
    %p37 = pneg %p31
    %p38 = scmp.eq.s32.totalorder %s10, 1
    %p39 = por %p37, %p38
    %p40 = scmp.ne.s32.totalorder %s32, %s35
    %p41 = scmp.eq.s32.totalorder %s10, 0
    %p42 = por %p40, %p41
    %p43 = scmp.ne.s32.totalorder %s32, %s35
    %p44 = scmp.eq.s32.totalorder %s15, 1
    %p45 = por %p43, %p44
    %p46 = scmp.ne.s32.totalorder %s35, %s36
    %p47 = scmp.eq.s32.totalorder %s15, 0
    %p48 = por %p46, %p47
    %p49 = scmp.ne.s32.totalorder %s35, %s36
    %p50 = scmp.eq.s32.totalorder %s16, 1
    %p51 = por %p49, %p50
    %p53 = scmp.ne.s32.totalorder %s36, %s52
    %p54 = scmp.eq.s32.totalorder %s16, 0
    %p55 = por %p53, %p54
    %s56 = ssub.s32 %s18, %s25
    %p57 = scmp.eq.s32.totalorder %s56, 0
    %s59 = sadd.s32 %s58, 1
    %s60 = scalar_select %p57, %s58, %s59
    %p63 = pneg %p57
    %p64 = scmp.eq.s32.totalorder %s10, 1
    %p65 = por %p63, %p64
    %p66 = scmp.ne.s32.totalorder %s58, %s61
    %p67 = scmp.eq.s32.totalorder %s10, 0
    %p68 = por %p66, %p67
    %p69 = scmp.ne.s32.totalorder %s58, %s61
    %p70 = scmp.eq.s32.totalorder %s15, 1
    %p71 = por %p69, %p70
    %p72 = scmp.ne.s32.totalorder %s61, %s62
    %p73 = scmp.eq.s32.totalorder %s15, 0
    %p74 = por %p72, %p73
    %p75 = scmp.ne.s32.totalorder %s61, %s62
    %p76 = scmp.eq.s32.totalorder %s16, 1
    %p77 = por %p75, %p76
    %p79 = scmp.ne.s32.totalorder %s62, %s78
    %p80 = scmp.eq.s32.totalorder %s16, 0
    %p81 = por %p79, %p80
    %s82 = ssub.s32 %s18, %s25
    %p83 = scmp.eq.s32.totalorder %s82, 0
    %s85 = sadd.s32 %s84, 1
    %s86 = scalar_select %p83, %s84, %s85
    %p89 = pneg %p83
    %p90 = scmp.eq.s32.totalorder %s10, 1
    %p91 = por %p89, %p90
    %p92 = scmp.ne.s32.totalorder %s84, %s87
    %p93 = scmp.eq.s32.totalorder %s10, 0
    %p94 = por %p92, %p93
    %p95 = scmp.ne.s32.totalorder %s84, %s87
    %p96 = scmp.eq.s32.totalorder %s15, 1
    %p97 = por %p95, %p96
    %p98 = scmp.ne.s32.totalorder %s87, %s88
    %p99 = scmp.eq.s32.totalorder %s15, 0
    %p100 = por %p98, %p99
    %p101 = scmp.ne.s32.totalorder %s87, %s88
    %p102 = scmp.eq.s32.totalorder %s16, 1
    %p103 = por %p101, %p102
    %p105 = scmp.ne.s32.totalorder %s88, %s104
    %p106 = scmp.eq.s32.totalorder %s16, 0
    %p107 = por %p105, %p106
    %s108 = ssub.s32 %s18, %s25
    %p109 = scmp.eq.s32.totalorder %s108, 0
    %s111 = sadd.s32 %s110, 1
    %s112 = scalar_select %p109, %s110, %s111
    %p115 = pneg %p109
    %p116 = scmp.eq.s32.totalorder %s10, 1
    %p117 = por %p115, %p116
    %p118 = scmp.ne.s32.totalorder %s110, %s113
    %p119 = scmp.eq.s32.totalorder %s10, 0
    %p120 = por %p118, %p119
    %p121 = scmp.ne.s32.totalorder %s110, %s113
    %p122 = scmp.eq.s32.totalorder %s15, 1
    %p123 = por %p121, %p122
    %p124 = scmp.ne.s32.totalorder %s113, %s114
    %p125 = scmp.eq.s32.totalorder %s15, 0
    %p126 = por %p124, %p125
    %p127 = scmp.ne.s32.totalorder %s113, %s114
    %p128 = scmp.eq.s32.totalorder %s16, 1
    %p129 = por %p127, %p128
    %p131 = scmp.ne.s32.totalorder %s114, %s130
    %p132 = scmp.eq.s32.totalorder %s16, 0
    %p133 = por %p131, %p132
    %s134 = ssub.s32 %s17, %s29
    %s135 = ssub.s32 %s18, %s25
    %s136 = sor.u32 %s134, %s135
    %p137 = scmp.eq.s32.totalorder %s136, 0
    %s139 = sadd.s32 %s138, 1
    %s140 = scalar_select %p137, %s138, %s139
    %p143 = pneg %p137
    %p144 = scmp.eq.s32.totalorder %s10, 1
    %p145 = por %p143, %p144
    %p146 = scmp.ne.s32.totalorder %s138, %s141
    %p147 = scmp.eq.s32.totalorder %s10, 0
    %p148 = por %p146, %p147
    %p149 = scmp.ne.s32.totalorder %s138, %s141
    %p150 = scmp.eq.s32.totalorder %s15, 1
    %p151 = por %p149, %p150
    %p152 = scmp.ne.s32.totalorder %s141, %s142
    %p153 = scmp.eq.s32.totalorder %s15, 0
    %p154 = por %p152, %p153
    %p155 = scmp.ne.s32.totalorder %s141, %s142
    %p156 = scmp.eq.s32.totalorder %s16, 1
    %p157 = por %p155, %p156
    %p159 = scmp.ne.s32.totalorder %s142, %s158
    %p160 = scmp.eq.s32.totalorder %s16, 0
    %p161 = por %p159, %p160
    %p162 = scmp.le.s32.totalorder 1, %s10
    %p163 = scmp.lt.s32.totalorder %s10, 3
    %p164 = pnand %p162, %p163
    %p165 = pneg %p164
    // Predicated region
    $region9: #{basic_block_forward.4} parent=5 // pred_check
      _
    $region10: #{basic_block_forward.4} parent=5 // pred_check_branch
      %167 = sbr.rel (%p164) target = $region12
    $region11: #{basic_block_forward.4} parent=5 // pred_region
      %s168 = ssub.s32 %s10, 1
      // Predicated region
      $region13: #{basic_block_forward.4} parent=11 // pred_check
        %p169 = pneg %p74
      $region14: #{basic_block_forward.4} parent=11 // pred_check_branch
        %171 = sbr.rel (%p169) target = $region16
      $region15: #{basic_block_forward.4} parent=11 // pred_region
        %p172 = scmp.lt.s32.totalorder %s20, 0
        %s173 = scalar_select %p172, %s20, 0
        %s174 = smul.addr %s173, 2
        %s175 = scalar_lea.vmem %s1, %s174
      $region16: #{basic_block_forward.4} parent=11 // pred_fallthru
        _
      // Predicated region
      $region17: #{basic_block_forward.4} parent=11 // pred_check
        %p176 = pneg %p100
      $region18: #{basic_block_forward.4} parent=11 // pred_check_branch
        %178 = sbr.rel (%p176) target = $region20
      $region19: #{basic_block_forward.4} parent=11 // pred_region
        %p179 = scmp.lt.s32.totalorder %s20, 0
        %s180 = scalar_select %p179, %s20, 0
        %s181 = scalar_lea.vmem %s2, %s180
      $region20: #{basic_block_forward.4} parent=11 // pred_fallthru
        _
      // Predicated region
      $region21: #{basic_block_forward.4} parent=11 // pred_check
        %p182 = pneg %p126
      $region22: #{basic_block_forward.4} parent=11 // pred_check_branch
        %184 = sbr.rel (%p182) target = $region24
      $region23: #{basic_block_forward.4} parent=11 // pred_region
        %p185 = scmp.lt.s32.totalorder %s20, 0
        %s186 = scalar_select %p185, %s20, 0
        %s187 = scalar_lea.vmem %s3, %s186
      $region24: #{basic_block_forward.4} parent=11 // pred_fallthru
        _
    $region12: #{basic_block_forward.4} parent=5 // pred_fallthru
      _
    %p188 = scmp.lt.s32.totalorder %s10, 2
    // Predicated region
    $region25: #{basic_block_forward.4} parent=5 // pred_check
      %p189 = pneg %p188
    $region26: #{basic_block_forward.4} parent=5 // pred_check_branch
      %191 = sbr.rel (%p189) target = $region28
    $region27: #{basic_block_forward.4} parent=5 // pred_region
      // Predicated region
      $region29: #{basic_block_forward.4} parent=27 // pred_check
        %p192 = pneg %p42
      $region30: #{basic_block_forward.4} parent=27 // pred_check_branch
        %194 = sbr.rel (%p192) target = $region32
      $region31: #{basic_block_forward.4} parent=27 // pred_region
        %p195 = scmp.lt.s32.totalorder %s17, 1
        %s196 = scalar_select %p195, %s17, 1
        %s197 = smul.addr %s196, 32
        %s198 = smul.addr %s197, 8
        %s199 = scalar_lea.vmem %s0, %s198
      $region32: #{basic_block_forward.4} parent=27 // pred_fallthru
        _
    $region28: #{basic_block_forward.4} parent=5 // pred_fallthru
      _
    %p200 = scmp.le.s32.totalorder 1, %s10
    %p201 = scmp.lt.s32.totalorder %s10, 3
    %p202 = pnand %p200, %p201
    %p203 = pneg %p202
    // Predicated region
    $region33: #{basic_block_forward.4} parent=5 // pred_check
      _
    $region34: #{basic_block_forward.4} parent=5 // pred_check_branch
      %205 = sbr.rel (%p202) target = $region36
    $region35: #{basic_block_forward.4} parent=5 // pred_region
      %s206 = ssub.s32 %s10, 1
      %p207 = scmp.lt.s32.totalorder %s19, 1
      %s208 = scalar_select %p207, %s19, 1
      %s209 = smul.addr %s208, 32
      %s210 = smul.addr %s209, 8
      %s211 = scalar_lea.vmem %s0, %s210
      %p212 = pneg %p48
      %p213 = pneg %p45
      %p214 = scmp.lt.s32.totalorder %s20, 0
      %s215 = scalar_select %p214, %s20, 0
      %s216 = smul.addr %s215, 2
      %s217 = scalar_lea.vmem %s1, %s216
      %p218 = pneg %p74
      %p219 = pneg %p71
      %p220 = scmp.lt.s32.totalorder %s20, 0
      %s221 = scalar_select %p220, %s20, 0
      %s222 = scalar_lea.vmem %s2, %s221
      %p223 = pneg %p100
      %p224 = pneg %p97
      %p225 = scmp.lt.s32.totalorder %s20, 0
      %s226 = scalar_select %p225, %s20, 0
      %s227 = scalar_lea.vmem %s3, %s226
      %p228 = pneg %p126
      %p229 = pneg %p123
      %p230 = pneg %p154
      %p231 = pneg %p151
      %p232 = scmp.lt.s32.totalorder %s19, 1
      %s233 = scalar_select %p232, %s19, 1
      %p234 = scmp.lt.s32.totalorder %s20, 0
      %s235 = scalar_select %p234, %s20, 0
      %s236 = smul.addr %s233, 32
      %s237 = sadd.s32 %s235, %s236
      %s238 = smul.addr %s237, 8
      %s239 = scalar_lea.vmem %s4, %s238
      %p240 = scmp.lt.s32.totalorder %s19, 1
      %s241 = scalar_select %p240, %s19, 1
      %s242 = smul.addr %s241, 32
      %s243 = smul.addr %s242, 8
      %s244 = scalar_lea.vmem %s0, %s243
      %p245 = scmp.lt.s32.totalorder %s20, 0
      %s246 = scalar_select %p245, %s20, 0
      %s247 = smul.addr %s246, 2
      %s248 = scalar_lea.vmem %s1, %s247
      %p249 = scmp.lt.s32.totalorder %s20, 0
      %s250 = scalar_select %p249, %s20, 0
      %s251 = scalar_lea.vmem %s2, %s250
      %p252 = scmp.lt.s32.totalorder %s20, 0
      %s253 = scalar_select %p252, %s20, 0
      %s254 = scalar_lea.vmem %s3, %s253
      %p255 = scmp.lt.s32.totalorder %s19, 1
      %s256 = scalar_select %p255, %s19, 1
      %p257 = scmp.lt.s32.totalorder %s20, 0
      %s258 = scalar_select %p257, %s20, 0
      %s259 = smul.addr %s256, 32
      %s260 = sadd.s32 %s258, %s259
      %s261 = smul.addr %s260, 8
      %s262 = scalar_lea.vmem %s4, %s261
      %vm264 = vcmask 31744
      %265 = vst.msk [vmem:[#allocation2] sm:$0xff] %vm264, 0.0
      %266 = vst.msk [vmem:[#allocation2 + $0x8] sm:$0xff] %vm264, 0.0
      %267 = vst.msk [vmem:[#allocation2 + $0x10] sm:$0xff] %vm264, 0.0
      %268 = vst.msk [vmem:[#allocation2 + $0x18] sm:$0xff] %vm264, 0.0
      %269 = vst.msk [vmem:[#allocation2 + $0x20] sm:$0xff] %vm264, 0.0
      %270 = vst.msk [vmem:[#allocation2 + $0x28] sm:$0xff] %vm264, 0.0
      %271 = vst.msk [vmem:[#allocation2 + $0x30] sm:$0xff] %vm264, 0.0
      %272 = vst.msk [vmem:[#allocation2 + $0x38] sm:$0xff] %vm264, 0.0
      %273 = vst.msk [vmem:[#allocation2 + $0x40] sm:$0xff] %vm264, 0.0
      %274 = vst.msk [vmem:[#allocation2 + $0x48] sm:$0xff] %vm264, 0.0
      %275 = vst.msk [vmem:[#allocation2 + $0x50] sm:$0xff] %vm264, 0.0
      %276 = vst.msk [vmem:[#allocation2 + $0x58] sm:$0xff] %vm264, 0.0
      %277 = vst.msk [vmem:[#allocation2 + $0x60] sm:$0xff] %vm264, 0.0
      %278 = vst.msk [vmem:[#allocation2 + $0x68] sm:$0xff] %vm264, 0.0
      %279 = vst.msk [vmem:[#allocation2 + $0x70] sm:$0xff] %vm264, 0.0
      %280 = vst.msk [vmem:[#allocation2 + $0x78] sm:$0xff] %vm264, 0.0
      %281 = vst.msk [vmem:[#allocation2 + $0x80] sm:$0xff] %vm264, 0.0
      %282 = vst.msk [vmem:[#allocation2 + $0x88] sm:$0xff] %vm264, 0.0
      %283 = vst.msk [vmem:[#allocation2 + $0x90] sm:$0xff] %vm264, 0.0
      %284 = vst.msk [vmem:[#allocation2 + $0x98] sm:$0xff] %vm264, 0.0
      %285 = vst.msk [vmem:[#allocation2 + $0xa0] sm:$0xff] %vm264, 0.0
      %286 = vst.msk [vmem:[#allocation2 + $0xa8] sm:$0xff] %vm264, 0.0
      %287 = vst.msk [vmem:[#allocation2 + $0xb0] sm:$0xff] %vm264, 0.0
      %288 = vst.msk [vmem:[#allocation2 + $0xb8] sm:$0xff] %vm264, 0.0
      %289 = vst.msk [vmem:[#allocation2 + $0xc0] sm:$0xff] %vm264, 0.0
      %290 = vst.msk [vmem:[#allocation2 + $0xc8] sm:$0xff] %vm264, 0.0
      %291 = vst.msk [vmem:[#allocation2 + $0xd0] sm:$0xff] %vm264, 0.0
      %292 = vst.msk [vmem:[#allocation2 + $0xd8] sm:$0xff] %vm264, 0.0
      %293 = vst.msk [vmem:[#allocation2 + $0xe0] sm:$0xff] %vm264, 0.0
      %294 = vst.msk [vmem:[#allocation2 + $0xe8] sm:$0xff] %vm264, 0.0
      %295 = vst.msk [vmem:[#allocation2 + $0xf0] sm:$0xff] %vm264, 0.0
      %296 = vst.msk [vmem:[#allocation2 + $0xf8] sm:$0xff] %vm264, 0.0
      %v297 = vld [vmem:[%s244] sm:$0xff]
      %v298 = vld [vmem:[%s244 + $0x8] sm:$0xff]
      %v299 = vld [vmem:[%s244 + $0x10] sm:$0xff]
      %v300 = vld [vmem:[%s244 + $0x18] sm:$0xff]
      %v301 = vld [vmem:[%s244 + $0x20] sm:$0xff]
      %v302 = vld [vmem:[%s244 + $0x28] sm:$0xff]
      %v303 = vld [vmem:[%s244 + $0x30] sm:$0xff]
      %v304 = vld [vmem:[%s244 + $0x38] sm:$0xff]
      %v305 = vld [vmem:[%s244 + $0x40] sm:$0xff]
      %v306 = vld [vmem:[%s244 + $0x48] sm:$0xff]
      %v307 = vld [vmem:[%s244 + $0x50] sm:$0xff]
      %v308 = vld [vmem:[%s244 + $0x58] sm:$0xff]
      %v309 = vld [vmem:[%s244 + $0x60] sm:$0xff]
      %v310 = vld [vmem:[%s244 + $0x68] sm:$0xff]
      %v311 = vld [vmem:[%s244 + $0x70] sm:$0xff]
      %v312 = vld [vmem:[%s244 + $0x78] sm:$0xff]
      %v313 = vld [vmem:[%s244 + $0x80] sm:$0xff]
      %v314 = vld [vmem:[%s244 + $0x88] sm:$0xff]
      %v315 = vld [vmem:[%s244 + $0x90] sm:$0xff]
      %v316 = vld [vmem:[%s244 + $0x98] sm:$0xff]
      %v317 = vld [vmem:[%s244 + $0xa0] sm:$0xff]
      %v318 = vld [vmem:[%s244 + $0xa8] sm:$0xff]
      %v319 = vld [vmem:[%s244 + $0xb0] sm:$0xff]
      %v320 = vld [vmem:[%s244 + $0xb8] sm:$0xff]
      %v321 = vld [vmem:[%s244 + $0xc0] sm:$0xff]
      %v322 = vld [vmem:[%s244 + $0xc8] sm:$0xff]
      %v323 = vld [vmem:[%s244 + $0xd0] sm:$0xff]
      %v324 = vld [vmem:[%s244 + $0xd8] sm:$0xff]
      %v325 = vld [vmem:[%s244 + $0xe0] sm:$0xff]
      %v326 = vld [vmem:[%s244 + $0xe8] sm:$0xff]
      %v327 = vld [vmem:[%s244 + $0xf0] sm:$0xff]
      %v328 = vld [vmem:[%s244 + $0xf8] sm:$0xff]
      %329 = vst.msk [vmem:[#allocation2] sm:$0xff] %vm264, %v297
      %330 = vst.msk [vmem:[#allocation2 + $0x8] sm:$0xff] %vm264, %v298
      %331 = vst.msk [vmem:[#allocation2 + $0x10] sm:$0xff] %vm264, %v299
      %332 = vst.msk [vmem:[#allocation2 + $0x18] sm:$0xff] %vm264, %v300
      %333 = vst.msk [vmem:[#allocation2 + $0x20] sm:$0xff] %vm264, %v301
      %334 = vst.msk [vmem:[#allocation2 + $0x28] sm:$0xff] %vm264, %v302
      %335 = vst.msk [vmem:[#allocation2 + $0x30] sm:$0xff] %vm264, %v303
      %336 = vst.msk [vmem:[#allocation2 + $0x38] sm:$0xff] %vm264, %v304
      %337 = vst.msk [vmem:[#allocation2 + $0x40] sm:$0xff] %vm264, %v305
      %338 = vst.msk [vmem:[#allocation2 + $0x48] sm:$0xff] %vm264, %v306
      %339 = vst.msk [vmem:[#allocation2 + $0x50] sm:$0xff] %vm264, %v307
      %340 = vst.msk [vmem:[#allocation2 + $0x58] sm:$0xff] %vm264, %v308
      %341 = vst.msk [vmem:[#allocation2 + $0x60] sm:$0xff] %vm264, %v309
      %342 = vst.msk [vmem:[#allocation2 + $0x68] sm:$0xff] %vm264, %v310
      %343 = vst.msk [vmem:[#allocation2 + $0x70] sm:$0xff] %vm264, %v311
      %344 = vst.msk [vmem:[#allocation2 + $0x78] sm:$0xff] %vm264, %v312
      %345 = vst.msk [vmem:[#allocation2 + $0x80] sm:$0xff] %vm264, %v313
      %346 = vst.msk [vmem:[#allocation2 + $0x88] sm:$0xff] %vm264, %v314
      %347 = vst.msk [vmem:[#allocation2 + $0x90] sm:$0xff] %vm264, %v315
      %348 = vst.msk [vmem:[#allocation2 + $0x98] sm:$0xff] %vm264, %v316
      %349 = vst.msk [vmem:[#allocation2 + $0xa0] sm:$0xff] %vm264, %v317
      %350 = vst.msk [vmem:[#allocation2 + $0xa8] sm:$0xff] %vm264, %v318
      %351 = vst.msk [vmem:[#allocation2 + $0xb0] sm:$0xff] %vm264, %v319
      %352 = vst.msk [vmem:[#allocation2 + $0xb8] sm:$0xff] %vm264, %v320
      %353 = vst.msk [vmem:[#allocation2 + $0xc0] sm:$0xff] %vm264, %v321
      %354 = vst.msk [vmem:[#allocation2 + $0xc8] sm:$0xff] %vm264, %v322
      %355 = vst.msk [vmem:[#allocation2 + $0xd0] sm:$0xff] %vm264, %v323
      %356 = vst.msk [vmem:[#allocation2 + $0xd8] sm:$0xff] %vm264, %v324
      %357 = vst.msk [vmem:[#allocation2 + $0xe0] sm:$0xff] %vm264, %v325
      %358 = vst.msk [vmem:[#allocation2 + $0xe8] sm:$0xff] %vm264, %v326
      %359 = vst.msk [vmem:[#allocation2 + $0xf0] sm:$0xff] %vm264, %v327
      %360 = vst.msk [vmem:[#allocation2 + $0xf8] sm:$0xff] %vm264, %v328
      %vm361 = vcmask 64512
      %362 = vst.msk [vmem:[#allocation3] sm:$0xff] %vm361, 0.0
      %363 = vst.msk [vmem:[#allocation3 + $0x8] sm:$0xff] %vm361, 0.0
      %364 = vst.msk [vmem:[#allocation3 + $0x10] sm:$0xff] %vm361, 0.0
      %365 = vst.msk [vmem:[#allocation3 + $0x18] sm:$0xff] %vm361, 0.0
      %366 = vst.msk [vmem:[#allocation3 + $0x20] sm:$0xff] %vm361, 0.0
      %367 = vst.msk [vmem:[#allocation3 + $0x28] sm:$0xff] %vm361, 0.0
      %368 = vst.msk [vmem:[#allocation3 + $0x30] sm:$0xff] %vm361, 0.0
      %369 = vst.msk [vmem:[#allocation3 + $0x38] sm:$0xff] %vm361, 0.0
      %370 = vst.msk [vmem:[#allocation3 + $0x40] sm:$0xff] %vm361, 0.0
      %371 = vst.msk [vmem:[#allocation3 + $0x48] sm:$0xff] %vm361, 0.0
      %372 = vst.msk [vmem:[#allocation3 + $0x50] sm:$0xff] %vm361, 0.0
      %373 = vst.msk [vmem:[#allocation3 + $0x58] sm:$0xff] %vm361, 0.0
      %374 = vst.msk [vmem:[#allocation3 + $0x60] sm:$0xff] %vm361, 0.0
      %375 = vst.msk [vmem:[#allocation3 + $0x68] sm:$0xff] %vm361, 0.0
      %376 = vst.msk [vmem:[#allocation3 + $0x70] sm:$0xff] %vm361, 0.0
      %377 = vst.msk [vmem:[#allocation3 + $0x78] sm:$0xff] %vm361, 0.0
      %378 = vst.msk [vmem:[#allocation3 + $0x80] sm:$0xff] %vm361, 0.0
      %379 = vst.msk [vmem:[#allocation3 + $0x88] sm:$0xff] %vm361, 0.0
      %380 = vst.msk [vmem:[#allocation3 + $0x90] sm:$0xff] %vm361, 0.0
      %381 = vst.msk [vmem:[#allocation3 + $0x98] sm:$0xff] %vm361, 0.0
      %382 = vst.msk [vmem:[#allocation3 + $0xa0] sm:$0xff] %vm361, 0.0
      %383 = vst.msk [vmem:[#allocation3 + $0xa8] sm:$0xff] %vm361, 0.0
      %384 = vst.msk [vmem:[#allocation3 + $0xb0] sm:$0xff] %vm361, 0.0
      %385 = vst.msk [vmem:[#allocation3 + $0xb8] sm:$0xff] %vm361, 0.0
      %386 = vst.msk [vmem:[#allocation3 + $0xc0] sm:$0xff] %vm361, 0.0
      %387 = vst.msk [vmem:[#allocation3 + $0xc8] sm:$0xff] %vm361, 0.0
      %388 = vst.msk [vmem:[#allocation3 + $0xd0] sm:$0xff] %vm361, 0.0
      %389 = vst.msk [vmem:[#allocation3 + $0xd8] sm:$0xff] %vm361, 0.0
      %390 = vst.msk [vmem:[#allocation3 + $0xe0] sm:$0xff] %vm361, 0.0
      %391 = vst.msk [vmem:[#allocation3 + $0xe8] sm:$0xff] %vm361, 0.0
      %392 = vst.msk [vmem:[#allocation3 + $0xf0] sm:$0xff] %vm361, 0.0
      %393 = vst.msk [vmem:[#allocation3 + $0xf8] sm:$0xff] %vm361, 0.0
      %v394 = vld [vmem:[#allocation2] sm:$0xff]
      %v395 = vld [vmem:[#allocation2 + $0x8] sm:$0xff]
      %v396 = vld [vmem:[#allocation2 + $0x10] sm:$0xff]
      %v397 = vld [vmem:[#allocation2 + $0x18] sm:$0xff]
      %v398 = vld [vmem:[#allocation2 + $0x20] sm:$0xff]
      %v399 = vld [vmem:[#allocation2 + $0x28] sm:$0xff]
      %v400 = vld [vmem:[#allocation2 + $0x30] sm:$0xff]
      %v401 = vld [vmem:[#allocation2 + $0x38] sm:$0xff]
      %v402 = vld [vmem:[#allocation2 + $0x40] sm:$0xff]
      %v403 = vld [vmem:[#allocation2 + $0x48] sm:$0xff]
      %v404 = vld [vmem:[#allocation2 + $0x50] sm:$0xff]
      %v405 = vld [vmem:[#allocation2 + $0x58] sm:$0xff]
      %v406 = vld [vmem:[#allocation2 + $0x60] sm:$0xff]
      %v407 = vld [vmem:[#allocation2 + $0x68] sm:$0xff]
      %v408 = vld [vmem:[#allocation2 + $0x70] sm:$0xff]
      %v409 = vld [vmem:[#allocation2 + $0x78] sm:$0xff]
      %v410 = vld [vmem:[#allocation2 + $0x80] sm:$0xff]
      %v411 = vld [vmem:[#allocation2 + $0x88] sm:$0xff]
      %v412 = vld [vmem:[#allocation2 + $0x90] sm:$0xff]
      %v413 = vld [vmem:[#allocation2 + $0x98] sm:$0xff]
      %v414 = vld [vmem:[#allocation2 + $0xa0] sm:$0xff]
      %v415 = vld [vmem:[#allocation2 + $0xa8] sm:$0xff]
      %v416 = vld [vmem:[#allocation2 + $0xb0] sm:$0xff]
      %v417 = vld [vmem:[#allocation2 + $0xb8] sm:$0xff]
      %v418 = vld [vmem:[#allocation2 + $0xc0] sm:$0xff]
      %v419 = vld [vmem:[#allocation2 + $0xc8] sm:$0xff]
      %v420 = vld [vmem:[#allocation2 + $0xd0] sm:$0xff]
      %v421 = vld [vmem:[#allocation2 + $0xd8] sm:$0xff]
      %v422 = vld [vmem:[#allocation2 + $0xe0] sm:$0xff]
      %v423 = vld [vmem:[#allocation2 + $0xe8] sm:$0xff]
      %v424 = vld [vmem:[#allocation2 + $0xf0] sm:$0xff]
      %v425 = vld [vmem:[#allocation2 + $0xf8] sm:$0xff]
      %v426 = vpack.c.bf16 %v395, %v394
      %v427 = vpack.c.bf16 %v397, %v396
      %v428 = vpack.c.bf16 %v399, %v398
      %v429 = vpack.c.bf16 %v401, %v400
      %v430 = vpack.c.bf16 %v403, %v402
      %v431 = vpack.c.bf16 %v405, %v404
      %v432 = vpack.c.bf16 %v407, %v406
      %v433 = vpack.c.bf16 %v409, %v408
      %v434 = vpack.c.bf16 %v411, %v410
      %v435 = vpack.c.bf16 %v413, %v412
      %v436 = vpack.c.bf16 %v415, %v414
      %v437 = vpack.c.bf16 %v417, %v416
      %v438 = vpack.c.bf16 %v419, %v418
      %v439 = vpack.c.bf16 %v421, %v420
      %v440 = vpack.c.bf16 %v423, %v422
      %v441 = vpack.c.bf16 %v425, %v424
      %v442 = vld [vmem:[%s248] sm:$0x3]
      %v443 = vld [vmem:[#allocation3] sm:$0xff]
      %v444 = vld [vmem:[#allocation3 + $0x8] sm:$0xff]
      %v445 = vld [vmem:[#allocation3 + $0x10] sm:$0xff]
      %v446 = vld [vmem:[#allocation3 + $0x18] sm:$0xff]
      %v447 = vld [vmem:[#allocation3 + $0x20] sm:$0xff]
      %v448 = vld [vmem:[#allocation3 + $0x28] sm:$0xff]
      %v449 = vld [vmem:[#allocation3 + $0x30] sm:$0xff]
      %v450 = vld [vmem:[#allocation3 + $0x38] sm:$0xff]
      %v451 = vld [vmem:[#allocation3 + $0x40] sm:$0xff]
      %v452 = vld [vmem:[#allocation3 + $0x48] sm:$0xff]
      %v453 = vld [vmem:[#allocation3 + $0x50] sm:$0xff]
      %v454 = vld [vmem:[#allocation3 + $0x58] sm:$0xff]
      %v455 = vld [vmem:[#allocation3 + $0x60] sm:$0xff]
      %v456 = vld [vmem:[#allocation3 + $0x68] sm:$0xff]
      %v457 = vld [vmem:[#allocation3 + $0x70] sm:$0xff]
      %v458 = vld [vmem:[#allocation3 + $0x78] sm:$0xff]
      %v459 = vld [vmem:[#allocation3 + $0x80] sm:$0xff]
      %v460 = vld [vmem:[#allocation3 + $0x88] sm:$0xff]
      %v461 = vld [vmem:[#allocation3 + $0x90] sm:$0xff]
      %v462 = vld [vmem:[#allocation3 + $0x98] sm:$0xff]
      %v463 = vld [vmem:[#allocation3 + $0xa0] sm:$0xff]
      %v464 = vld [vmem:[#allocation3 + $0xa8] sm:$0xff]
      %v465 = vld [vmem:[#allocation3 + $0xb0] sm:$0xff]
      %v466 = vld [vmem:[#allocation3 + $0xb8] sm:$0xff]
      %v467 = vld [vmem:[#allocation3 + $0xc0] sm:$0xff]
      %v468 = vld [vmem:[#allocation3 + $0xc8] sm:$0xff]
      %v469 = vld [vmem:[#allocation3 + $0xd0] sm:$0xff]
      %v470 = vld [vmem:[#allocation3 + $0xd8] sm:$0xff]
      %v471 = vld [vmem:[#allocation3 + $0xe0] sm:$0xff]
      %v472 = vld [vmem:[#allocation3 + $0xe8] sm:$0xff]
      %v473 = vld [vmem:[#allocation3 + $0xf0] sm:$0xff]
      %v474 = vld [vmem:[#allocation3 + $0xf8] sm:$0xff]
      %v476 = vsel %vm264, %v426, 0
      %v479 = vsel %vm264, %v427, 0
      %v482 = vsel %vm264, %v428, 0
      %v485 = vsel %vm264, %v429, 0
      %v488 = vsel %vm264, %v430, 0
      %v491 = vsel %vm264, %v431, 0
      %v494 = vsel %vm264, %v432, 0
      %v497 = vsel %vm264, %v433, 0
      %v500 = vsel %vm264, %v434, 0
      %v503 = vsel %vm264, %v435, 0
      %v506 = vsel %vm264, %v436, 0
      %v509 = vsel %vm264, %v437, 0
      %v512 = vsel %vm264, %v438, 0
      %v515 = vsel %vm264, %v439, 0
      %v518 = vsel %vm264, %v440, 0
      %v521 = vsel %vm264, %v441, 0
      %vm523 = vcmask 1041408
      %v525 = vsel %vm523, %v442, 0
      %527 = vmatprep.subr.bf16.mxu0 0
      %528 = vmatpush1.bf16.msra.mxu0 %v525
      %529 = vmatprep.subr.bf16.mxu0 0
      %530 = vmatpush1.bf16.msra.mxu0 0
      %531 = vmatprep.subr.bf16.mxu0 0
      %532 = vmatpush1.bf16.msra.mxu0 0
      %533 = vmatprep.subr.bf16.mxu0 0
      %534 = vmatpush1.bf16.msra.mxu0 0
      %535 = vmatprep.subr.bf16.mxu0 0
      %536 = vmatpush1.bf16.msra.mxu0 0
      %537 = vmatprep.subr.bf16.mxu0 0
      %538 = vmatpush1.bf16.msra.mxu0 0
      %539 = vmatprep.subr.bf16.mxu0 0
      %540 = vmatpush1.bf16.msra.mxu0 0
      %541 = vmatprep.subr.bf16.mxu0 0
      %542 = vmatpush1.bf16.msra.mxu0 0
      %543 = vmatprep.subr.bf16.mxu0 0
      %544 = vmatpush1.bf16.msra.mxu0 0
      %545 = vmatprep.subr.bf16.mxu0 0
      %546 = vmatpush1.bf16.msra.mxu0 0
      %547 = vmatprep.subr.bf16.mxu0 0
      %548 = vmatpush1.bf16.msra.mxu0 0
      %549 = vmatprep.subr.bf16.mxu0 0
      %550 = vmatpush1.bf16.msra.mxu0 0
      %551 = vmatprep.subr.bf16.mxu0 0
      %552 = vmatpush1.bf16.msra.mxu0 0
      %553 = vmatprep.subr.bf16.mxu0 0
      %554 = vmatpush1.bf16.msra.mxu0 0
      %555 = vmatprep.subr.bf16.mxu0 0
      %556 = vmatpush1.bf16.msra.mxu0 0
      %557 = vmatprep.subr.bf16.mxu0 0
      %558 = vmatpush1.bf16.msra.mxu0 0
      %559 = vmatprep.mubr.bf16.mxu0 0
      %560 = vmatmul.mubr.bf16.gmra.mrb[0].mxu0 %v476
      %v561 = vpop.f32.mrb[0].mxu0
      %v562 = vadd.f32 0.0, %v561
      %v563 = vpop.f32.mrb[0].mxu0
      %v564 = vpop.f32.mrb[0].mxu0
      %v565 = vadd.f32 0.0, %v564
      %v566 = vpop.f32.mrb[0].mxu0
      %567 = vmatprep.mubr.bf16.mxu0 0
      %568 = vmatmul.mubr.bf16.gmra.mrb[0].mxu0 %v479
      %v569 = vpop.f32.mrb[0].mxu0
      %v570 = vadd.f32 0.0, %v569
      %v571 = vpop.f32.mrb[0].mxu0
      %v572 = vpop.f32.mrb[0].mxu0
      %v573 = vadd.f32 0.0, %v572
      %v574 = vpop.f32.mrb[0].mxu0
      %575 = vmatprep.mubr.bf16.mxu0 0
      %576 = vmatmul.mubr.bf16.gmra.mrb[0].mxu0 %v482
      %v577 = vpop.f32.mrb[0].mxu0
      %v578 = vadd.f32 0.0, %v577
      %v579 = vpop.f32.mrb[0].mxu0
      %v580 = vpop.f32.mrb[0].mxu0
      %v581 = vadd.f32 0.0, %v580
      %v582 = vpop.f32.mrb[0].mxu0
      %583 = vmatprep.mubr.bf16.mxu0 0
      %584 = vmatmul.mubr.bf16.gmra.mrb[0].mxu0 %v485
      %v585 = vpop.f32.mrb[0].mxu0
      %v586 = vadd.f32 0.0, %v585
      %v587 = vpop.f32.mrb[0].mxu0
      %v588 = vpop.f32.mrb[0].mxu0
      %v589 = vadd.f32 0.0, %v588
      %v590 = vpop.f32.mrb[0].mxu0
      %591 = vmatprep.mubr.bf16.mxu0 0
      %592 = vmatmul.mubr.bf16.gmra.mrb[0].mxu0 %v488
      %v593 = vpop.f32.mrb[0].mxu0
      %v594 = vadd.f32 0.0, %v593
      %v595 = vpop.f32.mrb[0].mxu0
      %v596 = vpop.f32.mrb[0].mxu0
      %v597 = vadd.f32 0.0, %v596
      %v598 = vpop.f32.mrb[0].mxu0
      %599 = vmatprep.mubr.bf16.mxu0 0
      %600 = vmatmul.mubr.bf16.gmra.mrb[0].mxu0 %v491
      %v601 = vpop.f32.mrb[0].mxu0
      %v602 = vadd.f32 0.0, %v601
      %v603 = vpop.f32.mrb[0].mxu0
      %v604 = vpop.f32.mrb[0].mxu0
      %v605 = vadd.f32 0.0, %v604
      %v606 = vpop.f32.mrb[0].mxu0
      %607 = vmatprep.mubr.bf16.mxu0 0
      %608 = vmatmul.mubr.bf16.gmra.mrb[0].mxu0 %v494
      %v609 = vpop.f32.mrb[0].mxu0
      %v610 = vadd.f32 0.0, %v609
      %v611 = vpop.f32.mrb[0].mxu0
      %v612 = vpop.f32.mrb[0].mxu0
      %v613 = vadd.f32 0.0, %v612
      %v614 = vpop.f32.mrb[0].mxu0
      %615 = vmatprep.mubr.bf16.mxu0 0
      %616 = vmatmul.mubr.bf16.gmra.mrb[0].mxu0 %v497
      %v617 = vpop.f32.mrb[0].mxu0
      %v618 = vadd.f32 0.0, %v617
      %v619 = vpop.f32.mrb[0].mxu0
      %v620 = vpop.f32.mrb[0].mxu0
      %v621 = vadd.f32 0.0, %v620
      %v622 = vpop.f32.mrb[0].mxu0
      %623 = vmatprep.mubr.bf16.mxu0 0
      %624 = vmatmul.mubr.bf16.gmra.mrb[0].mxu0 %v500
      %v625 = vpop.f32.mrb[0].mxu0
      %v626 = vadd.f32 0.0, %v625
      %v627 = vpop.f32.mrb[0].mxu0
      %v628 = vpop.f32.mrb[0].mxu0
      %v629 = vadd.f32 0.0, %v628
      %v630 = vpop.f32.mrb[0].mxu0
      %631 = vmatprep.mubr.bf16.mxu0 0
      %632 = vmatmul.mubr.bf16.gmra.mrb[0].mxu0 %v503
      %v633 = vpop.f32.mrb[0].mxu0
      %v634 = vadd.f32 0.0, %v633
      %v635 = vpop.f32.mrb[0].mxu0
      %v636 = vpop.f32.mrb[0].mxu0
      %v637 = vadd.f32 0.0, %v636
      %v638 = vpop.f32.mrb[0].mxu0
      %639 = vmatprep.mubr.bf16.mxu0 0
      %640 = vmatmul.mubr.bf16.gmra.mrb[0].mxu0 %v506
      %v641 = vpop.f32.mrb[0].mxu0
      %v642 = vadd.f32 0.0, %v641
      %v643 = vpop.f32.mrb[0].mxu0
      %v644 = vpop.f32.mrb[0].mxu0
      %v645 = vadd.f32 0.0, %v644
      %v646 = vpop.f32.mrb[0].mxu0
      %647 = vmatprep.mubr.bf16.mxu0 0
      %648 = vmatmul.mubr.bf16.gmra.mrb[0].mxu0 %v509
      %v649 = vpop.f32.mrb[0].mxu0
      %v650 = vadd.f32 0.0, %v649
      %v651 = vpop.f32.mrb[0].mxu0
      %v652 = vpop.f32.mrb[0].mxu0
      %v653 = vadd.f32 0.0, %v652
      %v654 = vpop.f32.mrb[0].mxu0
      %655 = vmatprep.mubr.bf16.mxu0 0
      %656 = vmatmul.mubr.bf16.gmra.mrb[0].mxu0 %v512
      %v657 = vpop.f32.mrb[0].mxu0
      %v658 = vadd.f32 0.0, %v657
      %v659 = vpop.f32.mrb[0].mxu0
      %v660 = vpop.f32.mrb[0].mxu0
      %v661 = vadd.f32 0.0, %v660
      %v662 = vpop.f32.mrb[0].mxu0
      %663 = vmatprep.mubr.bf16.mxu0 0
      %664 = vmatmul.mubr.bf16.gmra.mrb[0].mxu0 %v515
      %v665 = vpop.f32.mrb[0].mxu0
      %v666 = vadd.f32 0.0, %v665
      %v667 = vpop.f32.mrb[0].mxu0
      %v668 = vpop.f32.mrb[0].mxu0
      %v669 = vadd.f32 0.0, %v668
      %v670 = vpop.f32.mrb[0].mxu0
      %671 = vmatprep.mubr.bf16.mxu0 0
      %672 = vmatmul.mubr.bf16.gmra.mrb[0].mxu0 %v518
      %v673 = vpop.f32.mrb[0].mxu0
      %v674 = vadd.f32 0.0, %v673
      %v675 = vpop.f32.mrb[0].mxu0
      %v676 = vpop.f32.mrb[0].mxu0
      %v677 = vadd.f32 0.0, %v676
      %v678 = vpop.f32.mrb[0].mxu0
      %679 = vmatprep.mubr.bf16.mxu0 0
      %680 = vmatmul.mubr.bf16.gmra.mrb[0].mxu0 %v521
      %v681 = vpop.f32.mrb[0].mxu0
      %v682 = vadd.f32 0.0, %v681
      %v683 = vpop.f32.mrb[0].mxu0
      %v684 = vpop.f32.mrb[0].mxu0
      %v685 = vadd.f32 0.0, %v684
      %v686 = vpop.f32.mrb[0].mxu0
      %687 = vdwg.mxu0
      %v688 = vadd.f32 %v443, %v562
      %v689 = vadd.f32 %v444, %v565
      %v690 = vadd.f32 %v445, %v570
      %v691 = vadd.f32 %v446, %v573
      %v692 = vadd.f32 %v447, %v578
      %v693 = vadd.f32 %v448, %v581
      %v694 = vadd.f32 %v449, %v586
      %v695 = vadd.f32 %v450, %v589
      %v696 = vadd.f32 %v451, %v594
      %v697 = vadd.f32 %v452, %v597
      %v698 = vadd.f32 %v453, %v602
      %v699 = vadd.f32 %v454, %v605
      %v700 = vadd.f32 %v455, %v610
      %v701 = vadd.f32 %v456, %v613
      %v702 = vadd.f32 %v457, %v618
      %v703 = vadd.f32 %v458, %v621
      %v704 = vadd.f32 %v459, %v626
      %v705 = vadd.f32 %v460, %v629
      %v706 = vadd.f32 %v461, %v634
      %v707 = vadd.f32 %v462, %v637
      %v708 = vadd.f32 %v463, %v642
      %v709 = vadd.f32 %v464, %v645
      %v710 = vadd.f32 %v465, %v650
      %v711 = vadd.f32 %v466, %v653
      %v712 = vadd.f32 %v467, %v658
      %v713 = vadd.f32 %v468, %v661
      %v714 = vadd.f32 %v469, %v666
      %v715 = vadd.f32 %v470, %v669
      %v716 = vadd.f32 %v471, %v674
      %v717 = vadd.f32 %v472, %v677
      %v718 = vadd.f32 %v473, %v682
      %v719 = vadd.f32 %v474, %v685
      %720 = vst.msk [vmem:[#allocation3] sm:$0xff] %vm361, %v688
      %721 = vst.msk [vmem:[#allocation3 + $0x8] sm:$0xff] %vm361, %v689
      %722 = vst.msk [vmem:[#allocation3 + $0x10] sm:$0xff] %vm361, %v690
      %723 = vst.msk [vmem:[#allocation3 + $0x18] sm:$0xff] %vm361, %v691
      %724 = vst.msk [vmem:[#allocation3 + $0x20] sm:$0xff] %vm361, %v692
      %725 = vst.msk [vmem:[#allocation3 + $0x28] sm:$0xff] %vm361, %v693
      %726 = vst.msk [vmem:[#allocation3 + $0x30] sm:$0xff] %vm361, %v694
      %727 = vst.msk [vmem:[#allocation3 + $0x38] sm:$0xff] %vm361, %v695
      %728 = vst.msk [vmem:[#allocation3 + $0x40] sm:$0xff] %vm361, %v696
      %729 = vst.msk [vmem:[#allocation3 + $0x48] sm:$0xff] %vm361, %v697
      %730 = vst.msk [vmem:[#allocation3 + $0x50] sm:$0xff] %vm361, %v698
      %731 = vst.msk [vmem:[#allocation3 + $0x58] sm:$0xff] %vm361, %v699
      %732 = vst.msk [vmem:[#allocation3 + $0x60] sm:$0xff] %vm361, %v700
      %733 = vst.msk [vmem:[#allocation3 + $0x68] sm:$0xff] %vm361, %v701
      %734 = vst.msk [vmem:[#allocation3 + $0x70] sm:$0xff] %vm361, %v702
      %735 = vst.msk [vmem:[#allocation3 + $0x78] sm:$0xff] %vm361, %v703
      %736 = vst.msk [vmem:[#allocation3 + $0x80] sm:$0xff] %vm361, %v704
      %737 = vst.msk [vmem:[#allocation3 + $0x88] sm:$0xff] %vm361, %v705
      %738 = vst.msk [vmem:[#allocation3 + $0x90] sm:$0xff] %vm361, %v706
      %739 = vst.msk [vmem:[#allocation3 + $0x98] sm:$0xff] %vm361, %v707
      %740 = vst.msk [vmem:[#allocation3 + $0xa0] sm:$0xff] %vm361, %v708
      %741 = vst.msk [vmem:[#allocation3 + $0xa8] sm:$0xff] %vm361, %v709
      %742 = vst.msk [vmem:[#allocation3 + $0xb0] sm:$0xff] %vm361, %v710
      %743 = vst.msk [vmem:[#allocation3 + $0xb8] sm:$0xff] %vm361, %v711
      %744 = vst.msk [vmem:[#allocation3 + $0xc0] sm:$0xff] %vm361, %v712
      %745 = vst.msk [vmem:[#allocation3 + $0xc8] sm:$0xff] %vm361, %v713
      %746 = vst.msk [vmem:[#allocation3 + $0xd0] sm:$0xff] %vm361, %v714
      %747 = vst.msk [vmem:[#allocation3 + $0xd8] sm:$0xff] %vm361, %v715
      %748 = vst.msk [vmem:[#allocation3 + $0xe0] sm:$0xff] %vm361, %v716
      %749 = vst.msk [vmem:[#allocation3 + $0xe8] sm:$0xff] %vm361, %v717
      %750 = vst.msk [vmem:[#allocation3 + $0xf0] sm:$0xff] %vm361, %v718
      %751 = vst.msk [vmem:[#allocation3 + $0xf8] sm:$0xff] %vm361, %v719
      %v752 = vld [vmem:[#allocation3] sm:$0xff]
      %v753 = vld [vmem:[#allocation3 + $0x8] sm:$0xff]
      %v754 = vld [vmem:[#allocation3 + $0x10] sm:$0xff]
      %v755 = vld [vmem:[#allocation3 + $0x18] sm:$0xff]
      %v756 = vld [vmem:[#allocation3 + $0x20] sm:$0xff]
      %v757 = vld [vmem:[#allocation3 + $0x28] sm:$0xff]
      %v758 = vld [vmem:[#allocation3 + $0x30] sm:$0xff]
      %v759 = vld [vmem:[#allocation3 + $0x38] sm:$0xff]
      %v760 = vld [vmem:[#allocation3 + $0x40] sm:$0xff]
      %v761 = vld [vmem:[#allocation3 + $0x48] sm:$0xff]
      %v762 = vld [vmem:[#allocation3 + $0x50] sm:$0xff]
      %v763 = vld [vmem:[#allocation3 + $0x58] sm:$0xff]
      %v764 = vld [vmem:[#allocation3 + $0x60] sm:$0xff]
      %v765 = vld [vmem:[#allocation3 + $0x68] sm:$0xff]
      %v766 = vld [vmem:[#allocation3 + $0x70] sm:$0xff]
      %v767 = vld [vmem:[#allocation3 + $0x78] sm:$0xff]
      %v768 = vld [vmem:[#allocation3 + $0x80] sm:$0xff]
      %v769 = vld [vmem:[#allocation3 + $0x88] sm:$0xff]
      %v770 = vld [vmem:[#allocation3 + $0x90] sm:$0xff]
      %v771 = vld [vmem:[#allocation3 + $0x98] sm:$0xff]
      %v772 = vld [vmem:[#allocation3 + $0xa0] sm:$0xff]
      %v773 = vld [vmem:[#allocation3 + $0xa8] sm:$0xff]
      %v774 = vld [vmem:[#allocation3 + $0xb0] sm:$0xff]
      %v775 = vld [vmem:[#allocation3 + $0xb8] sm:$0xff]
      %v776 = vld [vmem:[#allocation3 + $0xc0] sm:$0xff]
      %v777 = vld [vmem:[#allocation3 + $0xc8] sm:$0xff]
      %v778 = vld [vmem:[#allocation3 + $0xd0] sm:$0xff]
      %v779 = vld [vmem:[#allocation3 + $0xd8] sm:$0xff]
      %v780 = vld [vmem:[#allocation3 + $0xe0] sm:$0xff]
      %v781 = vld [vmem:[#allocation3 + $0xe8] sm:$0xff]
      %v782 = vld [vmem:[#allocation3 + $0xf0] sm:$0xff]
      %v783 = vld [vmem:[#allocation3 + $0xf8] sm:$0xff]
      %v784 = vld [vmem:[%s251] sm:$0x1]
      %v786 = vlaneseq
      %v787 = vshrl.u32 %v786, 7
      %v788 = vsub.s32 0, %v787
      %v789 = vrot.slane %v784, %v788
      %v791 = vmul.f32 %v752, %v789
      %v792 = vmul.f32 %v753, %v789
      %v793 = vmul.f32 %v754, %v789
      %v794 = vmul.f32 %v755, %v789
      %v795 = vmul.f32 %v756, %v789
      %v796 = vmul.f32 %v757, %v789
      %v797 = vmul.f32 %v758, %v789
      %v798 = vmul.f32 %v759, %v789
      %v799 = vmul.f32 %v760, %v789
      %v800 = vmul.f32 %v761, %v789
      %v801 = vmul.f32 %v762, %v789
      %v802 = vmul.f32 %v763, %v789
      %v803 = vmul.f32 %v764, %v789
      %v804 = vmul.f32 %v765, %v789
      %v805 = vmul.f32 %v766, %v789
      %v806 = vmul.f32 %v767, %v789
      %v807 = vmul.f32 %v768, %v789
      %v808 = vmul.f32 %v769, %v789
      %v809 = vmul.f32 %v770, %v789
      %v810 = vmul.f32 %v771, %v789
      %v811 = vmul.f32 %v772, %v789
      %v812 = vmul.f32 %v773, %v789
      %v813 = vmul.f32 %v774, %v789
      %v814 = vmul.f32 %v775, %v789
      %v815 = vmul.f32 %v776, %v789
      %v816 = vmul.f32 %v777, %v789
      %v817 = vmul.f32 %v778, %v789
      %v818 = vmul.f32 %v779, %v789
      %v819 = vmul.f32 %v780, %v789
      %v820 = vmul.f32 %v781, %v789
      %v821 = vmul.f32 %v782, %v789
      %v822 = vmul.f32 %v783, %v789
      %v823 = vld [vmem:[%s254] sm:$0x1]
      %v825 = vlaneseq
      %v826 = vshrl.u32 %v825, 7
      %v827 = vsub.s32 0, %v826
      %v828 = vrot.slane %v823, %v827
      %v830 = vadd.f32 %v791, %v828
      %v831 = vadd.f32 %v792, %v828
      %v832 = vadd.f32 %v793, %v828
      %v833 = vadd.f32 %v794, %v828
      %v834 = vadd.f32 %v795, %v828
      %v835 = vadd.f32 %v796, %v828
      %v836 = vadd.f32 %v797, %v828
      %v837 = vadd.f32 %v798, %v828
      %v838 = vadd.f32 %v799, %v828
      %v839 = vadd.f32 %v800, %v828
      %v840 = vadd.f32 %v801, %v828
      %v841 = vadd.f32 %v802, %v828
      %v842 = vadd.f32 %v803, %v828
      %v843 = vadd.f32 %v804, %v828
      %v844 = vadd.f32 %v805, %v828
      %v845 = vadd.f32 %v806, %v828
      %v846 = vadd.f32 %v807, %v828
      %v847 = vadd.f32 %v808, %v828
      %v848 = vadd.f32 %v809, %v828
      %v849 = vadd.f32 %v810, %v828
      %v850 = vadd.f32 %v811, %v828
      %v851 = vadd.f32 %v812, %v828
      %v852 = vadd.f32 %v813, %v828
      %v853 = vadd.f32 %v814, %v828
      %v854 = vadd.f32 %v815, %v828
      %v855 = vadd.f32 %v816, %v828
      %v856 = vadd.f32 %v817, %v828
      %v857 = vadd.f32 %v818, %v828
      %v858 = vadd.f32 %v819, %v828
      %v859 = vadd.f32 %v820, %v828
      %v860 = vadd.f32 %v821, %v828
      %v861 = vadd.f32 %v822, %v828
      %v862 = vmax.f32 %v830, 0.0
      %v863 = vmax.f32 %v831, 0.0
      %v864 = vmax.f32 %v832, 0.0
      %v865 = vmax.f32 %v833, 0.0
      %v866 = vmax.f32 %v834, 0.0
      %v867 = vmax.f32 %v835, 0.0
      %v868 = vmax.f32 %v836, 0.0
      %v869 = vmax.f32 %v837, 0.0
      %v870 = vmax.f32 %v838, 0.0
      %v871 = vmax.f32 %v839, 0.0
      %v872 = vmax.f32 %v840, 0.0
      %v873 = vmax.f32 %v841, 0.0
      %v874 = vmax.f32 %v842, 0.0
      %v875 = vmax.f32 %v843, 0.0
      %v876 = vmax.f32 %v844, 0.0
      %v877 = vmax.f32 %v845, 0.0
      %v878 = vmax.f32 %v846, 0.0
      %v879 = vmax.f32 %v847, 0.0
      %v880 = vmax.f32 %v848, 0.0
      %v881 = vmax.f32 %v849, 0.0
      %v882 = vmax.f32 %v850, 0.0
      %v883 = vmax.f32 %v851, 0.0
      %v884 = vmax.f32 %v852, 0.0
      %v885 = vmax.f32 %v853, 0.0
      %v886 = vmax.f32 %v854, 0.0
      %v887 = vmax.f32 %v855, 0.0
      %v888 = vmax.f32 %v856, 0.0
      %v889 = vmax.f32 %v857, 0.0
      %v890 = vmax.f32 %v858, 0.0
      %v891 = vmax.f32 %v859, 0.0
      %v892 = vmax.f32 %v860, 0.0
      %v893 = vmax.f32 %v861, 0.0
      %894 = vst.msk [vmem:[%s262] sm:$0xff] %vm361, %v862
      %895 = vst.msk [vmem:[%s262 + $0x8] sm:$0xff] %vm361, %v863
      %896 = vst.msk [vmem:[%s262 + $0x10] sm:$0xff] %vm361, %v864
      %897 = vst.msk [vmem:[%s262 + $0x18] sm:$0xff] %vm361, %v865
      %898 = vst.msk [vmem:[%s262 + $0x20] sm:$0xff] %vm361, %v866
      %899 = vst.msk [vmem:[%s262 + $0x28] sm:$0xff] %vm361, %v867
      %900 = vst.msk [vmem:[%s262 + $0x30] sm:$0xff] %vm361, %v868
      %901 = vst.msk [vmem:[%s262 + $0x38] sm:$0xff] %vm361, %v869
      %902 = vst.msk [vmem:[%s262 + $0x40] sm:$0xff] %vm361, %v870
      %903 = vst.msk [vmem:[%s262 + $0x48] sm:$0xff] %vm361, %v871
      %904 = vst.msk [vmem:[%s262 + $0x50] sm:$0xff] %vm361, %v872
      %905 = vst.msk [vmem:[%s262 + $0x58] sm:$0xff] %vm361, %v873
      %906 = vst.msk [vmem:[%s262 + $0x60] sm:$0xff] %vm361, %v874
      %907 = vst.msk [vmem:[%s262 + $0x68] sm:$0xff] %vm361, %v875
      %908 = vst.msk [vmem:[%s262 + $0x70] sm:$0xff] %vm361, %v876
      %909 = vst.msk [vmem:[%s262 + $0x78] sm:$0xff] %vm361, %v877
      %910 = vst.msk [vmem:[%s262 + $0x80] sm:$0xff] %vm361, %v878
      %911 = vst.msk [vmem:[%s262 + $0x88] sm:$0xff] %vm361, %v879
      %912 = vst.msk [vmem:[%s262 + $0x90] sm:$0xff] %vm361, %v880
      %913 = vst.msk [vmem:[%s262 + $0x98] sm:$0xff] %vm361, %v881
      %914 = vst.msk [vmem:[%s262 + $0xa0] sm:$0xff] %vm361, %v882
      %915 = vst.msk [vmem:[%s262 + $0xa8] sm:$0xff] %vm361, %v883
      %916 = vst.msk [vmem:[%s262 + $0xb0] sm:$0xff] %vm361, %v884
      %917 = vst.msk [vmem:[%s262 + $0xb8] sm:$0xff] %vm361, %v885
      %918 = vst.msk [vmem:[%s262 + $0xc0] sm:$0xff] %vm361, %v886
      %919 = vst.msk [vmem:[%s262 + $0xc8] sm:$0xff] %vm361, %v887
      %920 = vst.msk [vmem:[%s262 + $0xd0] sm:$0xff] %vm361, %v888
      %921 = vst.msk [vmem:[%s262 + $0xd8] sm:$0xff] %vm361, %v889
      %922 = vst.msk [vmem:[%s262 + $0xe0] sm:$0xff] %vm361, %v890
      %923 = vst.msk [vmem:[%s262 + $0xe8] sm:$0xff] %vm361, %v891
      %924 = vst.msk [vmem:[%s262 + $0xf0] sm:$0xff] %vm361, %v892
      %925 = vst.msk [vmem:[%s262 + $0xf8] sm:$0xff] %vm361, %v893
      %p926 = scmp.lt.s32.totalorder %s19, 1
      %s927 = scalar_select %p926, %s19, 1
      %p928 = scmp.lt.s32.totalorder %s20, 0
      %s929 = scalar_select %p928, %s20, 0
      %s930 = smul.addr %s927, 32
      %s931 = sadd.s32 %s929, %s930
      %s932 = smul.addr %s931, 8
      %s933 = scalar_lea.vmem %s4, %s932
      // Predicated region
      $region37: #{basic_block_forward.4} parent=35 // pred_check
        %p934 = pneg %p151
      $region38: #{basic_block_forward.4} parent=35 // pred_check_branch
        %936 = sbr.rel (%p934) target = $region40
      $region39: #{basic_block_forward.4} parent=35 // pred_region
        _
      $region40: #{basic_block_forward.4} parent=35 // pred_fallthru
        _
    $region36: #{basic_block_forward.4} parent=5 // pred_fallthru
      _
    %p937 = scmp.le.s32.totalorder 2, %s10
    // Predicated region
    $region41: #{basic_block_forward.4} parent=5 // pred_check
      %p938 = pneg %p937
    $region42: #{basic_block_forward.4} parent=5 // pred_check_branch
      %940 = sbr.rel (%p938) target = $region44
    $region43: #{basic_block_forward.4} parent=5 // pred_region
      %s941 = ssub.s32 %s10, 2
      // Predicated region
      $region45: #{basic_block_forward.4} parent=43 // pred_check
        %p942 = pneg %p157
      $region46: #{basic_block_forward.4} parent=43 // pred_check_branch
        %944 = sbr.rel (%p942) target = $region48
      $region47: #{basic_block_forward.4} parent=43 // pred_region
        %p945 = scmp.lt.s32.totalorder %s21, 1
        %s946 = scalar_select %p945, %s21, 1
        %p947 = scmp.lt.s32.totalorder %s22, 0
        %s948 = scalar_select %p947, %s22, 0
        %s949 = smul.addr %s946, 32
        %s950 = sadd.s32 %s948, %s949
        %s951 = smul.addr %s950, 8
        %s952 = scalar_lea.vmem %s4, %s951
      $region48: #{basic_block_forward.4} parent=43 // pred_fallthru
        _
    $region44: #{basic_block_forward.4} parent=5 // pred_fallthru
      _
  $region6: #{basic_block_forward.4} parent=0 // loop_footer
    %s14 = sadd.s32 1, %s10
  $region7: #{basic_block_forward.4} parent=0 // loop_footer_branch
    %9 = sbr.rel target = $region3
  $region8: #{basic_block_forward.4} parent=0 // loop_exit
    _

// kernel: basic_block_forward.3
$region0: #{basic_block_forward.3}
  #allocation0 [shape = 'u32[]', space=smem, size = 0x4, offset = 0x4, fixed_abs, tag = 'smem constant byte address 0x4 - core index']
  #allocation1 [shape = 'u32[144,128]{1,0:T(1,128)}', space=vmem, size = 0x12000, scoped, tag = 'internal scratch']
  #allocation2 [shape = 'f32[1,18,18,4]{3,2,1,0:T(8,128)}', space=vmem, size = 0x36000, scoped, tag = 'scratch operand']
  #allocation3 [shape = 'f32[256,8]{1,0:T(8,128)}', space=vmem, size = 0x20000, scoped, tag = 'scratch operand']
  %s0 = inlined_call_operand.vmem [shape: f32[2,16,16,4], index: 0, kind: input, shape index: {}]
  %s1 = inlined_call_operand.vmem [shape: bf16[36,8], index: 1, kind: input, shape index: {}]
  %s2 = inlined_call_operand.vmem [shape: f32[1,8], index: 2, kind: input, shape index: {}]
  %s3 = inlined_call_operand.vmem [shape: f32[1,8], index: 3, kind: input, shape index: {}]
  %s4 = inlined_call_operand.vmem [shape: f32[2,16,16,8], index: 4, kind: output, shape index: {}]
  %s5 = sld [smem:[#allocation0]]
  $region49: #{basic_block_forward.3} parent=0
    _
  %s7 = ssub.s32 1, %s5
  %s8 = scalar_select 0, %s7, %s5
  loop: start=0, step=1, limit=4
  $region2: #{basic_block_forward.3} parent=0 // loop_pre_header
    _
  $region3: #{basic_block_forward.3} parent=0 // loop_header
    %s10 = sphi 0, %s14
    %p11 = scmp.ge.s32.totalorder %s10, 4
    %s17 = sphi 0, %s29
    %s18 = sphi 0, %s25
    %s19 = sphi 0, %s17
    %s20 = sphi 0, %s18
    %s21 = sphi 0, %s19
    %s22 = sphi 0, %s20
    %s32 = sphi 0, %s34
    %s35 = sphi 0, %s32
    %s36 = sphi 0, %s35
    %s52 = sphi 0, %s36
    %s58 = sphi 0, %s60
    %s61 = sphi 0, %s58
    %s62 = sphi 0, %s61
    %s78 = sphi 0, %s62
    %s84 = sphi 0, %s86
    %s87 = sphi 0, %s84
    %s88 = sphi 0, %s87
    %s104 = sphi 0, %s88
    %s110 = sphi 0, %s112
    %s113 = sphi 0, %s110
    %s114 = sphi 0, %s113
    %s130 = sphi 0, %s114
    %s138 = sphi 0, %s140
    %s141 = sphi 0, %s138
    %s142 = sphi 0, %s141
    %s158 = sphi 0, %s142
  $region4: #{basic_block_forward.3} parent=0 // loop_header_branch
    %13 = sbr.rel (%p11) target = $region8
  $region5: #{basic_block_forward.3} parent=0 // loop_body
    %s15 = ssub.s32 %s10, 1
    %s16 = ssub.s32 %s10, 2
    %s23 = sadd.s32 1, %s18
    %p24 = scmp.ge.s32.totalorder %s23, 1
    %s25 = scalar_select %p24, 0, %s23
    %s26 = sadd.s32 1, %s17
    %s27 = scalar_select %p24, %s26, %s17
    %p28 = scmp.ge.s32.totalorder %s27, 2
    %s29 = scalar_select %p28, 0, %s27
    %s30 = ssub.s32 %s17, %s29
    %p31 = scmp.eq.s32.totalorder %s30, 0
    %s33 = sadd.s32 %s32, 1
    %s34 = scalar_select %p31, %s32, %s33
    %p37 = pneg %p31
    %p38 = scmp.eq.s32.totalorder %s10, 1
    %p39 = por %p37, %p38
    %p40 = scmp.ne.s32.totalorder %s32, %s35
    %p41 = scmp.eq.s32.totalorder %s10, 0
    %p42 = por %p40, %p41
    %p43 = scmp.ne.s32.totalorder %s32, %s35
    %p44 = scmp.eq.s32.totalorder %s15, 1
    %p45 = por %p43, %p44
    %p46 = scmp.ne.s32.totalorder %s35, %s36
    %p47 = scmp.eq.s32.totalorder %s15, 0
    %p48 = por %p46, %p47
    %p49 = scmp.ne.s32.totalorder %s35, %s36
    %p50 = scmp.eq.s32.totalorder %s16, 1
    %p51 = por %p49, %p50
    %p53 = scmp.ne.s32.totalorder %s36, %s52
    %p54 = scmp.eq.s32.totalorder %s16, 0
    %p55 = por %p53, %p54
    %s56 = ssub.s32 %s18, %s25
    %p57 = scmp.eq.s32.totalorder %s56, 0
    %s59 = sadd.s32 %s58, 1
    %s60 = scalar_select %p57, %s58, %s59
    %p63 = pneg %p57
    %p64 = scmp.eq.s32.totalorder %s10, 1
    %p65 = por %p63, %p64
    %p66 = scmp.ne.s32.totalorder %s58, %s61
    %p67 = scmp.eq.s32.totalorder %s10, 0
    %p68 = por %p66, %p67
    %p69 = scmp.ne.s32.totalorder %s58, %s61
    %p70 = scmp.eq.s32.totalorder %s15, 1
    %p71 = por %p69, %p70
    %p72 = scmp.ne.s32.totalorder %s61, %s62
    %p73 = scmp.eq.s32.totalorder %s15, 0
    %p74 = por %p72, %p73
    %p75 = scmp.ne.s32.totalorder %s61, %s62
    %p76 = scmp.eq.s32.totalorder %s16, 1
    %p77 = por %p75, %p76
    %p79 = scmp.ne.s32.totalorder %s62, %s78
    %p80 = scmp.eq.s32.totalorder %s16, 0
    %p81 = por %p79, %p80
    %s82 = ssub.s32 %s18, %s25
    %p83 = scmp.eq.s32.totalorder %s82, 0
    %s85 = sadd.s32 %s84, 1
    %s86 = scalar_select %p83, %s84, %s85
    %p89 = pneg %p83
    %p90 = scmp.eq.s32.totalorder %s10, 1
    %p91 = por %p89, %p90
    %p92 = scmp.ne.s32.totalorder %s84, %s87
    %p93 = scmp.eq.s32.totalorder %s10, 0
    %p94 = por %p92, %p93
    %p95 = scmp.ne.s32.totalorder %s84, %s87
    %p96 = scmp.eq.s32.totalorder %s15, 1
    %p97 = por %p95, %p96
    %p98 = scmp.ne.s32.totalorder %s87, %s88
    %p99 = scmp.eq.s32.totalorder %s15, 0
    %p100 = por %p98, %p99
    %p101 = scmp.ne.s32.totalorder %s87, %s88
    %p102 = scmp.eq.s32.totalorder %s16, 1
    %p103 = por %p101, %p102
    %p105 = scmp.ne.s32.totalorder %s88, %s104
    %p106 = scmp.eq.s32.totalorder %s16, 0
    %p107 = por %p105, %p106
    %s108 = ssub.s32 %s18, %s25
    %p109 = scmp.eq.s32.totalorder %s108, 0
    %s111 = sadd.s32 %s110, 1
    %s112 = scalar_select %p109, %s110, %s111
    %p115 = pneg %p109
    %p116 = scmp.eq.s32.totalorder %s10, 1
    %p117 = por %p115, %p116
    %p118 = scmp.ne.s32.totalorder %s110, %s113
    %p119 = scmp.eq.s32.totalorder %s10, 0
    %p120 = por %p118, %p119
    %p121 = scmp.ne.s32.totalorder %s110, %s113
    %p122 = scmp.eq.s32.totalorder %s15, 1
    %p123 = por %p121, %p122
    %p124 = scmp.ne.s32.totalorder %s113, %s114
    %p125 = scmp.eq.s32.totalorder %s15, 0
    %p126 = por %p124, %p125
    %p127 = scmp.ne.s32.totalorder %s113, %s114
    %p128 = scmp.eq.s32.totalorder %s16, 1
    %p129 = por %p127, %p128
    %p131 = scmp.ne.s32.totalorder %s114, %s130
    %p132 = scmp.eq.s32.totalorder %s16, 0
    %p133 = por %p131, %p132
    %s134 = ssub.s32 %s17, %s29
    %s135 = ssub.s32 %s18, %s25
    %s136 = sor.u32 %s134, %s135
    %p137 = scmp.eq.s32.totalorder %s136, 0
    %s139 = sadd.s32 %s138, 1
    %s140 = scalar_select %p137, %s138, %s139
    %p143 = pneg %p137
    %p144 = scmp.eq.s32.totalorder %s10, 1
    %p145 = por %p143, %p144
    %p146 = scmp.ne.s32.totalorder %s138, %s141
    %p147 = scmp.eq.s32.totalorder %s10, 0
    %p148 = por %p146, %p147
    %p149 = scmp.ne.s32.totalorder %s138, %s141
    %p150 = scmp.eq.s32.totalorder %s15, 1
    %p151 = por %p149, %p150
    %p152 = scmp.ne.s32.totalorder %s141, %s142
    %p153 = scmp.eq.s32.totalorder %s15, 0
    %p154 = por %p152, %p153
    %p155 = scmp.ne.s32.totalorder %s141, %s142
    %p156 = scmp.eq.s32.totalorder %s16, 1
    %p157 = por %p155, %p156
    %p159 = scmp.ne.s32.totalorder %s142, %s158
    %p160 = scmp.eq.s32.totalorder %s16, 0
    %p161 = por %p159, %p160
    %p162 = scmp.le.s32.totalorder 1, %s10
    %p163 = scmp.lt.s32.totalorder %s10, 3
    %p164 = pnand %p162, %p163
    %p165 = pneg %p164
    // Predicated region
    $region9: #{basic_block_forward.3} parent=5 // pred_check
      _
    $region10: #{basic_block_forward.3} parent=5 // pred_check_branch
      %167 = sbr.rel (%p164) target = $region12
    $region11: #{basic_block_forward.3} parent=5 // pred_region
      %s168 = ssub.s32 %s10, 1
      // Predicated region
      $region13: #{basic_block_forward.3} parent=11 // pred_check
        %p169 = pneg %p74
      $region14: #{basic_block_forward.3} parent=11 // pred_check_branch
        %171 = sbr.rel (%p169) target = $region16
      $region15: #{basic_block_forward.3} parent=11 // pred_region
        %p172 = scmp.lt.s32.totalorder %s20, 0
        %s173 = scalar_select %p172, %s20, 0
        %s174 = smul.addr %s173, 4
        %s175 = scalar_lea.vmem %s1, %s174
      $region16: #{basic_block_forward.3} parent=11 // pred_fallthru
        _
      // Predicated region
      $region17: #{basic_block_forward.3} parent=11 // pred_check
        %p176 = pneg %p100
      $region18: #{basic_block_forward.3} parent=11 // pred_check_branch
        %178 = sbr.rel (%p176) target = $region20
      $region19: #{basic_block_forward.3} parent=11 // pred_region
        %p179 = scmp.lt.s32.totalorder %s20, 0
        %s180 = scalar_select %p179, %s20, 0
        %s181 = scalar_lea.vmem %s2, %s180
      $region20: #{basic_block_forward.3} parent=11 // pred_fallthru
        _
      // Predicated region
      $region21: #{basic_block_forward.3} parent=11 // pred_check
        %p182 = pneg %p126
      $region22: #{basic_block_forward.3} parent=11 // pred_check_branch
        %184 = sbr.rel (%p182) target = $region24
      $region23: #{basic_block_forward.3} parent=11 // pred_region
        %p185 = scmp.lt.s32.totalorder %s20, 0
        %s186 = scalar_select %p185, %s20, 0
        %s187 = scalar_lea.vmem %s3, %s186
      $region24: #{basic_block_forward.3} parent=11 // pred_fallthru
        _
    $region12: #{basic_block_forward.3} parent=5 // pred_fallthru
      _
    %p188 = scmp.lt.s32.totalorder %s10, 2
    // Predicated region
    $region25: #{basic_block_forward.3} parent=5 // pred_check
      %p189 = pneg %p188
    $region26: #{basic_block_forward.3} parent=5 // pred_check_branch
      %191 = sbr.rel (%p189) target = $region28
    $region27: #{basic_block_forward.3} parent=5 // pred_region
      // Predicated region
      $region29: #{basic_block_forward.3} parent=27 // pred_check
        %p192 = pneg %p42
      $region30: #{basic_block_forward.3} parent=27 // pred_check_branch
        %194 = sbr.rel (%p192) target = $region32
      $region31: #{basic_block_forward.3} parent=27 // pred_region
        %p195 = scmp.lt.s32.totalorder %s17, 1
        %s196 = scalar_select %p195, %s17, 1
        %s197 = smul.addr %s196, 32
        %s198 = smul.addr %s197, 8
        %s199 = scalar_lea.vmem %s0, %s198
      $region32: #{basic_block_forward.3} parent=27 // pred_fallthru
        _
    $region28: #{basic_block_forward.3} parent=5 // pred_fallthru
      _
    %p200 = scmp.le.s32.totalorder 1, %s10
    %p201 = scmp.lt.s32.totalorder %s10, 3
    %p202 = pnand %p200, %p201
    %p203 = pneg %p202
    // Predicated region
    $region33: #{basic_block_forward.3} parent=5 // pred_check
      _
    $region34: #{basic_block_forward.3} parent=5 // pred_check_branch
      %205 = sbr.rel (%p202) target = $region36
    $region35: #{basic_block_forward.3} parent=5 // pred_region
      %s206 = ssub.s32 %s10, 1
      %p207 = scmp.lt.s32.totalorder %s19, 1
      %s208 = scalar_select %p207, %s19, 1
      %s209 = smul.addr %s208, 32
      %s210 = smul.addr %s209, 8
      %s211 = scalar_lea.vmem %s0, %s210
      %p212 = pneg %p48
      %p213 = pneg %p45
      %p214 = scmp.lt.s32.totalorder %s20, 0
      %s215 = scalar_select %p214, %s20, 0
      %s216 = smul.addr %s215, 4
      %s217 = scalar_lea.vmem %s1, %s216
      %p218 = pneg %p74
      %p219 = pneg %p71
      %p220 = scmp.lt.s32.totalorder %s20, 0
      %s221 = scalar_select %p220, %s20, 0
      %s222 = scalar_lea.vmem %s2, %s221
      %p223 = pneg %p100
      %p224 = pneg %p97
      %p225 = scmp.lt.s32.totalorder %s20, 0
      %s226 = scalar_select %p225, %s20, 0
      %s227 = scalar_lea.vmem %s3, %s226
      %p228 = pneg %p126
      %p229 = pneg %p123
      %p230 = pneg %p154
      %p231 = pneg %p151
      %p232 = scmp.lt.s32.totalorder %s19, 1
      %s233 = scalar_select %p232, %s19, 1
      %p234 = scmp.lt.s32.totalorder %s20, 0
      %s235 = scalar_select %p234, %s20, 0
      %s236 = smul.addr %s233, 32
      %s237 = sadd.s32 %s235, %s236
      %s238 = smul.addr %s237, 8
      %s239 = scalar_lea.vmem %s4, %s238
      %p240 = scmp.lt.s32.totalorder %s19, 1
      %s241 = scalar_select %p240, %s19, 1
      %s242 = smul.addr %s241, 32
      %s243 = smul.addr %s242, 8
      %s244 = scalar_lea.vmem %s0, %s243
      %p245 = scmp.lt.s32.totalorder %s20, 0
      %s246 = scalar_select %p245, %s20, 0
      %s247 = smul.addr %s246, 4
      %s248 = scalar_lea.vmem %s1, %s247
      %p249 = scmp.lt.s32.totalorder %s20, 0
      %s250 = scalar_select %p249, %s20, 0
      %s251 = scalar_lea.vmem %s2, %s250
      %p252 = scmp.lt.s32.totalorder %s20, 0
      %s253 = scalar_select %p252, %s20, 0
      %s254 = scalar_lea.vmem %s3, %s253
      %p255 = scmp.lt.s32.totalorder %s19, 1
      %s256 = scalar_select %p255, %s19, 1
      %p257 = scmp.lt.s32.totalorder %s20, 0
      %s258 = scalar_select %p257, %s20, 0
      %s259 = smul.addr %s256, 32
      %s260 = sadd.s32 %s258, %s259
      %s261 = smul.addr %s260, 8
      %s262 = scalar_lea.vmem %s4, %s261
      %vm264 = vcmask 31744
      %265 = vst.msk [vmem:[#allocation2] sm:$0xff] %vm264, 0.0
      %266 = vst.msk [vmem:[#allocation2 + $0x8] sm:$0xff] %vm264, 0.0
      %vm267 = vcmask 25600
      %268 = vst.msk [vmem:[#allocation2 + $0x10] sm:$0x3] %vm267, 0.0
      %269 = vst.msk [vmem:[#allocation2 + $0x18] sm:$0xff] %vm264, 0.0
      %270 = vst.msk [vmem:[#allocation2 + $0x20] sm:$0xff] %vm264, 0.0
      %271 = vst.msk [vmem:[#allocation2 + $0x28] sm:$0x3] %vm267, 0.0
      %272 = vst.msk [vmem:[#allocation2 + $0x30] sm:$0xff] %vm264, 0.0
      %273 = vst.msk [vmem:[#allocation2 + $0x38] sm:$0xff] %vm264, 0.0
      %274 = vst.msk [vmem:[#allocation2 + $0x40] sm:$0x3] %vm267, 0.0
      %275 = vst.msk [vmem:[#allocation2 + $0x48] sm:$0xff] %vm264, 0.0
      %276 = vst.msk [vmem:[#allocation2 + $0x50] sm:$0xff] %vm264, 0.0
      %277 = vst.msk [vmem:[#allocation2 + $0x58] sm:$0x3] %vm267, 0.0
      %278 = vst.msk [vmem:[#allocation2 + $0x60] sm:$0xff] %vm264, 0.0
      %279 = vst.msk [vmem:[#allocation2 + $0x68] sm:$0xff] %vm264, 0.0
      %280 = vst.msk [vmem:[#allocation2 + $0x70] sm:$0x3] %vm267, 0.0
      %281 = vst.msk [vmem:[#allocation2 + $0x78] sm:$0xff] %vm264, 0.0
      %282 = vst.msk [vmem:[#allocation2 + $0x80] sm:$0xff] %vm264, 0.0
      %283 = vst.msk [vmem:[#allocation2 + $0x88] sm:$0x3] %vm267, 0.0
      %284 = vst.msk [vmem:[#allocation2 + $0x90] sm:$0xff] %vm264, 0.0
      %285 = vst.msk [vmem:[#allocation2 + $0x98] sm:$0xff] %vm264, 0.0
      %286 = vst.msk [vmem:[#allocation2 + $0xa0] sm:$0x3] %vm267, 0.0
      %287 = vst.msk [vmem:[#allocation2 + $0xa8] sm:$0xff] %vm264, 0.0
      %288 = vst.msk [vmem:[#allocation2 + $0xb0] sm:$0xff] %vm264, 0.0
      %289 = vst.msk [vmem:[#allocation2 + $0xb8] sm:$0x3] %vm267, 0.0
      %290 = vst.msk [vmem:[#allocation2 + $0xc0] sm:$0xff] %vm264, 0.0
      %291 = vst.msk [vmem:[#allocation2 + $0xc8] sm:$0xff] %vm264, 0.0
      %292 = vst.msk [vmem:[#allocation2 + $0xd0] sm:$0x3] %vm267, 0.0
      %293 = vst.msk [vmem:[#allocation2 + $0xd8] sm:$0xff] %vm264, 0.0
      %294 = vst.msk [vmem:[#allocation2 + $0xe0] sm:$0xff] %vm264, 0.0
      %295 = vst.msk [vmem:[#allocation2 + $0xe8] sm:$0x3] %vm267, 0.0
      %296 = vst.msk [vmem:[#allocation2 + $0xf0] sm:$0xff] %vm264, 0.0
      %297 = vst.msk [vmem:[#allocation2 + $0xf8] sm:$0xff] %vm264, 0.0
      %298 = vst.msk [vmem:[#allocation2 + $0x100] sm:$0x3] %vm267, 0.0
      %299 = vst.msk [vmem:[#allocation2 + $0x108] sm:$0xff] %vm264, 0.0
      %300 = vst.msk [vmem:[#allocation2 + $0x110] sm:$0xff] %vm264, 0.0
      %301 = vst.msk [vmem:[#allocation2 + $0x118] sm:$0x3] %vm267, 0.0
      %302 = vst.msk [vmem:[#allocation2 + $0x120] sm:$0xff] %vm264, 0.0
      %303 = vst.msk [vmem:[#allocation2 + $0x128] sm:$0xff] %vm264, 0.0
      %304 = vst.msk [vmem:[#allocation2 + $0x130] sm:$0x3] %vm267, 0.0
      %305 = vst.msk [vmem:[#allocation2 + $0x138] sm:$0xff] %vm264, 0.0
      %306 = vst.msk [vmem:[#allocation2 + $0x140] sm:$0xff] %vm264, 0.0
      %307 = vst.msk [vmem:[#allocation2 + $0x148] sm:$0x3] %vm267, 0.0
      %308 = vst.msk [vmem:[#allocation2 + $0x150] sm:$0xff] %vm264, 0.0
      %309 = vst.msk [vmem:[#allocation2 + $0x158] sm:$0xff] %vm264, 0.0
      %310 = vst.msk [vmem:[#allocation2 + $0x160] sm:$0x3] %vm267, 0.0
      %311 = vst.msk [vmem:[#allocation2 + $0x168] sm:$0xff] %vm264, 0.0
      %312 = vst.msk [vmem:[#allocation2 + $0x170] sm:$0xff] %vm264, 0.0
      %313 = vst.msk [vmem:[#allocation2 + $0x178] sm:$0x3] %vm267, 0.0
      %314 = vst.msk [vmem:[#allocation2 + $0x180] sm:$0xff] %vm264, 0.0
      %315 = vst.msk [vmem:[#allocation2 + $0x188] sm:$0xff] %vm264, 0.0
      %316 = vst.msk [vmem:[#allocation2 + $0x190] sm:$0x3] %vm267, 0.0
      %317 = vst.msk [vmem:[#allocation2 + $0x198] sm:$0xff] %vm264, 0.0
      %318 = vst.msk [vmem:[#allocation2 + $0x1a0] sm:$0xff] %vm264, 0.0
      %319 = vst.msk [vmem:[#allocation2 + $0x1a8] sm:$0x3] %vm267, 0.0
      %v320 = vld [vmem:[%s244] sm:$0xff]
      %v321 = vld [vmem:[%s244 + $0x8] sm:$0xff]
      %v322 = vld [vmem:[%s244 + $0x10] sm:$0xff]
      %v323 = vld [vmem:[%s244 + $0x18] sm:$0xff]
      %v324 = vld [vmem:[%s244 + $0x20] sm:$0xff]
      %v325 = vld [vmem:[%s244 + $0x28] sm:$0xff]
      %v326 = vld [vmem:[%s244 + $0x30] sm:$0xff]
      %v327 = vld [vmem:[%s244 + $0x38] sm:$0xff]
      %v328 = vld [vmem:[%s244 + $0x40] sm:$0xff]
      %v329 = vld [vmem:[%s244 + $0x48] sm:$0xff]
      %v330 = vld [vmem:[%s244 + $0x50] sm:$0xff]
      %v331 = vld [vmem:[%s244 + $0x58] sm:$0xff]
      %v332 = vld [vmem:[%s244 + $0x60] sm:$0xff]
      %v333 = vld [vmem:[%s244 + $0x68] sm:$0xff]
      %v334 = vld [vmem:[%s244 + $0x70] sm:$0xff]
      %v335 = vld [vmem:[%s244 + $0x78] sm:$0xff]
      %v336 = vld [vmem:[%s244 + $0x80] sm:$0xff]
      %v337 = vld [vmem:[%s244 + $0x88] sm:$0xff]
      %v338 = vld [vmem:[%s244 + $0x90] sm:$0xff]
      %v339 = vld [vmem:[%s244 + $0x98] sm:$0xff]
      %v340 = vld [vmem:[%s244 + $0xa0] sm:$0xff]
      %v341 = vld [vmem:[%s244 + $0xa8] sm:$0xff]
      %v342 = vld [vmem:[%s244 + $0xb0] sm:$0xff]
      %v343 = vld [vmem:[%s244 + $0xb8] sm:$0xff]
      %v344 = vld [vmem:[%s244 + $0xc0] sm:$0xff]
      %v345 = vld [vmem:[%s244 + $0xc8] sm:$0xff]
      %v346 = vld [vmem:[%s244 + $0xd0] sm:$0xff]
      %v347 = vld [vmem:[%s244 + $0xd8] sm:$0xff]
      %v348 = vld [vmem:[%s244 + $0xe0] sm:$0xff]
      %v349 = vld [vmem:[%s244 + $0xe8] sm:$0xff]
      %v350 = vld [vmem:[%s244 + $0xf0] sm:$0xff]
      %v351 = vld [vmem:[%s244 + $0xf8] sm:$0xff]
      %s352 = scalar_lea.vmem [#allocation2], 24
      %353 = vst.msk [vmem:[%s352 + $0x1] sm:$0xff] %vm264, %v320
      %354 = vst.msk [vmem:[%s352 + $0x9] sm:$0xff] %vm264, %v321
      %355 = vst.msk [vmem:[%s352 + $0x19] sm:$0xff] %vm264, %v322
      %356 = vst.msk [vmem:[%s352 + $0x21] sm:$0xff] %vm264, %v323
      %357 = vst.msk [vmem:[%s352 + $0x31] sm:$0xff] %vm264, %v324
      %358 = vst.msk [vmem:[%s352 + $0x39] sm:$0xff] %vm264, %v325
      %359 = vst.msk [vmem:[%s352 + $0x49] sm:$0xff] %vm264, %v326
      %360 = vst.msk [vmem:[%s352 + $0x51] sm:$0xff] %vm264, %v327
      %361 = vst.msk [vmem:[%s352 + $0x61] sm:$0xff] %vm264, %v328
      %362 = vst.msk [vmem:[%s352 + $0x69] sm:$0xff] %vm264, %v329
      %363 = vst.msk [vmem:[%s352 + $0x79] sm:$0xff] %vm264, %v330
      %364 = vst.msk [vmem:[%s352 + $0x81] sm:$0xff] %vm264, %v331
      %365 = vst.msk [vmem:[%s352 + $0x91] sm:$0xff] %vm264, %v332
      %366 = vst.msk [vmem:[%s352 + $0x99] sm:$0xff] %vm264, %v333
      %367 = vst.msk [vmem:[%s352 + $0xa9] sm:$0xff] %vm264, %v334
      %368 = vst.msk [vmem:[%s352 + $0xb1] sm:$0xff] %vm264, %v335
      %369 = vst.msk [vmem:[%s352 + $0xc1] sm:$0xff] %vm264, %v336
      %370 = vst.msk [vmem:[%s352 + $0xc9] sm:$0xff] %vm264, %v337
      %371 = vst.msk [vmem:[%s352 + $0xd9] sm:$0xff] %vm264, %v338
      %372 = vst.msk [vmem:[%s352 + $0xe1] sm:$0xff] %vm264, %v339
      %373 = vst.msk [vmem:[%s352 + $0xf1] sm:$0xff] %vm264, %v340
      %374 = vst.msk [vmem:[%s352 + $0xf9] sm:$0xff] %vm264, %v341
      %375 = vst.msk [vmem:[%s352 + $0x109] sm:$0xff] %vm264, %v342
      %376 = vst.msk [vmem:[%s352 + $0x111] sm:$0xff] %vm264, %v343
      %377 = vst.msk [vmem:[%s352 + $0x121] sm:$0xff] %vm264, %v344
      %378 = vst.msk [vmem:[%s352 + $0x129] sm:$0xff] %vm264, %v345
      %379 = vst.msk [vmem:[%s352 + $0x139] sm:$0xff] %vm264, %v346
      %380 = vst.msk [vmem:[%s352 + $0x141] sm:$0xff] %vm264, %v347
      %381 = vst.msk [vmem:[%s352 + $0x151] sm:$0xff] %vm264, %v348
      %382 = vst.msk [vmem:[%s352 + $0x159] sm:$0xff] %vm264, %v349
      %383 = vst.msk [vmem:[%s352 + $0x169] sm:$0xff] %vm264, %v350
      %384 = vst.msk [vmem:[%s352 + $0x171] sm:$0xff] %vm264, %v351
      %vm385 = vcmask 64512
      %386 = vst.msk [vmem:[#allocation3] sm:$0xff] %vm385, 0.0
      %387 = vst.msk [vmem:[#allocation3 + $0x8] sm:$0xff] %vm385, 0.0
      %388 = vst.msk [vmem:[#allocation3 + $0x10] sm:$0xff] %vm385, 0.0
      %389 = vst.msk [vmem:[#allocation3 + $0x18] sm:$0xff] %vm385, 0.0
      %390 = vst.msk [vmem:[#allocation3 + $0x20] sm:$0xff] %vm385, 0.0
      %391 = vst.msk [vmem:[#allocation3 + $0x28] sm:$0xff] %vm385, 0.0
      %392 = vst.msk [vmem:[#allocation3 + $0x30] sm:$0xff] %vm385, 0.0
      %393 = vst.msk [vmem:[#allocation3 + $0x38] sm:$0xff] %vm385, 0.0
      %394 = vst.msk [vmem:[#allocation3 + $0x40] sm:$0xff] %vm385, 0.0
      %395 = vst.msk [vmem:[#allocation3 + $0x48] sm:$0xff] %vm385, 0.0
      %396 = vst.msk [vmem:[#allocation3 + $0x50] sm:$0xff] %vm385, 0.0
      %397 = vst.msk [vmem:[#allocation3 + $0x58] sm:$0xff] %vm385, 0.0
      %398 = vst.msk [vmem:[#allocation3 + $0x60] sm:$0xff] %vm385, 0.0
      %399 = vst.msk [vmem:[#allocation3 + $0x68] sm:$0xff] %vm385, 0.0
      %400 = vst.msk [vmem:[#allocation3 + $0x70] sm:$0xff] %vm385, 0.0
      %401 = vst.msk [vmem:[#allocation3 + $0x78] sm:$0xff] %vm385, 0.0
      %402 = vst.msk [vmem:[#allocation3 + $0x80] sm:$0xff] %vm385, 0.0
      %403 = vst.msk [vmem:[#allocation3 + $0x88] sm:$0xff] %vm385, 0.0
      %404 = vst.msk [vmem:[#allocation3 + $0x90] sm:$0xff] %vm385, 0.0
      %405 = vst.msk [vmem:[#allocation3 + $0x98] sm:$0xff] %vm385, 0.0
      %406 = vst.msk [vmem:[#allocation3 + $0xa0] sm:$0xff] %vm385, 0.0
      %407 = vst.msk [vmem:[#allocation3 + $0xa8] sm:$0xff] %vm385, 0.0
      %408 = vst.msk [vmem:[#allocation3 + $0xb0] sm:$0xff] %vm385, 0.0
      %409 = vst.msk [vmem:[#allocation3 + $0xb8] sm:$0xff] %vm385, 0.0
      %410 = vst.msk [vmem:[#allocation3 + $0xc0] sm:$0xff] %vm385, 0.0
      %411 = vst.msk [vmem:[#allocation3 + $0xc8] sm:$0xff] %vm385, 0.0
      %412 = vst.msk [vmem:[#allocation3 + $0xd0] sm:$0xff] %vm385, 0.0
      %413 = vst.msk [vmem:[#allocation3 + $0xd8] sm:$0xff] %vm385, 0.0
      %414 = vst.msk [vmem:[#allocation3 + $0xe0] sm:$0xff] %vm385, 0.0
      %415 = vst.msk [vmem:[#allocation3 + $0xe8] sm:$0xff] %vm385, 0.0
      %416 = vst.msk [vmem:[#allocation3 + $0xf0] sm:$0xff] %vm385, 0.0
      %417 = vst.msk [vmem:[#allocation3 + $0xf8] sm:$0xff] %vm385, 0.0
      %v418 = vld [vmem:[#allocation2] sm:$0xff]
      %v419 = vld [vmem:[#allocation2 + $0x8] sm:$0xff]
      %v420 = vld [vmem:[#allocation2 + $0x18] sm:$0xff]
      %v421 = vld [vmem:[#allocation2 + $0x20] sm:$0xff]
      %v422 = vld [vmem:[#allocation2 + $0x30] sm:$0xff]
      %v423 = vld [vmem:[#allocation2 + $0x38] sm:$0xff]
      %v424 = vld [vmem:[#allocation2 + $0x48] sm:$0xff]
      %v425 = vld [vmem:[#allocation2 + $0x50] sm:$0xff]
      %v426 = vld [vmem:[#allocation2 + $0x60] sm:$0xff]
      %v427 = vld [vmem:[#allocation2 + $0x68] sm:$0xff]
      %v428 = vld [vmem:[#allocation2 + $0x78] sm:$0xff]
      %v429 = vld [vmem:[#allocation2 + $0x80] sm:$0xff]
      %v430 = vld [vmem:[#allocation2 + $0x90] sm:$0xff]
      %v431 = vld [vmem:[#allocation2 + $0x98] sm:$0xff]
      %v432 = vld [vmem:[#allocation2 + $0xa8] sm:$0xff]
      %v433 = vld [vmem:[#allocation2 + $0xb0] sm:$0xff]
      %v434 = vld [vmem:[#allocation2 + $0xc0] sm:$0xff]
      %v435 = vld [vmem:[#allocation2 + $0xc8] sm:$0xff]
      %v436 = vld [vmem:[#allocation2 + $0xd8] sm:$0xff]
      %v437 = vld [vmem:[#allocation2 + $0xe0] sm:$0xff]
      %v438 = vld [vmem:[#allocation2 + $0xf0] sm:$0xff]
      %v439 = vld [vmem:[#allocation2 + $0xf8] sm:$0xff]
      %v440 = vld [vmem:[#allocation2 + $0x108] sm:$0xff]
      %v441 = vld [vmem:[#allocation2 + $0x110] sm:$0xff]
      %v442 = vld [vmem:[#allocation2 + $0x120] sm:$0xff]
      %v443 = vld [vmem:[#allocation2 + $0x128] sm:$0xff]
      %v444 = vld [vmem:[#allocation2 + $0x138] sm:$0xff]
      %v445 = vld [vmem:[#allocation2 + $0x140] sm:$0xff]
      %v446 = vld [vmem:[#allocation2 + $0x150] sm:$0xff]
      %v447 = vld [vmem:[#allocation2 + $0x158] sm:$0xff]
      %v448 = vld [vmem:[#allocation2 + $0x168] sm:$0xff]
      %v449 = vld [vmem:[#allocation2 + $0x170] sm:$0xff]
      %v450 = vpack.c.bf16 %v419, %v418
      %v451 = vpack.c.bf16 %v421, %v420
      %v452 = vpack.c.bf16 %v423, %v422
      %v453 = vpack.c.bf16 %v425, %v424
      %v454 = vpack.c.bf16 %v427, %v426
      %v455 = vpack.c.bf16 %v429, %v428
      %v456 = vpack.c.bf16 %v431, %v430
      %v457 = vpack.c.bf16 %v433, %v432
      %v458 = vpack.c.bf16 %v435, %v434
      %v459 = vpack.c.bf16 %v437, %v436
      %v460 = vpack.c.bf16 %v439, %v438
      %v461 = vpack.c.bf16 %v441, %v440
      %v462 = vpack.c.bf16 %v443, %v442
      %v463 = vpack.c.bf16 %v445, %v444
      %v464 = vpack.c.bf16 %v447, %v446
      %v465 = vpack.c.bf16 %v449, %v448
      %v466 = vld [vmem:[%s248] sm:$0x3]
      %v467 = vld [vmem:[#allocation3] sm:$0xff]
      %v468 = vld [vmem:[#allocation3 + $0x8] sm:$0xff]
      %v469 = vld [vmem:[#allocation3 + $0x10] sm:$0xff]
      %v470 = vld [vmem:[#allocation3 + $0x18] sm:$0xff]
      %v471 = vld [vmem:[#allocation3 + $0x20] sm:$0xff]
      %v472 = vld [vmem:[#allocation3 + $0x28] sm:$0xff]
      %v473 = vld [vmem:[#allocation3 + $0x30] sm:$0xff]
      %v474 = vld [vmem:[#allocation3 + $0x38] sm:$0xff]
      %v475 = vld [vmem:[#allocation3 + $0x40] sm:$0xff]
      %v476 = vld [vmem:[#allocation3 + $0x48] sm:$0xff]
      %v477 = vld [vmem:[#allocation3 + $0x50] sm:$0xff]
      %v478 = vld [vmem:[#allocation3 + $0x58] sm:$0xff]
      %v479 = vld [vmem:[#allocation3 + $0x60] sm:$0xff]
      %v480 = vld [vmem:[#allocation3 + $0x68] sm:$0xff]
      %v481 = vld [vmem:[#allocation3 + $0x70] sm:$0xff]
      %v482 = vld [vmem:[#allocation3 + $0x78] sm:$0xff]
      %v483 = vld [vmem:[#allocation3 + $0x80] sm:$0xff]
      %v484 = vld [vmem:[#allocation3 + $0x88] sm:$0xff]
      %v485 = vld [vmem:[#allocation3 + $0x90] sm:$0xff]
      %v486 = vld [vmem:[#allocation3 + $0x98] sm:$0xff]
      %v487 = vld [vmem:[#allocation3 + $0xa0] sm:$0xff]
      %v488 = vld [vmem:[#allocation3 + $0xa8] sm:$0xff]
      %v489 = vld [vmem:[#allocation3 + $0xb0] sm:$0xff]
      %v490 = vld [vmem:[#allocation3 + $0xb8] sm:$0xff]
      %v491 = vld [vmem:[#allocation3 + $0xc0] sm:$0xff]
      %v492 = vld [vmem:[#allocation3 + $0xc8] sm:$0xff]
      %v493 = vld [vmem:[#allocation3 + $0xd0] sm:$0xff]
      %v494 = vld [vmem:[#allocation3 + $0xd8] sm:$0xff]
      %v495 = vld [vmem:[#allocation3 + $0xe0] sm:$0xff]
      %v496 = vld [vmem:[#allocation3 + $0xe8] sm:$0xff]
      %v497 = vld [vmem:[#allocation3 + $0xf0] sm:$0xff]
      %v498 = vld [vmem:[#allocation3 + $0xf8] sm:$0xff]
      %v500 = vsel %vm264, %v450, 0
      %v503 = vsel %vm264, %v451, 0
      %v506 = vsel %vm264, %v452, 0
      %v509 = vsel %vm264, %v453, 0
      %v512 = vsel %vm264, %v454, 0
      %v515 = vsel %vm264, %v455, 0
      %v518 = vsel %vm264, %v456, 0
      %v521 = vsel %vm264, %v457, 0
      %v524 = vsel %vm264, %v458, 0
      %v527 = vsel %vm264, %v459, 0
      %v530 = vsel %vm264, %v460, 0
      %v533 = vsel %vm264, %v461, 0
      %v536 = vsel %vm264, %v462, 0
      %v539 = vsel %vm264, %v463, 0
      %v542 = vsel %vm264, %v464, 0
      %v545 = vsel %vm264, %v465, 0
      %vm547 = vcmask 1041408
      %v549 = vsel %vm547, %v466, 0
      %551 = vmatprep.subr.bf16.mxu0 0
      %552 = vmatpush1.bf16.msra.mxu0 %v549
      %553 = vmatprep.subr.bf16.mxu0 0
      %554 = vmatpush1.bf16.msra.mxu0 0
      %555 = vmatprep.subr.bf16.mxu0 0
      %556 = vmatpush1.bf16.msra.mxu0 0
      %557 = vmatprep.subr.bf16.mxu0 0
      %558 = vmatpush1.bf16.msra.mxu0 0
      %559 = vmatprep.subr.bf16.mxu0 0
      %560 = vmatpush1.bf16.msra.mxu0 0
      %561 = vmatprep.subr.bf16.mxu0 0
      %562 = vmatpush1.bf16.msra.mxu0 0
      %563 = vmatprep.subr.bf16.mxu0 0
      %564 = vmatpush1.bf16.msra.mxu0 0
      %565 = vmatprep.subr.bf16.mxu0 0
      %566 = vmatpush1.bf16.msra.mxu0 0
      %567 = vmatprep.subr.bf16.mxu0 0
      %568 = vmatpush1.bf16.msra.mxu0 0
      %569 = vmatprep.subr.bf16.mxu0 0
      %570 = vmatpush1.bf16.msra.mxu0 0
      %571 = vmatprep.subr.bf16.mxu0 0
      %572 = vmatpush1.bf16.msra.mxu0 0
      %573 = vmatprep.subr.bf16.mxu0 0
      %574 = vmatpush1.bf16.msra.mxu0 0
      %575 = vmatprep.subr.bf16.mxu0 0
      %576 = vmatpush1.bf16.msra.mxu0 0
      %577 = vmatprep.subr.bf16.mxu0 0
      %578 = vmatpush1.bf16.msra.mxu0 0
      %579 = vmatprep.subr.bf16.mxu0 0
      %580 = vmatpush1.bf16.msra.mxu0 0
      %581 = vmatprep.subr.bf16.mxu0 0
      %582 = vmatpush1.bf16.msra.mxu0 0
      %583 = vmatprep.mubr.bf16.mxu0 0
      %584 = vmatmul.mubr.bf16.gmra.mrb[0].mxu0 %v500
      %v585 = vpop.f32.mrb[0].mxu0
      %v586 = vadd.f32 0.0, %v585
      %v587 = vpop.f32.mrb[0].mxu0
      %v588 = vpop.f32.mrb[0].mxu0
      %v589 = vadd.f32 0.0, %v588
      %v590 = vpop.f32.mrb[0].mxu0
      %591 = vmatprep.mubr.bf16.mxu0 0
      %592 = vmatmul.mubr.bf16.gmra.mrb[0].mxu0 %v503
      %v593 = vpop.f32.mrb[0].mxu0
      %v594 = vadd.f32 0.0, %v593
      %v595 = vpop.f32.mrb[0].mxu0
      %v596 = vpop.f32.mrb[0].mxu0
      %v597 = vadd.f32 0.0, %v596
      %v598 = vpop.f32.mrb[0].mxu0
      %599 = vmatprep.mubr.bf16.mxu0 0
      %600 = vmatmul.mubr.bf16.gmra.mrb[0].mxu0 %v506
      %v601 = vpop.f32.mrb[0].mxu0
      %v602 = vadd.f32 0.0, %v601
      %v603 = vpop.f32.mrb[0].mxu0
      %v604 = vpop.f32.mrb[0].mxu0
      %v605 = vadd.f32 0.0, %v604
      %v606 = vpop.f32.mrb[0].mxu0
      %607 = vmatprep.mubr.bf16.mxu0 0
      %608 = vmatmul.mubr.bf16.gmra.mrb[0].mxu0 %v509
      %v609 = vpop.f32.mrb[0].mxu0
      %v610 = vadd.f32 0.0, %v609
      %v611 = vpop.f32.mrb[0].mxu0
      %v612 = vpop.f32.mrb[0].mxu0
      %v613 = vadd.f32 0.0, %v612
      %v614 = vpop.f32.mrb[0].mxu0
      %615 = vmatprep.mubr.bf16.mxu0 0
      %616 = vmatmul.mubr.bf16.gmra.mrb[0].mxu0 %v512
      %v617 = vpop.f32.mrb[0].mxu0
      %v618 = vadd.f32 0.0, %v617
      %v619 = vpop.f32.mrb[0].mxu0
      %v620 = vpop.f32.mrb[0].mxu0
      %v621 = vadd.f32 0.0, %v620
      %v622 = vpop.f32.mrb[0].mxu0
      %623 = vmatprep.mubr.bf16.mxu0 0
      %624 = vmatmul.mubr.bf16.gmra.mrb[0].mxu0 %v515
      %v625 = vpop.f32.mrb[0].mxu0
      %v626 = vadd.f32 0.0, %v625
      %v627 = vpop.f32.mrb[0].mxu0
      %v628 = vpop.f32.mrb[0].mxu0
      %v629 = vadd.f32 0.0, %v628
      %v630 = vpop.f32.mrb[0].mxu0
      %631 = vmatprep.mubr.bf16.mxu0 0
      %632 = vmatmul.mubr.bf16.gmra.mrb[0].mxu0 %v518
      %v633 = vpop.f32.mrb[0].mxu0
      %v634 = vadd.f32 0.0, %v633
      %v635 = vpop.f32.mrb[0].mxu0
      %v636 = vpop.f32.mrb[0].mxu0
      %v637 = vadd.f32 0.0, %v636
      %v638 = vpop.f32.mrb[0].mxu0
      %639 = vmatprep.mubr.bf16.mxu0 0
      %640 = vmatmul.mubr.bf16.gmra.mrb[0].mxu0 %v521
      %v641 = vpop.f32.mrb[0].mxu0
      %v642 = vadd.f32 0.0, %v641
      %v643 = vpop.f32.mrb[0].mxu0
      %v644 = vpop.f32.mrb[0].mxu0
      %v645 = vadd.f32 0.0, %v644
      %v646 = vpop.f32.mrb[0].mxu0
      %647 = vmatprep.mubr.bf16.mxu0 0
      %648 = vmatmul.mubr.bf16.gmra.mrb[0].mxu0 %v524
      %v649 = vpop.f32.mrb[0].mxu0
      %v650 = vadd.f32 0.0, %v649
      %v651 = vpop.f32.mrb[0].mxu0
      %v652 = vpop.f32.mrb[0].mxu0
      %v653 = vadd.f32 0.0, %v652
      %v654 = vpop.f32.mrb[0].mxu0
      %655 = vmatprep.mubr.bf16.mxu0 0
      %656 = vmatmul.mubr.bf16.gmra.mrb[0].mxu0 %v527
      %v657 = vpop.f32.mrb[0].mxu0
      %v658 = vadd.f32 0.0, %v657
      %v659 = vpop.f32.mrb[0].mxu0
      %v660 = vpop.f32.mrb[0].mxu0
      %v661 = vadd.f32 0.0, %v660
      %v662 = vpop.f32.mrb[0].mxu0
      %663 = vmatprep.mubr.bf16.mxu0 0
      %664 = vmatmul.mubr.bf16.gmra.mrb[0].mxu0 %v530
      %v665 = vpop.f32.mrb[0].mxu0
      %v666 = vadd.f32 0.0, %v665
      %v667 = vpop.f32.mrb[0].mxu0
      %v668 = vpop.f32.mrb[0].mxu0
      %v669 = vadd.f32 0.0, %v668
      %v670 = vpop.f32.mrb[0].mxu0
      %671 = vmatprep.mubr.bf16.mxu0 0
      %672 = vmatmul.mubr.bf16.gmra.mrb[0].mxu0 %v533
      %v673 = vpop.f32.mrb[0].mxu0
      %v674 = vadd.f32 0.0, %v673
      %v675 = vpop.f32.mrb[0].mxu0
      %v676 = vpop.f32.mrb[0].mxu0
      %v677 = vadd.f32 0.0, %v676
      %v678 = vpop.f32.mrb[0].mxu0
      %679 = vmatprep.mubr.bf16.mxu0 0
      %680 = vmatmul.mubr.bf16.gmra.mrb[0].mxu0 %v536
      %v681 = vpop.f32.mrb[0].mxu0
      %v682 = vadd.f32 0.0, %v681
      %v683 = vpop.f32.mrb[0].mxu0
      %v684 = vpop.f32.mrb[0].mxu0
      %v685 = vadd.f32 0.0, %v684
      %v686 = vpop.f32.mrb[0].mxu0
      %687 = vmatprep.mubr.bf16.mxu0 0
      %688 = vmatmul.mubr.bf16.gmra.mrb[0].mxu0 %v539
      %v689 = vpop.f32.mrb[0].mxu0
      %v690 = vadd.f32 0.0, %v689
      %v691 = vpop.f32.mrb[0].mxu0
      %v692 = vpop.f32.mrb[0].mxu0
      %v693 = vadd.f32 0.0, %v692
      %v694 = vpop.f32.mrb[0].mxu0
      %695 = vmatprep.mubr.bf16.mxu0 0
      %696 = vmatmul.mubr.bf16.gmra.mrb[0].mxu0 %v542
      %v697 = vpop.f32.mrb[0].mxu0
      %v698 = vadd.f32 0.0, %v697
      %v699 = vpop.f32.mrb[0].mxu0
      %v700 = vpop.f32.mrb[0].mxu0
      %v701 = vadd.f32 0.0, %v700
      %v702 = vpop.f32.mrb[0].mxu0
      %703 = vmatprep.mubr.bf16.mxu0 0
      %704 = vmatmul.mubr.bf16.gmra.mrb[0].mxu0 %v545
      %v705 = vpop.f32.mrb[0].mxu0
      %v706 = vadd.f32 0.0, %v705
      %v707 = vpop.f32.mrb[0].mxu0
      %v708 = vpop.f32.mrb[0].mxu0
      %v709 = vadd.f32 0.0, %v708
      %v710 = vpop.f32.mrb[0].mxu0
      %711 = vdwg.mxu0
      %v712 = vadd.f32 %v467, %v586
      %v713 = vadd.f32 %v468, %v589
      %v714 = vadd.f32 %v469, %v594
      %v715 = vadd.f32 %v470, %v597
      %v716 = vadd.f32 %v471, %v602
      %v717 = vadd.f32 %v472, %v605
      %v718 = vadd.f32 %v473, %v610
      %v719 = vadd.f32 %v474, %v613
      %v720 = vadd.f32 %v475, %v618
      %v721 = vadd.f32 %v476, %v621
      %v722 = vadd.f32 %v477, %v626
      %v723 = vadd.f32 %v478, %v629
      %v724 = vadd.f32 %v479, %v634
      %v725 = vadd.f32 %v480, %v637
      %v726 = vadd.f32 %v481, %v642
      %v727 = vadd.f32 %v482, %v645
      %v728 = vadd.f32 %v483, %v650
      %v729 = vadd.f32 %v484, %v653
      %v730 = vadd.f32 %v485, %v658
      %v731 = vadd.f32 %v486, %v661
      %v732 = vadd.f32 %v487, %v666
      %v733 = vadd.f32 %v488, %v669
      %v734 = vadd.f32 %v489, %v674
      %v735 = vadd.f32 %v490, %v677
      %v736 = vadd.f32 %v491, %v682
      %v737 = vadd.f32 %v492, %v685
      %v738 = vadd.f32 %v493, %v690
      %v739 = vadd.f32 %v494, %v693
      %v740 = vadd.f32 %v495, %v698
      %v741 = vadd.f32 %v496, %v701
      %v742 = vadd.f32 %v497, %v706
      %v743 = vadd.f32 %v498, %v709
      %744 = vst.msk [vmem:[#allocation3] sm:$0xff] %vm385, %v712
      %745 = vst.msk [vmem:[#allocation3 + $0x8] sm:$0xff] %vm385, %v713
      %746 = vst.msk [vmem:[#allocation3 + $0x10] sm:$0xff] %vm385, %v714
      %747 = vst.msk [vmem:[#allocation3 + $0x18] sm:$0xff] %vm385, %v715
      %748 = vst.msk [vmem:[#allocation3 + $0x20] sm:$0xff] %vm385, %v716
      %749 = vst.msk [vmem:[#allocation3 + $0x28] sm:$0xff] %vm385, %v717
      %750 = vst.msk [vmem:[#allocation3 + $0x30] sm:$0xff] %vm385, %v718
      %751 = vst.msk [vmem:[#allocation3 + $0x38] sm:$0xff] %vm385, %v719
      %752 = vst.msk [vmem:[#allocation3 + $0x40] sm:$0xff] %vm385, %v720
      %753 = vst.msk [vmem:[#allocation3 + $0x48] sm:$0xff] %vm385, %v721
      %754 = vst.msk [vmem:[#allocation3 + $0x50] sm:$0xff] %vm385, %v722
      %755 = vst.msk [vmem:[#allocation3 + $0x58] sm:$0xff] %vm385, %v723
      %756 = vst.msk [vmem:[#allocation3 + $0x60] sm:$0xff] %vm385, %v724
      %757 = vst.msk [vmem:[#allocation3 + $0x68] sm:$0xff] %vm385, %v725
      %758 = vst.msk [vmem:[#allocation3 + $0x70] sm:$0xff] %vm385, %v726
      %759 = vst.msk [vmem:[#allocation3 + $0x78] sm:$0xff] %vm385, %v727
      %760 = vst.msk [vmem:[#allocation3 + $0x80] sm:$0xff] %vm385, %v728
      %761 = vst.msk [vmem:[#allocation3 + $0x88] sm:$0xff] %vm385, %v729
      %762 = vst.msk [vmem:[#allocation3 + $0x90] sm:$0xff] %vm385, %v730
      %763 = vst.msk [vmem:[#allocation3 + $0x98] sm:$0xff] %vm385, %v731
      %764 = vst.msk [vmem:[#allocation3 + $0xa0] sm:$0xff] %vm385, %v732
      %765 = vst.msk [vmem:[#allocation3 + $0xa8] sm:$0xff] %vm385, %v733
      %766 = vst.msk [vmem:[#allocation3 + $0xb0] sm:$0xff] %vm385, %v734
      %767 = vst.msk [vmem:[#allocation3 + $0xb8] sm:$0xff] %vm385, %v735
      %768 = vst.msk [vmem:[#allocation3 + $0xc0] sm:$0xff] %vm385, %v736
      %769 = vst.msk [vmem:[#allocation3 + $0xc8] sm:$0xff] %vm385, %v737
      %770 = vst.msk [vmem:[#allocation3 + $0xd0] sm:$0xff] %vm385, %v738
      %771 = vst.msk [vmem:[#allocation3 + $0xd8] sm:$0xff] %vm385, %v739
      %772 = vst.msk [vmem:[#allocation3 + $0xe0] sm:$0xff] %vm385, %v740
      %773 = vst.msk [vmem:[#allocation3 + $0xe8] sm:$0xff] %vm385, %v741
      %774 = vst.msk [vmem:[#allocation3 + $0xf0] sm:$0xff] %vm385, %v742
      %775 = vst.msk [vmem:[#allocation3 + $0xf8] sm:$0xff] %vm385, %v743
      %v776 = vld [vmem:[#allocation2 + $0x1] sm:$0xff]
      %v777 = vld [vmem:[#allocation2 + $0x9] sm:$0xff]
      %v778 = vld [vmem:[#allocation2 + $0x19] sm:$0xff]
      %v779 = vld [vmem:[#allocation2 + $0x21] sm:$0xff]
      %v780 = vld [vmem:[#allocation2 + $0x31] sm:$0xff]
      %v781 = vld [vmem:[#allocation2 + $0x39] sm:$0xff]
      %v782 = vld [vmem:[#allocation2 + $0x49] sm:$0xff]
      %v783 = vld [vmem:[#allocation2 + $0x51] sm:$0xff]
      %v784 = vld [vmem:[#allocation2 + $0x61] sm:$0xff]
      %v785 = vld [vmem:[#allocation2 + $0x69] sm:$0xff]
      %v786 = vld [vmem:[#allocation2 + $0x79] sm:$0xff]
      %v787 = vld [vmem:[#allocation2 + $0x81] sm:$0xff]
      %v788 = vld [vmem:[#allocation2 + $0x91] sm:$0xff]
      %v789 = vld [vmem:[#allocation2 + $0x99] sm:$0xff]
      %v790 = vld [vmem:[#allocation2 + $0xa9] sm:$0xff]
      %v791 = vld [vmem:[#allocation2 + $0xb1] sm:$0xff]
      %v792 = vld [vmem:[#allocation2 + $0xc1] sm:$0xff]
      %v793 = vld [vmem:[#allocation2 + $0xc9] sm:$0xff]
      %v794 = vld [vmem:[#allocation2 + $0xd9] sm:$0xff]
      %v795 = vld [vmem:[#allocation2 + $0xe1] sm:$0xff]
      %v796 = vld [vmem:[#allocation2 + $0xf1] sm:$0xff]
      %v797 = vld [vmem:[#allocation2 + $0xf9] sm:$0xff]
      %v798 = vld [vmem:[#allocation2 + $0x109] sm:$0xff]
      %v799 = vld [vmem:[#allocation2 + $0x111] sm:$0xff]
      %v800 = vld [vmem:[#allocation2 + $0x121] sm:$0xff]
      %v801 = vld [vmem:[#allocation2 + $0x129] sm:$0xff]
      %v802 = vld [vmem:[#allocation2 + $0x139] sm:$0xff]
      %v803 = vld [vmem:[#allocation2 + $0x141] sm:$0xff]
      %v804 = vld [vmem:[#allocation2 + $0x151] sm:$0xff]
      %v805 = vld [vmem:[#allocation2 + $0x159] sm:$0xff]
      %v806 = vld [vmem:[#allocation2 + $0x169] sm:$0xff]
      %v807 = vld [vmem:[#allocation2 + $0x171] sm:$0xff]
      %v808 = vpack.c.bf16 %v777, %v776
      %v809 = vpack.c.bf16 %v779, %v778
      %v810 = vpack.c.bf16 %v781, %v780
      %v811 = vpack.c.bf16 %v783, %v782
      %v812 = vpack.c.bf16 %v785, %v784
      %v813 = vpack.c.bf16 %v787, %v786
      %v814 = vpack.c.bf16 %v789, %v788
      %v815 = vpack.c.bf16 %v791, %v790
      %v816 = vpack.c.bf16 %v793, %v792
      %v817 = vpack.c.bf16 %v795, %v794
      %v818 = vpack.c.bf16 %v797, %v796
      %v819 = vpack.c.bf16 %v799, %v798
      %v820 = vpack.c.bf16 %v801, %v800
      %v821 = vpack.c.bf16 %v803, %v802
      %v822 = vpack.c.bf16 %v805, %v804
      %v823 = vpack.c.bf16 %v807, %v806
      %v824 = vld [vmem:[%s248] sm:$0xc]
      %v825 = vld [vmem:[#allocation3] sm:$0xff]
      %v826 = vld [vmem:[#allocation3 + $0x8] sm:$0xff]
      %v827 = vld [vmem:[#allocation3 + $0x10] sm:$0xff]
      %v828 = vld [vmem:[#allocation3 + $0x18] sm:$0xff]
      %v829 = vld [vmem:[#allocation3 + $0x20] sm:$0xff]
      %v830 = vld [vmem:[#allocation3 + $0x28] sm:$0xff]
      %v831 = vld [vmem:[#allocation3 + $0x30] sm:$0xff]
      %v832 = vld [vmem:[#allocation3 + $0x38] sm:$0xff]
      %v833 = vld [vmem:[#allocation3 + $0x40] sm:$0xff]
      %v834 = vld [vmem:[#allocation3 + $0x48] sm:$0xff]
      %v835 = vld [vmem:[#allocation3 + $0x50] sm:$0xff]
      %v836 = vld [vmem:[#allocation3 + $0x58] sm:$0xff]
      %v837 = vld [vmem:[#allocation3 + $0x60] sm:$0xff]
      %v838 = vld [vmem:[#allocation3 + $0x68] sm:$0xff]
      %v839 = vld [vmem:[#allocation3 + $0x70] sm:$0xff]
      %v840 = vld [vmem:[#allocation3 + $0x78] sm:$0xff]
      %v841 = vld [vmem:[#allocation3 + $0x80] sm:$0xff]
      %v842 = vld [vmem:[#allocation3 + $0x88] sm:$0xff]
      %v843 = vld [vmem:[#allocation3 + $0x90] sm:$0xff]
      %v844 = vld [vmem:[#allocation3 + $0x98] sm:$0xff]
      %v845 = vld [vmem:[#allocation3 + $0xa0] sm:$0xff]
      %v846 = vld [vmem:[#allocation3 + $0xa8] sm:$0xff]
      %v847 = vld [vmem:[#allocation3 + $0xb0] sm:$0xff]
      %v848 = vld [vmem:[#allocation3 + $0xb8] sm:$0xff]
      %v849 = vld [vmem:[#allocation3 + $0xc0] sm:$0xff]
      %v850 = vld [vmem:[#allocation3 + $0xc8] sm:$0xff]
      %v851 = vld [vmem:[#allocation3 + $0xd0] sm:$0xff]
      %v852 = vld [vmem:[#allocation3 + $0xd8] sm:$0xff]
      %v853 = vld [vmem:[#allocation3 + $0xe0] sm:$0xff]
      %v854 = vld [vmem:[#allocation3 + $0xe8] sm:$0xff]
      %v855 = vld [vmem:[#allocation3 + $0xf0] sm:$0xff]
      %v856 = vld [vmem:[#allocation3 + $0xf8] sm:$0xff]
      %v858 = vunpack.c.l.b16 %v824
      %v859 = vpack.c.b16 %v858, %v858
      %v860 = vrot.slane %v859, 2
      %v862 = vsel %vm264, %v808, 0
      %v865 = vsel %vm264, %v809, 0
      %v868 = vsel %vm264, %v810, 0
      %v871 = vsel %vm264, %v811, 0
      %v874 = vsel %vm264, %v812, 0
      %v877 = vsel %vm264, %v813, 0
      %v880 = vsel %vm264, %v814, 0
      %v883 = vsel %vm264, %v815, 0
      %v886 = vsel %vm264, %v816, 0
      %v889 = vsel %vm264, %v817, 0
      %v892 = vsel %vm264, %v818, 0
      %v895 = vsel %vm264, %v819, 0
      %v898 = vsel %vm264, %v820, 0
      %v901 = vsel %vm264, %v821, 0
      %v904 = vsel %vm264, %v822, 0
      %v907 = vsel %vm264, %v823, 0
      %v910 = vsel %vm547, %v860, 0
      %912 = vmatprep.subr.bf16.mxu0 0
      %913 = vmatpush1.bf16.msra.mxu0 %v910
      %914 = vmatprep.subr.bf16.mxu0 0
      %915 = vmatpush1.bf16.msra.mxu0 0
      %916 = vmatprep.subr.bf16.mxu0 0
      %917 = vmatpush1.bf16.msra.mxu0 0
      %918 = vmatprep.subr.bf16.mxu0 0
      %919 = vmatpush1.bf16.msra.mxu0 0
      %920 = vmatprep.subr.bf16.mxu0 0
      %921 = vmatpush1.bf16.msra.mxu0 0
      %922 = vmatprep.subr.bf16.mxu0 0
      %923 = vmatpush1.bf16.msra.mxu0 0
      %924 = vmatprep.subr.bf16.mxu0 0
      %925 = vmatpush1.bf16.msra.mxu0 0
      %926 = vmatprep.subr.bf16.mxu0 0
      %927 = vmatpush1.bf16.msra.mxu0 0
      %928 = vmatprep.subr.bf16.mxu0 0
      %929 = vmatpush1.bf16.msra.mxu0 0
      %930 = vmatprep.subr.bf16.mxu0 0
      %931 = vmatpush1.bf16.msra.mxu0 0
      %932 = vmatprep.subr.bf16.mxu0 0
      %933 = vmatpush1.bf16.msra.mxu0 0
      %934 = vmatprep.subr.bf16.mxu0 0
      %935 = vmatpush1.bf16.msra.mxu0 0
      %936 = vmatprep.subr.bf16.mxu0 0
      %937 = vmatpush1.bf16.msra.mxu0 0
      %938 = vmatprep.subr.bf16.mxu0 0
      %939 = vmatpush1.bf16.msra.mxu0 0
      %940 = vmatprep.subr.bf16.mxu0 0
      %941 = vmatpush1.bf16.msra.mxu0 0
      %942 = vmatprep.subr.bf16.mxu0 0
      %943 = vmatpush1.bf16.msra.mxu0 0
      %944 = vmatprep.mubr.bf16.mxu0 0
      %945 = vmatmul.mubr.bf16.gmra.mrb[0].mxu0 %v862
      %v946 = vpop.f32.mrb[0].mxu0
      %v947 = vadd.f32 0.0, %v946
      %v948 = vpop.f32.mrb[0].mxu0
      %v949 = vpop.f32.mrb[0].mxu0
      %v950 = vadd.f32 0.0, %v949
      %v951 = vpop.f32.mrb[0].mxu0
      %952 = vmatprep.mubr.bf16.mxu0 0
      %953 = vmatmul.mubr.bf16.gmra.mrb[0].mxu0 %v865
      %v954 = vpop.f32.mrb[0].mxu0
      %v955 = vadd.f32 0.0, %v954
      %v956 = vpop.f32.mrb[0].mxu0
      %v957 = vpop.f32.mrb[0].mxu0
      %v958 = vadd.f32 0.0, %v957
      %v959 = vpop.f32.mrb[0].mxu0
      %960 = vmatprep.mubr.bf16.mxu0 0
      %961 = vmatmul.mubr.bf16.gmra.mrb[0].mxu0 %v868
      %v962 = vpop.f32.mrb[0].mxu0
      %v963 = vadd.f32 0.0, %v962
      %v964 = vpop.f32.mrb[0].mxu0
      %v965 = vpop.f32.mrb[0].mxu0
      %v966 = vadd.f32 0.0, %v965
      %v967 = vpop.f32.mrb[0].mxu0
      %968 = vmatprep.mubr.bf16.mxu0 0
      %969 = vmatmul.mubr.bf16.gmra.mrb[0].mxu0 %v871
      %v970 = vpop.f32.mrb[0].mxu0
      %v971 = vadd.f32 0.0, %v970
      %v972 = vpop.f32.mrb[0].mxu0
      %v973 = vpop.f32.mrb[0].mxu0
      %v974 = vadd.f32 0.0, %v973
      %v975 = vpop.f32.mrb[0].mxu0
      %976 = vmatprep.mubr.bf16.mxu0 0
      %977 = vmatmul.mubr.bf16.gmra.mrb[0].mxu0 %v874
      %v978 = vpop.f32.mrb[0].mxu0
      %v979 = vadd.f32 0.0, %v978
      %v980 = vpop.f32.mrb[0].mxu0
      %v981 = vpop.f32.mrb[0].mxu0
      %v982 = vadd.f32 0.0, %v981
      %v983 = vpop.f32.mrb[0].mxu0
      %984 = vmatprep.mubr.bf16.mxu0 0
      %985 = vmatmul.mubr.bf16.gmra.mrb[0].mxu0 %v877
      %v986 = vpop.f32.mrb[0].mxu0
      %v987 = vadd.f32 0.0, %v986
      %v988 = vpop.f32.mrb[0].mxu0
      %v989 = vpop.f32.mrb[0].mxu0
      %v990 = vadd.f32 0.0, %v989
      %v991 = vpop.f32.mrb[0].mxu0
      %992 = vmatprep.mubr.bf16.mxu0 0
      %993 = vmatmul.mubr.bf16.gmra.mrb[0].mxu0 %v880
      %v994 = vpop.f32.mrb[0].mxu0
      %v995 = vadd.f32 0.0, %v994
      %v996 = vpop.f32.mrb[0].mxu0
      %v997 = vpop.f32.mrb[0].mxu0
      %v998 = vadd.f32 0.0, %v997
      %v999 = vpop.f32.mrb[0].mxu0
      %1000 = vmatprep.mubr.bf16.mxu0 0
      %1001 = vmatmul.mubr.bf16.gmra.mrb[0].mxu0 %v883
      %v1002 = vpop.f32.mrb[0].mxu0
      %v1003 = vadd.f32 0.0, %v1002
      %v1004 = vpop.f32.mrb[0].mxu0
      %v1005 = vpop.f32.mrb[0].mxu0
      %v1006 = vadd.f32 0.0, %v1005
      %v1007 = vpop.f32.mrb[0].mxu0
      %1008 = vmatprep.mubr.bf16.mxu0 0
      %1009 = vmatmul.mubr.bf16.gmra.mrb[0].mxu0 %v886
      %v1010 = vpop.f32.mrb[0].mxu0
      %v1011 = vadd.f32 0.0, %v1010
      %v1012 = vpop.f32.mrb[0].mxu0
      %v1013 = vpop.f32.mrb[0].mxu0
      %v1014 = vadd.f32 0.0, %v1013
      %v1015 = vpop.f32.mrb[0].mxu0
      %1016 = vmatprep.mubr.bf16.mxu0 0
      %1017 = vmatmul.mubr.bf16.gmra.mrb[0].mxu0 %v889
      %v1018 = vpop.f32.mrb[0].mxu0
      %v1019 = vadd.f32 0.0, %v1018
      %v1020 = vpop.f32.mrb[0].mxu0
      %v1021 = vpop.f32.mrb[0].mxu0
      %v1022 = vadd.f32 0.0, %v1021
      %v1023 = vpop.f32.mrb[0].mxu0
      %1024 = vmatprep.mubr.bf16.mxu0 0
      %1025 = vmatmul.mubr.bf16.gmra.mrb[0].mxu0 %v892
      %v1026 = vpop.f32.mrb[0].mxu0
      %v1027 = vadd.f32 0.0, %v1026
      %v1028 = vpop.f32.mrb[0].mxu0
      %v1029 = vpop.f32.mrb[0].mxu0
      %v1030 = vadd.f32 0.0, %v1029
      %v1031 = vpop.f32.mrb[0].mxu0
      %1032 = vmatprep.mubr.bf16.mxu0 0
      %1033 = vmatmul.mubr.bf16.gmra.mrb[0].mxu0 %v895
      %v1034 = vpop.f32.mrb[0].mxu0
      %v1035 = vadd.f32 0.0, %v1034
      %v1036 = vpop.f32.mrb[0].mxu0
      %v1037 = vpop.f32.mrb[0].mxu0
      %v1038 = vadd.f32 0.0, %v1037
      %v1039 = vpop.f32.mrb[0].mxu0
      %1040 = vmatprep.mubr.bf16.mxu0 0
      %1041 = vmatmul.mubr.bf16.gmra.mrb[0].mxu0 %v898
      %v1042 = vpop.f32.mrb[0].mxu0
      %v1043 = vadd.f32 0.0, %v1042
      %v1044 = vpop.f32.mrb[0].mxu0
      %v1045 = vpop.f32.mrb[0].mxu0
      %v1046 = vadd.f32 0.0, %v1045
      %v1047 = vpop.f32.mrb[0].mxu0
      %1048 = vmatprep.mubr.bf16.mxu0 0
      %1049 = vmatmul.mubr.bf16.gmra.mrb[0].mxu0 %v901
      %v1050 = vpop.f32.mrb[0].mxu0
      %v1051 = vadd.f32 0.0, %v1050
      %v1052 = vpop.f32.mrb[0].mxu0
      %v1053 = vpop.f32.mrb[0].mxu0
      %v1054 = vadd.f32 0.0, %v1053
      %v1055 = vpop.f32.mrb[0].mxu0
      %1056 = vmatprep.mubr.bf16.mxu0 0
      %1057 = vmatmul.mubr.bf16.gmra.mrb[0].mxu0 %v904
      %v1058 = vpop.f32.mrb[0].mxu0
      %v1059 = vadd.f32 0.0, %v1058
      %v1060 = vpop.f32.mrb[0].mxu0
      %v1061 = vpop.f32.mrb[0].mxu0
      %v1062 = vadd.f32 0.0, %v1061
      %v1063 = vpop.f32.mrb[0].mxu0
      %1064 = vmatprep.mubr.bf16.mxu0 0
      %1065 = vmatmul.mubr.bf16.gmra.mrb[0].mxu0 %v907
      %v1066 = vpop.f32.mrb[0].mxu0
      %v1067 = vadd.f32 0.0, %v1066
      %v1068 = vpop.f32.mrb[0].mxu0
      %v1069 = vpop.f32.mrb[0].mxu0
      %v1070 = vadd.f32 0.0, %v1069
      %v1071 = vpop.f32.mrb[0].mxu0
      %1072 = vdwg.mxu0
      %v1073 = vadd.f32 %v825, %v947
      %v1074 = vadd.f32 %v826, %v950
      %v1075 = vadd.f32 %v827, %v955
      %v1076 = vadd.f32 %v828, %v958
      %v1077 = vadd.f32 %v829, %v963
      %v1078 = vadd.f32 %v830, %v966
      %v1079 = vadd.f32 %v831, %v971
      %v1080 = vadd.f32 %v832, %v974
      %v1081 = vadd.f32 %v833, %v979
      %v1082 = vadd.f32 %v834, %v982
      %v1083 = vadd.f32 %v835, %v987
      %v1084 = vadd.f32 %v836, %v990
      %v1085 = vadd.f32 %v837, %v995
      %v1086 = vadd.f32 %v838, %v998
      %v1087 = vadd.f32 %v839, %v1003
      %v1088 = vadd.f32 %v840, %v1006
      %v1089 = vadd.f32 %v841, %v1011
      %v1090 = vadd.f32 %v842, %v1014
      %v1091 = vadd.f32 %v843, %v1019
      %v1092 = vadd.f32 %v844, %v1022
      %v1093 = vadd.f32 %v845, %v1027
      %v1094 = vadd.f32 %v846, %v1030
      %v1095 = vadd.f32 %v847, %v1035
      %v1096 = vadd.f32 %v848, %v1038
      %v1097 = vadd.f32 %v849, %v1043
      %v1098 = vadd.f32 %v850, %v1046
      %v1099 = vadd.f32 %v851, %v1051
      %v1100 = vadd.f32 %v852, %v1054
      %v1101 = vadd.f32 %v853, %v1059
      %v1102 = vadd.f32 %v854, %v1062
      %v1103 = vadd.f32 %v855, %v1067
      %v1104 = vadd.f32 %v856, %v1070
      %1105 = vst.msk [vmem:[#allocation3] sm:$0xff] %vm385, %v1073
      %1106 = vst.msk [vmem:[#allocation3 + $0x8] sm:$0xff] %vm385, %v1074
      %1107 = vst.msk [vmem:[#allocation3 + $0x10] sm:$0xff] %vm385, %v1075
      %1108 = vst.msk [vmem:[#allocation3 + $0x18] sm:$0xff] %vm385, %v1076
      %1109 = vst.msk [vmem:[#allocation3 + $0x20] sm:$0xff] %vm385, %v1077
      %1110 = vst.msk [vmem:[#allocation3 + $0x28] sm:$0xff] %vm385, %v1078
      %1111 = vst.msk [vmem:[#allocation3 + $0x30] sm:$0xff] %vm385, %v1079
      %1112 = vst.msk [vmem:[#allocation3 + $0x38] sm:$0xff] %vm385, %v1080
      %1113 = vst.msk [vmem:[#allocation3 + $0x40] sm:$0xff] %vm385, %v1081
      %1114 = vst.msk [vmem:[#allocation3 + $0x48] sm:$0xff] %vm385, %v1082
      %1115 = vst.msk [vmem:[#allocation3 + $0x50] sm:$0xff] %vm385, %v1083
      %1116 = vst.msk [vmem:[#allocation3 + $0x58] sm:$0xff] %vm385, %v1084
      %1117 = vst.msk [vmem:[#allocation3 + $0x60] sm:$0xff] %vm385, %v1085
      %1118 = vst.msk [vmem:[#allocation3 + $0x68] sm:$0xff] %vm385, %v1086
      %1119 = vst.msk [vmem:[#allocation3 + $0x70] sm:$0xff] %vm385, %v1087
      %1120 = vst.msk [vmem:[#allocation3 + $0x78] sm:$0xff] %vm385, %v1088
      %1121 = vst.msk [vmem:[#allocation3 + $0x80] sm:$0xff] %vm385, %v1089
      %1122 = vst.msk [vmem:[#allocation3 + $0x88] sm:$0xff] %vm385, %v1090
      %1123 = vst.msk [vmem:[#allocation3 + $0x90] sm:$0xff] %vm385, %v1091
      %1124 = vst.msk [vmem:[#allocation3 + $0x98] sm:$0xff] %vm385, %v1092
      %1125 = vst.msk [vmem:[#allocation3 + $0xa0] sm:$0xff] %vm385, %v1093
      %1126 = vst.msk [vmem:[#allocation3 + $0xa8] sm:$0xff] %vm385, %v1094
      %1127 = vst.msk [vmem:[#allocation3 + $0xb0] sm:$0xff] %vm385, %v1095
      %1128 = vst.msk [vmem:[#allocation3 + $0xb8] sm:$0xff] %vm385, %v1096
      %1129 = vst.msk [vmem:[#allocation3 + $0xc0] sm:$0xff] %vm385, %v1097
      %1130 = vst.msk [vmem:[#allocation3 + $0xc8] sm:$0xff] %vm385, %v1098
      %1131 = vst.msk [vmem:[#allocation3 + $0xd0] sm:$0xff] %vm385, %v1099
      %1132 = vst.msk [vmem:[#allocation3 + $0xd8] sm:$0xff] %vm385, %v1100
      %1133 = vst.msk [vmem:[#allocation3 + $0xe0] sm:$0xff] %vm385, %v1101
      %1134 = vst.msk [vmem:[#allocation3 + $0xe8] sm:$0xff] %vm385, %v1102
      %1135 = vst.msk [vmem:[#allocation3 + $0xf0] sm:$0xff] %vm385, %v1103
      %1136 = vst.msk [vmem:[#allocation3 + $0xf8] sm:$0xff] %vm385, %v1104
      %v1137 = vld [vmem:[#allocation2 + $0x2] sm:$0xff]
      %v1138 = vld [vmem:[#allocation2 + $0xa] sm:$0xff]
      %v1139 = vld [vmem:[#allocation2 + $0x1a] sm:$0xff]
      %v1140 = vld [vmem:[#allocation2 + $0x22] sm:$0xff]
      %v1141 = vld [vmem:[#allocation2 + $0x32] sm:$0xff]
      %v1142 = vld [vmem:[#allocation2 + $0x3a] sm:$0xff]
      %v1143 = vld [vmem:[#allocation2 + $0x4a] sm:$0xff]
      %v1144 = vld [vmem:[#allocation2 + $0x52] sm:$0xff]
      %v1145 = vld [vmem:[#allocation2 + $0x62] sm:$0xff]
      %v1146 = vld [vmem:[#allocation2 + $0x6a] sm:$0xff]
      %v1147 = vld [vmem:[#allocation2 + $0x7a] sm:$0xff]
      %v1148 = vld [vmem:[#allocation2 + $0x82] sm:$0xff]
      %v1149 = vld [vmem:[#allocation2 + $0x92] sm:$0xff]
      %v1150 = vld [vmem:[#allocation2 + $0x9a] sm:$0xff]
      %v1151 = vld [vmem:[#allocation2 + $0xaa] sm:$0xff]
      %v1152 = vld [vmem:[#allocation2 + $0xb2] sm:$0xff]
      %v1153 = vld [vmem:[#allocation2 + $0xc2] sm:$0xff]
      %v1154 = vld [vmem:[#allocation2 + $0xca] sm:$0xff]
      %v1155 = vld [vmem:[#allocation2 + $0xda] sm:$0xff]
      %v1156 = vld [vmem:[#allocation2 + $0xe2] sm:$0xff]
      %v1157 = vld [vmem:[#allocation2 + $0xf2] sm:$0xff]
      %v1158 = vld [vmem:[#allocation2 + $0xfa] sm:$0xff]
      %v1159 = vld [vmem:[#allocation2 + $0x10a] sm:$0xff]
      %v1160 = vld [vmem:[#allocation2 + $0x112] sm:$0xff]
      %v1161 = vld [vmem:[#allocation2 + $0x122] sm:$0xff]
      %v1162 = vld [vmem:[#allocation2 + $0x12a] sm:$0xff]
      %v1163 = vld [vmem:[#allocation2 + $0x13a] sm:$0xff]
      %v1164 = vld [vmem:[#allocation2 + $0x142] sm:$0xff]
      %v1165 = vld [vmem:[#allocation2 + $0x152] sm:$0xff]
      %v1166 = vld [vmem:[#allocation2 + $0x15a] sm:$0xff]
      %v1167 = vld [vmem:[#allocation2 + $0x16a] sm:$0xff]
      %v1168 = vld [vmem:[#allocation2 + $0x172] sm:$0xff]
      %v1169 = vpack.c.bf16 %v1138, %v1137
      %v1170 = vpack.c.bf16 %v1140, %v1139
      %v1171 = vpack.c.bf16 %v1142, %v1141
      %v1172 = vpack.c.bf16 %v1144, %v1143
      %v1173 = vpack.c.bf16 %v1146, %v1145
      %v1174 = vpack.c.bf16 %v1148, %v1147
      %v1175 = vpack.c.bf16 %v1150, %v1149
      %v1176 = vpack.c.bf16 %v1152, %v1151
      %v1177 = vpack.c.bf16 %v1154, %v1153
      %v1178 = vpack.c.bf16 %v1156, %v1155
      %v1179 = vpack.c.bf16 %v1158, %v1157
      %v1180 = vpack.c.bf16 %v1160, %v1159
      %v1181 = vpack.c.bf16 %v1162, %v1161
      %v1182 = vpack.c.bf16 %v1164, %v1163
      %v1183 = vpack.c.bf16 %v1166, %v1165
      %v1184 = vpack.c.bf16 %v1168, %v1167
      %v1185 = vld [vmem:[%s248 + $0x4] sm:$0x3]
      %v1186 = vld [vmem:[#allocation3] sm:$0xff]
      %v1187 = vld [vmem:[#allocation3 + $0x8] sm:$0xff]
      %v1188 = vld [vmem:[#allocation3 + $0x10] sm:$0xff]
      %v1189 = vld [vmem:[#allocation3 + $0x18] sm:$0xff]
      %v1190 = vld [vmem:[#allocation3 + $0x20] sm:$0xff]
      %v1191 = vld [vmem:[#allocation3 + $0x28] sm:$0xff]
      %v1192 = vld [vmem:[#allocation3 + $0x30] sm:$0xff]
      %v1193 = vld [vmem:[#allocation3 + $0x38] sm:$0xff]
      %v1194 = vld [vmem:[#allocation3 + $0x40] sm:$0xff]
      %v1195 = vld [vmem:[#allocation3 + $0x48] sm:$0xff]
      %v1196 = vld [vmem:[#allocation3 + $0x50] sm:$0xff]
      %v1197 = vld [vmem:[#allocation3 + $0x58] sm:$0xff]
      %v1198 = vld [vmem:[#allocation3 + $0x60] sm:$0xff]
      %v1199 = vld [vmem:[#allocation3 + $0x68] sm:$0xff]
      %v1200 = vld [vmem:[#allocation3 + $0x70] sm:$0xff]
      %v1201 = vld [vmem:[#allocation3 + $0x78] sm:$0xff]
      %v1202 = vld [vmem:[#allocation3 + $0x80] sm:$0xff]
      %v1203 = vld [vmem:[#allocation3 + $0x88] sm:$0xff]
      %v1204 = vld [vmem:[#allocation3 + $0x90] sm:$0xff]
      %v1205 = vld [vmem:[#allocation3 + $0x98] sm:$0xff]
      %v1206 = vld [vmem:[#allocation3 + $0xa0] sm:$0xff]
      %v1207 = vld [vmem:[#allocation3 + $0xa8] sm:$0xff]
      %v1208 = vld [vmem:[#allocation3 + $0xb0] sm:$0xff]
      %v1209 = vld [vmem:[#allocation3 + $0xb8] sm:$0xff]
      %v1210 = vld [vmem:[#allocation3 + $0xc0] sm:$0xff]
      %v1211 = vld [vmem:[#allocation3 + $0xc8] sm:$0xff]
      %v1212 = vld [vmem:[#allocation3 + $0xd0] sm:$0xff]
      %v1213 = vld [vmem:[#allocation3 + $0xd8] sm:$0xff]
      %v1214 = vld [vmem:[#allocation3 + $0xe0] sm:$0xff]
      %v1215 = vld [vmem:[#allocation3 + $0xe8] sm:$0xff]
      %v1216 = vld [vmem:[#allocation3 + $0xf0] sm:$0xff]
      %v1217 = vld [vmem:[#allocation3 + $0xf8] sm:$0xff]
      %v1219 = vsel %vm264, %v1169, 0
      %v1222 = vsel %vm264, %v1170, 0
      %v1225 = vsel %vm264, %v1171, 0
      %v1228 = vsel %vm264, %v1172, 0
      %v1231 = vsel %vm264, %v1173, 0
      %v1234 = vsel %vm264, %v1174, 0
      %v1237 = vsel %vm264, %v1175, 0
      %v1240 = vsel %vm264, %v1176, 0
      %v1243 = vsel %vm264, %v1177, 0
      %v1246 = vsel %vm264, %v1178, 0
      %v1249 = vsel %vm264, %v1179, 0
      %v1252 = vsel %vm264, %v1180, 0
      %v1255 = vsel %vm264, %v1181, 0
      %v1258 = vsel %vm264, %v1182, 0
      %v1261 = vsel %vm264, %v1183, 0
      %v1264 = vsel %vm264, %v1184, 0
      %v1267 = vsel %vm547, %v1185, 0
      %1269 = vmatprep.subr.bf16.mxu0 0
      %1270 = vmatpush1.bf16.msra.mxu0 %v1267
      %1271 = vmatprep.subr.bf16.mxu0 0
      %1272 = vmatpush1.bf16.msra.mxu0 0
      %1273 = vmatprep.subr.bf16.mxu0 0
      %1274 = vmatpush1.bf16.msra.mxu0 0
      %1275 = vmatprep.subr.bf16.mxu0 0
      %1276 = vmatpush1.bf16.msra.mxu0 0
      %1277 = vmatprep.subr.bf16.mxu0 0
      %1278 = vmatpush1.bf16.msra.mxu0 0
      %1279 = vmatprep.subr.bf16.mxu0 0
      %1280 = vmatpush1.bf16.msra.mxu0 0
      %1281 = vmatprep.subr.bf16.mxu0 0
      %1282 = vmatpush1.bf16.msra.mxu0 0
      %1283 = vmatprep.subr.bf16.mxu0 0
      %1284 = vmatpush1.bf16.msra.mxu0 0
      %1285 = vmatprep.subr.bf16.mxu0 0
      %1286 = vmatpush1.bf16.msra.mxu0 0
      %1287 = vmatprep.subr.bf16.mxu0 0
      %1288 = vmatpush1.bf16.msra.mxu0 0
      %1289 = vmatprep.subr.bf16.mxu0 0
      %1290 = vmatpush1.bf16.msra.mxu0 0
      %1291 = vmatprep.subr.bf16.mxu0 0
      %1292 = vmatpush1.bf16.msra.mxu0 0
      %1293 = vmatprep.subr.bf16.mxu0 0
      %1294 = vmatpush1.bf16.msra.mxu0 0
      %1295 = vmatprep.subr.bf16.mxu0 0
      %1296 = vmatpush1.bf16.msra.mxu0 0
      %1297 = vmatprep.subr.bf16.mxu0 0
      %1298 = vmatpush1.bf16.msra.mxu0 0
      %1299 = vmatprep.subr.bf16.mxu0 0
      %1300 = vmatpush1.bf16.msra.mxu0 0
      %1301 = vmatprep.mubr.bf16.mxu0 0
      %1302 = vmatmul.mubr.bf16.gmra.mrb[0].mxu0 %v1219
      %v1303 = vpop.f32.mrb[0].mxu0
      %v1304 = vadd.f32 0.0, %v1303
      %v1305 = vpop.f32.mrb[0].mxu0
      %v1306 = vpop.f32.mrb[0].mxu0
      %v1307 = vadd.f32 0.0, %v1306
      %v1308 = vpop.f32.mrb[0].mxu0
      %1309 = vmatprep.mubr.bf16.mxu0 0
      %1310 = vmatmul.mubr.bf16.gmra.mrb[0].mxu0 %v1222
      %v1311 = vpop.f32.mrb[0].mxu0
      %v1312 = vadd.f32 0.0, %v1311
      %v1313 = vpop.f32.mrb[0].mxu0
      %v1314 = vpop.f32.mrb[0].mxu0
      %v1315 = vadd.f32 0.0, %v1314
      %v1316 = vpop.f32.mrb[0].mxu0
      %1317 = vmatprep.mubr.bf16.mxu0 0
      %1318 = vmatmul.mubr.bf16.gmra.mrb[0].mxu0 %v1225
      %v1319 = vpop.f32.mrb[0].mxu0
      %v1320 = vadd.f32 0.0, %v1319
      %v1321 = vpop.f32.mrb[0].mxu0
      %v1322 = vpop.f32.mrb[0].mxu0
      %v1323 = vadd.f32 0.0, %v1322
      %v1324 = vpop.f32.mrb[0].mxu0
      %1325 = vmatprep.mubr.bf16.mxu0 0
      %1326 = vmatmul.mubr.bf16.gmra.mrb[0].mxu0 %v1228
      %v1327 = vpop.f32.mrb[0].mxu0
      %v1328 = vadd.f32 0.0, %v1327
      %v1329 = vpop.f32.mrb[0].mxu0
      %v1330 = vpop.f32.mrb[0].mxu0
      %v1331 = vadd.f32 0.0, %v1330
      %v1332 = vpop.f32.mrb[0].mxu0
      %1333 = vmatprep.mubr.bf16.mxu0 0
      %1334 = vmatmul.mubr.bf16.gmra.mrb[0].mxu0 %v1231
      %v1335 = vpop.f32.mrb[0].mxu0
      %v1336 = vadd.f32 0.0, %v1335
      %v1337 = vpop.f32.mrb[0].mxu0
      %v1338 = vpop.f32.mrb[0].mxu0
      %v1339 = vadd.f32 0.0, %v1338
      %v1340 = vpop.f32.mrb[0].mxu0
      %1341 = vmatprep.mubr.bf16.mxu0 0
      %1342 = vmatmul.mubr.bf16.gmra.mrb[0].mxu0 %v1234
      %v1343 = vpop.f32.mrb[0].mxu0
      %v1344 = vadd.f32 0.0, %v1343
      %v1345 = vpop.f32.mrb[0].mxu0
      %v1346 = vpop.f32.mrb[0].mxu0
      %v1347 = vadd.f32 0.0, %v1346
      %v1348 = vpop.f32.mrb[0].mxu0
      %1349 = vmatprep.mubr.bf16.mxu0 0
      %1350 = vmatmul.mubr.bf16.gmra.mrb[0].mxu0 %v1237
      %v1351 = vpop.f32.mrb[0].mxu0
      %v1352 = vadd.f32 0.0, %v1351
      %v1353 = vpop.f32.mrb[0].mxu0
      %v1354 = vpop.f32.mrb[0].mxu0
      %v1355 = vadd.f32 0.0, %v1354
      %v1356 = vpop.f32.mrb[0].mxu0
      %1357 = vmatprep.mubr.bf16.mxu0 0
      %1358 = vmatmul.mubr.bf16.gmra.mrb[0].mxu0 %v1240
      %v1359 = vpop.f32.mrb[0].mxu0
      %v1360 = vadd.f32 0.0, %v1359
      %v1361 = vpop.f32.mrb[0].mxu0
      %v1362 = vpop.f32.mrb[0].mxu0
      %v1363 = vadd.f32 0.0, %v1362
      %v1364 = vpop.f32.mrb[0].mxu0
      %1365 = vmatprep.mubr.bf16.mxu0 0
      %1366 = vmatmul.mubr.bf16.gmra.mrb[0].mxu0 %v1243
      %v1367 = vpop.f32.mrb[0].mxu0
      %v1368 = vadd.f32 0.0, %v1367
      %v1369 = vpop.f32.mrb[0].mxu0
      %v1370 = vpop.f32.mrb[0].mxu0
      %v1371 = vadd.f32 0.0, %v1370
      %v1372 = vpop.f32.mrb[0].mxu0
      %1373 = vmatprep.mubr.bf16.mxu0 0
      %1374 = vmatmul.mubr.bf16.gmra.mrb[0].mxu0 %v1246
      %v1375 = vpop.f32.mrb[0].mxu0
      %v1376 = vadd.f32 0.0, %v1375
      %v1377 = vpop.f32.mrb[0].mxu0
      %v1378 = vpop.f32.mrb[0].mxu0
      %v1379 = vadd.f32 0.0, %v1378
      %v1380 = vpop.f32.mrb[0].mxu0
      %1381 = vmatprep.mubr.bf16.mxu0 0
      %1382 = vmatmul.mubr.bf16.gmra.mrb[0].mxu0 %v1249
      %v1383 = vpop.f32.mrb[0].mxu0
      %v1384 = vadd.f32 0.0, %v1383
      %v1385 = vpop.f32.mrb[0].mxu0
      %v1386 = vpop.f32.mrb[0].mxu0
      %v1387 = vadd.f32 0.0, %v1386
      %v1388 = vpop.f32.mrb[0].mxu0
      %1389 = vmatprep.mubr.bf16.mxu0 0
      %1390 = vmatmul.mubr.bf16.gmra.mrb[0].mxu0 %v1252
      %v1391 = vpop.f32.mrb[0].mxu0
      %v1392 = vadd.f32 0.0, %v1391
      %v1393 = vpop.f32.mrb[0].mxu0
      %v1394 = vpop.f32.mrb[0].mxu0
      %v1395 = vadd.f32 0.0, %v1394
      %v1396 = vpop.f32.mrb[0].mxu0
      %1397 = vmatprep.mubr.bf16.mxu0 0
      %1398 = vmatmul.mubr.bf16.gmra.mrb[0].mxu0 %v1255
      %v1399 = vpop.f32.mrb[0].mxu0
      %v1400 = vadd.f32 0.0, %v1399
      %v1401 = vpop.f32.mrb[0].mxu0
      %v1402 = vpop.f32.mrb[0].mxu0
      %v1403 = vadd.f32 0.0, %v1402
      %v1404 = vpop.f32.mrb[0].mxu0
      %1405 = vmatprep.mubr.bf16.mxu0 0
      %1406 = vmatmul.mubr.bf16.gmra.mrb[0].mxu0 %v1258
      %v1407 = vpop.f32.mrb[0].mxu0
      %v1408 = vadd.f32 0.0, %v1407
      %v1409 = vpop.f32.mrb[0].mxu0
      %v1410 = vpop.f32.mrb[0].mxu0
      %v1411 = vadd.f32 0.0, %v1410
      %v1412 = vpop.f32.mrb[0].mxu0
      %1413 = vmatprep.mubr.bf16.mxu0 0
      %1414 = vmatmul.mubr.bf16.gmra.mrb[0].mxu0 %v1261
      %v1415 = vpop.f32.mrb[0].mxu0
      %v1416 = vadd.f32 0.0, %v1415
      %v1417 = vpop.f32.mrb[0].mxu0
      %v1418 = vpop.f32.mrb[0].mxu0
      %v1419 = vadd.f32 0.0, %v1418
      %v1420 = vpop.f32.mrb[0].mxu0
      %1421 = vmatprep.mubr.bf16.mxu0 0
      %1422 = vmatmul.mubr.bf16.gmra.mrb[0].mxu0 %v1264
      %v1423 = vpop.f32.mrb[0].mxu0
      %v1424 = vadd.f32 0.0, %v1423
      %v1425 = vpop.f32.mrb[0].mxu0
      %v1426 = vpop.f32.mrb[0].mxu0
      %v1427 = vadd.f32 0.0, %v1426
      %v1428 = vpop.f32.mrb[0].mxu0
      %1429 = vdwg.mxu0
      %v1430 = vadd.f32 %v1186, %v1304
      %v1431 = vadd.f32 %v1187, %v1307
      %v1432 = vadd.f32 %v1188, %v1312
      %v1433 = vadd.f32 %v1189, %v1315
      %v1434 = vadd.f32 %v1190, %v1320
      %v1435 = vadd.f32 %v1191, %v1323
      %v1436 = vadd.f32 %v1192, %v1328
      %v1437 = vadd.f32 %v1193, %v1331
      %v1438 = vadd.f32 %v1194, %v1336
      %v1439 = vadd.f32 %v1195, %v1339
      %v1440 = vadd.f32 %v1196, %v1344
      %v1441 = vadd.f32 %v1197, %v1347
      %v1442 = vadd.f32 %v1198, %v1352
      %v1443 = vadd.f32 %v1199, %v1355
      %v1444 = vadd.f32 %v1200, %v1360
      %v1445 = vadd.f32 %v1201, %v1363
      %v1446 = vadd.f32 %v1202, %v1368
      %v1447 = vadd.f32 %v1203, %v1371
      %v1448 = vadd.f32 %v1204, %v1376
      %v1449 = vadd.f32 %v1205, %v1379
      %v1450 = vadd.f32 %v1206, %v1384
      %v1451 = vadd.f32 %v1207, %v1387
      %v1452 = vadd.f32 %v1208, %v1392
      %v1453 = vadd.f32 %v1209, %v1395
      %v1454 = vadd.f32 %v1210, %v1400
      %v1455 = vadd.f32 %v1211, %v1403
      %v1456 = vadd.f32 %v1212, %v1408
      %v1457 = vadd.f32 %v1213, %v1411
      %v1458 = vadd.f32 %v1214, %v1416
      %v1459 = vadd.f32 %v1215, %v1419
      %v1460 = vadd.f32 %v1216, %v1424
      %v1461 = vadd.f32 %v1217, %v1427
      %1462 = vst.msk [vmem:[#allocation3] sm:$0xff] %vm385, %v1430
      %1463 = vst.msk [vmem:[#allocation3 + $0x8] sm:$0xff] %vm385, %v1431
      %1464 = vst.msk [vmem:[#allocation3 + $0x10] sm:$0xff] %vm385, %v1432
      %1465 = vst.msk [vmem:[#allocation3 + $0x18] sm:$0xff] %vm385, %v1433
      %1466 = vst.msk [vmem:[#allocation3 + $0x20] sm:$0xff] %vm385, %v1434
      %1467 = vst.msk [vmem:[#allocation3 + $0x28] sm:$0xff] %vm385, %v1435
      %1468 = vst.msk [vmem:[#allocation3 + $0x30] sm:$0xff] %vm385, %v1436
      %1469 = vst.msk [vmem:[#allocation3 + $0x38] sm:$0xff] %vm385, %v1437
      %1470 = vst.msk [vmem:[#allocation3 + $0x40] sm:$0xff] %vm385, %v1438
      %1471 = vst.msk [vmem:[#allocation3 + $0x48] sm:$0xff] %vm385, %v1439
      %1472 = vst.msk [vmem:[#allocation3 + $0x50] sm:$0xff] %vm385, %v1440
      %1473 = vst.msk [vmem:[#allocation3 + $0x58] sm:$0xff] %vm385, %v1441
      %1474 = vst.msk [vmem:[#allocation3 + $0x60] sm:$0xff] %vm385, %v1442
      %1475 = vst.msk [vmem:[#allocation3 + $0x68] sm:$0xff] %vm385, %v1443
      %1476 = vst.msk [vmem:[#allocation3 + $0x70] sm:$0xff] %vm385, %v1444
      %1477 = vst.msk [vmem:[#allocation3 + $0x78] sm:$0xff] %vm385, %v1445
      %1478 = vst.msk [vmem:[#allocation3 + $0x80] sm:$0xff] %vm385, %v1446
      %1479 = vst.msk [vmem:[#allocation3 + $0x88] sm:$0xff] %vm385, %v1447
      %1480 = vst.msk [vmem:[#allocation3 + $0x90] sm:$0xff] %vm385, %v1448
      %1481 = vst.msk [vmem:[#allocation3 + $0x98] sm:$0xff] %vm385, %v1449
      %1482 = vst.msk [vmem:[#allocation3 + $0xa0] sm:$0xff] %vm385, %v1450
      %1483 = vst.msk [vmem:[#allocation3 + $0xa8] sm:$0xff] %vm385, %v1451
      %1484 = vst.msk [vmem:[#allocation3 + $0xb0] sm:$0xff] %vm385, %v1452
      %1485 = vst.msk [vmem:[#allocation3 + $0xb8] sm:$0xff] %vm385, %v1453
      %1486 = vst.msk [vmem:[#allocation3 + $0xc0] sm:$0xff] %vm385, %v1454
      %1487 = vst.msk [vmem:[#allocation3 + $0xc8] sm:$0xff] %vm385, %v1455
      %1488 = vst.msk [vmem:[#allocation3 + $0xd0] sm:$0xff] %vm385, %v1456
      %1489 = vst.msk [vmem:[#allocation3 + $0xd8] sm:$0xff] %vm385, %v1457
      %1490 = vst.msk [vmem:[#allocation3 + $0xe0] sm:$0xff] %vm385, %v1458
      %1491 = vst.msk [vmem:[#allocation3 + $0xe8] sm:$0xff] %vm385, %v1459
      %1492 = vst.msk [vmem:[#allocation3 + $0xf0] sm:$0xff] %vm385, %v1460
      %1493 = vst.msk [vmem:[#allocation3 + $0xf8] sm:$0xff] %vm385, %v1461
      %v1494 = vld [vmem:[%s352] sm:$0xff]
      %v1495 = vld [vmem:[%s352 + $0x8] sm:$0xff]
      %v1496 = vld [vmem:[%s352 + $0x18] sm:$0xff]
      %v1497 = vld [vmem:[%s352 + $0x20] sm:$0xff]
      %v1498 = vld [vmem:[%s352 + $0x30] sm:$0xff]
      %v1499 = vld [vmem:[%s352 + $0x38] sm:$0xff]
      %v1500 = vld [vmem:[%s352 + $0x48] sm:$0xff]
      %v1501 = vld [vmem:[%s352 + $0x50] sm:$0xff]
      %v1502 = vld [vmem:[%s352 + $0x60] sm:$0xff]
      %v1503 = vld [vmem:[%s352 + $0x68] sm:$0xff]
      %v1504 = vld [vmem:[%s352 + $0x78] sm:$0xff]
      %v1505 = vld [vmem:[%s352 + $0x80] sm:$0xff]
      %v1506 = vld [vmem:[%s352 + $0x90] sm:$0xff]
      %v1507 = vld [vmem:[%s352 + $0x98] sm:$0xff]
      %v1508 = vld [vmem:[%s352 + $0xa8] sm:$0xff]
      %v1509 = vld [vmem:[%s352 + $0xb0] sm:$0xff]
      %v1510 = vld [vmem:[%s352 + $0xc0] sm:$0xff]
      %v1511 = vld [vmem:[%s352 + $0xc8] sm:$0xff]
      %v1512 = vld [vmem:[%s352 + $0xd8] sm:$0xff]
      %v1513 = vld [vmem:[%s352 + $0xe0] sm:$0xff]
      %v1514 = vld [vmem:[%s352 + $0xf0] sm:$0xff]
      %v1515 = vld [vmem:[%s352 + $0xf8] sm:$0xff]
      %v1516 = vld [vmem:[%s352 + $0x108] sm:$0xff]
      %v1517 = vld [vmem:[%s352 + $0x110] sm:$0xff]
      %v1518 = vld [vmem:[%s352 + $0x120] sm:$0xff]
      %v1519 = vld [vmem:[%s352 + $0x128] sm:$0xff]
      %v1520 = vld [vmem:[%s352 + $0x138] sm:$0xff]
      %v1521 = vld [vmem:[%s352 + $0x140] sm:$0xff]
      %v1522 = vld [vmem:[%s352 + $0x150] sm:$0xff]
      %v1523 = vld [vmem:[%s352 + $0x158] sm:$0xff]
      %v1524 = vld [vmem:[%s352 + $0x168] sm:$0xff]
      %v1525 = vld [vmem:[%s352 + $0x170] sm:$0xff]
      %v1526 = vpack.c.bf16 %v1495, %v1494
      %v1527 = vpack.c.bf16 %v1497, %v1496
      %v1528 = vpack.c.bf16 %v1499, %v1498
      %v1529 = vpack.c.bf16 %v1501, %v1500
      %v1530 = vpack.c.bf16 %v1503, %v1502
      %v1531 = vpack.c.bf16 %v1505, %v1504
      %v1532 = vpack.c.bf16 %v1507, %v1506
      %v1533 = vpack.c.bf16 %v1509, %v1508
      %v1534 = vpack.c.bf16 %v1511, %v1510
      %v1535 = vpack.c.bf16 %v1513, %v1512
      %v1536 = vpack.c.bf16 %v1515, %v1514
      %v1537 = vpack.c.bf16 %v1517, %v1516
      %v1538 = vpack.c.bf16 %v1519, %v1518
      %v1539 = vpack.c.bf16 %v1521, %v1520
      %v1540 = vpack.c.bf16 %v1523, %v1522
      %v1541 = vpack.c.bf16 %v1525, %v1524
      %v1542 = vld [vmem:[%s248 + $0x4] sm:$0xc]
      %v1543 = vld [vmem:[#allocation3] sm:$0xff]
      %v1544 = vld [vmem:[#allocation3 + $0x8] sm:$0xff]
      %v1545 = vld [vmem:[#allocation3 + $0x10] sm:$0xff]
      %v1546 = vld [vmem:[#allocation3 + $0x18] sm:$0xff]
      %v1547 = vld [vmem:[#allocation3 + $0x20] sm:$0xff]
      %v1548 = vld [vmem:[#allocation3 + $0x28] sm:$0xff]
      %v1549 = vld [vmem:[#allocation3 + $0x30] sm:$0xff]
      %v1550 = vld [vmem:[#allocation3 + $0x38] sm:$0xff]
      %v1551 = vld [vmem:[#allocation3 + $0x40] sm:$0xff]
      %v1552 = vld [vmem:[#allocation3 + $0x48] sm:$0xff]
      %v1553 = vld [vmem:[#allocation3 + $0x50] sm:$0xff]
      %v1554 = vld [vmem:[#allocation3 + $0x58] sm:$0xff]
      %v1555 = vld [vmem:[#allocation3 + $0x60] sm:$0xff]
      %v1556 = vld [vmem:[#allocation3 + $0x68] sm:$0xff]
      %v1557 = vld [vmem:[#allocation3 + $0x70] sm:$0xff]
      %v1558 = vld [vmem:[#allocation3 + $0x78] sm:$0xff]
      %v1559 = vld [vmem:[#allocation3 + $0x80] sm:$0xff]
      %v1560 = vld [vmem:[#allocation3 + $0x88] sm:$0xff]
      %v1561 = vld [vmem:[#allocation3 + $0x90] sm:$0xff]
      %v1562 = vld [vmem:[#allocation3 + $0x98] sm:$0xff]
      %v1563 = vld [vmem:[#allocation3 + $0xa0] sm:$0xff]
      %v1564 = vld [vmem:[#allocation3 + $0xa8] sm:$0xff]
      %v1565 = vld [vmem:[#allocation3 + $0xb0] sm:$0xff]
      %v1566 = vld [vmem:[#allocation3 + $0xb8] sm:$0xff]
      %v1567 = vld [vmem:[#allocation3 + $0xc0] sm:$0xff]
      %v1568 = vld [vmem:[#allocation3 + $0xc8] sm:$0xff]
      %v1569 = vld [vmem:[#allocation3 + $0xd0] sm:$0xff]
      %v1570 = vld [vmem:[#allocation3 + $0xd8] sm:$0xff]
      %v1571 = vld [vmem:[#allocation3 + $0xe0] sm:$0xff]
      %v1572 = vld [vmem:[#allocation3 + $0xe8] sm:$0xff]
      %v1573 = vld [vmem:[#allocation3 + $0xf0] sm:$0xff]
      %v1574 = vld [vmem:[#allocation3 + $0xf8] sm:$0xff]
      %v1576 = vunpack.c.l.b16 %v1542
      %v1577 = vpack.c.b16 %v1576, %v1576
      %v1578 = vrot.slane %v1577, 2
      %v1580 = vsel %vm264, %v1526, 0
      %v1583 = vsel %vm264, %v1527, 0
      %v1586 = vsel %vm264, %v1528, 0
      %v1589 = vsel %vm264, %v1529, 0
      %v1592 = vsel %vm264, %v1530, 0
      %v1595 = vsel %vm264, %v1531, 0
      %v1598 = vsel %vm264, %v1532, 0
      %v1601 = vsel %vm264, %v1533, 0
      %v1604 = vsel %vm264, %v1534, 0
      %v1607 = vsel %vm264, %v1535, 0
      %v1610 = vsel %vm264, %v1536, 0
      %v1613 = vsel %vm264, %v1537, 0
      %v1616 = vsel %vm264, %v1538, 0
      %v1619 = vsel %vm264, %v1539, 0
      %v1622 = vsel %vm264, %v1540, 0
      %v1625 = vsel %vm264, %v1541, 0
      %v1628 = vsel %vm547, %v1578, 0
      %1630 = vmatprep.subr.bf16.mxu0 0
      %1631 = vmatpush1.bf16.msra.mxu0 %v1628
      %1632 = vmatprep.subr.bf16.mxu0 0
      %1633 = vmatpush1.bf16.msra.mxu0 0
      %1634 = vmatprep.subr.bf16.mxu0 0
      %1635 = vmatpush1.bf16.msra.mxu0 0
      %1636 = vmatprep.subr.bf16.mxu0 0
      %1637 = vmatpush1.bf16.msra.mxu0 0
      %1638 = vmatprep.subr.bf16.mxu0 0
      %1639 = vmatpush1.bf16.msra.mxu0 0
      %1640 = vmatprep.subr.bf16.mxu0 0
      %1641 = vmatpush1.bf16.msra.mxu0 0
      %1642 = vmatprep.subr.bf16.mxu0 0
      %1643 = vmatpush1.bf16.msra.mxu0 0
      %1644 = vmatprep.subr.bf16.mxu0 0
      %1645 = vmatpush1.bf16.msra.mxu0 0
      %1646 = vmatprep.subr.bf16.mxu0 0
      %1647 = vmatpush1.bf16.msra.mxu0 0
      %1648 = vmatprep.subr.bf16.mxu0 0
      %1649 = vmatpush1.bf16.msra.mxu0 0
      %1650 = vmatprep.subr.bf16.mxu0 0
      %1651 = vmatpush1.bf16.msra.mxu0 0
      %1652 = vmatprep.subr.bf16.mxu0 0
      %1653 = vmatpush1.bf16.msra.mxu0 0
      %1654 = vmatprep.subr.bf16.mxu0 0
      %1655 = vmatpush1.bf16.msra.mxu0 0
      %1656 = vmatprep.subr.bf16.mxu0 0
      %1657 = vmatpush1.bf16.msra.mxu0 0
      %1658 = vmatprep.subr.bf16.mxu0 0
      %1659 = vmatpush1.bf16.msra.mxu0 0
      %1660 = vmatprep.subr.bf16.mxu0 0
      %1661 = vmatpush1.bf16.msra.mxu0 0
      %1662 = vmatprep.mubr.bf16.mxu0 0
      %1663 = vmatmul.mubr.bf16.gmra.mrb[0].mxu0 %v1580
      %v1664 = vpop.f32.mrb[0].mxu0
      %v1665 = vadd.f32 0.0, %v1664
      %v1666 = vpop.f32.mrb[0].mxu0
      %v1667 = vpop.f32.mrb[0].mxu0
      %v1668 = vadd.f32 0.0, %v1667
      %v1669 = vpop.f32.mrb[0].mxu0
      %1670 = vmatprep.mubr.bf16.mxu0 0
      %1671 = vmatmul.mubr.bf16.gmra.mrb[0].mxu0 %v1583
      %v1672 = vpop.f32.mrb[0].mxu0
      %v1673 = vadd.f32 0.0, %v1672
      %v1674 = vpop.f32.mrb[0].mxu0
      %v1675 = vpop.f32.mrb[0].mxu0
      %v1676 = vadd.f32 0.0, %v1675
      %v1677 = vpop.f32.mrb[0].mxu0
      %1678 = vmatprep.mubr.bf16.mxu0 0
      %1679 = vmatmul.mubr.bf16.gmra.mrb[0].mxu0 %v1586
      %v1680 = vpop.f32.mrb[0].mxu0
      %v1681 = vadd.f32 0.0, %v1680
      %v1682 = vpop.f32.mrb[0].mxu0
      %v1683 = vpop.f32.mrb[0].mxu0
      %v1684 = vadd.f32 0.0, %v1683
      %v1685 = vpop.f32.mrb[0].mxu0
      %1686 = vmatprep.mubr.bf16.mxu0 0
      %1687 = vmatmul.mubr.bf16.gmra.mrb[0].mxu0 %v1589
      %v1688 = vpop.f32.mrb[0].mxu0
      %v1689 = vadd.f32 0.0, %v1688
      %v1690 = vpop.f32.mrb[0].mxu0
      %v1691 = vpop.f32.mrb[0].mxu0
      %v1692 = vadd.f32 0.0, %v1691
      %v1693 = vpop.f32.mrb[0].mxu0
      %1694 = vmatprep.mubr.bf16.mxu0 0
      %1695 = vmatmul.mubr.bf16.gmra.mrb[0].mxu0 %v1592
      %v1696 = vpop.f32.mrb[0].mxu0
      %v1697 = vadd.f32 0.0, %v1696
      %v1698 = vpop.f32.mrb[0].mxu0
      %v1699 = vpop.f32.mrb[0].mxu0
      %v1700 = vadd.f32 0.0, %v1699
      %v1701 = vpop.f32.mrb[0].mxu0
      %1702 = vmatprep.mubr.bf16.mxu0 0
      %1703 = vmatmul.mubr.bf16.gmra.mrb[0].mxu0 %v1595
      %v1704 = vpop.f32.mrb[0].mxu0
      %v1705 = vadd.f32 0.0, %v1704
      %v1706 = vpop.f32.mrb[0].mxu0
      %v1707 = vpop.f32.mrb[0].mxu0
      %v1708 = vadd.f32 0.0, %v1707
      %v1709 = vpop.f32.mrb[0].mxu0
      %1710 = vmatprep.mubr.bf16.mxu0 0
      %1711 = vmatmul.mubr.bf16.gmra.mrb[0].mxu0 %v1598
      %v1712 = vpop.f32.mrb[0].mxu0
      %v1713 = vadd.f32 0.0, %v1712
      %v1714 = vpop.f32.mrb[0].mxu0
      %v1715 = vpop.f32.mrb[0].mxu0
      %v1716 = vadd.f32 0.0, %v1715
      %v1717 = vpop.f32.mrb[0].mxu0
      %1718 = vmatprep.mubr.bf16.mxu0 0
      %1719 = vmatmul.mubr.bf16.gmra.mrb[0].mxu0 %v1601
      %v1720 = vpop.f32.mrb[0].mxu0
      %v1721 = vadd.f32 0.0, %v1720
      %v1722 = vpop.f32.mrb[0].mxu0
      %v1723 = vpop.f32.mrb[0].mxu0
      %v1724 = vadd.f32 0.0, %v1723
      %v1725 = vpop.f32.mrb[0].mxu0
      %1726 = vmatprep.mubr.bf16.mxu0 0
      %1727 = vmatmul.mubr.bf16.gmra.mrb[0].mxu0 %v1604
      %v1728 = vpop.f32.mrb[0].mxu0
      %v1729 = vadd.f32 0.0, %v1728
      %v1730 = vpop.f32.mrb[0].mxu0
      %v1731 = vpop.f32.mrb[0].mxu0
      %v1732 = vadd.f32 0.0, %v1731
      %v1733 = vpop.f32.mrb[0].mxu0
      %1734 = vmatprep.mubr.bf16.mxu0 0
      %1735 = vmatmul.mubr.bf16.gmra.mrb[0].mxu0 %v1607
      %v1736 = vpop.f32.mrb[0].mxu0
      %v1737 = vadd.f32 0.0, %v1736
      %v1738 = vpop.f32.mrb[0].mxu0
      %v1739 = vpop.f32.mrb[0].mxu0
      %v1740 = vadd.f32 0.0, %v1739
      %v1741 = vpop.f32.mrb[0].mxu0
      %1742 = vmatprep.mubr.bf16.mxu0 0
      %1743 = vmatmul.mubr.bf16.gmra.mrb[0].mxu0 %v1610
      %v1744 = vpop.f32.mrb[0].mxu0
      %v1745 = vadd.f32 0.0, %v1744
      %v1746 = vpop.f32.mrb[0].mxu0
      %v1747 = vpop.f32.mrb[0].mxu0
      %v1748 = vadd.f32 0.0, %v1747
      %v1749 = vpop.f32.mrb[0].mxu0
      %1750 = vmatprep.mubr.bf16.mxu0 0
      %1751 = vmatmul.mubr.bf16.gmra.mrb[0].mxu0 %v1613
      %v1752 = vpop.f32.mrb[0].mxu0
      %v1753 = vadd.f32 0.0, %v1752
      %v1754 = vpop.f32.mrb[0].mxu0
      %v1755 = vpop.f32.mrb[0].mxu0
      %v1756 = vadd.f32 0.0, %v1755
      %v1757 = vpop.f32.mrb[0].mxu0
      %1758 = vmatprep.mubr.bf16.mxu0 0
      %1759 = vmatmul.mubr.bf16.gmra.mrb[0].mxu0 %v1616
      %v1760 = vpop.f32.mrb[0].mxu0
      %v1761 = vadd.f32 0.0, %v1760
      %v1762 = vpop.f32.mrb[0].mxu0
      %v1763 = vpop.f32.mrb[0].mxu0
      %v1764 = vadd.f32 0.0, %v1763
      %v1765 = vpop.f32.mrb[0].mxu0
      %1766 = vmatprep.mubr.bf16.mxu0 0
      %1767 = vmatmul.mubr.bf16.gmra.mrb[0].mxu0 %v1619
      %v1768 = vpop.f32.mrb[0].mxu0
      %v1769 = vadd.f32 0.0, %v1768
      %v1770 = vpop.f32.mrb[0].mxu0
      %v1771 = vpop.f32.mrb[0].mxu0
      %v1772 = vadd.f32 0.0, %v1771
      %v1773 = vpop.f32.mrb[0].mxu0
      %1774 = vmatprep.mubr.bf16.mxu0 0
      %1775 = vmatmul.mubr.bf16.gmra.mrb[0].mxu0 %v1622
      %v1776 = vpop.f32.mrb[0].mxu0
      %v1777 = vadd.f32 0.0, %v1776
      %v1778 = vpop.f32.mrb[0].mxu0
      %v1779 = vpop.f32.mrb[0].mxu0
      %v1780 = vadd.f32 0.0, %v1779
      %v1781 = vpop.f32.mrb[0].mxu0
      %1782 = vmatprep.mubr.bf16.mxu0 0
      %1783 = vmatmul.mubr.bf16.gmra.mrb[0].mxu0 %v1625
      %v1784 = vpop.f32.mrb[0].mxu0
      %v1785 = vadd.f32 0.0, %v1784
      %v1786 = vpop.f32.mrb[0].mxu0
      %v1787 = vpop.f32.mrb[0].mxu0
      %v1788 = vadd.f32 0.0, %v1787
      %v1789 = vpop.f32.mrb[0].mxu0
      %1790 = vdwg.mxu0
      %v1791 = vadd.f32 %v1543, %v1665
      %v1792 = vadd.f32 %v1544, %v1668
      %v1793 = vadd.f32 %v1545, %v1673
      %v1794 = vadd.f32 %v1546, %v1676
      %v1795 = vadd.f32 %v1547, %v1681
      %v1796 = vadd.f32 %v1548, %v1684
      %v1797 = vadd.f32 %v1549, %v1689
      %v1798 = vadd.f32 %v1550, %v1692
      %v1799 = vadd.f32 %v1551, %v1697
      %v1800 = vadd.f32 %v1552, %v1700
      %v1801 = vadd.f32 %v1553, %v1705
      %v1802 = vadd.f32 %v1554, %v1708
      %v1803 = vadd.f32 %v1555, %v1713
      %v1804 = vadd.f32 %v1556, %v1716
      %v1805 = vadd.f32 %v1557, %v1721
      %v1806 = vadd.f32 %v1558, %v1724
      %v1807 = vadd.f32 %v1559, %v1729
      %v1808 = vadd.f32 %v1560, %v1732
      %v1809 = vadd.f32 %v1561, %v1737
      %v1810 = vadd.f32 %v1562, %v1740
      %v1811 = vadd.f32 %v1563, %v1745
      %v1812 = vadd.f32 %v1564, %v1748
      %v1813 = vadd.f32 %v1565, %v1753
      %v1814 = vadd.f32 %v1566, %v1756
      %v1815 = vadd.f32 %v1567, %v1761
      %v1816 = vadd.f32 %v1568, %v1764
      %v1817 = vadd.f32 %v1569, %v1769
      %v1818 = vadd.f32 %v1570, %v1772
      %v1819 = vadd.f32 %v1571, %v1777
      %v1820 = vadd.f32 %v1572, %v1780
      %v1821 = vadd.f32 %v1573, %v1785
      %v1822 = vadd.f32 %v1574, %v1788
      %1823 = vst.msk [vmem:[#allocation3] sm:$0xff] %vm385, %v1791
      %1824 = vst.msk [vmem:[#allocation3 + $0x8] sm:$0xff] %vm385, %v1792
      %1825 = vst.msk [vmem:[#allocation3 + $0x10] sm:$0xff] %vm385, %v1793
      %1826 = vst.msk [vmem:[#allocation3 + $0x18] sm:$0xff] %vm385, %v1794
      %1827 = vst.msk [vmem:[#allocation3 + $0x20] sm:$0xff] %vm385, %v1795
      %1828 = vst.msk [vmem:[#allocation3 + $0x28] sm:$0xff] %vm385, %v1796
      %1829 = vst.msk [vmem:[#allocation3 + $0x30] sm:$0xff] %vm385, %v1797
      %1830 = vst.msk [vmem:[#allocation3 + $0x38] sm:$0xff] %vm385, %v1798
      %1831 = vst.msk [vmem:[#allocation3 + $0x40] sm:$0xff] %vm385, %v1799
      %1832 = vst.msk [vmem:[#allocation3 + $0x48] sm:$0xff] %vm385, %v1800
      %1833 = vst.msk [vmem:[#allocation3 + $0x50] sm:$0xff] %vm385, %v1801
      %1834 = vst.msk [vmem:[#allocation3 + $0x58] sm:$0xff] %vm385, %v1802
      %1835 = vst.msk [vmem:[#allocation3 + $0x60] sm:$0xff] %vm385, %v1803
      %1836 = vst.msk [vmem:[#allocation3 + $0x68] sm:$0xff] %vm385, %v1804
      %1837 = vst.msk [vmem:[#allocation3 + $0x70] sm:$0xff] %vm385, %v1805
      %1838 = vst.msk [vmem:[#allocation3 + $0x78] sm:$0xff] %vm385, %v1806
      %1839 = vst.msk [vmem:[#allocation3 + $0x80] sm:$0xff] %vm385, %v1807
      %1840 = vst.msk [vmem:[#allocation3 + $0x88] sm:$0xff] %vm385, %v1808
      %1841 = vst.msk [vmem:[#allocation3 + $0x90] sm:$0xff] %vm385, %v1809
      %1842 = vst.msk [vmem:[#allocation3 + $0x98] sm:$0xff] %vm385, %v1810
      %1843 = vst.msk [vmem:[#allocation3 + $0xa0] sm:$0xff] %vm385, %v1811
      %1844 = vst.msk [vmem:[#allocation3 + $0xa8] sm:$0xff] %vm385, %v1812
      %1845 = vst.msk [vmem:[#allocation3 + $0xb0] sm:$0xff] %vm385, %v1813
      %1846 = vst.msk [vmem:[#allocation3 + $0xb8] sm:$0xff] %vm385, %v1814
      %1847 = vst.msk [vmem:[#allocation3 + $0xc0] sm:$0xff] %vm385, %v1815
      %1848 = vst.msk [vmem:[#allocation3 + $0xc8] sm:$0xff] %vm385, %v1816
      %1849 = vst.msk [vmem:[#allocation3 + $0xd0] sm:$0xff] %vm385, %v1817
      %1850 = vst.msk [vmem:[#allocation3 + $0xd8] sm:$0xff] %vm385, %v1818
      %1851 = vst.msk [vmem:[#allocation3 + $0xe0] sm:$0xff] %vm385, %v1819
      %1852 = vst.msk [vmem:[#allocation3 + $0xe8] sm:$0xff] %vm385, %v1820
      %1853 = vst.msk [vmem:[#allocation3 + $0xf0] sm:$0xff] %vm385, %v1821
      %1854 = vst.msk [vmem:[#allocation3 + $0xf8] sm:$0xff] %vm385, %v1822
      %v1855 = vld [vmem:[%s352 + $0x1] sm:$0xff]
      %v1856 = vld [vmem:[%s352 + $0x9] sm:$0xff]
      %v1857 = vld [vmem:[%s352 + $0x19] sm:$0xff]
      %v1858 = vld [vmem:[%s352 + $0x21] sm:$0xff]
      %v1859 = vld [vmem:[%s352 + $0x31] sm:$0xff]
      %v1860 = vld [vmem:[%s352 + $0x39] sm:$0xff]
      %v1861 = vld [vmem:[%s352 + $0x49] sm:$0xff]
      %v1862 = vld [vmem:[%s352 + $0x51] sm:$0xff]
      %v1863 = vld [vmem:[%s352 + $0x61] sm:$0xff]
      %v1864 = vld [vmem:[%s352 + $0x69] sm:$0xff]
      %v1865 = vld [vmem:[%s352 + $0x79] sm:$0xff]
      %v1866 = vld [vmem:[%s352 + $0x81] sm:$0xff]
      %v1867 = vld [vmem:[%s352 + $0x91] sm:$0xff]
      %v1868 = vld [vmem:[%s352 + $0x99] sm:$0xff]
      %v1869 = vld [vmem:[%s352 + $0xa9] sm:$0xff]
      %v1870 = vld [vmem:[%s352 + $0xb1] sm:$0xff]
      %v1871 = vld [vmem:[%s352 + $0xc1] sm:$0xff]
      %v1872 = vld [vmem:[%s352 + $0xc9] sm:$0xff]
      %v1873 = vld [vmem:[%s352 + $0xd9] sm:$0xff]
      %v1874 = vld [vmem:[%s352 + $0xe1] sm:$0xff]
      %v1875 = vld [vmem:[%s352 + $0xf1] sm:$0xff]
      %v1876 = vld [vmem:[%s352 + $0xf9] sm:$0xff]
      %v1877 = vld [vmem:[%s352 + $0x109] sm:$0xff]
      %v1878 = vld [vmem:[%s352 + $0x111] sm:$0xff]
      %v1879 = vld [vmem:[%s352 + $0x121] sm:$0xff]
      %v1880 = vld [vmem:[%s352 + $0x129] sm:$0xff]
      %v1881 = vld [vmem:[%s352 + $0x139] sm:$0xff]
      %v1882 = vld [vmem:[%s352 + $0x141] sm:$0xff]
      %v1883 = vld [vmem:[%s352 + $0x151] sm:$0xff]
      %v1884 = vld [vmem:[%s352 + $0x159] sm:$0xff]
      %v1885 = vld [vmem:[%s352 + $0x169] sm:$0xff]
      %v1886 = vld [vmem:[%s352 + $0x171] sm:$0xff]
      %v1887 = vpack.c.bf16 %v1856, %v1855
      %v1888 = vpack.c.bf16 %v1858, %v1857
      %v1889 = vpack.c.bf16 %v1860, %v1859
      %v1890 = vpack.c.bf16 %v1862, %v1861
      %v1891 = vpack.c.bf16 %v1864, %v1863
      %v1892 = vpack.c.bf16 %v1866, %v1865
      %v1893 = vpack.c.bf16 %v1868, %v1867
      %v1894 = vpack.c.bf16 %v1870, %v1869
      %v1895 = vpack.c.bf16 %v1872, %v1871
      %v1896 = vpack.c.bf16 %v1874, %v1873
      %v1897 = vpack.c.bf16 %v1876, %v1875
      %v1898 = vpack.c.bf16 %v1878, %v1877
      %v1899 = vpack.c.bf16 %v1880, %v1879
      %v1900 = vpack.c.bf16 %v1882, %v1881
      %v1901 = vpack.c.bf16 %v1884, %v1883
      %v1902 = vpack.c.bf16 %v1886, %v1885
      %v1903 = vld [vmem:[%s248 + $0x8] sm:$0x3]
      %v1904 = vld [vmem:[#allocation3] sm:$0xff]
      %v1905 = vld [vmem:[#allocation3 + $0x8] sm:$0xff]
      %v1906 = vld [vmem:[#allocation3 + $0x10] sm:$0xff]
      %v1907 = vld [vmem:[#allocation3 + $0x18] sm:$0xff]
      %v1908 = vld [vmem:[#allocation3 + $0x20] sm:$0xff]
      %v1909 = vld [vmem:[#allocation3 + $0x28] sm:$0xff]
      %v1910 = vld [vmem:[#allocation3 + $0x30] sm:$0xff]
      %v1911 = vld [vmem:[#allocation3 + $0x38] sm:$0xff]
      %v1912 = vld [vmem:[#allocation3 + $0x40] sm:$0xff]
      %v1913 = vld [vmem:[#allocation3 + $0x48] sm:$0xff]
      %v1914 = vld [vmem:[#allocation3 + $0x50] sm:$0xff]
      %v1915 = vld [vmem:[#allocation3 + $0x58] sm:$0xff]
      %v1916 = vld [vmem:[#allocation3 + $0x60] sm:$0xff]
      %v1917 = vld [vmem:[#allocation3 + $0x68] sm:$0xff]
      %v1918 = vld [vmem:[#allocation3 + $0x70] sm:$0xff]
      %v1919 = vld [vmem:[#allocation3 + $0x78] sm:$0xff]
      %v1920 = vld [vmem:[#allocation3 + $0x80] sm:$0xff]
      %v1921 = vld [vmem:[#allocation3 + $0x88] sm:$0xff]
      %v1922 = vld [vmem:[#allocation3 + $0x90] sm:$0xff]
      %v1923 = vld [vmem:[#allocation3 + $0x98] sm:$0xff]
      %v1924 = vld [vmem:[#allocation3 + $0xa0] sm:$0xff]
      %v1925 = vld [vmem:[#allocation3 + $0xa8] sm:$0xff]
      %v1926 = vld [vmem:[#allocation3 + $0xb0] sm:$0xff]
      %v1927 = vld [vmem:[#allocation3 + $0xb8] sm:$0xff]
      %v1928 = vld [vmem:[#allocation3 + $0xc0] sm:$0xff]
      %v1929 = vld [vmem:[#allocation3 + $0xc8] sm:$0xff]
      %v1930 = vld [vmem:[#allocation3 + $0xd0] sm:$0xff]
      %v1931 = vld [vmem:[#allocation3 + $0xd8] sm:$0xff]
      %v1932 = vld [vmem:[#allocation3 + $0xe0] sm:$0xff]
      %v1933 = vld [vmem:[#allocation3 + $0xe8] sm:$0xff]
      %v1934 = vld [vmem:[#allocation3 + $0xf0] sm:$0xff]
      %v1935 = vld [vmem:[#allocation3 + $0xf8] sm:$0xff]
      %v1937 = vsel %vm264, %v1887, 0
      %v1940 = vsel %vm264, %v1888, 0
      %v1943 = vsel %vm264, %v1889, 0
      %v1946 = vsel %vm264, %v1890, 0
      %v1949 = vsel %vm264, %v1891, 0
      %v1952 = vsel %vm264, %v1892, 0
      %v1955 = vsel %vm264, %v1893, 0
      %v1958 = vsel %vm264, %v1894, 0
      %v1961 = vsel %vm264, %v1895, 0
      %v1964 = vsel %vm264, %v1896, 0
      %v1967 = vsel %vm264, %v1897, 0
      %v1970 = vsel %vm264, %v1898, 0
      %v1973 = vsel %vm264, %v1899, 0
      %v1976 = vsel %vm264, %v1900, 0
      %v1979 = vsel %vm264, %v1901, 0
      %v1982 = vsel %vm264, %v1902, 0
      %v1985 = vsel %vm547, %v1903, 0
      %1987 = vmatprep.subr.bf16.mxu0 0
      %1988 = vmatpush1.bf16.msra.mxu0 %v1985
      %1989 = vmatprep.subr.bf16.mxu0 0
      %1990 = vmatpush1.bf16.msra.mxu0 0
      %1991 = vmatprep.subr.bf16.mxu0 0
      %1992 = vmatpush1.bf16.msra.mxu0 0
      %1993 = vmatprep.subr.bf16.mxu0 0
      %1994 = vmatpush1.bf16.msra.mxu0 0
      %1995 = vmatprep.subr.bf16.mxu0 0
      %1996 = vmatpush1.bf16.msra.mxu0 0
      %1997 = vmatprep.subr.bf16.mxu0 0
      %1998 = vmatpush1.bf16.msra.mxu0 0
      %1999 = vmatprep.subr.bf16.mxu0 0
      %2000 = vmatpush1.bf16.msra.mxu0 0
      %2001 = vmatprep.subr.bf16.mxu0 0
      %2002 = vmatpush1.bf16.msra.mxu0 0
      %2003 = vmatprep.subr.bf16.mxu0 0
      %2004 = vmatpush1.bf16.msra.mxu0 0
      %2005 = vmatprep.subr.bf16.mxu0 0
      %2006 = vmatpush1.bf16.msra.mxu0 0
      %2007 = vmatprep.subr.bf16.mxu0 0
      %2008 = vmatpush1.bf16.msra.mxu0 0
      %2009 = vmatprep.subr.bf16.mxu0 0
      %2010 = vmatpush1.bf16.msra.mxu0 0
      %2011 = vmatprep.subr.bf16.mxu0 0
      %2012 = vmatpush1.bf16.msra.mxu0 0
      %2013 = vmatprep.subr.bf16.mxu0 0
      %2014 = vmatpush1.bf16.msra.mxu0 0
      %2015 = vmatprep.subr.bf16.mxu0 0
      %2016 = vmatpush1.bf16.msra.mxu0 0
      %2017 = vmatprep.subr.bf16.mxu0 0
      %2018 = vmatpush1.bf16.msra.mxu0 0
      %2019 = vmatprep.mubr.bf16.mxu0 0
      %2020 = vmatmul.mubr.bf16.gmra.mrb[0].mxu0 %v1937
      %v2021 = vpop.f32.mrb[0].mxu0
      %v2022 = vadd.f32 0.0, %v2021
      %v2023 = vpop.f32.mrb[0].mxu0
      %v2024 = vpop.f32.mrb[0].mxu0
      %v2025 = vadd.f32 0.0, %v2024
      %v2026 = vpop.f32.mrb[0].mxu0
      %2027 = vmatprep.mubr.bf16.mxu0 0
      %2028 = vmatmul.mubr.bf16.gmra.mrb[0].mxu0 %v1940
      %v2029 = vpop.f32.mrb[0].mxu0
      %v2030 = vadd.f32 0.0, %v2029
      %v2031 = vpop.f32.mrb[0].mxu0
      %v2032 = vpop.f32.mrb[0].mxu0
      %v2033 = vadd.f32 0.0, %v2032
      %v2034 = vpop.f32.mrb[0].mxu0
      %2035 = vmatprep.mubr.bf16.mxu0 0
      %2036 = vmatmul.mubr.bf16.gmra.mrb[0].mxu0 %v1943
      %v2037 = vpop.f32.mrb[0].mxu0
      %v2038 = vadd.f32 0.0, %v2037
      %v2039 = vpop.f32.mrb[0].mxu0
      %v2040 = vpop.f32.mrb[0].mxu0
      %v2041 = vadd.f32 0.0, %v2040
      %v2042 = vpop.f32.mrb[0].mxu0
      %2043 = vmatprep.mubr.bf16.mxu0 0
      %2044 = vmatmul.mubr.bf16.gmra.mrb[0].mxu0 %v1946
      %v2045 = vpop.f32.mrb[0].mxu0
      %v2046 = vadd.f32 0.0, %v2045
      %v2047 = vpop.f32.mrb[0].mxu0
      %v2048 = vpop.f32.mrb[0].mxu0
      %v2049 = vadd.f32 0.0, %v2048
      %v2050 = vpop.f32.mrb[0].mxu0
      %2051 = vmatprep.mubr.bf16.mxu0 0
      %2052 = vmatmul.mubr.bf16.gmra.mrb[0].mxu0 %v1949
      %v2053 = vpop.f32.mrb[0].mxu0
      %v2054 = vadd.f32 0.0, %v2053
      %v2055 = vpop.f32.mrb[0].mxu0
      %v2056 = vpop.f32.mrb[0].mxu0
      %v2057 = vadd.f32 0.0, %v2056
      %v2058 = vpop.f32.mrb[0].mxu0
      %2059 = vmatprep.mubr.bf16.mxu0 0
      %2060 = vmatmul.mubr.bf16.gmra.mrb[0].mxu0 %v1952
      %v2061 = vpop.f32.mrb[0].mxu0
      %v2062 = vadd.f32 0.0, %v2061
      %v2063 = vpop.f32.mrb[0].mxu0
      %v2064 = vpop.f32.mrb[0].mxu0
      %v2065 = vadd.f32 0.0, %v2064
      %v2066 = vpop.f32.mrb[0].mxu0
      %2067 = vmatprep.mubr.bf16.mxu0 0
      %2068 = vmatmul.mubr.bf16.gmra.mrb[0].mxu0 %v1955
      %v2069 = vpop.f32.mrb[0].mxu0
      %v2070 = vadd.f32 0.0, %v2069
      %v2071 = vpop.f32.mrb[0].mxu0
      %v2072 = vpop.f32.mrb[0].mxu0
      %v2073 = vadd.f32 0.0, %v2072
      %v2074 = vpop.f32.mrb[0].mxu0
      %2075 = vmatprep.mubr.bf16.mxu0 0
      %2076 = vmatmul.mubr.bf16.gmra.mrb[0].mxu0 %v1958
      %v2077 = vpop.f32.mrb[0].mxu0
      %v2078 = vadd.f32 0.0, %v2077
      %v2079 = vpop.f32.mrb[0].mxu0
      %v2080 = vpop.f32.mrb[0].mxu0
      %v2081 = vadd.f32 0.0, %v2080
      %v2082 = vpop.f32.mrb[0].mxu0
      %2083 = vmatprep.mubr.bf16.mxu0 0
      %2084 = vmatmul.mubr.bf16.gmra.mrb[0].mxu0 %v1961
      %v2085 = vpop.f32.mrb[0].mxu0
      %v2086 = vadd.f32 0.0, %v2085
      %v2087 = vpop.f32.mrb[0].mxu0
      %v2088 = vpop.f32.mrb[0].mxu0
      %v2089 = vadd.f32 0.0, %v2088
      %v2090 = vpop.f32.mrb[0].mxu0
      %2091 = vmatprep.mubr.bf16.mxu0 0
      %2092 = vmatmul.mubr.bf16.gmra.mrb[0].mxu0 %v1964
      %v2093 = vpop.f32.mrb[0].mxu0
      %v2094 = vadd.f32 0.0, %v2093
      %v2095 = vpop.f32.mrb[0].mxu0
      %v2096 = vpop.f32.mrb[0].mxu0
      %v2097 = vadd.f32 0.0, %v2096
      %v2098 = vpop.f32.mrb[0].mxu0
      %2099 = vmatprep.mubr.bf16.mxu0 0
      %2100 = vmatmul.mubr.bf16.gmra.mrb[0].mxu0 %v1967
      %v2101 = vpop.f32.mrb[0].mxu0
      %v2102 = vadd.f32 0.0, %v2101
      %v2103 = vpop.f32.mrb[0].mxu0
      %v2104 = vpop.f32.mrb[0].mxu0
      %v2105 = vadd.f32 0.0, %v2104
      %v2106 = vpop.f32.mrb[0].mxu0
      %2107 = vmatprep.mubr.bf16.mxu0 0
      %2108 = vmatmul.mubr.bf16.gmra.mrb[0].mxu0 %v1970
      %v2109 = vpop.f32.mrb[0].mxu0
      %v2110 = vadd.f32 0.0, %v2109
      %v2111 = vpop.f32.mrb[0].mxu0
      %v2112 = vpop.f32.mrb[0].mxu0
      %v2113 = vadd.f32 0.0, %v2112
      %v2114 = vpop.f32.mrb[0].mxu0
      %2115 = vmatprep.mubr.bf16.mxu0 0
      %2116 = vmatmul.mubr.bf16.gmra.mrb[0].mxu0 %v1973
      %v2117 = vpop.f32.mrb[0].mxu0
      %v2118 = vadd.f32 0.0, %v2117
      %v2119 = vpop.f32.mrb[0].mxu0
      %v2120 = vpop.f32.mrb[0].mxu0
      %v2121 = vadd.f32 0.0, %v2120
      %v2122 = vpop.f32.mrb[0].mxu0
      %2123 = vmatprep.mubr.bf16.mxu0 0
      %2124 = vmatmul.mubr.bf16.gmra.mrb[0].mxu0 %v1976
      %v2125 = vpop.f32.mrb[0].mxu0
      %v2126 = vadd.f32 0.0, %v2125
      %v2127 = vpop.f32.mrb[0].mxu0
      %v2128 = vpop.f32.mrb[0].mxu0
      %v2129 = vadd.f32 0.0, %v2128
      %v2130 = vpop.f32.mrb[0].mxu0
      %2131 = vmatprep.mubr.bf16.mxu0 0
      %2132 = vmatmul.mubr.bf16.gmra.mrb[0].mxu0 %v1979
      %v2133 = vpop.f32.mrb[0].mxu0
      %v2134 = vadd.f32 0.0, %v2133
      %v2135 = vpop.f32.mrb[0].mxu0
      %v2136 = vpop.f32.mrb[0].mxu0
      %v2137 = vadd.f32 0.0, %v2136
      %v2138 = vpop.f32.mrb[0].mxu0
      %2139 = vmatprep.mubr.bf16.mxu0 0
      %2140 = vmatmul.mubr.bf16.gmra.mrb[0].mxu0 %v1982
      %v2141 = vpop.f32.mrb[0].mxu0
      %v2142 = vadd.f32 0.0, %v2141
      %v2143 = vpop.f32.mrb[0].mxu0
      %v2144 = vpop.f32.mrb[0].mxu0
      %v2145 = vadd.f32 0.0, %v2144
      %v2146 = vpop.f32.mrb[0].mxu0
      %2147 = vdwg.mxu0
      %v2148 = vadd.f32 %v1904, %v2022
      %v2149 = vadd.f32 %v1905, %v2025
      %v2150 = vadd.f32 %v1906, %v2030
      %v2151 = vadd.f32 %v1907, %v2033
      %v2152 = vadd.f32 %v1908, %v2038
      %v2153 = vadd.f32 %v1909, %v2041
      %v2154 = vadd.f32 %v1910, %v2046
      %v2155 = vadd.f32 %v1911, %v2049
      %v2156 = vadd.f32 %v1912, %v2054
      %v2157 = vadd.f32 %v1913, %v2057
      %v2158 = vadd.f32 %v1914, %v2062
      %v2159 = vadd.f32 %v1915, %v2065
      %v2160 = vadd.f32 %v1916, %v2070
      %v2161 = vadd.f32 %v1917, %v2073
      %v2162 = vadd.f32 %v1918, %v2078
      %v2163 = vadd.f32 %v1919, %v2081
      %v2164 = vadd.f32 %v1920, %v2086
      %v2165 = vadd.f32 %v1921, %v2089
      %v2166 = vadd.f32 %v1922, %v2094
      %v2167 = vadd.f32 %v1923, %v2097
      %v2168 = vadd.f32 %v1924, %v2102
      %v2169 = vadd.f32 %v1925, %v2105
      %v2170 = vadd.f32 %v1926, %v2110
      %v2171 = vadd.f32 %v1927, %v2113
      %v2172 = vadd.f32 %v1928, %v2118
      %v2173 = vadd.f32 %v1929, %v2121
      %v2174 = vadd.f32 %v1930, %v2126
      %v2175 = vadd.f32 %v1931, %v2129
      %v2176 = vadd.f32 %v1932, %v2134
      %v2177 = vadd.f32 %v1933, %v2137
      %v2178 = vadd.f32 %v1934, %v2142
      %v2179 = vadd.f32 %v1935, %v2145
      %2180 = vst.msk [vmem:[#allocation3] sm:$0xff] %vm385, %v2148
      %2181 = vst.msk [vmem:[#allocation3 + $0x8] sm:$0xff] %vm385, %v2149
      %2182 = vst.msk [vmem:[#allocation3 + $0x10] sm:$0xff] %vm385, %v2150
      %2183 = vst.msk [vmem:[#allocation3 + $0x18] sm:$0xff] %vm385, %v2151
      %2184 = vst.msk [vmem:[#allocation3 + $0x20] sm:$0xff] %vm385, %v2152
      %2185 = vst.msk [vmem:[#allocation3 + $0x28] sm:$0xff] %vm385, %v2153
      %2186 = vst.msk [vmem:[#allocation3 + $0x30] sm:$0xff] %vm385, %v2154
      %2187 = vst.msk [vmem:[#allocation3 + $0x38] sm:$0xff] %vm385, %v2155
      %2188 = vst.msk [vmem:[#allocation3 + $0x40] sm:$0xff] %vm385, %v2156
      %2189 = vst.msk [vmem:[#allocation3 + $0x48] sm:$0xff] %vm385, %v2157
      %2190 = vst.msk [vmem:[#allocation3 + $0x50] sm:$0xff] %vm385, %v2158
      %2191 = vst.msk [vmem:[#allocation3 + $0x58] sm:$0xff] %vm385, %v2159
      %2192 = vst.msk [vmem:[#allocation3 + $0x60] sm:$0xff] %vm385, %v2160
      %2193 = vst.msk [vmem:[#allocation3 + $0x68] sm:$0xff] %vm385, %v2161
      %2194 = vst.msk [vmem:[#allocation3 + $0x70] sm:$0xff] %vm385, %v2162
      %2195 = vst.msk [vmem:[#allocation3 + $0x78] sm:$0xff] %vm385, %v2163
      %2196 = vst.msk [vmem:[#allocation3 + $0x80] sm:$0xff] %vm385, %v2164
      %2197 = vst.msk [vmem:[#allocation3 + $0x88] sm:$0xff] %vm385, %v2165
      %2198 = vst.msk [vmem:[#allocation3 + $0x90] sm:$0xff] %vm385, %v2166
      %2199 = vst.msk [vmem:[#allocation3 + $0x98] sm:$0xff] %vm385, %v2167
      %2200 = vst.msk [vmem:[#allocation3 + $0xa0] sm:$0xff] %vm385, %v2168
      %2201 = vst.msk [vmem:[#allocation3 + $0xa8] sm:$0xff] %vm385, %v2169
      %2202 = vst.msk [vmem:[#allocation3 + $0xb0] sm:$0xff] %vm385, %v2170
      %2203 = vst.msk [vmem:[#allocation3 + $0xb8] sm:$0xff] %vm385, %v2171
      %2204 = vst.msk [vmem:[#allocation3 + $0xc0] sm:$0xff] %vm385, %v2172
      %2205 = vst.msk [vmem:[#allocation3 + $0xc8] sm:$0xff] %vm385, %v2173
      %2206 = vst.msk [vmem:[#allocation3 + $0xd0] sm:$0xff] %vm385, %v2174
      %2207 = vst.msk [vmem:[#allocation3 + $0xd8] sm:$0xff] %vm385, %v2175
      %2208 = vst.msk [vmem:[#allocation3 + $0xe0] sm:$0xff] %vm385, %v2176
      %2209 = vst.msk [vmem:[#allocation3 + $0xe8] sm:$0xff] %vm385, %v2177
      %2210 = vst.msk [vmem:[#allocation3 + $0xf0] sm:$0xff] %vm385, %v2178
      %2211 = vst.msk [vmem:[#allocation3 + $0xf8] sm:$0xff] %vm385, %v2179
      %v2212 = vld [vmem:[%s352 + $0x2] sm:$0xff]
      %v2213 = vld [vmem:[%s352 + $0xa] sm:$0xff]
      %v2214 = vld [vmem:[%s352 + $0x1a] sm:$0xff]
      %v2215 = vld [vmem:[%s352 + $0x22] sm:$0xff]
      %v2216 = vld [vmem:[%s352 + $0x32] sm:$0xff]
      %v2217 = vld [vmem:[%s352 + $0x3a] sm:$0xff]
      %v2218 = vld [vmem:[%s352 + $0x4a] sm:$0xff]
      %v2219 = vld [vmem:[%s352 + $0x52] sm:$0xff]
      %v2220 = vld [vmem:[%s352 + $0x62] sm:$0xff]
      %v2221 = vld [vmem:[%s352 + $0x6a] sm:$0xff]
      %v2222 = vld [vmem:[%s352 + $0x7a] sm:$0xff]
      %v2223 = vld [vmem:[%s352 + $0x82] sm:$0xff]
      %v2224 = vld [vmem:[%s352 + $0x92] sm:$0xff]
      %v2225 = vld [vmem:[%s352 + $0x9a] sm:$0xff]
      %v2226 = vld [vmem:[%s352 + $0xaa] sm:$0xff]
      %v2227 = vld [vmem:[%s352 + $0xb2] sm:$0xff]
      %v2228 = vld [vmem:[%s352 + $0xc2] sm:$0xff]
      %v2229 = vld [vmem:[%s352 + $0xca] sm:$0xff]
      %v2230 = vld [vmem:[%s352 + $0xda] sm:$0xff]
      %v2231 = vld [vmem:[%s352 + $0xe2] sm:$0xff]
      %v2232 = vld [vmem:[%s352 + $0xf2] sm:$0xff]
      %v2233 = vld [vmem:[%s352 + $0xfa] sm:$0xff]
      %v2234 = vld [vmem:[%s352 + $0x10a] sm:$0xff]
      %v2235 = vld [vmem:[%s352 + $0x112] sm:$0xff]
      %v2236 = vld [vmem:[%s352 + $0x122] sm:$0xff]
      %v2237 = vld [vmem:[%s352 + $0x12a] sm:$0xff]
      %v2238 = vld [vmem:[%s352 + $0x13a] sm:$0xff]
      %v2239 = vld [vmem:[%s352 + $0x142] sm:$0xff]
      %v2240 = vld [vmem:[%s352 + $0x152] sm:$0xff]
      %v2241 = vld [vmem:[%s352 + $0x15a] sm:$0xff]
      %v2242 = vld [vmem:[%s352 + $0x16a] sm:$0xff]
      %v2243 = vld [vmem:[%s352 + $0x172] sm:$0xff]
      %v2244 = vpack.c.bf16 %v2213, %v2212
      %v2245 = vpack.c.bf16 %v2215, %v2214
      %v2246 = vpack.c.bf16 %v2217, %v2216
      %v2247 = vpack.c.bf16 %v2219, %v2218
      %v2248 = vpack.c.bf16 %v2221, %v2220
      %v2249 = vpack.c.bf16 %v2223, %v2222
      %v2250 = vpack.c.bf16 %v2225, %v2224
      %v2251 = vpack.c.bf16 %v2227, %v2226
      %v2252 = vpack.c.bf16 %v2229, %v2228
      %v2253 = vpack.c.bf16 %v2231, %v2230
      %v2254 = vpack.c.bf16 %v2233, %v2232
      %v2255 = vpack.c.bf16 %v2235, %v2234
      %v2256 = vpack.c.bf16 %v2237, %v2236
      %v2257 = vpack.c.bf16 %v2239, %v2238
      %v2258 = vpack.c.bf16 %v2241, %v2240
      %v2259 = vpack.c.bf16 %v2243, %v2242
      %v2260 = vld [vmem:[%s248 + $0x8] sm:$0xc]
      %v2261 = vld [vmem:[#allocation3] sm:$0xff]
      %v2262 = vld [vmem:[#allocation3 + $0x8] sm:$0xff]
      %v2263 = vld [vmem:[#allocation3 + $0x10] sm:$0xff]
      %v2264 = vld [vmem:[#allocation3 + $0x18] sm:$0xff]
      %v2265 = vld [vmem:[#allocation3 + $0x20] sm:$0xff]
      %v2266 = vld [vmem:[#allocation3 + $0x28] sm:$0xff]
      %v2267 = vld [vmem:[#allocation3 + $0x30] sm:$0xff]
      %v2268 = vld [vmem:[#allocation3 + $0x38] sm:$0xff]
      %v2269 = vld [vmem:[#allocation3 + $0x40] sm:$0xff]
      %v2270 = vld [vmem:[#allocation3 + $0x48] sm:$0xff]
      %v2271 = vld [vmem:[#allocation3 + $0x50] sm:$0xff]
      %v2272 = vld [vmem:[#allocation3 + $0x58] sm:$0xff]
      %v2273 = vld [vmem:[#allocation3 + $0x60] sm:$0xff]
      %v2274 = vld [vmem:[#allocation3 + $0x68] sm:$0xff]
      %v2275 = vld [vmem:[#allocation3 + $0x70] sm:$0xff]
      %v2276 = vld [vmem:[#allocation3 + $0x78] sm:$0xff]
      %v2277 = vld [vmem:[#allocation3 + $0x80] sm:$0xff]
      %v2278 = vld [vmem:[#allocation3 + $0x88] sm:$0xff]
      %v2279 = vld [vmem:[#allocation3 + $0x90] sm:$0xff]
      %v2280 = vld [vmem:[#allocation3 + $0x98] sm:$0xff]
      %v2281 = vld [vmem:[#allocation3 + $0xa0] sm:$0xff]
      %v2282 = vld [vmem:[#allocation3 + $0xa8] sm:$0xff]
      %v2283 = vld [vmem:[#allocation3 + $0xb0] sm:$0xff]
      %v2284 = vld [vmem:[#allocation3 + $0xb8] sm:$0xff]
      %v2285 = vld [vmem:[#allocation3 + $0xc0] sm:$0xff]
      %v2286 = vld [vmem:[#allocation3 + $0xc8] sm:$0xff]
      %v2287 = vld [vmem:[#allocation3 + $0xd0] sm:$0xff]
      %v2288 = vld [vmem:[#allocation3 + $0xd8] sm:$0xff]
      %v2289 = vld [vmem:[#allocation3 + $0xe0] sm:$0xff]
      %v2290 = vld [vmem:[#allocation3 + $0xe8] sm:$0xff]
      %v2291 = vld [vmem:[#allocation3 + $0xf0] sm:$0xff]
      %v2292 = vld [vmem:[#allocation3 + $0xf8] sm:$0xff]
      %v2294 = vunpack.c.l.b16 %v2260
      %v2295 = vpack.c.b16 %v2294, %v2294
      %v2296 = vrot.slane %v2295, 2
      %v2298 = vsel %vm264, %v2244, 0
      %v2301 = vsel %vm264, %v2245, 0
      %v2304 = vsel %vm264, %v2246, 0
      %v2307 = vsel %vm264, %v2247, 0
      %v2310 = vsel %vm264, %v2248, 0
      %v2313 = vsel %vm264, %v2249, 0
      %v2316 = vsel %vm264, %v2250, 0
      %v2319 = vsel %vm264, %v2251, 0
      %v2322 = vsel %vm264, %v2252, 0
      %v2325 = vsel %vm264, %v2253, 0
      %v2328 = vsel %vm264, %v2254, 0
      %v2331 = vsel %vm264, %v2255, 0
      %v2334 = vsel %vm264, %v2256, 0
      %v2337 = vsel %vm264, %v2257, 0
      %v2340 = vsel %vm264, %v2258, 0
      %v2343 = vsel %vm264, %v2259, 0
      %v2346 = vsel %vm547, %v2296, 0
      %2348 = vmatprep.subr.bf16.mxu0 0
      %2349 = vmatpush1.bf16.msra.mxu0 %v2346
      %2350 = vmatprep.subr.bf16.mxu0 0
      %2351 = vmatpush1.bf16.msra.mxu0 0
      %2352 = vmatprep.subr.bf16.mxu0 0
      %2353 = vmatpush1.bf16.msra.mxu0 0
      %2354 = vmatprep.subr.bf16.mxu0 0
      %2355 = vmatpush1.bf16.msra.mxu0 0
      %2356 = vmatprep.subr.bf16.mxu0 0
      %2357 = vmatpush1.bf16.msra.mxu0 0
      %2358 = vmatprep.subr.bf16.mxu0 0
      %2359 = vmatpush1.bf16.msra.mxu0 0
      %2360 = vmatprep.subr.bf16.mxu0 0
      %2361 = vmatpush1.bf16.msra.mxu0 0
      %2362 = vmatprep.subr.bf16.mxu0 0
      %2363 = vmatpush1.bf16.msra.mxu0 0
      %2364 = vmatprep.subr.bf16.mxu0 0
      %2365 = vmatpush1.bf16.msra.mxu0 0
      %2366 = vmatprep.subr.bf16.mxu0 0
      %2367 = vmatpush1.bf16.msra.mxu0 0
      %2368 = vmatprep.subr.bf16.mxu0 0
      %2369 = vmatpush1.bf16.msra.mxu0 0
      %2370 = vmatprep.subr.bf16.mxu0 0
      %2371 = vmatpush1.bf16.msra.mxu0 0
      %2372 = vmatprep.subr.bf16.mxu0 0
      %2373 = vmatpush1.bf16.msra.mxu0 0
      %2374 = vmatprep.subr.bf16.mxu0 0
      %2375 = vmatpush1.bf16.msra.mxu0 0
      %2376 = vmatprep.subr.bf16.mxu0 0
      %2377 = vmatpush1.bf16.msra.mxu0 0
      %2378 = vmatprep.subr.bf16.mxu0 0
      %2379 = vmatpush1.bf16.msra.mxu0 0
      %2380 = vmatprep.mubr.bf16.mxu0 0
      %2381 = vmatmul.mubr.bf16.gmra.mrb[0].mxu0 %v2298
      %v2382 = vpop.f32.mrb[0].mxu0
      %v2383 = vadd.f32 0.0, %v2382
      %v2384 = vpop.f32.mrb[0].mxu0
      %v2385 = vpop.f32.mrb[0].mxu0
      %v2386 = vadd.f32 0.0, %v2385
      %v2387 = vpop.f32.mrb[0].mxu0
      %2388 = vmatprep.mubr.bf16.mxu0 0
      %2389 = vmatmul.mubr.bf16.gmra.mrb[0].mxu0 %v2301
      %v2390 = vpop.f32.mrb[0].mxu0
      %v2391 = vadd.f32 0.0, %v2390
      %v2392 = vpop.f32.mrb[0].mxu0
      %v2393 = vpop.f32.mrb[0].mxu0
      %v2394 = vadd.f32 0.0, %v2393
      %v2395 = vpop.f32.mrb[0].mxu0
      %2396 = vmatprep.mubr.bf16.mxu0 0
      %2397 = vmatmul.mubr.bf16.gmra.mrb[0].mxu0 %v2304
      %v2398 = vpop.f32.mrb[0].mxu0
      %v2399 = vadd.f32 0.0, %v2398
      %v2400 = vpop.f32.mrb[0].mxu0
      %v2401 = vpop.f32.mrb[0].mxu0
      %v2402 = vadd.f32 0.0, %v2401
      %v2403 = vpop.f32.mrb[0].mxu0
      %2404 = vmatprep.mubr.bf16.mxu0 0
      %2405 = vmatmul.mubr.bf16.gmra.mrb[0].mxu0 %v2307
      %v2406 = vpop.f32.mrb[0].mxu0
      %v2407 = vadd.f32 0.0, %v2406
      %v2408 = vpop.f32.mrb[0].mxu0
      %v2409 = vpop.f32.mrb[0].mxu0
      %v2410 = vadd.f32 0.0, %v2409
      %v2411 = vpop.f32.mrb[0].mxu0
      %2412 = vmatprep.mubr.bf16.mxu0 0
      %2413 = vmatmul.mubr.bf16.gmra.mrb[0].mxu0 %v2310
      %v2414 = vpop.f32.mrb[0].mxu0
      %v2415 = vadd.f32 0.0, %v2414
      %v2416 = vpop.f32.mrb[0].mxu0
      %v2417 = vpop.f32.mrb[0].mxu0
      %v2418 = vadd.f32 0.0, %v2417
      %v2419 = vpop.f32.mrb[0].mxu0
      %2420 = vmatprep.mubr.bf16.mxu0 0
      %2421 = vmatmul.mubr.bf16.gmra.mrb[0].mxu0 %v2313
      %v2422 = vpop.f32.mrb[0].mxu0
      %v2423 = vadd.f32 0.0, %v2422
      %v2424 = vpop.f32.mrb[0].mxu0
      %v2425 = vpop.f32.mrb[0].mxu0
      %v2426 = vadd.f32 0.0, %v2425
      %v2427 = vpop.f32.mrb[0].mxu0
      %2428 = vmatprep.mubr.bf16.mxu0 0
      %2429 = vmatmul.mubr.bf16.gmra.mrb[0].mxu0 %v2316
      %v2430 = vpop.f32.mrb[0].mxu0
      %v2431 = vadd.f32 0.0, %v2430
      %v2432 = vpop.f32.mrb[0].mxu0
      %v2433 = vpop.f32.mrb[0].mxu0
      %v2434 = vadd.f32 0.0, %v2433
      %v2435 = vpop.f32.mrb[0].mxu0
      %2436 = vmatprep.mubr.bf16.mxu0 0
      %2437 = vmatmul.mubr.bf16.gmra.mrb[0].mxu0 %v2319
      %v2438 = vpop.f32.mrb[0].mxu0
      %v2439 = vadd.f32 0.0, %v2438
      %v2440 = vpop.f32.mrb[0].mxu0
      %v2441 = vpop.f32.mrb[0].mxu0
      %v2442 = vadd.f32 0.0, %v2441
      %v2443 = vpop.f32.mrb[0].mxu0
      %2444 = vmatprep.mubr.bf16.mxu0 0
      %2445 = vmatmul.mubr.bf16.gmra.mrb[0].mxu0 %v2322
      %v2446 = vpop.f32.mrb[0].mxu0
      %v2447 = vadd.f32 0.0, %v2446
      %v2448 = vpop.f32.mrb[0].mxu0
      %v2449 = vpop.f32.mrb[0].mxu0
      %v2450 = vadd.f32 0.0, %v2449
      %v2451 = vpop.f32.mrb[0].mxu0
      %2452 = vmatprep.mubr.bf16.mxu0 0
      %2453 = vmatmul.mubr.bf16.gmra.mrb[0].mxu0 %v2325
      %v2454 = vpop.f32.mrb[0].mxu0
      %v2455 = vadd.f32 0.0, %v2454
      %v2456 = vpop.f32.mrb[0].mxu0
      %v2457 = vpop.f32.mrb[0].mxu0
      %v2458 = vadd.f32 0.0, %v2457
      %v2459 = vpop.f32.mrb[0].mxu0
      %2460 = vmatprep.mubr.bf16.mxu0 0
      %2461 = vmatmul.mubr.bf16.gmra.mrb[0].mxu0 %v2328
      %v2462 = vpop.f32.mrb[0].mxu0
      %v2463 = vadd.f32 0.0, %v2462
      %v2464 = vpop.f32.mrb[0].mxu0
      %v2465 = vpop.f32.mrb[0].mxu0
      %v2466 = vadd.f32 0.0, %v2465
      %v2467 = vpop.f32.mrb[0].mxu0
      %2468 = vmatprep.mubr.bf16.mxu0 0
      %2469 = vmatmul.mubr.bf16.gmra.mrb[0].mxu0 %v2331
      %v2470 = vpop.f32.mrb[0].mxu0
      %v2471 = vadd.f32 0.0, %v2470
      %v2472 = vpop.f32.mrb[0].mxu0
      %v2473 = vpop.f32.mrb[0].mxu0
      %v2474 = vadd.f32 0.0, %v2473
      %v2475 = vpop.f32.mrb[0].mxu0
      %2476 = vmatprep.mubr.bf16.mxu0 0
      %2477 = vmatmul.mubr.bf16.gmra.mrb[0].mxu0 %v2334
      %v2478 = vpop.f32.mrb[0].mxu0
      %v2479 = vadd.f32 0.0, %v2478
      %v2480 = vpop.f32.mrb[0].mxu0
      %v2481 = vpop.f32.mrb[0].mxu0
      %v2482 = vadd.f32 0.0, %v2481
      %v2483 = vpop.f32.mrb[0].mxu0
      %2484 = vmatprep.mubr.bf16.mxu0 0
      %2485 = vmatmul.mubr.bf16.gmra.mrb[0].mxu0 %v2337
      %v2486 = vpop.f32.mrb[0].mxu0
      %v2487 = vadd.f32 0.0, %v2486
      %v2488 = vpop.f32.mrb[0].mxu0
      %v2489 = vpop.f32.mrb[0].mxu0
      %v2490 = vadd.f32 0.0, %v2489
      %v2491 = vpop.f32.mrb[0].mxu0
      %2492 = vmatprep.mubr.bf16.mxu0 0
      %2493 = vmatmul.mubr.bf16.gmra.mrb[0].mxu0 %v2340
      %v2494 = vpop.f32.mrb[0].mxu0
      %v2495 = vadd.f32 0.0, %v2494
      %v2496 = vpop.f32.mrb[0].mxu0
      %v2497 = vpop.f32.mrb[0].mxu0
      %v2498 = vadd.f32 0.0, %v2497
      %v2499 = vpop.f32.mrb[0].mxu0
      %2500 = vmatprep.mubr.bf16.mxu0 0
      %2501 = vmatmul.mubr.bf16.gmra.mrb[0].mxu0 %v2343
      %v2502 = vpop.f32.mrb[0].mxu0
      %v2503 = vadd.f32 0.0, %v2502
      %v2504 = vpop.f32.mrb[0].mxu0
      %v2505 = vpop.f32.mrb[0].mxu0
      %v2506 = vadd.f32 0.0, %v2505
      %v2507 = vpop.f32.mrb[0].mxu0
      %2508 = vdwg.mxu0
      %v2509 = vadd.f32 %v2261, %v2383
      %v2510 = vadd.f32 %v2262, %v2386
      %v2511 = vadd.f32 %v2263, %v2391
      %v2512 = vadd.f32 %v2264, %v2394
      %v2513 = vadd.f32 %v2265, %v2399
      %v2514 = vadd.f32 %v2266, %v2402
      %v2515 = vadd.f32 %v2267, %v2407
      %v2516 = vadd.f32 %v2268, %v2410
      %v2517 = vadd.f32 %v2269, %v2415
      %v2518 = vadd.f32 %v2270, %v2418
      %v2519 = vadd.f32 %v2271, %v2423
      %v2520 = vadd.f32 %v2272, %v2426
      %v2521 = vadd.f32 %v2273, %v2431
      %v2522 = vadd.f32 %v2274, %v2434
      %v2523 = vadd.f32 %v2275, %v2439
      %v2524 = vadd.f32 %v2276, %v2442
      %v2525 = vadd.f32 %v2277, %v2447
      %v2526 = vadd.f32 %v2278, %v2450
      %v2527 = vadd.f32 %v2279, %v2455
      %v2528 = vadd.f32 %v2280, %v2458
      %v2529 = vadd.f32 %v2281, %v2463
      %v2530 = vadd.f32 %v2282, %v2466
      %v2531 = vadd.f32 %v2283, %v2471
      %v2532 = vadd.f32 %v2284, %v2474
      %v2533 = vadd.f32 %v2285, %v2479
      %v2534 = vadd.f32 %v2286, %v2482
      %v2535 = vadd.f32 %v2287, %v2487
      %v2536 = vadd.f32 %v2288, %v2490
      %v2537 = vadd.f32 %v2289, %v2495
      %v2538 = vadd.f32 %v2290, %v2498
      %v2539 = vadd.f32 %v2291, %v2503
      %v2540 = vadd.f32 %v2292, %v2506
      %2541 = vst.msk [vmem:[#allocation3] sm:$0xff] %vm385, %v2509
      %2542 = vst.msk [vmem:[#allocation3 + $0x8] sm:$0xff] %vm385, %v2510
      %2543 = vst.msk [vmem:[#allocation3 + $0x10] sm:$0xff] %vm385, %v2511
      %2544 = vst.msk [vmem:[#allocation3 + $0x18] sm:$0xff] %vm385, %v2512
      %2545 = vst.msk [vmem:[#allocation3 + $0x20] sm:$0xff] %vm385, %v2513
      %2546 = vst.msk [vmem:[#allocation3 + $0x28] sm:$0xff] %vm385, %v2514
      %2547 = vst.msk [vmem:[#allocation3 + $0x30] sm:$0xff] %vm385, %v2515
      %2548 = vst.msk [vmem:[#allocation3 + $0x38] sm:$0xff] %vm385, %v2516
      %2549 = vst.msk [vmem:[#allocation3 + $0x40] sm:$0xff] %vm385, %v2517
      %2550 = vst.msk [vmem:[#allocation3 + $0x48] sm:$0xff] %vm385, %v2518
      %2551 = vst.msk [vmem:[#allocation3 + $0x50] sm:$0xff] %vm385, %v2519
      %2552 = vst.msk [vmem:[#allocation3 + $0x58] sm:$0xff] %vm385, %v2520
      %2553 = vst.msk [vmem:[#allocation3 + $0x60] sm:$0xff] %vm385, %v2521
      %2554 = vst.msk [vmem:[#allocation3 + $0x68] sm:$0xff] %vm385, %v2522
      %2555 = vst.msk [vmem:[#allocation3 + $0x70] sm:$0xff] %vm385, %v2523
      %2556 = vst.msk [vmem:[#allocation3 + $0x78] sm:$0xff] %vm385, %v2524
      %2557 = vst.msk [vmem:[#allocation3 + $0x80] sm:$0xff] %vm385, %v2525
      %2558 = vst.msk [vmem:[#allocation3 + $0x88] sm:$0xff] %vm385, %v2526
      %2559 = vst.msk [vmem:[#allocation3 + $0x90] sm:$0xff] %vm385, %v2527
      %2560 = vst.msk [vmem:[#allocation3 + $0x98] sm:$0xff] %vm385, %v2528
      %2561 = vst.msk [vmem:[#allocation3 + $0xa0] sm:$0xff] %vm385, %v2529
      %2562 = vst.msk [vmem:[#allocation3 + $0xa8] sm:$0xff] %vm385, %v2530
      %2563 = vst.msk [vmem:[#allocation3 + $0xb0] sm:$0xff] %vm385, %v2531
      %2564 = vst.msk [vmem:[#allocation3 + $0xb8] sm:$0xff] %vm385, %v2532
      %2565 = vst.msk [vmem:[#allocation3 + $0xc0] sm:$0xff] %vm385, %v2533
      %2566 = vst.msk [vmem:[#allocation3 + $0xc8] sm:$0xff] %vm385, %v2534
      %2567 = vst.msk [vmem:[#allocation3 + $0xd0] sm:$0xff] %vm385, %v2535
      %2568 = vst.msk [vmem:[#allocation3 + $0xd8] sm:$0xff] %vm385, %v2536
      %2569 = vst.msk [vmem:[#allocation3 + $0xe0] sm:$0xff] %vm385, %v2537
      %2570 = vst.msk [vmem:[#allocation3 + $0xe8] sm:$0xff] %vm385, %v2538
      %2571 = vst.msk [vmem:[#allocation3 + $0xf0] sm:$0xff] %vm385, %v2539
      %2572 = vst.msk [vmem:[#allocation3 + $0xf8] sm:$0xff] %vm385, %v2540
      %s2573 = scalar_lea.vmem [#allocation2], 48
      %v2574 = vld [vmem:[%s2573] sm:$0xff]
      %v2575 = vld [vmem:[%s2573 + $0x8] sm:$0xff]
      %v2576 = vld [vmem:[%s2573 + $0x18] sm:$0xff]
      %v2577 = vld [vmem:[%s2573 + $0x20] sm:$0xff]
      %v2578 = vld [vmem:[%s2573 + $0x30] sm:$0xff]
      %v2579 = vld [vmem:[%s2573 + $0x38] sm:$0xff]
      %v2580 = vld [vmem:[%s2573 + $0x48] sm:$0xff]
      %v2581 = vld [vmem:[%s2573 + $0x50] sm:$0xff]
      %v2582 = vld [vmem:[%s2573 + $0x60] sm:$0xff]
      %v2583 = vld [vmem:[%s2573 + $0x68] sm:$0xff]
      %v2584 = vld [vmem:[%s2573 + $0x78] sm:$0xff]
      %v2585 = vld [vmem:[%s2573 + $0x80] sm:$0xff]
      %v2586 = vld [vmem:[%s2573 + $0x90] sm:$0xff]
      %v2587 = vld [vmem:[%s2573 + $0x98] sm:$0xff]
      %v2588 = vld [vmem:[%s2573 + $0xa8] sm:$0xff]
      %v2589 = vld [vmem:[%s2573 + $0xb0] sm:$0xff]
      %v2590 = vld [vmem:[%s2573 + $0xc0] sm:$0xff]
      %v2591 = vld [vmem:[%s2573 + $0xc8] sm:$0xff]
      %v2592 = vld [vmem:[%s2573 + $0xd8] sm:$0xff]
      %v2593 = vld [vmem:[%s2573 + $0xe0] sm:$0xff]
      %v2594 = vld [vmem:[%s2573 + $0xf0] sm:$0xff]
      %v2595 = vld [vmem:[%s2573 + $0xf8] sm:$0xff]
      %v2596 = vld [vmem:[%s2573 + $0x108] sm:$0xff]
      %v2597 = vld [vmem:[%s2573 + $0x110] sm:$0xff]
      %v2598 = vld [vmem:[%s2573 + $0x120] sm:$0xff]
      %v2599 = vld [vmem:[%s2573 + $0x128] sm:$0xff]
      %v2600 = vld [vmem:[%s2573 + $0x138] sm:$0xff]
      %v2601 = vld [vmem:[%s2573 + $0x140] sm:$0xff]
      %v2602 = vld [vmem:[%s2573 + $0x150] sm:$0xff]
      %v2603 = vld [vmem:[%s2573 + $0x158] sm:$0xff]
      %v2604 = vld [vmem:[%s2573 + $0x168] sm:$0xff]
      %v2605 = vld [vmem:[%s2573 + $0x170] sm:$0xff]
      %v2606 = vpack.c.bf16 %v2575, %v2574
      %v2607 = vpack.c.bf16 %v2577, %v2576
      %v2608 = vpack.c.bf16 %v2579, %v2578
      %v2609 = vpack.c.bf16 %v2581, %v2580
      %v2610 = vpack.c.bf16 %v2583, %v2582
      %v2611 = vpack.c.bf16 %v2585, %v2584
      %v2612 = vpack.c.bf16 %v2587, %v2586
      %v2613 = vpack.c.bf16 %v2589, %v2588
      %v2614 = vpack.c.bf16 %v2591, %v2590
      %v2615 = vpack.c.bf16 %v2593, %v2592
      %v2616 = vpack.c.bf16 %v2595, %v2594
      %v2617 = vpack.c.bf16 %v2597, %v2596
      %v2618 = vpack.c.bf16 %v2599, %v2598
      %v2619 = vpack.c.bf16 %v2601, %v2600
      %v2620 = vpack.c.bf16 %v2603, %v2602
      %v2621 = vpack.c.bf16 %v2605, %v2604
      %v2622 = vld [vmem:[%s248 + $0xc] sm:$0x3]
      %v2623 = vld [vmem:[#allocation3] sm:$0xff]
      %v2624 = vld [vmem:[#allocation3 + $0x8] sm:$0xff]
      %v2625 = vld [vmem:[#allocation3 + $0x10] sm:$0xff]
      %v2626 = vld [vmem:[#allocation3 + $0x18] sm:$0xff]
      %v2627 = vld [vmem:[#allocation3 + $0x20] sm:$0xff]
      %v2628 = vld [vmem:[#allocation3 + $0x28] sm:$0xff]
      %v2629 = vld [vmem:[#allocation3 + $0x30] sm:$0xff]
      %v2630 = vld [vmem:[#allocation3 + $0x38] sm:$0xff]
      %v2631 = vld [vmem:[#allocation3 + $0x40] sm:$0xff]
      %v2632 = vld [vmem:[#allocation3 + $0x48] sm:$0xff]
      %v2633 = vld [vmem:[#allocation3 + $0x50] sm:$0xff]
      %v2634 = vld [vmem:[#allocation3 + $0x58] sm:$0xff]
      %v2635 = vld [vmem:[#allocation3 + $0x60] sm:$0xff]
      %v2636 = vld [vmem:[#allocation3 + $0x68] sm:$0xff]
      %v2637 = vld [vmem:[#allocation3 + $0x70] sm:$0xff]
      %v2638 = vld [vmem:[#allocation3 + $0x78] sm:$0xff]
      %v2639 = vld [vmem:[#allocation3 + $0x80] sm:$0xff]
      %v2640 = vld [vmem:[#allocation3 + $0x88] sm:$0xff]
      %v2641 = vld [vmem:[#allocation3 + $0x90] sm:$0xff]
      %v2642 = vld [vmem:[#allocation3 + $0x98] sm:$0xff]
      %v2643 = vld [vmem:[#allocation3 + $0xa0] sm:$0xff]
      %v2644 = vld [vmem:[#allocation3 + $0xa8] sm:$0xff]
      %v2645 = vld [vmem:[#allocation3 + $0xb0] sm:$0xff]
      %v2646 = vld [vmem:[#allocation3 + $0xb8] sm:$0xff]
      %v2647 = vld [vmem:[#allocation3 + $0xc0] sm:$0xff]
      %v2648 = vld [vmem:[#allocation3 + $0xc8] sm:$0xff]
      %v2649 = vld [vmem:[#allocation3 + $0xd0] sm:$0xff]
      %v2650 = vld [vmem:[#allocation3 + $0xd8] sm:$0xff]
      %v2651 = vld [vmem:[#allocation3 + $0xe0] sm:$0xff]
      %v2652 = vld [vmem:[#allocation3 + $0xe8] sm:$0xff]
      %v2653 = vld [vmem:[#allocation3 + $0xf0] sm:$0xff]
      %v2654 = vld [vmem:[#allocation3 + $0xf8] sm:$0xff]
      %v2656 = vsel %vm264, %v2606, 0
      %v2659 = vsel %vm264, %v2607, 0
      %v2662 = vsel %vm264, %v2608, 0
      %v2665 = vsel %vm264, %v2609, 0
      %v2668 = vsel %vm264, %v2610, 0
      %v2671 = vsel %vm264, %v2611, 0
      %v2674 = vsel %vm264, %v2612, 0
      %v2677 = vsel %vm264, %v2613, 0
      %v2680 = vsel %vm264, %v2614, 0
      %v2683 = vsel %vm264, %v2615, 0
      %v2686 = vsel %vm264, %v2616, 0
      %v2689 = vsel %vm264, %v2617, 0
      %v2692 = vsel %vm264, %v2618, 0
      %v2695 = vsel %vm264, %v2619, 0
      %v2698 = vsel %vm264, %v2620, 0
      %v2701 = vsel %vm264, %v2621, 0
      %v2704 = vsel %vm547, %v2622, 0
      %2706 = vmatprep.subr.bf16.mxu0 0
      %2707 = vmatpush1.bf16.msra.mxu0 %v2704
      %2708 = vmatprep.subr.bf16.mxu0 0
      %2709 = vmatpush1.bf16.msra.mxu0 0
      %2710 = vmatprep.subr.bf16.mxu0 0
      %2711 = vmatpush1.bf16.msra.mxu0 0
      %2712 = vmatprep.subr.bf16.mxu0 0
      %2713 = vmatpush1.bf16.msra.mxu0 0
      %2714 = vmatprep.subr.bf16.mxu0 0
      %2715 = vmatpush1.bf16.msra.mxu0 0
      %2716 = vmatprep.subr.bf16.mxu0 0
      %2717 = vmatpush1.bf16.msra.mxu0 0
      %2718 = vmatprep.subr.bf16.mxu0 0
      %2719 = vmatpush1.bf16.msra.mxu0 0
      %2720 = vmatprep.subr.bf16.mxu0 0
      %2721 = vmatpush1.bf16.msra.mxu0 0
      %2722 = vmatprep.subr.bf16.mxu0 0
      %2723 = vmatpush1.bf16.msra.mxu0 0
      %2724 = vmatprep.subr.bf16.mxu0 0
      %2725 = vmatpush1.bf16.msra.mxu0 0
      %2726 = vmatprep.subr.bf16.mxu0 0
      %2727 = vmatpush1.bf16.msra.mxu0 0
      %2728 = vmatprep.subr.bf16.mxu0 0
      %2729 = vmatpush1.bf16.msra.mxu0 0
      %2730 = vmatprep.subr.bf16.mxu0 0
      %2731 = vmatpush1.bf16.msra.mxu0 0
      %2732 = vmatprep.subr.bf16.mxu0 0
      %2733 = vmatpush1.bf16.msra.mxu0 0
      %2734 = vmatprep.subr.bf16.mxu0 0
      %2735 = vmatpush1.bf16.msra.mxu0 0
      %2736 = vmatprep.subr.bf16.mxu0 0
      %2737 = vmatpush1.bf16.msra.mxu0 0
      %2738 = vmatprep.mubr.bf16.mxu0 0
      %2739 = vmatmul.mubr.bf16.gmra.mrb[0].mxu0 %v2656
      %v2740 = vpop.f32.mrb[0].mxu0
      %v2741 = vadd.f32 0.0, %v2740
      %v2742 = vpop.f32.mrb[0].mxu0
      %v2743 = vpop.f32.mrb[0].mxu0
      %v2744 = vadd.f32 0.0, %v2743
      %v2745 = vpop.f32.mrb[0].mxu0
      %2746 = vmatprep.mubr.bf16.mxu0 0
      %2747 = vmatmul.mubr.bf16.gmra.mrb[0].mxu0 %v2659
      %v2748 = vpop.f32.mrb[0].mxu0
      %v2749 = vadd.f32 0.0, %v2748
      %v2750 = vpop.f32.mrb[0].mxu0
      %v2751 = vpop.f32.mrb[0].mxu0
      %v2752 = vadd.f32 0.0, %v2751
      %v2753 = vpop.f32.mrb[0].mxu0
      %2754 = vmatprep.mubr.bf16.mxu0 0
      %2755 = vmatmul.mubr.bf16.gmra.mrb[0].mxu0 %v2662
      %v2756 = vpop.f32.mrb[0].mxu0
      %v2757 = vadd.f32 0.0, %v2756
      %v2758 = vpop.f32.mrb[0].mxu0
      %v2759 = vpop.f32.mrb[0].mxu0
      %v2760 = vadd.f32 0.0, %v2759
      %v2761 = vpop.f32.mrb[0].mxu0
      %2762 = vmatprep.mubr.bf16.mxu0 0
      %2763 = vmatmul.mubr.bf16.gmra.mrb[0].mxu0 %v2665
      %v2764 = vpop.f32.mrb[0].mxu0
      %v2765 = vadd.f32 0.0, %v2764
      %v2766 = vpop.f32.mrb[0].mxu0
      %v2767 = vpop.f32.mrb[0].mxu0
      %v2768 = vadd.f32 0.0, %v2767
      %v2769 = vpop.f32.mrb[0].mxu0
      %2770 = vmatprep.mubr.bf16.mxu0 0
      %2771 = vmatmul.mubr.bf16.gmra.mrb[0].mxu0 %v2668
      %v2772 = vpop.f32.mrb[0].mxu0
      %v2773 = vadd.f32 0.0, %v2772
      %v2774 = vpop.f32.mrb[0].mxu0
      %v2775 = vpop.f32.mrb[0].mxu0
      %v2776 = vadd.f32 0.0, %v2775
      %v2777 = vpop.f32.mrb[0].mxu0
      %2778 = vmatprep.mubr.bf16.mxu0 0
      %2779 = vmatmul.mubr.bf16.gmra.mrb[0].mxu0 %v2671
      %v2780 = vpop.f32.mrb[0].mxu0
      %v2781 = vadd.f32 0.0, %v2780
      %v2782 = vpop.f32.mrb[0].mxu0
      %v2783 = vpop.f32.mrb[0].mxu0
      %v2784 = vadd.f32 0.0, %v2783
      %v2785 = vpop.f32.mrb[0].mxu0
      %2786 = vmatprep.mubr.bf16.mxu0 0
      %2787 = vmatmul.mubr.bf16.gmra.mrb[0].mxu0 %v2674
      %v2788 = vpop.f32.mrb[0].mxu0
      %v2789 = vadd.f32 0.0, %v2788
      %v2790 = vpop.f32.mrb[0].mxu0
      %v2791 = vpop.f32.mrb[0].mxu0
      %v2792 = vadd.f32 0.0, %v2791
      %v2793 = vpop.f32.mrb[0].mxu0
      %2794 = vmatprep.mubr.bf16.mxu0 0
      %2795 = vmatmul.mubr.bf16.gmra.mrb[0].mxu0 %v2677
      %v2796 = vpop.f32.mrb[0].mxu0
      %v2797 = vadd.f32 0.0, %v2796
      %v2798 = vpop.f32.mrb[0].mxu0
      %v2799 = vpop.f32.mrb[0].mxu0
      %v2800 = vadd.f32 0.0, %v2799
      %v2801 = vpop.f32.mrb[0].mxu0
      %2802 = vmatprep.mubr.bf16.mxu0 0
      %2803 = vmatmul.mubr.bf16.gmra.mrb[0].mxu0 %v2680
      %v2804 = vpop.f32.mrb[0].mxu0
      %v2805 = vadd.f32 0.0, %v2804
      %v2806 = vpop.f32.mrb[0].mxu0
      %v2807 = vpop.f32.mrb[0].mxu0
      %v2808 = vadd.f32 0.0, %v2807
      %v2809 = vpop.f32.mrb[0].mxu0
      %2810 = vmatprep.mubr.bf16.mxu0 0
      %2811 = vmatmul.mubr.bf16.gmra.mrb[0].mxu0 %v2683
      %v2812 = vpop.f32.mrb[0].mxu0
      %v2813 = vadd.f32 0.0, %v2812
      %v2814 = vpop.f32.mrb[0].mxu0
      %v2815 = vpop.f32.mrb[0].mxu0
      %v2816 = vadd.f32 0.0, %v2815
      %v2817 = vpop.f32.mrb[0].mxu0
      %2818 = vmatprep.mubr.bf16.mxu0 0
      %2819 = vmatmul.mubr.bf16.gmra.mrb[0].mxu0 %v2686
      %v2820 = vpop.f32.mrb[0].mxu0
      %v2821 = vadd.f32 0.0, %v2820
      %v2822 = vpop.f32.mrb[0].mxu0
      %v2823 = vpop.f32.mrb[0].mxu0
      %v2824 = vadd.f32 0.0, %v2823
      %v2825 = vpop.f32.mrb[0].mxu0
      %2826 = vmatprep.mubr.bf16.mxu0 0
      %2827 = vmatmul.mubr.bf16.gmra.mrb[0].mxu0 %v2689
      %v2828 = vpop.f32.mrb[0].mxu0
      %v2829 = vadd.f32 0.0, %v2828
      %v2830 = vpop.f32.mrb[0].mxu0
      %v2831 = vpop.f32.mrb[0].mxu0
      %v2832 = vadd.f32 0.0, %v2831
      %v2833 = vpop.f32.mrb[0].mxu0
      %2834 = vmatprep.mubr.bf16.mxu0 0
      %2835 = vmatmul.mubr.bf16.gmra.mrb[0].mxu0 %v2692
      %v2836 = vpop.f32.mrb[0].mxu0
      %v2837 = vadd.f32 0.0, %v2836
      %v2838 = vpop.f32.mrb[0].mxu0
      %v2839 = vpop.f32.mrb[0].mxu0
      %v2840 = vadd.f32 0.0, %v2839
      %v2841 = vpop.f32.mrb[0].mxu0
      %2842 = vmatprep.mubr.bf16.mxu0 0
      %2843 = vmatmul.mubr.bf16.gmra.mrb[0].mxu0 %v2695
      %v2844 = vpop.f32.mrb[0].mxu0
      %v2845 = vadd.f32 0.0, %v2844
      %v2846 = vpop.f32.mrb[0].mxu0
      %v2847 = vpop.f32.mrb[0].mxu0
      %v2848 = vadd.f32 0.0, %v2847
      %v2849 = vpop.f32.mrb[0].mxu0
      %2850 = vmatprep.mubr.bf16.mxu0 0
      %2851 = vmatmul.mubr.bf16.gmra.mrb[0].mxu0 %v2698
      %v2852 = vpop.f32.mrb[0].mxu0
      %v2853 = vadd.f32 0.0, %v2852
      %v2854 = vpop.f32.mrb[0].mxu0
      %v2855 = vpop.f32.mrb[0].mxu0
      %v2856 = vadd.f32 0.0, %v2855
      %v2857 = vpop.f32.mrb[0].mxu0
      %2858 = vmatprep.mubr.bf16.mxu0 0
      %2859 = vmatmul.mubr.bf16.gmra.mrb[0].mxu0 %v2701
      %v2860 = vpop.f32.mrb[0].mxu0
      %v2861 = vadd.f32 0.0, %v2860
      %v2862 = vpop.f32.mrb[0].mxu0
      %v2863 = vpop.f32.mrb[0].mxu0
      %v2864 = vadd.f32 0.0, %v2863
      %v2865 = vpop.f32.mrb[0].mxu0
      %2866 = vdwg.mxu0
      %v2867 = vadd.f32 %v2623, %v2741
      %v2868 = vadd.f32 %v2624, %v2744
      %v2869 = vadd.f32 %v2625, %v2749
      %v2870 = vadd.f32 %v2626, %v2752
      %v2871 = vadd.f32 %v2627, %v2757
      %v2872 = vadd.f32 %v2628, %v2760
      %v2873 = vadd.f32 %v2629, %v2765
      %v2874 = vadd.f32 %v2630, %v2768
      %v2875 = vadd.f32 %v2631, %v2773
      %v2876 = vadd.f32 %v2632, %v2776
      %v2877 = vadd.f32 %v2633, %v2781
      %v2878 = vadd.f32 %v2634, %v2784
      %v2879 = vadd.f32 %v2635, %v2789
      %v2880 = vadd.f32 %v2636, %v2792
      %v2881 = vadd.f32 %v2637, %v2797
      %v2882 = vadd.f32 %v2638, %v2800
      %v2883 = vadd.f32 %v2639, %v2805
      %v2884 = vadd.f32 %v2640, %v2808
      %v2885 = vadd.f32 %v2641, %v2813
      %v2886 = vadd.f32 %v2642, %v2816
      %v2887 = vadd.f32 %v2643, %v2821
      %v2888 = vadd.f32 %v2644, %v2824
      %v2889 = vadd.f32 %v2645, %v2829
      %v2890 = vadd.f32 %v2646, %v2832
      %v2891 = vadd.f32 %v2647, %v2837
      %v2892 = vadd.f32 %v2648, %v2840
      %v2893 = vadd.f32 %v2649, %v2845
      %v2894 = vadd.f32 %v2650, %v2848
      %v2895 = vadd.f32 %v2651, %v2853
      %v2896 = vadd.f32 %v2652, %v2856
      %v2897 = vadd.f32 %v2653, %v2861
      %v2898 = vadd.f32 %v2654, %v2864
      %2899 = vst.msk [vmem:[#allocation3] sm:$0xff] %vm385, %v2867
      %2900 = vst.msk [vmem:[#allocation3 + $0x8] sm:$0xff] %vm385, %v2868
      %2901 = vst.msk [vmem:[#allocation3 + $0x10] sm:$0xff] %vm385, %v2869
      %2902 = vst.msk [vmem:[#allocation3 + $0x18] sm:$0xff] %vm385, %v2870
      %2903 = vst.msk [vmem:[#allocation3 + $0x20] sm:$0xff] %vm385, %v2871
      %2904 = vst.msk [vmem:[#allocation3 + $0x28] sm:$0xff] %vm385, %v2872
      %2905 = vst.msk [vmem:[#allocation3 + $0x30] sm:$0xff] %vm385, %v2873
      %2906 = vst.msk [vmem:[#allocation3 + $0x38] sm:$0xff] %vm385, %v2874
      %2907 = vst.msk [vmem:[#allocation3 + $0x40] sm:$0xff] %vm385, %v2875
      %2908 = vst.msk [vmem:[#allocation3 + $0x48] sm:$0xff] %vm385, %v2876
      %2909 = vst.msk [vmem:[#allocation3 + $0x50] sm:$0xff] %vm385, %v2877
      %2910 = vst.msk [vmem:[#allocation3 + $0x58] sm:$0xff] %vm385, %v2878
      %2911 = vst.msk [vmem:[#allocation3 + $0x60] sm:$0xff] %vm385, %v2879
      %2912 = vst.msk [vmem:[#allocation3 + $0x68] sm:$0xff] %vm385, %v2880
      %2913 = vst.msk [vmem:[#allocation3 + $0x70] sm:$0xff] %vm385, %v2881
      %2914 = vst.msk [vmem:[#allocation3 + $0x78] sm:$0xff] %vm385, %v2882
      %2915 = vst.msk [vmem:[#allocation3 + $0x80] sm:$0xff] %vm385, %v2883
      %2916 = vst.msk [vmem:[#allocation3 + $0x88] sm:$0xff] %vm385, %v2884
      %2917 = vst.msk [vmem:[#allocation3 + $0x90] sm:$0xff] %vm385, %v2885
      %2918 = vst.msk [vmem:[#allocation3 + $0x98] sm:$0xff] %vm385, %v2886
      %2919 = vst.msk [vmem:[#allocation3 + $0xa0] sm:$0xff] %vm385, %v2887
      %2920 = vst.msk [vmem:[#allocation3 + $0xa8] sm:$0xff] %vm385, %v2888
      %2921 = vst.msk [vmem:[#allocation3 + $0xb0] sm:$0xff] %vm385, %v2889
      %2922 = vst.msk [vmem:[#allocation3 + $0xb8] sm:$0xff] %vm385, %v2890
      %2923 = vst.msk [vmem:[#allocation3 + $0xc0] sm:$0xff] %vm385, %v2891
      %2924 = vst.msk [vmem:[#allocation3 + $0xc8] sm:$0xff] %vm385, %v2892
      %2925 = vst.msk [vmem:[#allocation3 + $0xd0] sm:$0xff] %vm385, %v2893
      %2926 = vst.msk [vmem:[#allocation3 + $0xd8] sm:$0xff] %vm385, %v2894
      %2927 = vst.msk [vmem:[#allocation3 + $0xe0] sm:$0xff] %vm385, %v2895
      %2928 = vst.msk [vmem:[#allocation3 + $0xe8] sm:$0xff] %vm385, %v2896
      %2929 = vst.msk [vmem:[#allocation3 + $0xf0] sm:$0xff] %vm385, %v2897
      %2930 = vst.msk [vmem:[#allocation3 + $0xf8] sm:$0xff] %vm385, %v2898
      %v2931 = vld [vmem:[%s2573 + $0x1] sm:$0xff]
      %v2932 = vld [vmem:[%s2573 + $0x9] sm:$0xff]
      %v2933 = vld [vmem:[%s2573 + $0x19] sm:$0xff]
      %v2934 = vld [vmem:[%s2573 + $0x21] sm:$0xff]
      %v2935 = vld [vmem:[%s2573 + $0x31] sm:$0xff]
      %v2936 = vld [vmem:[%s2573 + $0x39] sm:$0xff]
      %v2937 = vld [vmem:[%s2573 + $0x49] sm:$0xff]
      %v2938 = vld [vmem:[%s2573 + $0x51] sm:$0xff]
      %v2939 = vld [vmem:[%s2573 + $0x61] sm:$0xff]
      %v2940 = vld [vmem:[%s2573 + $0x69] sm:$0xff]
      %v2941 = vld [vmem:[%s2573 + $0x79] sm:$0xff]
      %v2942 = vld [vmem:[%s2573 + $0x81] sm:$0xff]
      %v2943 = vld [vmem:[%s2573 + $0x91] sm:$0xff]
      %v2944 = vld [vmem:[%s2573 + $0x99] sm:$0xff]
      %v2945 = vld [vmem:[%s2573 + $0xa9] sm:$0xff]
      %v2946 = vld [vmem:[%s2573 + $0xb1] sm:$0xff]
      %v2947 = vld [vmem:[%s2573 + $0xc1] sm:$0xff]
      %v2948 = vld [vmem:[%s2573 + $0xc9] sm:$0xff]
      %v2949 = vld [vmem:[%s2573 + $0xd9] sm:$0xff]
      %v2950 = vld [vmem:[%s2573 + $0xe1] sm:$0xff]
      %v2951 = vld [vmem:[%s2573 + $0xf1] sm:$0xff]
      %v2952 = vld [vmem:[%s2573 + $0xf9] sm:$0xff]
      %v2953 = vld [vmem:[%s2573 + $0x109] sm:$0xff]
      %v2954 = vld [vmem:[%s2573 + $0x111] sm:$0xff]
      %v2955 = vld [vmem:[%s2573 + $0x121] sm:$0xff]
      %v2956 = vld [vmem:[%s2573 + $0x129] sm:$0xff]
      %v2957 = vld [vmem:[%s2573 + $0x139] sm:$0xff]
      %v2958 = vld [vmem:[%s2573 + $0x141] sm:$0xff]
      %v2959 = vld [vmem:[%s2573 + $0x151] sm:$0xff]
      %v2960 = vld [vmem:[%s2573 + $0x159] sm:$0xff]
      %v2961 = vld [vmem:[%s2573 + $0x169] sm:$0xff]
      %v2962 = vld [vmem:[%s2573 + $0x171] sm:$0xff]
      %v2963 = vpack.c.bf16 %v2932, %v2931
      %v2964 = vpack.c.bf16 %v2934, %v2933
      %v2965 = vpack.c.bf16 %v2936, %v2935
      %v2966 = vpack.c.bf16 %v2938, %v2937
      %v2967 = vpack.c.bf16 %v2940, %v2939
      %v2968 = vpack.c.bf16 %v2942, %v2941
      %v2969 = vpack.c.bf16 %v2944, %v2943
      %v2970 = vpack.c.bf16 %v2946, %v2945
      %v2971 = vpack.c.bf16 %v2948, %v2947
      %v2972 = vpack.c.bf16 %v2950, %v2949
      %v2973 = vpack.c.bf16 %v2952, %v2951
      %v2974 = vpack.c.bf16 %v2954, %v2953
      %v2975 = vpack.c.bf16 %v2956, %v2955
      %v2976 = vpack.c.bf16 %v2958, %v2957
      %v2977 = vpack.c.bf16 %v2960, %v2959
      %v2978 = vpack.c.bf16 %v2962, %v2961
      %v2979 = vld [vmem:[%s248 + $0xc] sm:$0xc]
      %v2980 = vld [vmem:[#allocation3] sm:$0xff]
      %v2981 = vld [vmem:[#allocation3 + $0x8] sm:$0xff]
      %v2982 = vld [vmem:[#allocation3 + $0x10] sm:$0xff]
      %v2983 = vld [vmem:[#allocation3 + $0x18] sm:$0xff]
      %v2984 = vld [vmem:[#allocation3 + $0x20] sm:$0xff]
      %v2985 = vld [vmem:[#allocation3 + $0x28] sm:$0xff]
      %v2986 = vld [vmem:[#allocation3 + $0x30] sm:$0xff]
      %v2987 = vld [vmem:[#allocation3 + $0x38] sm:$0xff]
      %v2988 = vld [vmem:[#allocation3 + $0x40] sm:$0xff]
      %v2989 = vld [vmem:[#allocation3 + $0x48] sm:$0xff]
      %v2990 = vld [vmem:[#allocation3 + $0x50] sm:$0xff]
      %v2991 = vld [vmem:[#allocation3 + $0x58] sm:$0xff]
      %v2992 = vld [vmem:[#allocation3 + $0x60] sm:$0xff]
      %v2993 = vld [vmem:[#allocation3 + $0x68] sm:$0xff]
      %v2994 = vld [vmem:[#allocation3 + $0x70] sm:$0xff]
      %v2995 = vld [vmem:[#allocation3 + $0x78] sm:$0xff]
      %v2996 = vld [vmem:[#allocation3 + $0x80] sm:$0xff]
      %v2997 = vld [vmem:[#allocation3 + $0x88] sm:$0xff]
      %v2998 = vld [vmem:[#allocation3 + $0x90] sm:$0xff]
      %v2999 = vld [vmem:[#allocation3 + $0x98] sm:$0xff]
      %v3000 = vld [vmem:[#allocation3 + $0xa0] sm:$0xff]
      %v3001 = vld [vmem:[#allocation3 + $0xa8] sm:$0xff]
      %v3002 = vld [vmem:[#allocation3 + $0xb0] sm:$0xff]
      %v3003 = vld [vmem:[#allocation3 + $0xb8] sm:$0xff]
      %v3004 = vld [vmem:[#allocation3 + $0xc0] sm:$0xff]
      %v3005 = vld [vmem:[#allocation3 + $0xc8] sm:$0xff]
      %v3006 = vld [vmem:[#allocation3 + $0xd0] sm:$0xff]
      %v3007 = vld [vmem:[#allocation3 + $0xd8] sm:$0xff]
      %v3008 = vld [vmem:[#allocation3 + $0xe0] sm:$0xff]
      %v3009 = vld [vmem:[#allocation3 + $0xe8] sm:$0xff]
      %v3010 = vld [vmem:[#allocation3 + $0xf0] sm:$0xff]
      %v3011 = vld [vmem:[#allocation3 + $0xf8] sm:$0xff]
      %v3013 = vunpack.c.l.b16 %v2979
      %v3014 = vpack.c.b16 %v3013, %v3013
      %v3015 = vrot.slane %v3014, 2
      %v3017 = vsel %vm264, %v2963, 0
      %v3020 = vsel %vm264, %v2964, 0
      %v3023 = vsel %vm264, %v2965, 0
      %v3026 = vsel %vm264, %v2966, 0
      %v3029 = vsel %vm264, %v2967, 0
      %v3032 = vsel %vm264, %v2968, 0
      %v3035 = vsel %vm264, %v2969, 0
      %v3038 = vsel %vm264, %v2970, 0
      %v3041 = vsel %vm264, %v2971, 0
      %v3044 = vsel %vm264, %v2972, 0
      %v3047 = vsel %vm264, %v2973, 0
      %v3050 = vsel %vm264, %v2974, 0
      %v3053 = vsel %vm264, %v2975, 0
      %v3056 = vsel %vm264, %v2976, 0
      %v3059 = vsel %vm264, %v2977, 0
      %v3062 = vsel %vm264, %v2978, 0
      %v3065 = vsel %vm547, %v3015, 0
      %3067 = vmatprep.subr.bf16.mxu0 0
      %3068 = vmatpush1.bf16.msra.mxu0 %v3065
      %3069 = vmatprep.subr.bf16.mxu0 0
      %3070 = vmatpush1.bf16.msra.mxu0 0
      %3071 = vmatprep.subr.bf16.mxu0 0
      %3072 = vmatpush1.bf16.msra.mxu0 0
      %3073 = vmatprep.subr.bf16.mxu0 0
      %3074 = vmatpush1.bf16.msra.mxu0 0
      %3075 = vmatprep.subr.bf16.mxu0 0
      %3076 = vmatpush1.bf16.msra.mxu0 0
      %3077 = vmatprep.subr.bf16.mxu0 0
      %3078 = vmatpush1.bf16.msra.mxu0 0
      %3079 = vmatprep.subr.bf16.mxu0 0
      %3080 = vmatpush1.bf16.msra.mxu0 0
      %3081 = vmatprep.subr.bf16.mxu0 0
      %3082 = vmatpush1.bf16.msra.mxu0 0
      %3083 = vmatprep.subr.bf16.mxu0 0
      %3084 = vmatpush1.bf16.msra.mxu0 0
      %3085 = vmatprep.subr.bf16.mxu0 0
      %3086 = vmatpush1.bf16.msra.mxu0 0
      %3087 = vmatprep.subr.bf16.mxu0 0
      %3088 = vmatpush1.bf16.msra.mxu0 0
      %3089 = vmatprep.subr.bf16.mxu0 0
      %3090 = vmatpush1.bf16.msra.mxu0 0
      %3091 = vmatprep.subr.bf16.mxu0 0
      %3092 = vmatpush1.bf16.msra.mxu0 0
      %3093 = vmatprep.subr.bf16.mxu0 0
      %3094 = vmatpush1.bf16.msra.mxu0 0
      %3095 = vmatprep.subr.bf16.mxu0 0
      %3096 = vmatpush1.bf16.msra.mxu0 0
      %3097 = vmatprep.subr.bf16.mxu0 0
      %3098 = vmatpush1.bf16.msra.mxu0 0
      %3099 = vmatprep.mubr.bf16.mxu0 0
      %3100 = vmatmul.mubr.bf16.gmra.mrb[0].mxu0 %v3017
      %v3101 = vpop.f32.mrb[0].mxu0
      %v3102 = vadd.f32 0.0, %v3101
      %v3103 = vpop.f32.mrb[0].mxu0
      %v3104 = vpop.f32.mrb[0].mxu0
      %v3105 = vadd.f32 0.0, %v3104
      %v3106 = vpop.f32.mrb[0].mxu0
      %3107 = vmatprep.mubr.bf16.mxu0 0
      %3108 = vmatmul.mubr.bf16.gmra.mrb[0].mxu0 %v3020
      %v3109 = vpop.f32.mrb[0].mxu0
      %v3110 = vadd.f32 0.0, %v3109
      %v3111 = vpop.f32.mrb[0].mxu0
      %v3112 = vpop.f32.mrb[0].mxu0
      %v3113 = vadd.f32 0.0, %v3112
      %v3114 = vpop.f32.mrb[0].mxu0
      %3115 = vmatprep.mubr.bf16.mxu0 0
      %3116 = vmatmul.mubr.bf16.gmra.mrb[0].mxu0 %v3023
      %v3117 = vpop.f32.mrb[0].mxu0
      %v3118 = vadd.f32 0.0, %v3117
      %v3119 = vpop.f32.mrb[0].mxu0
      %v3120 = vpop.f32.mrb[0].mxu0
      %v3121 = vadd.f32 0.0, %v3120
      %v3122 = vpop.f32.mrb[0].mxu0
      %3123 = vmatprep.mubr.bf16.mxu0 0
      %3124 = vmatmul.mubr.bf16.gmra.mrb[0].mxu0 %v3026
      %v3125 = vpop.f32.mrb[0].mxu0
      %v3126 = vadd.f32 0.0, %v3125
      %v3127 = vpop.f32.mrb[0].mxu0
      %v3128 = vpop.f32.mrb[0].mxu0
      %v3129 = vadd.f32 0.0, %v3128
      %v3130 = vpop.f32.mrb[0].mxu0
      %3131 = vmatprep.mubr.bf16.mxu0 0
      %3132 = vmatmul.mubr.bf16.gmra.mrb[0].mxu0 %v3029
      %v3133 = vpop.f32.mrb[0].mxu0
      %v3134 = vadd.f32 0.0, %v3133
      %v3135 = vpop.f32.mrb[0].mxu0
      %v3136 = vpop.f32.mrb[0].mxu0
      %v3137 = vadd.f32 0.0, %v3136
      %v3138 = vpop.f32.mrb[0].mxu0
      %3139 = vmatprep.mubr.bf16.mxu0 0
      %3140 = vmatmul.mubr.bf16.gmra.mrb[0].mxu0 %v3032
      %v3141 = vpop.f32.mrb[0].mxu0
      %v3142 = vadd.f32 0.0, %v3141
      %v3143 = vpop.f32.mrb[0].mxu0
      %v3144 = vpop.f32.mrb[0].mxu0
      %v3145 = vadd.f32 0.0, %v3144
      %v3146 = vpop.f32.mrb[0].mxu0
      %3147 = vmatprep.mubr.bf16.mxu0 0
      %3148 = vmatmul.mubr.bf16.gmra.mrb[0].mxu0 %v3035
      %v3149 = vpop.f32.mrb[0].mxu0
      %v3150 = vadd.f32 0.0, %v3149
      %v3151 = vpop.f32.mrb[0].mxu0
      %v3152 = vpop.f32.mrb[0].mxu0
      %v3153 = vadd.f32 0.0, %v3152
      %v3154 = vpop.f32.mrb[0].mxu0
      %3155 = vmatprep.mubr.bf16.mxu0 0
      %3156 = vmatmul.mubr.bf16.gmra.mrb[0].mxu0 %v3038
      %v3157 = vpop.f32.mrb[0].mxu0
      %v3158 = vadd.f32 0.0, %v3157
      %v3159 = vpop.f32.mrb[0].mxu0
      %v3160 = vpop.f32.mrb[0].mxu0
      %v3161 = vadd.f32 0.0, %v3160
      %v3162 = vpop.f32.mrb[0].mxu0
      %3163 = vmatprep.mubr.bf16.mxu0 0
      %3164 = vmatmul.mubr.bf16.gmra.mrb[0].mxu0 %v3041
      %v3165 = vpop.f32.mrb[0].mxu0
      %v3166 = vadd.f32 0.0, %v3165
      %v3167 = vpop.f32.mrb[0].mxu0
      %v3168 = vpop.f32.mrb[0].mxu0
      %v3169 = vadd.f32 0.0, %v3168
      %v3170 = vpop.f32.mrb[0].mxu0
      %3171 = vmatprep.mubr.bf16.mxu0 0
      %3172 = vmatmul.mubr.bf16.gmra.mrb[0].mxu0 %v3044
      %v3173 = vpop.f32.mrb[0].mxu0
      %v3174 = vadd.f32 0.0, %v3173
      %v3175 = vpop.f32.mrb[0].mxu0
      %v3176 = vpop.f32.mrb[0].mxu0
      %v3177 = vadd.f32 0.0, %v3176
      %v3178 = vpop.f32.mrb[0].mxu0
      %3179 = vmatprep.mubr.bf16.mxu0 0
      %3180 = vmatmul.mubr.bf16.gmra.mrb[0].mxu0 %v3047
      %v3181 = vpop.f32.mrb[0].mxu0
      %v3182 = vadd.f32 0.0, %v3181
      %v3183 = vpop.f32.mrb[0].mxu0
      %v3184 = vpop.f32.mrb[0].mxu0
      %v3185 = vadd.f32 0.0, %v3184
      %v3186 = vpop.f32.mrb[0].mxu0
      %3187 = vmatprep.mubr.bf16.mxu0 0
      %3188 = vmatmul.mubr.bf16.gmra.mrb[0].mxu0 %v3050
      %v3189 = vpop.f32.mrb[0].mxu0
      %v3190 = vadd.f32 0.0, %v3189
      %v3191 = vpop.f32.mrb[0].mxu0
      %v3192 = vpop.f32.mrb[0].mxu0
      %v3193 = vadd.f32 0.0, %v3192
      %v3194 = vpop.f32.mrb[0].mxu0
      %3195 = vmatprep.mubr.bf16.mxu0 0
      %3196 = vmatmul.mubr.bf16.gmra.mrb[0].mxu0 %v3053
      %v3197 = vpop.f32.mrb[0].mxu0
      %v3198 = vadd.f32 0.0, %v3197
      %v3199 = vpop.f32.mrb[0].mxu0
      %v3200 = vpop.f32.mrb[0].mxu0
      %v3201 = vadd.f32 0.0, %v3200
      %v3202 = vpop.f32.mrb[0].mxu0
      %3203 = vmatprep.mubr.bf16.mxu0 0
      %3204 = vmatmul.mubr.bf16.gmra.mrb[0].mxu0 %v3056
      %v3205 = vpop.f32.mrb[0].mxu0
      %v3206 = vadd.f32 0.0, %v3205
      %v3207 = vpop.f32.mrb[0].mxu0
      %v3208 = vpop.f32.mrb[0].mxu0
      %v3209 = vadd.f32 0.0, %v3208
      %v3210 = vpop.f32.mrb[0].mxu0
      %3211 = vmatprep.mubr.bf16.mxu0 0
      %3212 = vmatmul.mubr.bf16.gmra.mrb[0].mxu0 %v3059
      %v3213 = vpop.f32.mrb[0].mxu0
      %v3214 = vadd.f32 0.0, %v3213
      %v3215 = vpop.f32.mrb[0].mxu0
      %v3216 = vpop.f32.mrb[0].mxu0
      %v3217 = vadd.f32 0.0, %v3216
      %v3218 = vpop.f32.mrb[0].mxu0
      %3219 = vmatprep.mubr.bf16.mxu0 0
      %3220 = vmatmul.mubr.bf16.gmra.mrb[0].mxu0 %v3062
      %v3221 = vpop.f32.mrb[0].mxu0
      %v3222 = vadd.f32 0.0, %v3221
      %v3223 = vpop.f32.mrb[0].mxu0
      %v3224 = vpop.f32.mrb[0].mxu0
      %v3225 = vadd.f32 0.0, %v3224
      %v3226 = vpop.f32.mrb[0].mxu0
      %3227 = vdwg.mxu0
      %v3228 = vadd.f32 %v2980, %v3102
      %v3229 = vadd.f32 %v2981, %v3105
      %v3230 = vadd.f32 %v2982, %v3110
      %v3231 = vadd.f32 %v2983, %v3113
      %v3232 = vadd.f32 %v2984, %v3118
      %v3233 = vadd.f32 %v2985, %v3121
      %v3234 = vadd.f32 %v2986, %v3126
      %v3235 = vadd.f32 %v2987, %v3129
      %v3236 = vadd.f32 %v2988, %v3134
      %v3237 = vadd.f32 %v2989, %v3137
      %v3238 = vadd.f32 %v2990, %v3142
      %v3239 = vadd.f32 %v2991, %v3145
      %v3240 = vadd.f32 %v2992, %v3150
      %v3241 = vadd.f32 %v2993, %v3153
      %v3242 = vadd.f32 %v2994, %v3158
      %v3243 = vadd.f32 %v2995, %v3161
      %v3244 = vadd.f32 %v2996, %v3166
      %v3245 = vadd.f32 %v2997, %v3169
      %v3246 = vadd.f32 %v2998, %v3174
      %v3247 = vadd.f32 %v2999, %v3177
      %v3248 = vadd.f32 %v3000, %v3182
      %v3249 = vadd.f32 %v3001, %v3185
      %v3250 = vadd.f32 %v3002, %v3190
      %v3251 = vadd.f32 %v3003, %v3193
      %v3252 = vadd.f32 %v3004, %v3198
      %v3253 = vadd.f32 %v3005, %v3201
      %v3254 = vadd.f32 %v3006, %v3206
      %v3255 = vadd.f32 %v3007, %v3209
      %v3256 = vadd.f32 %v3008, %v3214
      %v3257 = vadd.f32 %v3009, %v3217
      %v3258 = vadd.f32 %v3010, %v3222
      %v3259 = vadd.f32 %v3011, %v3225
      %3260 = vst.msk [vmem:[#allocation3] sm:$0xff] %vm385, %v3228
      %3261 = vst.msk [vmem:[#allocation3 + $0x8] sm:$0xff] %vm385, %v3229
      %3262 = vst.msk [vmem:[#allocation3 + $0x10] sm:$0xff] %vm385, %v3230
      %3263 = vst.msk [vmem:[#allocation3 + $0x18] sm:$0xff] %vm385, %v3231
      %3264 = vst.msk [vmem:[#allocation3 + $0x20] sm:$0xff] %vm385, %v3232
      %3265 = vst.msk [vmem:[#allocation3 + $0x28] sm:$0xff] %vm385, %v3233
      %3266 = vst.msk [vmem:[#allocation3 + $0x30] sm:$0xff] %vm385, %v3234
      %3267 = vst.msk [vmem:[#allocation3 + $0x38] sm:$0xff] %vm385, %v3235
      %3268 = vst.msk [vmem:[#allocation3 + $0x40] sm:$0xff] %vm385, %v3236
      %3269 = vst.msk [vmem:[#allocation3 + $0x48] sm:$0xff] %vm385, %v3237
      %3270 = vst.msk [vmem:[#allocation3 + $0x50] sm:$0xff] %vm385, %v3238
      %3271 = vst.msk [vmem:[#allocation3 + $0x58] sm:$0xff] %vm385, %v3239
      %3272 = vst.msk [vmem:[#allocation3 + $0x60] sm:$0xff] %vm385, %v3240
      %3273 = vst.msk [vmem:[#allocation3 + $0x68] sm:$0xff] %vm385, %v3241
      %3274 = vst.msk [vmem:[#allocation3 + $0x70] sm:$0xff] %vm385, %v3242
      %3275 = vst.msk [vmem:[#allocation3 + $0x78] sm:$0xff] %vm385, %v3243
      %3276 = vst.msk [vmem:[#allocation3 + $0x80] sm:$0xff] %vm385, %v3244
      %3277 = vst.msk [vmem:[#allocation3 + $0x88] sm:$0xff] %vm385, %v3245
      %3278 = vst.msk [vmem:[#allocation3 + $0x90] sm:$0xff] %vm385, %v3246
      %3279 = vst.msk [vmem:[#allocation3 + $0x98] sm:$0xff] %vm385, %v3247
      %3280 = vst.msk [vmem:[#allocation3 + $0xa0] sm:$0xff] %vm385, %v3248
      %3281 = vst.msk [vmem:[#allocation3 + $0xa8] sm:$0xff] %vm385, %v3249
      %3282 = vst.msk [vmem:[#allocation3 + $0xb0] sm:$0xff] %vm385, %v3250
      %3283 = vst.msk [vmem:[#allocation3 + $0xb8] sm:$0xff] %vm385, %v3251
      %3284 = vst.msk [vmem:[#allocation3 + $0xc0] sm:$0xff] %vm385, %v3252
      %3285 = vst.msk [vmem:[#allocation3 + $0xc8] sm:$0xff] %vm385, %v3253
      %3286 = vst.msk [vmem:[#allocation3 + $0xd0] sm:$0xff] %vm385, %v3254
      %3287 = vst.msk [vmem:[#allocation3 + $0xd8] sm:$0xff] %vm385, %v3255
      %3288 = vst.msk [vmem:[#allocation3 + $0xe0] sm:$0xff] %vm385, %v3256
      %3289 = vst.msk [vmem:[#allocation3 + $0xe8] sm:$0xff] %vm385, %v3257
      %3290 = vst.msk [vmem:[#allocation3 + $0xf0] sm:$0xff] %vm385, %v3258
      %3291 = vst.msk [vmem:[#allocation3 + $0xf8] sm:$0xff] %vm385, %v3259
      %v3292 = vld [vmem:[%s2573 + $0x2] sm:$0xff]
      %v3293 = vld [vmem:[%s2573 + $0xa] sm:$0xff]
      %v3294 = vld [vmem:[%s2573 + $0x1a] sm:$0xff]
      %v3295 = vld [vmem:[%s2573 + $0x22] sm:$0xff]
      %v3296 = vld [vmem:[%s2573 + $0x32] sm:$0xff]
      %v3297 = vld [vmem:[%s2573 + $0x3a] sm:$0xff]
      %v3298 = vld [vmem:[%s2573 + $0x4a] sm:$0xff]
      %v3299 = vld [vmem:[%s2573 + $0x52] sm:$0xff]
      %v3300 = vld [vmem:[%s2573 + $0x62] sm:$0xff]
      %v3301 = vld [vmem:[%s2573 + $0x6a] sm:$0xff]
      %v3302 = vld [vmem:[%s2573 + $0x7a] sm:$0xff]
      %v3303 = vld [vmem:[%s2573 + $0x82] sm:$0xff]
      %v3304 = vld [vmem:[%s2573 + $0x92] sm:$0xff]
      %v3305 = vld [vmem:[%s2573 + $0x9a] sm:$0xff]
      %v3306 = vld [vmem:[%s2573 + $0xaa] sm:$0xff]
      %v3307 = vld [vmem:[%s2573 + $0xb2] sm:$0xff]
      %v3308 = vld [vmem:[%s2573 + $0xc2] sm:$0xff]
      %v3309 = vld [vmem:[%s2573 + $0xca] sm:$0xff]
      %v3310 = vld [vmem:[%s2573 + $0xda] sm:$0xff]
      %v3311 = vld [vmem:[%s2573 + $0xe2] sm:$0xff]
      %v3312 = vld [vmem:[%s2573 + $0xf2] sm:$0xff]
      %v3313 = vld [vmem:[%s2573 + $0xfa] sm:$0xff]
      %v3314 = vld [vmem:[%s2573 + $0x10a] sm:$0xff]
      %v3315 = vld [vmem:[%s2573 + $0x112] sm:$0xff]
      %v3316 = vld [vmem:[%s2573 + $0x122] sm:$0xff]
      %v3317 = vld [vmem:[%s2573 + $0x12a] sm:$0xff]
      %v3318 = vld [vmem:[%s2573 + $0x13a] sm:$0xff]
      %v3319 = vld [vmem:[%s2573 + $0x142] sm:$0xff]
      %v3320 = vld [vmem:[%s2573 + $0x152] sm:$0xff]
      %v3321 = vld [vmem:[%s2573 + $0x15a] sm:$0xff]
      %v3322 = vld [vmem:[%s2573 + $0x16a] sm:$0xff]
      %v3323 = vld [vmem:[%s2573 + $0x172] sm:$0xff]
      %v3324 = vpack.c.bf16 %v3293, %v3292
      %v3325 = vpack.c.bf16 %v3295, %v3294
      %v3326 = vpack.c.bf16 %v3297, %v3296
      %v3327 = vpack.c.bf16 %v3299, %v3298
      %v3328 = vpack.c.bf16 %v3301, %v3300
      %v3329 = vpack.c.bf16 %v3303, %v3302
      %v3330 = vpack.c.bf16 %v3305, %v3304
      %v3331 = vpack.c.bf16 %v3307, %v3306
      %v3332 = vpack.c.bf16 %v3309, %v3308
      %v3333 = vpack.c.bf16 %v3311, %v3310
      %v3334 = vpack.c.bf16 %v3313, %v3312
      %v3335 = vpack.c.bf16 %v3315, %v3314
      %v3336 = vpack.c.bf16 %v3317, %v3316
      %v3337 = vpack.c.bf16 %v3319, %v3318
      %v3338 = vpack.c.bf16 %v3321, %v3320
      %v3339 = vpack.c.bf16 %v3323, %v3322
      %v3340 = vld [vmem:[%s248 + $0x10] sm:$0x3]
      %v3341 = vld [vmem:[#allocation3] sm:$0xff]
      %v3342 = vld [vmem:[#allocation3 + $0x8] sm:$0xff]
      %v3343 = vld [vmem:[#allocation3 + $0x10] sm:$0xff]
      %v3344 = vld [vmem:[#allocation3 + $0x18] sm:$0xff]
      %v3345 = vld [vmem:[#allocation3 + $0x20] sm:$0xff]
      %v3346 = vld [vmem:[#allocation3 + $0x28] sm:$0xff]
      %v3347 = vld [vmem:[#allocation3 + $0x30] sm:$0xff]
      %v3348 = vld [vmem:[#allocation3 + $0x38] sm:$0xff]
      %v3349 = vld [vmem:[#allocation3 + $0x40] sm:$0xff]
      %v3350 = vld [vmem:[#allocation3 + $0x48] sm:$0xff]
      %v3351 = vld [vmem:[#allocation3 + $0x50] sm:$0xff]
      %v3352 = vld [vmem:[#allocation3 + $0x58] sm:$0xff]
      %v3353 = vld [vmem:[#allocation3 + $0x60] sm:$0xff]
      %v3354 = vld [vmem:[#allocation3 + $0x68] sm:$0xff]
      %v3355 = vld [vmem:[#allocation3 + $0x70] sm:$0xff]
      %v3356 = vld [vmem:[#allocation3 + $0x78] sm:$0xff]
      %v3357 = vld [vmem:[#allocation3 + $0x80] sm:$0xff]
      %v3358 = vld [vmem:[#allocation3 + $0x88] sm:$0xff]
      %v3359 = vld [vmem:[#allocation3 + $0x90] sm:$0xff]
      %v3360 = vld [vmem:[#allocation3 + $0x98] sm:$0xff]
      %v3361 = vld [vmem:[#allocation3 + $0xa0] sm:$0xff]
      %v3362 = vld [vmem:[#allocation3 + $0xa8] sm:$0xff]
      %v3363 = vld [vmem:[#allocation3 + $0xb0] sm:$0xff]
      %v3364 = vld [vmem:[#allocation3 + $0xb8] sm:$0xff]
      %v3365 = vld [vmem:[#allocation3 + $0xc0] sm:$0xff]
      %v3366 = vld [vmem:[#allocation3 + $0xc8] sm:$0xff]
      %v3367 = vld [vmem:[#allocation3 + $0xd0] sm:$0xff]
      %v3368 = vld [vmem:[#allocation3 + $0xd8] sm:$0xff]
      %v3369 = vld [vmem:[#allocation3 + $0xe0] sm:$0xff]
      %v3370 = vld [vmem:[#allocation3 + $0xe8] sm:$0xff]
      %v3371 = vld [vmem:[#allocation3 + $0xf0] sm:$0xff]
      %v3372 = vld [vmem:[#allocation3 + $0xf8] sm:$0xff]
      %v3374 = vsel %vm264, %v3324, 0
      %v3377 = vsel %vm264, %v3325, 0
      %v3380 = vsel %vm264, %v3326, 0
      %v3383 = vsel %vm264, %v3327, 0
      %v3386 = vsel %vm264, %v3328, 0
      %v3389 = vsel %vm264, %v3329, 0
      %v3392 = vsel %vm264, %v3330, 0
      %v3395 = vsel %vm264, %v3331, 0
      %v3398 = vsel %vm264, %v3332, 0
      %v3401 = vsel %vm264, %v3333, 0
      %v3404 = vsel %vm264, %v3334, 0
      %v3407 = vsel %vm264, %v3335, 0
      %v3410 = vsel %vm264, %v3336, 0
      %v3413 = vsel %vm264, %v3337, 0
      %v3416 = vsel %vm264, %v3338, 0
      %v3419 = vsel %vm264, %v3339, 0
      %v3422 = vsel %vm547, %v3340, 0
      %3424 = vmatprep.subr.bf16.mxu0 0
      %3425 = vmatpush1.bf16.msra.mxu0 %v3422
      %3426 = vmatprep.subr.bf16.mxu0 0
      %3427 = vmatpush1.bf16.msra.mxu0 0
      %3428 = vmatprep.subr.bf16.mxu0 0
      %3429 = vmatpush1.bf16.msra.mxu0 0
      %3430 = vmatprep.subr.bf16.mxu0 0
      %3431 = vmatpush1.bf16.msra.mxu0 0
      %3432 = vmatprep.subr.bf16.mxu0 0
      %3433 = vmatpush1.bf16.msra.mxu0 0
      %3434 = vmatprep.subr.bf16.mxu0 0
      %3435 = vmatpush1.bf16.msra.mxu0 0
      %3436 = vmatprep.subr.bf16.mxu0 0
      %3437 = vmatpush1.bf16.msra.mxu0 0
      %3438 = vmatprep.subr.bf16.mxu0 0
      %3439 = vmatpush1.bf16.msra.mxu0 0
      %3440 = vmatprep.subr.bf16.mxu0 0
      %3441 = vmatpush1.bf16.msra.mxu0 0
      %3442 = vmatprep.subr.bf16.mxu0 0
      %3443 = vmatpush1.bf16.msra.mxu0 0
      %3444 = vmatprep.subr.bf16.mxu0 0
      %3445 = vmatpush1.bf16.msra.mxu0 0
      %3446 = vmatprep.subr.bf16.mxu0 0
      %3447 = vmatpush1.bf16.msra.mxu0 0
      %3448 = vmatprep.subr.bf16.mxu0 0
      %3449 = vmatpush1.bf16.msra.mxu0 0
      %3450 = vmatprep.subr.bf16.mxu0 0
      %3451 = vmatpush1.bf16.msra.mxu0 0
      %3452 = vmatprep.subr.bf16.mxu0 0
      %3453 = vmatpush1.bf16.msra.mxu0 0
      %3454 = vmatprep.subr.bf16.mxu0 0
      %3455 = vmatpush1.bf16.msra.mxu0 0
      %3456 = vmatprep.mubr.bf16.mxu0 0
      %3457 = vmatmul.mubr.bf16.gmra.mrb[0].mxu0 %v3374
      %v3458 = vpop.f32.mrb[0].mxu0
      %v3459 = vadd.f32 0.0, %v3458
      %v3460 = vpop.f32.mrb[0].mxu0
      %v3461 = vpop.f32.mrb[0].mxu0
      %v3462 = vadd.f32 0.0, %v3461
      %v3463 = vpop.f32.mrb[0].mxu0
      %3464 = vmatprep.mubr.bf16.mxu0 0
      %3465 = vmatmul.mubr.bf16.gmra.mrb[0].mxu0 %v3377
      %v3466 = vpop.f32.mrb[0].mxu0
      %v3467 = vadd.f32 0.0, %v3466
      %v3468 = vpop.f32.mrb[0].mxu0
      %v3469 = vpop.f32.mrb[0].mxu0
      %v3470 = vadd.f32 0.0, %v3469
      %v3471 = vpop.f32.mrb[0].mxu0
      %3472 = vmatprep.mubr.bf16.mxu0 0
      %3473 = vmatmul.mubr.bf16.gmra.mrb[0].mxu0 %v3380
      %v3474 = vpop.f32.mrb[0].mxu0
      %v3475 = vadd.f32 0.0, %v3474
      %v3476 = vpop.f32.mrb[0].mxu0
      %v3477 = vpop.f32.mrb[0].mxu0
      %v3478 = vadd.f32 0.0, %v3477
      %v3479 = vpop.f32.mrb[0].mxu0
      %3480 = vmatprep.mubr.bf16.mxu0 0
      %3481 = vmatmul.mubr.bf16.gmra.mrb[0].mxu0 %v3383
      %v3482 = vpop.f32.mrb[0].mxu0
      %v3483 = vadd.f32 0.0, %v3482
      %v3484 = vpop.f32.mrb[0].mxu0
      %v3485 = vpop.f32.mrb[0].mxu0
      %v3486 = vadd.f32 0.0, %v3485
      %v3487 = vpop.f32.mrb[0].mxu0
      %3488 = vmatprep.mubr.bf16.mxu0 0
      %3489 = vmatmul.mubr.bf16.gmra.mrb[0].mxu0 %v3386
      %v3490 = vpop.f32.mrb[0].mxu0
      %v3491 = vadd.f32 0.0, %v3490
      %v3492 = vpop.f32.mrb[0].mxu0
      %v3493 = vpop.f32.mrb[0].mxu0
      %v3494 = vadd.f32 0.0, %v3493
      %v3495 = vpop.f32.mrb[0].mxu0
      %3496 = vmatprep.mubr.bf16.mxu0 0
      %3497 = vmatmul.mubr.bf16.gmra.mrb[0].mxu0 %v3389
      %v3498 = vpop.f32.mrb[0].mxu0
      %v3499 = vadd.f32 0.0, %v3498
      %v3500 = vpop.f32.mrb[0].mxu0
      %v3501 = vpop.f32.mrb[0].mxu0
      %v3502 = vadd.f32 0.0, %v3501
      %v3503 = vpop.f32.mrb[0].mxu0
      %3504 = vmatprep.mubr.bf16.mxu0 0
      %3505 = vmatmul.mubr.bf16.gmra.mrb[0].mxu0 %v3392
      %v3506 = vpop.f32.mrb[0].mxu0
      %v3507 = vadd.f32 0.0, %v3506
      %v3508 = vpop.f32.mrb[0].mxu0
      %v3509 = vpop.f32.mrb[0].mxu0
      %v3510 = vadd.f32 0.0, %v3509
      %v3511 = vpop.f32.mrb[0].mxu0
      %3512 = vmatprep.mubr.bf16.mxu0 0
      %3513 = vmatmul.mubr.bf16.gmra.mrb[0].mxu0 %v3395
      %v3514 = vpop.f32.mrb[0].mxu0
      %v3515 = vadd.f32 0.0, %v3514
      %v3516 = vpop.f32.mrb[0].mxu0
      %v3517 = vpop.f32.mrb[0].mxu0
      %v3518 = vadd.f32 0.0, %v3517
      %v3519 = vpop.f32.mrb[0].mxu0
      %3520 = vmatprep.mubr.bf16.mxu0 0
      %3521 = vmatmul.mubr.bf16.gmra.mrb[0].mxu0 %v3398
      %v3522 = vpop.f32.mrb[0].mxu0
      %v3523 = vadd.f32 0.0, %v3522
      %v3524 = vpop.f32.mrb[0].mxu0
      %v3525 = vpop.f32.mrb[0].mxu0
      %v3526 = vadd.f32 0.0, %v3525
      %v3527 = vpop.f32.mrb[0].mxu0
      %3528 = vmatprep.mubr.bf16.mxu0 0
      %3529 = vmatmul.mubr.bf16.gmra.mrb[0].mxu0 %v3401
      %v3530 = vpop.f32.mrb[0].mxu0
      %v3531 = vadd.f32 0.0, %v3530
      %v3532 = vpop.f32.mrb[0].mxu0
      %v3533 = vpop.f32.mrb[0].mxu0
      %v3534 = vadd.f32 0.0, %v3533
      %v3535 = vpop.f32.mrb[0].mxu0
      %3536 = vmatprep.mubr.bf16.mxu0 0
      %3537 = vmatmul.mubr.bf16.gmra.mrb[0].mxu0 %v3404
      %v3538 = vpop.f32.mrb[0].mxu0
      %v3539 = vadd.f32 0.0, %v3538
      %v3540 = vpop.f32.mrb[0].mxu0
      %v3541 = vpop.f32.mrb[0].mxu0
      %v3542 = vadd.f32 0.0, %v3541
      %v3543 = vpop.f32.mrb[0].mxu0
      %3544 = vmatprep.mubr.bf16.mxu0 0
      %3545 = vmatmul.mubr.bf16.gmra.mrb[0].mxu0 %v3407
      %v3546 = vpop.f32.mrb[0].mxu0
      %v3547 = vadd.f32 0.0, %v3546
      %v3548 = vpop.f32.mrb[0].mxu0
      %v3549 = vpop.f32.mrb[0].mxu0
      %v3550 = vadd.f32 0.0, %v3549
      %v3551 = vpop.f32.mrb[0].mxu0
      %3552 = vmatprep.mubr.bf16.mxu0 0
      %3553 = vmatmul.mubr.bf16.gmra.mrb[0].mxu0 %v3410
      %v3554 = vpop.f32.mrb[0].mxu0
      %v3555 = vadd.f32 0.0, %v3554
      %v3556 = vpop.f32.mrb[0].mxu0
      %v3557 = vpop.f32.mrb[0].mxu0
      %v3558 = vadd.f32 0.0, %v3557
      %v3559 = vpop.f32.mrb[0].mxu0
      %3560 = vmatprep.mubr.bf16.mxu0 0
      %3561 = vmatmul.mubr.bf16.gmra.mrb[0].mxu0 %v3413
      %v3562 = vpop.f32.mrb[0].mxu0
      %v3563 = vadd.f32 0.0, %v3562
      %v3564 = vpop.f32.mrb[0].mxu0
      %v3565 = vpop.f32.mrb[0].mxu0
      %v3566 = vadd.f32 0.0, %v3565
      %v3567 = vpop.f32.mrb[0].mxu0
      %3568 = vmatprep.mubr.bf16.mxu0 0
      %3569 = vmatmul.mubr.bf16.gmra.mrb[0].mxu0 %v3416
      %v3570 = vpop.f32.mrb[0].mxu0
      %v3571 = vadd.f32 0.0, %v3570
      %v3572 = vpop.f32.mrb[0].mxu0
      %v3573 = vpop.f32.mrb[0].mxu0
      %v3574 = vadd.f32 0.0, %v3573
      %v3575 = vpop.f32.mrb[0].mxu0
      %3576 = vmatprep.mubr.bf16.mxu0 0
      %3577 = vmatmul.mubr.bf16.gmra.mrb[0].mxu0 %v3419
      %v3578 = vpop.f32.mrb[0].mxu0
      %v3579 = vadd.f32 0.0, %v3578
      %v3580 = vpop.f32.mrb[0].mxu0
      %v3581 = vpop.f32.mrb[0].mxu0
      %v3582 = vadd.f32 0.0, %v3581
      %v3583 = vpop.f32.mrb[0].mxu0
      %3584 = vdwg.mxu0
      %v3585 = vadd.f32 %v3341, %v3459
      %v3586 = vadd.f32 %v3342, %v3462
      %v3587 = vadd.f32 %v3343, %v3467
      %v3588 = vadd.f32 %v3344, %v3470
      %v3589 = vadd.f32 %v3345, %v3475
      %v3590 = vadd.f32 %v3346, %v3478
      %v3591 = vadd.f32 %v3347, %v3483
      %v3592 = vadd.f32 %v3348, %v3486
      %v3593 = vadd.f32 %v3349, %v3491
      %v3594 = vadd.f32 %v3350, %v3494
      %v3595 = vadd.f32 %v3351, %v3499
      %v3596 = vadd.f32 %v3352, %v3502
      %v3597 = vadd.f32 %v3353, %v3507
      %v3598 = vadd.f32 %v3354, %v3510
      %v3599 = vadd.f32 %v3355, %v3515
      %v3600 = vadd.f32 %v3356, %v3518
      %v3601 = vadd.f32 %v3357, %v3523
      %v3602 = vadd.f32 %v3358, %v3526
      %v3603 = vadd.f32 %v3359, %v3531
      %v3604 = vadd.f32 %v3360, %v3534
      %v3605 = vadd.f32 %v3361, %v3539
      %v3606 = vadd.f32 %v3362, %v3542
      %v3607 = vadd.f32 %v3363, %v3547
      %v3608 = vadd.f32 %v3364, %v3550
      %v3609 = vadd.f32 %v3365, %v3555
      %v3610 = vadd.f32 %v3366, %v3558
      %v3611 = vadd.f32 %v3367, %v3563
      %v3612 = vadd.f32 %v3368, %v3566
      %v3613 = vadd.f32 %v3369, %v3571
      %v3614 = vadd.f32 %v3370, %v3574
      %v3615 = vadd.f32 %v3371, %v3579
      %v3616 = vadd.f32 %v3372, %v3582
      %3617 = vst.msk [vmem:[#allocation3] sm:$0xff] %vm385, %v3585
      %3618 = vst.msk [vmem:[#allocation3 + $0x8] sm:$0xff] %vm385, %v3586
      %3619 = vst.msk [vmem:[#allocation3 + $0x10] sm:$0xff] %vm385, %v3587
      %3620 = vst.msk [vmem:[#allocation3 + $0x18] sm:$0xff] %vm385, %v3588
      %3621 = vst.msk [vmem:[#allocation3 + $0x20] sm:$0xff] %vm385, %v3589
      %3622 = vst.msk [vmem:[#allocation3 + $0x28] sm:$0xff] %vm385, %v3590
      %3623 = vst.msk [vmem:[#allocation3 + $0x30] sm:$0xff] %vm385, %v3591
      %3624 = vst.msk [vmem:[#allocation3 + $0x38] sm:$0xff] %vm385, %v3592
      %3625 = vst.msk [vmem:[#allocation3 + $0x40] sm:$0xff] %vm385, %v3593
      %3626 = vst.msk [vmem:[#allocation3 + $0x48] sm:$0xff] %vm385, %v3594
      %3627 = vst.msk [vmem:[#allocation3 + $0x50] sm:$0xff] %vm385, %v3595
      %3628 = vst.msk [vmem:[#allocation3 + $0x58] sm:$0xff] %vm385, %v3596
      %3629 = vst.msk [vmem:[#allocation3 + $0x60] sm:$0xff] %vm385, %v3597
      %3630 = vst.msk [vmem:[#allocation3 + $0x68] sm:$0xff] %vm385, %v3598
      %3631 = vst.msk [vmem:[#allocation3 + $0x70] sm:$0xff] %vm385, %v3599
      %3632 = vst.msk [vmem:[#allocation3 + $0x78] sm:$0xff] %vm385, %v3600
      %3633 = vst.msk [vmem:[#allocation3 + $0x80] sm:$0xff] %vm385, %v3601
      %3634 = vst.msk [vmem:[#allocation3 + $0x88] sm:$0xff] %vm385, %v3602
      %3635 = vst.msk [vmem:[#allocation3 + $0x90] sm:$0xff] %vm385, %v3603
      %3636 = vst.msk [vmem:[#allocation3 + $0x98] sm:$0xff] %vm385, %v3604
      %3637 = vst.msk [vmem:[#allocation3 + $0xa0] sm:$0xff] %vm385, %v3605
      %3638 = vst.msk [vmem:[#allocation3 + $0xa8] sm:$0xff] %vm385, %v3606
      %3639 = vst.msk [vmem:[#allocation3 + $0xb0] sm:$0xff] %vm385, %v3607
      %3640 = vst.msk [vmem:[#allocation3 + $0xb8] sm:$0xff] %vm385, %v3608
      %3641 = vst.msk [vmem:[#allocation3 + $0xc0] sm:$0xff] %vm385, %v3609
      %3642 = vst.msk [vmem:[#allocation3 + $0xc8] sm:$0xff] %vm385, %v3610
      %3643 = vst.msk [vmem:[#allocation3 + $0xd0] sm:$0xff] %vm385, %v3611
      %3644 = vst.msk [vmem:[#allocation3 + $0xd8] sm:$0xff] %vm385, %v3612
      %3645 = vst.msk [vmem:[#allocation3 + $0xe0] sm:$0xff] %vm385, %v3613
      %3646 = vst.msk [vmem:[#allocation3 + $0xe8] sm:$0xff] %vm385, %v3614
      %3647 = vst.msk [vmem:[#allocation3 + $0xf0] sm:$0xff] %vm385, %v3615
      %3648 = vst.msk [vmem:[#allocation3 + $0xf8] sm:$0xff] %vm385, %v3616
      %v3649 = vld [vmem:[#allocation3] sm:$0xff]
      %v3650 = vld [vmem:[#allocation3 + $0x8] sm:$0xff]
      %v3651 = vld [vmem:[#allocation3 + $0x10] sm:$0xff]
      %v3652 = vld [vmem:[#allocation3 + $0x18] sm:$0xff]
      %v3653 = vld [vmem:[#allocation3 + $0x20] sm:$0xff]
      %v3654 = vld [vmem:[#allocation3 + $0x28] sm:$0xff]
      %v3655 = vld [vmem:[#allocation3 + $0x30] sm:$0xff]
      %v3656 = vld [vmem:[#allocation3 + $0x38] sm:$0xff]
      %v3657 = vld [vmem:[#allocation3 + $0x40] sm:$0xff]
      %v3658 = vld [vmem:[#allocation3 + $0x48] sm:$0xff]
      %v3659 = vld [vmem:[#allocation3 + $0x50] sm:$0xff]
      %v3660 = vld [vmem:[#allocation3 + $0x58] sm:$0xff]
      %v3661 = vld [vmem:[#allocation3 + $0x60] sm:$0xff]
      %v3662 = vld [vmem:[#allocation3 + $0x68] sm:$0xff]
      %v3663 = vld [vmem:[#allocation3 + $0x70] sm:$0xff]
      %v3664 = vld [vmem:[#allocation3 + $0x78] sm:$0xff]
      %v3665 = vld [vmem:[#allocation3 + $0x80] sm:$0xff]
      %v3666 = vld [vmem:[#allocation3 + $0x88] sm:$0xff]
      %v3667 = vld [vmem:[#allocation3 + $0x90] sm:$0xff]
      %v3668 = vld [vmem:[#allocation3 + $0x98] sm:$0xff]
      %v3669 = vld [vmem:[#allocation3 + $0xa0] sm:$0xff]
      %v3670 = vld [vmem:[#allocation3 + $0xa8] sm:$0xff]
      %v3671 = vld [vmem:[#allocation3 + $0xb0] sm:$0xff]
      %v3672 = vld [vmem:[#allocation3 + $0xb8] sm:$0xff]
      %v3673 = vld [vmem:[#allocation3 + $0xc0] sm:$0xff]
      %v3674 = vld [vmem:[#allocation3 + $0xc8] sm:$0xff]
      %v3675 = vld [vmem:[#allocation3 + $0xd0] sm:$0xff]
      %v3676 = vld [vmem:[#allocation3 + $0xd8] sm:$0xff]
      %v3677 = vld [vmem:[#allocation3 + $0xe0] sm:$0xff]
      %v3678 = vld [vmem:[#allocation3 + $0xe8] sm:$0xff]
      %v3679 = vld [vmem:[#allocation3 + $0xf0] sm:$0xff]
      %v3680 = vld [vmem:[#allocation3 + $0xf8] sm:$0xff]
      %v3681 = vld [vmem:[%s251] sm:$0x1]
      %v3683 = vlaneseq
      %v3684 = vshrl.u32 %v3683, 7
      %v3685 = vsub.s32 0, %v3684
      %v3686 = vrot.slane %v3681, %v3685
      %v3688 = vmul.f32 %v3649, %v3686
      %v3689 = vmul.f32 %v3650, %v3686
      %v3690 = vmul.f32 %v3651, %v3686
      %v3691 = vmul.f32 %v3652, %v3686
      %v3692 = vmul.f32 %v3653, %v3686
      %v3693 = vmul.f32 %v3654, %v3686
      %v3694 = vmul.f32 %v3655, %v3686
      %v3695 = vmul.f32 %v3656, %v3686
      %v3696 = vmul.f32 %v3657, %v3686
      %v3697 = vmul.f32 %v3658, %v3686
      %v3698 = vmul.f32 %v3659, %v3686
      %v3699 = vmul.f32 %v3660, %v3686
      %v3700 = vmul.f32 %v3661, %v3686
      %v3701 = vmul.f32 %v3662, %v3686
      %v3702 = vmul.f32 %v3663, %v3686
      %v3703 = vmul.f32 %v3664, %v3686
      %v3704 = vmul.f32 %v3665, %v3686
      %v3705 = vmul.f32 %v3666, %v3686
      %v3706 = vmul.f32 %v3667, %v3686
      %v3707 = vmul.f32 %v3668, %v3686
      %v3708 = vmul.f32 %v3669, %v3686
      %v3709 = vmul.f32 %v3670, %v3686
      %v3710 = vmul.f32 %v3671, %v3686
      %v3711 = vmul.f32 %v3672, %v3686
      %v3712 = vmul.f32 %v3673, %v3686
      %v3713 = vmul.f32 %v3674, %v3686
      %v3714 = vmul.f32 %v3675, %v3686
      %v3715 = vmul.f32 %v3676, %v3686
      %v3716 = vmul.f32 %v3677, %v3686
      %v3717 = vmul.f32 %v3678, %v3686
      %v3718 = vmul.f32 %v3679, %v3686
      %v3719 = vmul.f32 %v3680, %v3686
      %v3720 = vld [vmem:[%s254] sm:$0x1]
      %v3722 = vlaneseq
      %v3723 = vshrl.u32 %v3722, 7
      %v3724 = vsub.s32 0, %v3723
      %v3725 = vrot.slane %v3720, %v3724
      %v3727 = vadd.f32 %v3688, %v3725
      %v3728 = vadd.f32 %v3689, %v3725
      %v3729 = vadd.f32 %v3690, %v3725
      %v3730 = vadd.f32 %v3691, %v3725
      %v3731 = vadd.f32 %v3692, %v3725
      %v3732 = vadd.f32 %v3693, %v3725
      %v3733 = vadd.f32 %v3694, %v3725
      %v3734 = vadd.f32 %v3695, %v3725
      %v3735 = vadd.f32 %v3696, %v3725
      %v3736 = vadd.f32 %v3697, %v3725
      %v3737 = vadd.f32 %v3698, %v3725
      %v3738 = vadd.f32 %v3699, %v3725
      %v3739 = vadd.f32 %v3700, %v3725
      %v3740 = vadd.f32 %v3701, %v3725
      %v3741 = vadd.f32 %v3702, %v3725
      %v3742 = vadd.f32 %v3703, %v3725
      %v3743 = vadd.f32 %v3704, %v3725
      %v3744 = vadd.f32 %v3705, %v3725
      %v3745 = vadd.f32 %v3706, %v3725
      %v3746 = vadd.f32 %v3707, %v3725
      %v3747 = vadd.f32 %v3708, %v3725
      %v3748 = vadd.f32 %v3709, %v3725
      %v3749 = vadd.f32 %v3710, %v3725
      %v3750 = vadd.f32 %v3711, %v3725
      %v3751 = vadd.f32 %v3712, %v3725
      %v3752 = vadd.f32 %v3713, %v3725
      %v3753 = vadd.f32 %v3714, %v3725
      %v3754 = vadd.f32 %v3715, %v3725
      %v3755 = vadd.f32 %v3716, %v3725
      %v3756 = vadd.f32 %v3717, %v3725
      %v3757 = vadd.f32 %v3718, %v3725
      %v3758 = vadd.f32 %v3719, %v3725
      %v3759 = vmax.f32 %v3727, 0.0
      %v3760 = vmax.f32 %v3728, 0.0
      %v3761 = vmax.f32 %v3729, 0.0
      %v3762 = vmax.f32 %v3730, 0.0
      %v3763 = vmax.f32 %v3731, 0.0
      %v3764 = vmax.f32 %v3732, 0.0
      %v3765 = vmax.f32 %v3733, 0.0
      %v3766 = vmax.f32 %v3734, 0.0
      %v3767 = vmax.f32 %v3735, 0.0
      %v3768 = vmax.f32 %v3736, 0.0
      %v3769 = vmax.f32 %v3737, 0.0
      %v3770 = vmax.f32 %v3738, 0.0
      %v3771 = vmax.f32 %v3739, 0.0
      %v3772 = vmax.f32 %v3740, 0.0
      %v3773 = vmax.f32 %v3741, 0.0
      %v3774 = vmax.f32 %v3742, 0.0
      %v3775 = vmax.f32 %v3743, 0.0
      %v3776 = vmax.f32 %v3744, 0.0
      %v3777 = vmax.f32 %v3745, 0.0
      %v3778 = vmax.f32 %v3746, 0.0
      %v3779 = vmax.f32 %v3747, 0.0
      %v3780 = vmax.f32 %v3748, 0.0
      %v3781 = vmax.f32 %v3749, 0.0
      %v3782 = vmax.f32 %v3750, 0.0
      %v3783 = vmax.f32 %v3751, 0.0
      %v3784 = vmax.f32 %v3752, 0.0
      %v3785 = vmax.f32 %v3753, 0.0
      %v3786 = vmax.f32 %v3754, 0.0
      %v3787 = vmax.f32 %v3755, 0.0
      %v3788 = vmax.f32 %v3756, 0.0
      %v3789 = vmax.f32 %v3757, 0.0
      %v3790 = vmax.f32 %v3758, 0.0
      %3791 = vst.msk [vmem:[%s262] sm:$0xff] %vm385, %v3759
      %3792 = vst.msk [vmem:[%s262 + $0x8] sm:$0xff] %vm385, %v3760
      %3793 = vst.msk [vmem:[%s262 + $0x10] sm:$0xff] %vm385, %v3761
      %3794 = vst.msk [vmem:[%s262 + $0x18] sm:$0xff] %vm385, %v3762
      %3795 = vst.msk [vmem:[%s262 + $0x20] sm:$0xff] %vm385, %v3763
      %3796 = vst.msk [vmem:[%s262 + $0x28] sm:$0xff] %vm385, %v3764
      %3797 = vst.msk [vmem:[%s262 + $0x30] sm:$0xff] %vm385, %v3765
      %3798 = vst.msk [vmem:[%s262 + $0x38] sm:$0xff] %vm385, %v3766
      %3799 = vst.msk [vmem:[%s262 + $0x40] sm:$0xff] %vm385, %v3767
      %3800 = vst.msk [vmem:[%s262 + $0x48] sm:$0xff] %vm385, %v3768
      %3801 = vst.msk [vmem:[%s262 + $0x50] sm:$0xff] %vm385, %v3769
      %3802 = vst.msk [vmem:[%s262 + $0x58] sm:$0xff] %vm385, %v3770
      %3803 = vst.msk [vmem:[%s262 + $0x60] sm:$0xff] %vm385, %v3771
      %3804 = vst.msk [vmem:[%s262 + $0x68] sm:$0xff] %vm385, %v3772
      %3805 = vst.msk [vmem:[%s262 + $0x70] sm:$0xff] %vm385, %v3773
      %3806 = vst.msk [vmem:[%s262 + $0x78] sm:$0xff] %vm385, %v3774
      %3807 = vst.msk [vmem:[%s262 + $0x80] sm:$0xff] %vm385, %v3775
      %3808 = vst.msk [vmem:[%s262 + $0x88] sm:$0xff] %vm385, %v3776
      %3809 = vst.msk [vmem:[%s262 + $0x90] sm:$0xff] %vm385, %v3777
      %3810 = vst.msk [vmem:[%s262 + $0x98] sm:$0xff] %vm385, %v3778
      %3811 = vst.msk [vmem:[%s262 + $0xa0] sm:$0xff] %vm385, %v3779
      %3812 = vst.msk [vmem:[%s262 + $0xa8] sm:$0xff] %vm385, %v3780
      %3813 = vst.msk [vmem:[%s262 + $0xb0] sm:$0xff] %vm385, %v3781
      %3814 = vst.msk [vmem:[%s262 + $0xb8] sm:$0xff] %vm385, %v3782
      %3815 = vst.msk [vmem:[%s262 + $0xc0] sm:$0xff] %vm385, %v3783
      %3816 = vst.msk [vmem:[%s262 + $0xc8] sm:$0xff] %vm385, %v3784
      %3817 = vst.msk [vmem:[%s262 + $0xd0] sm:$0xff] %vm385, %v3785
      %3818 = vst.msk [vmem:[%s262 + $0xd8] sm:$0xff] %vm385, %v3786
      %3819 = vst.msk [vmem:[%s262 + $0xe0] sm:$0xff] %vm385, %v3787
      %3820 = vst.msk [vmem:[%s262 + $0xe8] sm:$0xff] %vm385, %v3788
      %3821 = vst.msk [vmem:[%s262 + $0xf0] sm:$0xff] %vm385, %v3789
      %3822 = vst.msk [vmem:[%s262 + $0xf8] sm:$0xff] %vm385, %v3790
      %p3823 = scmp.lt.s32.totalorder %s19, 1
      %s3824 = scalar_select %p3823, %s19, 1
      %p3825 = scmp.lt.s32.totalorder %s20, 0
      %s3826 = scalar_select %p3825, %s20, 0
      %s3827 = smul.addr %s3824, 32
      %s3828 = sadd.s32 %s3826, %s3827
      %s3829 = smul.addr %s3828, 8
      %s3830 = scalar_lea.vmem %s4, %s3829
      // Predicated region
      $region37: #{basic_block_forward.3} parent=35 // pred_check
        %p3831 = pneg %p151
      $region38: #{basic_block_forward.3} parent=35 // pred_check_branch
        %3833 = sbr.rel (%p3831) target = $region40
      $region39: #{basic_block_forward.3} parent=35 // pred_region
        _
      $region40: #{basic_block_forward.3} parent=35 // pred_fallthru
        _
    $region36: #{basic_block_forward.3} parent=5 // pred_fallthru
      _
    %p3834 = scmp.le.s32.totalorder 2, %s10
    // Predicated region
    $region41: #{basic_block_forward.3} parent=5 // pred_check
      %p3835 = pneg %p3834
    $region42: #{basic_block_forward.3} parent=5 // pred_check_branch
      %3837 = sbr.rel (%p3835) target = $region44
    $region43: #{basic_block_forward.3} parent=5 // pred_region
      %s3838 = ssub.s32 %s10, 2
      // Predicated region
      $region45: #{basic_block_forward.3} parent=43 // pred_check
        %p3839 = pneg %p157
      $region46: #{basic_block_forward.3} parent=43 // pred_check_branch
        %3841 = sbr.rel (%p3839) target = $region48
      $region47: #{basic_block_forward.3} parent=43 // pred_region
        %p3842 = scmp.lt.s32.totalorder %s21, 1
        %s3843 = scalar_select %p3842, %s21, 1
        %p3844 = scmp.lt.s32.totalorder %s22, 0
        %s3845 = scalar_select %p3844, %s22, 0
        %s3846 = smul.addr %s3843, 32
        %s3847 = sadd.s32 %s3845, %s3846
        %s3848 = smul.addr %s3847, 8
        %s3849 = scalar_lea.vmem %s4, %s3848
      $region48: #{basic_block_forward.3} parent=43 // pred_fallthru
        _
    $region44: #{basic_block_forward.3} parent=5 // pred_fallthru
      _
  $region6: #{basic_block_forward.3} parent=0 // loop_footer
    %s14 = sadd.s32 1, %s10
  $region7: #{basic_block_forward.3} parent=0 // loop_footer_branch
    %9 = sbr.rel target = $region3
  $region8: #{basic_block_forward.3} parent=0 // loop_exit
    _

// kernel: basic_block_forward.5
$region0: #{basic_block_forward.5}
  #allocation0 [shape = 'u32[]', space=smem, size = 0x4, offset = 0x4, fixed_abs, tag = 'smem constant byte address 0x4 - core index']
  #allocation1 [shape = 'u32[144,128]{1,0:T(1,128)}', space=vmem, size = 0x12000, scoped, tag = 'internal scratch']
  #allocation2 [shape = 'f32[1,18,18,8]{3,2,1,0:T(8,128)}', space=vmem, size = 0x36000, scoped, tag = 'scratch operand']
  #allocation3 [shape = 'f32[256,8]{1,0:T(8,128)}', space=vmem, size = 0x20000, scoped, tag = 'scratch operand']
  %s0 = inlined_call_operand.vmem [shape: f32[2,16,16,8], index: 0, kind: input, shape index: {}]
  %s1 = inlined_call_operand.vmem [shape: bf16[72,8], index: 1, kind: input, shape index: {}]
  %s2 = inlined_call_operand.vmem [shape: f32[1,8], index: 2, kind: input, shape index: {}]
  %s3 = inlined_call_operand.vmem [shape: f32[1,8], index: 3, kind: input, shape index: {}]
  %s4 = inlined_call_operand.vmem [shape: f32[2,16,16,8], index: 4, kind: input, shape index: {}]
  %s5 = inlined_call_operand.vmem [shape: f32[2,16,16,8], index: 5, kind: output, shape index: {}]
  %s6 = sld [smem:[#allocation0]]
  $region53: #{basic_block_forward.5} parent=0
    _
  %s8 = ssub.s32 1, %s6
  %s9 = scalar_select 0, %s8, %s6
  loop: start=0, step=1, limit=4
  $region2: #{basic_block_forward.5} parent=0 // loop_pre_header
    _
  $region3: #{basic_block_forward.5} parent=0 // loop_header
    %s11 = sphi 0, %s15
    %p12 = scmp.ge.s32.totalorder %s11, 4
    %s18 = sphi 0, %s30
    %s19 = sphi 0, %s26
    %s20 = sphi 0, %s18
    %s21 = sphi 0, %s19
    %s22 = sphi 0, %s20
    %s23 = sphi 0, %s21
    %s33 = sphi 0, %s35
    %s36 = sphi 0, %s33
    %s37 = sphi 0, %s36
    %s53 = sphi 0, %s37
    %s59 = sphi 0, %s61
    %s62 = sphi 0, %s59
    %s63 = sphi 0, %s62
    %s79 = sphi 0, %s63
    %s85 = sphi 0, %s87
    %s88 = sphi 0, %s85
    %s89 = sphi 0, %s88
    %s105 = sphi 0, %s89
    %s111 = sphi 0, %s113
    %s114 = sphi 0, %s111
    %s115 = sphi 0, %s114
    %s131 = sphi 0, %s115
    %s139 = sphi 0, %s141
    %s142 = sphi 0, %s139
    %s143 = sphi 0, %s142
    %s159 = sphi 0, %s143
    %s167 = sphi 0, %s169
    %s170 = sphi 0, %s167
    %s171 = sphi 0, %s170
    %s187 = sphi 0, %s171
  $region4: #{basic_block_forward.5} parent=0 // loop_header_branch
    %14 = sbr.rel (%p12) target = $region8
  $region5: #{basic_block_forward.5} parent=0 // loop_body
    %s16 = ssub.s32 %s11, 1
    %s17 = ssub.s32 %s11, 2
    %s24 = sadd.s32 1, %s19
    %p25 = scmp.ge.s32.totalorder %s24, 1
    %s26 = scalar_select %p25, 0, %s24
    %s27 = sadd.s32 1, %s18
    %s28 = scalar_select %p25, %s27, %s18
    %p29 = scmp.ge.s32.totalorder %s28, 2
    %s30 = scalar_select %p29, 0, %s28
    %s31 = ssub.s32 %s18, %s30
    %p32 = scmp.eq.s32.totalorder %s31, 0
    %s34 = sadd.s32 %s33, 1
    %s35 = scalar_select %p32, %s33, %s34
    %p38 = pneg %p32
    %p39 = scmp.eq.s32.totalorder %s11, 1
    %p40 = por %p38, %p39
    %p41 = scmp.ne.s32.totalorder %s33, %s36
    %p42 = scmp.eq.s32.totalorder %s11, 0
    %p43 = por %p41, %p42
    %p44 = scmp.ne.s32.totalorder %s33, %s36
    %p45 = scmp.eq.s32.totalorder %s16, 1
    %p46 = por %p44, %p45
    %p47 = scmp.ne.s32.totalorder %s36, %s37
    %p48 = scmp.eq.s32.totalorder %s16, 0
    %p49 = por %p47, %p48
    %p50 = scmp.ne.s32.totalorder %s36, %s37
    %p51 = scmp.eq.s32.totalorder %s17, 1
    %p52 = por %p50, %p51
    %p54 = scmp.ne.s32.totalorder %s37, %s53
    %p55 = scmp.eq.s32.totalorder %s17, 0
    %p56 = por %p54, %p55
    %s57 = ssub.s32 %s19, %s26
    %p58 = scmp.eq.s32.totalorder %s57, 0
    %s60 = sadd.s32 %s59, 1
    %s61 = scalar_select %p58, %s59, %s60
    %p64 = pneg %p58
    %p65 = scmp.eq.s32.totalorder %s11, 1
    %p66 = por %p64, %p65
    %p67 = scmp.ne.s32.totalorder %s59, %s62
    %p68 = scmp.eq.s32.totalorder %s11, 0
    %p69 = por %p67, %p68
    %p70 = scmp.ne.s32.totalorder %s59, %s62
    %p71 = scmp.eq.s32.totalorder %s16, 1
    %p72 = por %p70, %p71
    %p73 = scmp.ne.s32.totalorder %s62, %s63
    %p74 = scmp.eq.s32.totalorder %s16, 0
    %p75 = por %p73, %p74
    %p76 = scmp.ne.s32.totalorder %s62, %s63
    %p77 = scmp.eq.s32.totalorder %s17, 1
    %p78 = por %p76, %p77
    %p80 = scmp.ne.s32.totalorder %s63, %s79
    %p81 = scmp.eq.s32.totalorder %s17, 0
    %p82 = por %p80, %p81
    %s83 = ssub.s32 %s19, %s26
    %p84 = scmp.eq.s32.totalorder %s83, 0
    %s86 = sadd.s32 %s85, 1
    %s87 = scalar_select %p84, %s85, %s86
    %p90 = pneg %p84
    %p91 = scmp.eq.s32.totalorder %s11, 1
    %p92 = por %p90, %p91
    %p93 = scmp.ne.s32.totalorder %s85, %s88
    %p94 = scmp.eq.s32.totalorder %s11, 0
    %p95 = por %p93, %p94
    %p96 = scmp.ne.s32.totalorder %s85, %s88
    %p97 = scmp.eq.s32.totalorder %s16, 1
    %p98 = por %p96, %p97
    %p99 = scmp.ne.s32.totalorder %s88, %s89
    %p100 = scmp.eq.s32.totalorder %s16, 0
    %p101 = por %p99, %p100
    %p102 = scmp.ne.s32.totalorder %s88, %s89
    %p103 = scmp.eq.s32.totalorder %s17, 1
    %p104 = por %p102, %p103
    %p106 = scmp.ne.s32.totalorder %s89, %s105
    %p107 = scmp.eq.s32.totalorder %s17, 0
    %p108 = por %p106, %p107
    %s109 = ssub.s32 %s19, %s26
    %p110 = scmp.eq.s32.totalorder %s109, 0
    %s112 = sadd.s32 %s111, 1
    %s113 = scalar_select %p110, %s111, %s112
    %p116 = pneg %p110
    %p117 = scmp.eq.s32.totalorder %s11, 1
    %p118 = por %p116, %p117
    %p119 = scmp.ne.s32.totalorder %s111, %s114
    %p120 = scmp.eq.s32.totalorder %s11, 0
    %p121 = por %p119, %p120
    %p122 = scmp.ne.s32.totalorder %s111, %s114
    %p123 = scmp.eq.s32.totalorder %s16, 1
    %p124 = por %p122, %p123
    %p125 = scmp.ne.s32.totalorder %s114, %s115
    %p126 = scmp.eq.s32.totalorder %s16, 0
    %p127 = por %p125, %p126
    %p128 = scmp.ne.s32.totalorder %s114, %s115
    %p129 = scmp.eq.s32.totalorder %s17, 1
    %p130 = por %p128, %p129
    %p132 = scmp.ne.s32.totalorder %s115, %s131
    %p133 = scmp.eq.s32.totalorder %s17, 0
    %p134 = por %p132, %p133
    %s135 = ssub.s32 %s18, %s30
    %s136 = ssub.s32 %s19, %s26
    %s137 = sor.u32 %s135, %s136
    %p138 = scmp.eq.s32.totalorder %s137, 0
    %s140 = sadd.s32 %s139, 1
    %s141 = scalar_select %p138, %s139, %s140
    %p144 = pneg %p138
    %p145 = scmp.eq.s32.totalorder %s11, 1
    %p146 = por %p144, %p145
    %p147 = scmp.ne.s32.totalorder %s139, %s142
    %p148 = scmp.eq.s32.totalorder %s11, 0
    %p149 = por %p147, %p148
    %p150 = scmp.ne.s32.totalorder %s139, %s142
    %p151 = scmp.eq.s32.totalorder %s16, 1
    %p152 = por %p150, %p151
    %p153 = scmp.ne.s32.totalorder %s142, %s143
    %p154 = scmp.eq.s32.totalorder %s16, 0
    %p155 = por %p153, %p154
    %p156 = scmp.ne.s32.totalorder %s142, %s143
    %p157 = scmp.eq.s32.totalorder %s17, 1
    %p158 = por %p156, %p157
    %p160 = scmp.ne.s32.totalorder %s143, %s159
    %p161 = scmp.eq.s32.totalorder %s17, 0
    %p162 = por %p160, %p161
    %s163 = ssub.s32 %s18, %s30
    %s164 = ssub.s32 %s19, %s26
    %s165 = sor.u32 %s163, %s164
    %p166 = scmp.eq.s32.totalorder %s165, 0
    %s168 = sadd.s32 %s167, 1
    %s169 = scalar_select %p166, %s167, %s168
    %p172 = pneg %p166
    %p173 = scmp.eq.s32.totalorder %s11, 1
    %p174 = por %p172, %p173
    %p175 = scmp.ne.s32.totalorder %s167, %s170
    %p176 = scmp.eq.s32.totalorder %s11, 0
    %p177 = por %p175, %p176
    %p178 = scmp.ne.s32.totalorder %s167, %s170
    %p179 = scmp.eq.s32.totalorder %s16, 1
    %p180 = por %p178, %p179
    %p181 = scmp.ne.s32.totalorder %s170, %s171
    %p182 = scmp.eq.s32.totalorder %s16, 0
    %p183 = por %p181, %p182
    %p184 = scmp.ne.s32.totalorder %s170, %s171
    %p185 = scmp.eq.s32.totalorder %s17, 1
    %p186 = por %p184, %p185
    %p188 = scmp.ne.s32.totalorder %s171, %s187
    %p189 = scmp.eq.s32.totalorder %s17, 0
    %p190 = por %p188, %p189
    %p191 = scmp.le.s32.totalorder 1, %s11
    %p192 = scmp.lt.s32.totalorder %s11, 3
    %p193 = pnand %p191, %p192
    %p194 = pneg %p193
    // Predicated region
    $region9: #{basic_block_forward.5} parent=5 // pred_check
      _
    $region10: #{basic_block_forward.5} parent=5 // pred_check_branch
      %196 = sbr.rel (%p193) target = $region12
    $region11: #{basic_block_forward.5} parent=5 // pred_region
      %s197 = ssub.s32 %s11, 1
      // Predicated region
      $region13: #{basic_block_forward.5} parent=11 // pred_check
        %p198 = pneg %p75
      $region14: #{basic_block_forward.5} parent=11 // pred_check_branch
        %200 = sbr.rel (%p198) target = $region16
      $region15: #{basic_block_forward.5} parent=11 // pred_region
        %p201 = scmp.lt.s32.totalorder %s21, 0
        %s202 = scalar_select %p201, %s21, 0
        %s203 = smul.addr %s202, 4
        %s204 = scalar_lea.vmem %s1, %s203
      $region16: #{basic_block_forward.5} parent=11 // pred_fallthru
        _
      // Predicated region
      $region17: #{basic_block_forward.5} parent=11 // pred_check
        %p205 = pneg %p101
      $region18: #{basic_block_forward.5} parent=11 // pred_check_branch
        %207 = sbr.rel (%p205) target = $region20
      $region19: #{basic_block_forward.5} parent=11 // pred_region
        %p208 = scmp.lt.s32.totalorder %s21, 0
        %s209 = scalar_select %p208, %s21, 0
        %s210 = scalar_lea.vmem %s2, %s209
      $region20: #{basic_block_forward.5} parent=11 // pred_fallthru
        _
      // Predicated region
      $region21: #{basic_block_forward.5} parent=11 // pred_check
        %p211 = pneg %p127
      $region22: #{basic_block_forward.5} parent=11 // pred_check_branch
        %213 = sbr.rel (%p211) target = $region24
      $region23: #{basic_block_forward.5} parent=11 // pred_region
        %p214 = scmp.lt.s32.totalorder %s21, 0
        %s215 = scalar_select %p214, %s21, 0
        %s216 = scalar_lea.vmem %s3, %s215
      $region24: #{basic_block_forward.5} parent=11 // pred_fallthru
        _
    $region12: #{basic_block_forward.5} parent=5 // pred_fallthru
      _
    %p217 = scmp.lt.s32.totalorder %s11, 2
    // Predicated region
    $region25: #{basic_block_forward.5} parent=5 // pred_check
      %p218 = pneg %p217
    $region26: #{basic_block_forward.5} parent=5 // pred_check_branch
      %220 = sbr.rel (%p218) target = $region28
    $region27: #{basic_block_forward.5} parent=5 // pred_region
      // Predicated region
      $region29: #{basic_block_forward.5} parent=27 // pred_check
        %p221 = pneg %p43
      $region30: #{basic_block_forward.5} parent=27 // pred_check_branch
        %223 = sbr.rel (%p221) target = $region32
      $region31: #{basic_block_forward.5} parent=27 // pred_region
        %p224 = scmp.lt.s32.totalorder %s18, 1
        %s225 = scalar_select %p224, %s18, 1
        %s226 = smul.addr %s225, 32
        %s227 = smul.addr %s226, 8
        %s228 = scalar_lea.vmem %s0, %s227
      $region32: #{basic_block_forward.5} parent=27 // pred_fallthru
        _
      // Predicated region
      $region33: #{basic_block_forward.5} parent=27 // pred_check
        %p229 = pneg %p149
      $region34: #{basic_block_forward.5} parent=27 // pred_check_branch
        %231 = sbr.rel (%p229) target = $region36
      $region35: #{basic_block_forward.5} parent=27 // pred_region
        %p232 = scmp.lt.s32.totalorder %s18, 1
        %s233 = scalar_select %p232, %s18, 1
        %p234 = scmp.lt.s32.totalorder %s19, 0
        %s235 = scalar_select %p234, %s19, 0
        %s236 = smul.addr %s233, 32
        %s237 = sadd.s32 %s235, %s236
        %s238 = smul.addr %s237, 8
        %s239 = scalar_lea.vmem %s4, %s238
      $region36: #{basic_block_forward.5} parent=27 // pred_fallthru
        _
    $region28: #{basic_block_forward.5} parent=5 // pred_fallthru
      _
    %p240 = scmp.le.s32.totalorder 1, %s11
    %p241 = scmp.lt.s32.totalorder %s11, 3
    %p242 = pnand %p240, %p241
    %p243 = pneg %p242
    // Predicated region
    $region37: #{basic_block_forward.5} parent=5 // pred_check
      _
    $region38: #{basic_block_forward.5} parent=5 // pred_check_branch
      %245 = sbr.rel (%p242) target = $region40
    $region39: #{basic_block_forward.5} parent=5 // pred_region
      %s246 = ssub.s32 %s11, 1
      %p247 = scmp.lt.s32.totalorder %s20, 1
      %s248 = scalar_select %p247, %s20, 1
      %s249 = smul.addr %s248, 32
      %s250 = smul.addr %s249, 8
      %s251 = scalar_lea.vmem %s0, %s250
      %p252 = pneg %p49
      %p253 = pneg %p46
      %p254 = scmp.lt.s32.totalorder %s21, 0
      %s255 = scalar_select %p254, %s21, 0
      %s256 = smul.addr %s255, 4
      %s257 = scalar_lea.vmem %s1, %s256
      %p258 = pneg %p75
      %p259 = pneg %p72
      %p260 = scmp.lt.s32.totalorder %s21, 0
      %s261 = scalar_select %p260, %s21, 0
      %s262 = scalar_lea.vmem %s2, %s261
      %p263 = pneg %p101
      %p264 = pneg %p98
      %p265 = scmp.lt.s32.totalorder %s21, 0
      %s266 = scalar_select %p265, %s21, 0
      %s267 = scalar_lea.vmem %s3, %s266
      %p268 = pneg %p127
      %p269 = pneg %p124
      %p270 = scmp.lt.s32.totalorder %s20, 1
      %s271 = scalar_select %p270, %s20, 1
      %p272 = scmp.lt.s32.totalorder %s21, 0
      %s273 = scalar_select %p272, %s21, 0
      %s274 = smul.addr %s271, 32
      %s275 = sadd.s32 %s273, %s274
      %s276 = smul.addr %s275, 8
      %s277 = scalar_lea.vmem %s4, %s276
      %p278 = pneg %p155
      %p279 = pneg %p152
      %p280 = pneg %p183
      %p281 = pneg %p180
      %p282 = scmp.lt.s32.totalorder %s20, 1
      %s283 = scalar_select %p282, %s20, 1
      %p284 = scmp.lt.s32.totalorder %s21, 0
      %s285 = scalar_select %p284, %s21, 0
      %s286 = smul.addr %s283, 32
      %s287 = sadd.s32 %s285, %s286
      %s288 = smul.addr %s287, 8
      %s289 = scalar_lea.vmem %s5, %s288
      %p290 = scmp.lt.s32.totalorder %s20, 1
      %s291 = scalar_select %p290, %s20, 1
      %s292 = smul.addr %s291, 32
      %s293 = smul.addr %s292, 8
      %s294 = scalar_lea.vmem %s0, %s293
      %p295 = scmp.lt.s32.totalorder %s21, 0
      %s296 = scalar_select %p295, %s21, 0
      %s297 = smul.addr %s296, 4
      %s298 = scalar_lea.vmem %s1, %s297
      %p299 = scmp.lt.s32.totalorder %s21, 0
      %s300 = scalar_select %p299, %s21, 0
      %s301 = scalar_lea.vmem %s2, %s300
      %p302 = scmp.lt.s32.totalorder %s21, 0
      %s303 = scalar_select %p302, %s21, 0
      %s304 = scalar_lea.vmem %s3, %s303
      %p305 = scmp.lt.s32.totalorder %s20, 1
      %s306 = scalar_select %p305, %s20, 1
      %p307 = scmp.lt.s32.totalorder %s21, 0
      %s308 = scalar_select %p307, %s21, 0
      %s309 = smul.addr %s306, 32
      %s310 = sadd.s32 %s308, %s309
      %s311 = smul.addr %s310, 8
      %s312 = scalar_lea.vmem %s4, %s311
      %p313 = scmp.lt.s32.totalorder %s20, 1
      %s314 = scalar_select %p313, %s20, 1
      %p315 = scmp.lt.s32.totalorder %s21, 0
      %s316 = scalar_select %p315, %s21, 0
      %s317 = smul.addr %s314, 32
      %s318 = sadd.s32 %s316, %s317
      %s319 = smul.addr %s318, 8
      %s320 = scalar_lea.vmem %s5, %s319
      %vm322 = vcmask 64512
      %323 = vst.msk [vmem:[#allocation2] sm:$0xff] %vm322, 0.0
      %324 = vst.msk [vmem:[#allocation2 + $0x8] sm:$0xff] %vm322, 0.0
      %vm325 = vcmask 58368
      %326 = vst.msk [vmem:[#allocation2 + $0x10] sm:$0x3] %vm325, 0.0
      %327 = vst.msk [vmem:[#allocation2 + $0x18] sm:$0xff] %vm322, 0.0
      %328 = vst.msk [vmem:[#allocation2 + $0x20] sm:$0xff] %vm322, 0.0
      %329 = vst.msk [vmem:[#allocation2 + $0x28] sm:$0x3] %vm325, 0.0
      %330 = vst.msk [vmem:[#allocation2 + $0x30] sm:$0xff] %vm322, 0.0
      %331 = vst.msk [vmem:[#allocation2 + $0x38] sm:$0xff] %vm322, 0.0
      %332 = vst.msk [vmem:[#allocation2 + $0x40] sm:$0x3] %vm325, 0.0
      %333 = vst.msk [vmem:[#allocation2 + $0x48] sm:$0xff] %vm322, 0.0
      %334 = vst.msk [vmem:[#allocation2 + $0x50] sm:$0xff] %vm322, 0.0
      %335 = vst.msk [vmem:[#allocation2 + $0x58] sm:$0x3] %vm325, 0.0
      %336 = vst.msk [vmem:[#allocation2 + $0x60] sm:$0xff] %vm322, 0.0
      %337 = vst.msk [vmem:[#allocation2 + $0x68] sm:$0xff] %vm322, 0.0
      %338 = vst.msk [vmem:[#allocation2 + $0x70] sm:$0x3] %vm325, 0.0
      %339 = vst.msk [vmem:[#allocation2 + $0x78] sm:$0xff] %vm322, 0.0
      %340 = vst.msk [vmem:[#allocation2 + $0x80] sm:$0xff] %vm322, 0.0
      %341 = vst.msk [vmem:[#allocation2 + $0x88] sm:$0x3] %vm325, 0.0
      %342 = vst.msk [vmem:[#allocation2 + $0x90] sm:$0xff] %vm322, 0.0
      %343 = vst.msk [vmem:[#allocation2 + $0x98] sm:$0xff] %vm322, 0.0
      %344 = vst.msk [vmem:[#allocation2 + $0xa0] sm:$0x3] %vm325, 0.0
      %345 = vst.msk [vmem:[#allocation2 + $0xa8] sm:$0xff] %vm322, 0.0
      %346 = vst.msk [vmem:[#allocation2 + $0xb0] sm:$0xff] %vm322, 0.0
      %347 = vst.msk [vmem:[#allocation2 + $0xb8] sm:$0x3] %vm325, 0.0
      %348 = vst.msk [vmem:[#allocation2 + $0xc0] sm:$0xff] %vm322, 0.0
      %349 = vst.msk [vmem:[#allocation2 + $0xc8] sm:$0xff] %vm322, 0.0
      %350 = vst.msk [vmem:[#allocation2 + $0xd0] sm:$0x3] %vm325, 0.0
      %351 = vst.msk [vmem:[#allocation2 + $0xd8] sm:$0xff] %vm322, 0.0
      %352 = vst.msk [vmem:[#allocation2 + $0xe0] sm:$0xff] %vm322, 0.0
      %353 = vst.msk [vmem:[#allocation2 + $0xe8] sm:$0x3] %vm325, 0.0
      %354 = vst.msk [vmem:[#allocation2 + $0xf0] sm:$0xff] %vm322, 0.0
      %355 = vst.msk [vmem:[#allocation2 + $0xf8] sm:$0xff] %vm322, 0.0
      %356 = vst.msk [vmem:[#allocation2 + $0x100] sm:$0x3] %vm325, 0.0
      %357 = vst.msk [vmem:[#allocation2 + $0x108] sm:$0xff] %vm322, 0.0
      %358 = vst.msk [vmem:[#allocation2 + $0x110] sm:$0xff] %vm322, 0.0
      %359 = vst.msk [vmem:[#allocation2 + $0x118] sm:$0x3] %vm325, 0.0
      %360 = vst.msk [vmem:[#allocation2 + $0x120] sm:$0xff] %vm322, 0.0
      %361 = vst.msk [vmem:[#allocation2 + $0x128] sm:$0xff] %vm322, 0.0
      %362 = vst.msk [vmem:[#allocation2 + $0x130] sm:$0x3] %vm325, 0.0
      %363 = vst.msk [vmem:[#allocation2 + $0x138] sm:$0xff] %vm322, 0.0
      %364 = vst.msk [vmem:[#allocation2 + $0x140] sm:$0xff] %vm322, 0.0
      %365 = vst.msk [vmem:[#allocation2 + $0x148] sm:$0x3] %vm325, 0.0
      %366 = vst.msk [vmem:[#allocation2 + $0x150] sm:$0xff] %vm322, 0.0
      %367 = vst.msk [vmem:[#allocation2 + $0x158] sm:$0xff] %vm322, 0.0
      %368 = vst.msk [vmem:[#allocation2 + $0x160] sm:$0x3] %vm325, 0.0
      %369 = vst.msk [vmem:[#allocation2 + $0x168] sm:$0xff] %vm322, 0.0
      %370 = vst.msk [vmem:[#allocation2 + $0x170] sm:$0xff] %vm322, 0.0
      %371 = vst.msk [vmem:[#allocation2 + $0x178] sm:$0x3] %vm325, 0.0
      %372 = vst.msk [vmem:[#allocation2 + $0x180] sm:$0xff] %vm322, 0.0
      %373 = vst.msk [vmem:[#allocation2 + $0x188] sm:$0xff] %vm322, 0.0
      %374 = vst.msk [vmem:[#allocation2 + $0x190] sm:$0x3] %vm325, 0.0
      %375 = vst.msk [vmem:[#allocation2 + $0x198] sm:$0xff] %vm322, 0.0
      %376 = vst.msk [vmem:[#allocation2 + $0x1a0] sm:$0xff] %vm322, 0.0
      %377 = vst.msk [vmem:[#allocation2 + $0x1a8] sm:$0x3] %vm325, 0.0
      %v378 = vld [vmem:[%s294] sm:$0xff]
      %v379 = vld [vmem:[%s294 + $0x8] sm:$0xff]
      %v380 = vld [vmem:[%s294 + $0x10] sm:$0xff]
      %v381 = vld [vmem:[%s294 + $0x18] sm:$0xff]
      %v382 = vld [vmem:[%s294 + $0x20] sm:$0xff]
      %v383 = vld [vmem:[%s294 + $0x28] sm:$0xff]
      %v384 = vld [vmem:[%s294 + $0x30] sm:$0xff]
      %v385 = vld [vmem:[%s294 + $0x38] sm:$0xff]
      %v386 = vld [vmem:[%s294 + $0x40] sm:$0xff]
      %v387 = vld [vmem:[%s294 + $0x48] sm:$0xff]
      %v388 = vld [vmem:[%s294 + $0x50] sm:$0xff]
      %v389 = vld [vmem:[%s294 + $0x58] sm:$0xff]
      %v390 = vld [vmem:[%s294 + $0x60] sm:$0xff]
      %v391 = vld [vmem:[%s294 + $0x68] sm:$0xff]
      %v392 = vld [vmem:[%s294 + $0x70] sm:$0xff]
      %v393 = vld [vmem:[%s294 + $0x78] sm:$0xff]
      %v394 = vld [vmem:[%s294 + $0x80] sm:$0xff]
      %v395 = vld [vmem:[%s294 + $0x88] sm:$0xff]
      %v396 = vld [vmem:[%s294 + $0x90] sm:$0xff]
      %v397 = vld [vmem:[%s294 + $0x98] sm:$0xff]
      %v398 = vld [vmem:[%s294 + $0xa0] sm:$0xff]
      %v399 = vld [vmem:[%s294 + $0xa8] sm:$0xff]
      %v400 = vld [vmem:[%s294 + $0xb0] sm:$0xff]
      %v401 = vld [vmem:[%s294 + $0xb8] sm:$0xff]
      %v402 = vld [vmem:[%s294 + $0xc0] sm:$0xff]
      %v403 = vld [vmem:[%s294 + $0xc8] sm:$0xff]
      %v404 = vld [vmem:[%s294 + $0xd0] sm:$0xff]
      %v405 = vld [vmem:[%s294 + $0xd8] sm:$0xff]
      %v406 = vld [vmem:[%s294 + $0xe0] sm:$0xff]
      %v407 = vld [vmem:[%s294 + $0xe8] sm:$0xff]
      %v408 = vld [vmem:[%s294 + $0xf0] sm:$0xff]
      %v409 = vld [vmem:[%s294 + $0xf8] sm:$0xff]
      %s410 = scalar_lea.vmem [#allocation2], 24
      %411 = vst.msk [vmem:[%s410 + $0x1] sm:$0xff] %vm322, %v378
      %412 = vst.msk [vmem:[%s410 + $0x9] sm:$0xff] %vm322, %v379
      %413 = vst.msk [vmem:[%s410 + $0x19] sm:$0xff] %vm322, %v380
      %414 = vst.msk [vmem:[%s410 + $0x21] sm:$0xff] %vm322, %v381
      %415 = vst.msk [vmem:[%s410 + $0x31] sm:$0xff] %vm322, %v382
      %416 = vst.msk [vmem:[%s410 + $0x39] sm:$0xff] %vm322, %v383
      %417 = vst.msk [vmem:[%s410 + $0x49] sm:$0xff] %vm322, %v384
      %418 = vst.msk [vmem:[%s410 + $0x51] sm:$0xff] %vm322, %v385
      %419 = vst.msk [vmem:[%s410 + $0x61] sm:$0xff] %vm322, %v386
      %420 = vst.msk [vmem:[%s410 + $0x69] sm:$0xff] %vm322, %v387
      %421 = vst.msk [vmem:[%s410 + $0x79] sm:$0xff] %vm322, %v388
      %422 = vst.msk [vmem:[%s410 + $0x81] sm:$0xff] %vm322, %v389
      %423 = vst.msk [vmem:[%s410 + $0x91] sm:$0xff] %vm322, %v390
      %424 = vst.msk [vmem:[%s410 + $0x99] sm:$0xff] %vm322, %v391
      %425 = vst.msk [vmem:[%s410 + $0xa9] sm:$0xff] %vm322, %v392
      %426 = vst.msk [vmem:[%s410 + $0xb1] sm:$0xff] %vm322, %v393
      %427 = vst.msk [vmem:[%s410 + $0xc1] sm:$0xff] %vm322, %v394
      %428 = vst.msk [vmem:[%s410 + $0xc9] sm:$0xff] %vm322, %v395
      %429 = vst.msk [vmem:[%s410 + $0xd9] sm:$0xff] %vm322, %v396
      %430 = vst.msk [vmem:[%s410 + $0xe1] sm:$0xff] %vm322, %v397
      %431 = vst.msk [vmem:[%s410 + $0xf1] sm:$0xff] %vm322, %v398
      %432 = vst.msk [vmem:[%s410 + $0xf9] sm:$0xff] %vm322, %v399
      %433 = vst.msk [vmem:[%s410 + $0x109] sm:$0xff] %vm322, %v400
      %434 = vst.msk [vmem:[%s410 + $0x111] sm:$0xff] %vm322, %v401
      %435 = vst.msk [vmem:[%s410 + $0x121] sm:$0xff] %vm322, %v402
      %436 = vst.msk [vmem:[%s410 + $0x129] sm:$0xff] %vm322, %v403
      %437 = vst.msk [vmem:[%s410 + $0x139] sm:$0xff] %vm322, %v404
      %438 = vst.msk [vmem:[%s410 + $0x141] sm:$0xff] %vm322, %v405
      %439 = vst.msk [vmem:[%s410 + $0x151] sm:$0xff] %vm322, %v406
      %440 = vst.msk [vmem:[%s410 + $0x159] sm:$0xff] %vm322, %v407
      %441 = vst.msk [vmem:[%s410 + $0x169] sm:$0xff] %vm322, %v408
      %442 = vst.msk [vmem:[%s410 + $0x171] sm:$0xff] %vm322, %v409
      %443 = vst.msk [vmem:[#allocation3] sm:$0xff] %vm322, 0.0
      %444 = vst.msk [vmem:[#allocation3 + $0x8] sm:$0xff] %vm322, 0.0
      %445 = vst.msk [vmem:[#allocation3 + $0x10] sm:$0xff] %vm322, 0.0
      %446 = vst.msk [vmem:[#allocation3 + $0x18] sm:$0xff] %vm322, 0.0
      %447 = vst.msk [vmem:[#allocation3 + $0x20] sm:$0xff] %vm322, 0.0
      %448 = vst.msk [vmem:[#allocation3 + $0x28] sm:$0xff] %vm322, 0.0
      %449 = vst.msk [vmem:[#allocation3 + $0x30] sm:$0xff] %vm322, 0.0
      %450 = vst.msk [vmem:[#allocation3 + $0x38] sm:$0xff] %vm322, 0.0
      %451 = vst.msk [vmem:[#allocation3 + $0x40] sm:$0xff] %vm322, 0.0
      %452 = vst.msk [vmem:[#allocation3 + $0x48] sm:$0xff] %vm322, 0.0
      %453 = vst.msk [vmem:[#allocation3 + $0x50] sm:$0xff] %vm322, 0.0
      %454 = vst.msk [vmem:[#allocation3 + $0x58] sm:$0xff] %vm322, 0.0
      %455 = vst.msk [vmem:[#allocation3 + $0x60] sm:$0xff] %vm322, 0.0
      %456 = vst.msk [vmem:[#allocation3 + $0x68] sm:$0xff] %vm322, 0.0
      %457 = vst.msk [vmem:[#allocation3 + $0x70] sm:$0xff] %vm322, 0.0
      %458 = vst.msk [vmem:[#allocation3 + $0x78] sm:$0xff] %vm322, 0.0
      %459 = vst.msk [vmem:[#allocation3 + $0x80] sm:$0xff] %vm322, 0.0
      %460 = vst.msk [vmem:[#allocation3 + $0x88] sm:$0xff] %vm322, 0.0
      %461 = vst.msk [vmem:[#allocation3 + $0x90] sm:$0xff] %vm322, 0.0
      %462 = vst.msk [vmem:[#allocation3 + $0x98] sm:$0xff] %vm322, 0.0
      %463 = vst.msk [vmem:[#allocation3 + $0xa0] sm:$0xff] %vm322, 0.0
      %464 = vst.msk [vmem:[#allocation3 + $0xa8] sm:$0xff] %vm322, 0.0
      %465 = vst.msk [vmem:[#allocation3 + $0xb0] sm:$0xff] %vm322, 0.0
      %466 = vst.msk [vmem:[#allocation3 + $0xb8] sm:$0xff] %vm322, 0.0
      %467 = vst.msk [vmem:[#allocation3 + $0xc0] sm:$0xff] %vm322, 0.0
      %468 = vst.msk [vmem:[#allocation3 + $0xc8] sm:$0xff] %vm322, 0.0
      %469 = vst.msk [vmem:[#allocation3 + $0xd0] sm:$0xff] %vm322, 0.0
      %470 = vst.msk [vmem:[#allocation3 + $0xd8] sm:$0xff] %vm322, 0.0
      %471 = vst.msk [vmem:[#allocation3 + $0xe0] sm:$0xff] %vm322, 0.0
      %472 = vst.msk [vmem:[#allocation3 + $0xe8] sm:$0xff] %vm322, 0.0
      %473 = vst.msk [vmem:[#allocation3 + $0xf0] sm:$0xff] %vm322, 0.0
      %474 = vst.msk [vmem:[#allocation3 + $0xf8] sm:$0xff] %vm322, 0.0
      %v475 = vld [vmem:[#allocation2] sm:$0xff]
      %v476 = vld [vmem:[#allocation2 + $0x8] sm:$0xff]
      %v477 = vld [vmem:[#allocation2 + $0x18] sm:$0xff]
      %v478 = vld [vmem:[#allocation2 + $0x20] sm:$0xff]
      %v479 = vld [vmem:[#allocation2 + $0x30] sm:$0xff]
      %v480 = vld [vmem:[#allocation2 + $0x38] sm:$0xff]
      %v481 = vld [vmem:[#allocation2 + $0x48] sm:$0xff]
      %v482 = vld [vmem:[#allocation2 + $0x50] sm:$0xff]
      %v483 = vld [vmem:[#allocation2 + $0x60] sm:$0xff]
      %v484 = vld [vmem:[#allocation2 + $0x68] sm:$0xff]
      %v485 = vld [vmem:[#allocation2 + $0x78] sm:$0xff]
      %v486 = vld [vmem:[#allocation2 + $0x80] sm:$0xff]
      %v487 = vld [vmem:[#allocation2 + $0x90] sm:$0xff]
      %v488 = vld [vmem:[#allocation2 + $0x98] sm:$0xff]
      %v489 = vld [vmem:[#allocation2 + $0xa8] sm:$0xff]
      %v490 = vld [vmem:[#allocation2 + $0xb0] sm:$0xff]
      %v491 = vld [vmem:[#allocation2 + $0xc0] sm:$0xff]
      %v492 = vld [vmem:[#allocation2 + $0xc8] sm:$0xff]
      %v493 = vld [vmem:[#allocation2 + $0xd8] sm:$0xff]
      %v494 = vld [vmem:[#allocation2 + $0xe0] sm:$0xff]
      %v495 = vld [vmem:[#allocation2 + $0xf0] sm:$0xff]
      %v496 = vld [vmem:[#allocation2 + $0xf8] sm:$0xff]
      %v497 = vld [vmem:[#allocation2 + $0x108] sm:$0xff]
      %v498 = vld [vmem:[#allocation2 + $0x110] sm:$0xff]
      %v499 = vld [vmem:[#allocation2 + $0x120] sm:$0xff]
      %v500 = vld [vmem:[#allocation2 + $0x128] sm:$0xff]
      %v501 = vld [vmem:[#allocation2 + $0x138] sm:$0xff]
      %v502 = vld [vmem:[#allocation2 + $0x140] sm:$0xff]
      %v503 = vld [vmem:[#allocation2 + $0x150] sm:$0xff]
      %v504 = vld [vmem:[#allocation2 + $0x158] sm:$0xff]
      %v505 = vld [vmem:[#allocation2 + $0x168] sm:$0xff]
      %v506 = vld [vmem:[#allocation2 + $0x170] sm:$0xff]
      %v507 = vpack.c.bf16 %v476, %v475
      %v508 = vpack.c.bf16 %v478, %v477
      %v509 = vpack.c.bf16 %v480, %v479
      %v510 = vpack.c.bf16 %v482, %v481
      %v511 = vpack.c.bf16 %v484, %v483
      %v512 = vpack.c.bf16 %v486, %v485
      %v513 = vpack.c.bf16 %v488, %v487
      %v514 = vpack.c.bf16 %v490, %v489
      %v515 = vpack.c.bf16 %v492, %v491
      %v516 = vpack.c.bf16 %v494, %v493
      %v517 = vpack.c.bf16 %v496, %v495
      %v518 = vpack.c.bf16 %v498, %v497
      %v519 = vpack.c.bf16 %v500, %v499
      %v520 = vpack.c.bf16 %v502, %v501
      %v521 = vpack.c.bf16 %v504, %v503
      %v522 = vpack.c.bf16 %v506, %v505
      %v523 = vld [vmem:[%s298] sm:$0xf]
      %v524 = vld [vmem:[#allocation3] sm:$0xff]
      %v525 = vld [vmem:[#allocation3 + $0x8] sm:$0xff]
      %v526 = vld [vmem:[#allocation3 + $0x10] sm:$0xff]
      %v527 = vld [vmem:[#allocation3 + $0x18] sm:$0xff]
      %v528 = vld [vmem:[#allocation3 + $0x20] sm:$0xff]
      %v529 = vld [vmem:[#allocation3 + $0x28] sm:$0xff]
      %v530 = vld [vmem:[#allocation3 + $0x30] sm:$0xff]
      %v531 = vld [vmem:[#allocation3 + $0x38] sm:$0xff]
      %v532 = vld [vmem:[#allocation3 + $0x40] sm:$0xff]
      %v533 = vld [vmem:[#allocation3 + $0x48] sm:$0xff]
      %v534 = vld [vmem:[#allocation3 + $0x50] sm:$0xff]
      %v535 = vld [vmem:[#allocation3 + $0x58] sm:$0xff]
      %v536 = vld [vmem:[#allocation3 + $0x60] sm:$0xff]
      %v537 = vld [vmem:[#allocation3 + $0x68] sm:$0xff]
      %v538 = vld [vmem:[#allocation3 + $0x70] sm:$0xff]
      %v539 = vld [vmem:[#allocation3 + $0x78] sm:$0xff]
      %v540 = vld [vmem:[#allocation3 + $0x80] sm:$0xff]
      %v541 = vld [vmem:[#allocation3 + $0x88] sm:$0xff]
      %v542 = vld [vmem:[#allocation3 + $0x90] sm:$0xff]
      %v543 = vld [vmem:[#allocation3 + $0x98] sm:$0xff]
      %v544 = vld [vmem:[#allocation3 + $0xa0] sm:$0xff]
      %v545 = vld [vmem:[#allocation3 + $0xa8] sm:$0xff]
      %v546 = vld [vmem:[#allocation3 + $0xb0] sm:$0xff]
      %v547 = vld [vmem:[#allocation3 + $0xb8] sm:$0xff]
      %v548 = vld [vmem:[#allocation3 + $0xc0] sm:$0xff]
      %v549 = vld [vmem:[#allocation3 + $0xc8] sm:$0xff]
      %v550 = vld [vmem:[#allocation3 + $0xd0] sm:$0xff]
      %v551 = vld [vmem:[#allocation3 + $0xd8] sm:$0xff]
      %v552 = vld [vmem:[#allocation3 + $0xe0] sm:$0xff]
      %v553 = vld [vmem:[#allocation3 + $0xe8] sm:$0xff]
      %v554 = vld [vmem:[#allocation3 + $0xf0] sm:$0xff]
      %v555 = vld [vmem:[#allocation3 + $0xf8] sm:$0xff]
      %v557 = vsel %vm322, %v507, 0
      %v560 = vsel %vm322, %v508, 0
      %v563 = vsel %vm322, %v509, 0
      %v566 = vsel %vm322, %v510, 0
      %v569 = vsel %vm322, %v511, 0
      %v572 = vsel %vm322, %v512, 0
      %v575 = vsel %vm322, %v513, 0
      %v578 = vsel %vm322, %v514, 0
      %v581 = vsel %vm322, %v515, 0
      %v584 = vsel %vm322, %v516, 0
      %v587 = vsel %vm322, %v517, 0
      %v590 = vsel %vm322, %v518, 0
      %v593 = vsel %vm322, %v519, 0
      %v596 = vsel %vm322, %v520, 0
      %v599 = vsel %vm322, %v521, 0
      %v602 = vsel %vm322, %v522, 0
      %vm604 = vcmask 1043456
      %v606 = vsel %vm604, %v523, 0
      %608 = vmatprep.subr.bf16.mxu0 0
      %609 = vmatpush1.bf16.msra.mxu0 %v606
      %610 = vmatprep.subr.bf16.mxu0 0
      %611 = vmatpush1.bf16.msra.mxu0 0
      %612 = vmatprep.subr.bf16.mxu0 0
      %613 = vmatpush1.bf16.msra.mxu0 0
      %614 = vmatprep.subr.bf16.mxu0 0
      %615 = vmatpush1.bf16.msra.mxu0 0
      %616 = vmatprep.subr.bf16.mxu0 0
      %617 = vmatpush1.bf16.msra.mxu0 0
      %618 = vmatprep.subr.bf16.mxu0 0
      %619 = vmatpush1.bf16.msra.mxu0 0
      %620 = vmatprep.subr.bf16.mxu0 0
      %621 = vmatpush1.bf16.msra.mxu0 0
      %622 = vmatprep.subr.bf16.mxu0 0
      %623 = vmatpush1.bf16.msra.mxu0 0
      %624 = vmatprep.subr.bf16.mxu0 0
      %625 = vmatpush1.bf16.msra.mxu0 0
      %626 = vmatprep.subr.bf16.mxu0 0
      %627 = vmatpush1.bf16.msra.mxu0 0
      %628 = vmatprep.subr.bf16.mxu0 0
      %629 = vmatpush1.bf16.msra.mxu0 0
      %630 = vmatprep.subr.bf16.mxu0 0
      %631 = vmatpush1.bf16.msra.mxu0 0
      %632 = vmatprep.subr.bf16.mxu0 0
      %633 = vmatpush1.bf16.msra.mxu0 0
      %634 = vmatprep.subr.bf16.mxu0 0
      %635 = vmatpush1.bf16.msra.mxu0 0
      %636 = vmatprep.subr.bf16.mxu0 0
      %637 = vmatpush1.bf16.msra.mxu0 0
      %638 = vmatprep.subr.bf16.mxu0 0
      %639 = vmatpush1.bf16.msra.mxu0 0
      %640 = vmatprep.mubr.bf16.mxu0 0
      %641 = vmatmul.mubr.bf16.gmra.mrb[0].mxu0 %v557
      %v642 = vpop.f32.mrb[0].mxu0
      %v643 = vadd.f32 0.0, %v642
      %v644 = vpop.f32.mrb[0].mxu0
      %v645 = vpop.f32.mrb[0].mxu0
      %v646 = vadd.f32 0.0, %v645
      %v647 = vpop.f32.mrb[0].mxu0
      %648 = vmatprep.mubr.bf16.mxu0 0
      %649 = vmatmul.mubr.bf16.gmra.mrb[0].mxu0 %v560
      %v650 = vpop.f32.mrb[0].mxu0
      %v651 = vadd.f32 0.0, %v650
      %v652 = vpop.f32.mrb[0].mxu0
      %v653 = vpop.f32.mrb[0].mxu0
      %v654 = vadd.f32 0.0, %v653
      %v655 = vpop.f32.mrb[0].mxu0
      %656 = vmatprep.mubr.bf16.mxu0 0
      %657 = vmatmul.mubr.bf16.gmra.mrb[0].mxu0 %v563
      %v658 = vpop.f32.mrb[0].mxu0
      %v659 = vadd.f32 0.0, %v658
      %v660 = vpop.f32.mrb[0].mxu0
      %v661 = vpop.f32.mrb[0].mxu0
      %v662 = vadd.f32 0.0, %v661
      %v663 = vpop.f32.mrb[0].mxu0
      %664 = vmatprep.mubr.bf16.mxu0 0
      %665 = vmatmul.mubr.bf16.gmra.mrb[0].mxu0 %v566
      %v666 = vpop.f32.mrb[0].mxu0
      %v667 = vadd.f32 0.0, %v666
      %v668 = vpop.f32.mrb[0].mxu0
      %v669 = vpop.f32.mrb[0].mxu0
      %v670 = vadd.f32 0.0, %v669
      %v671 = vpop.f32.mrb[0].mxu0
      %672 = vmatprep.mubr.bf16.mxu0 0
      %673 = vmatmul.mubr.bf16.gmra.mrb[0].mxu0 %v569
      %v674 = vpop.f32.mrb[0].mxu0
      %v675 = vadd.f32 0.0, %v674
      %v676 = vpop.f32.mrb[0].mxu0
      %v677 = vpop.f32.mrb[0].mxu0
      %v678 = vadd.f32 0.0, %v677
      %v679 = vpop.f32.mrb[0].mxu0
      %680 = vmatprep.mubr.bf16.mxu0 0
      %681 = vmatmul.mubr.bf16.gmra.mrb[0].mxu0 %v572
      %v682 = vpop.f32.mrb[0].mxu0
      %v683 = vadd.f32 0.0, %v682
      %v684 = vpop.f32.mrb[0].mxu0
      %v685 = vpop.f32.mrb[0].mxu0
      %v686 = vadd.f32 0.0, %v685
      %v687 = vpop.f32.mrb[0].mxu0
      %688 = vmatprep.mubr.bf16.mxu0 0
      %689 = vmatmul.mubr.bf16.gmra.mrb[0].mxu0 %v575
      %v690 = vpop.f32.mrb[0].mxu0
      %v691 = vadd.f32 0.0, %v690
      %v692 = vpop.f32.mrb[0].mxu0
      %v693 = vpop.f32.mrb[0].mxu0
      %v694 = vadd.f32 0.0, %v693
      %v695 = vpop.f32.mrb[0].mxu0
      %696 = vmatprep.mubr.bf16.mxu0 0
      %697 = vmatmul.mubr.bf16.gmra.mrb[0].mxu0 %v578
      %v698 = vpop.f32.mrb[0].mxu0
      %v699 = vadd.f32 0.0, %v698
      %v700 = vpop.f32.mrb[0].mxu0
      %v701 = vpop.f32.mrb[0].mxu0
      %v702 = vadd.f32 0.0, %v701
      %v703 = vpop.f32.mrb[0].mxu0
      %704 = vmatprep.mubr.bf16.mxu0 0
      %705 = vmatmul.mubr.bf16.gmra.mrb[0].mxu0 %v581
      %v706 = vpop.f32.mrb[0].mxu0
      %v707 = vadd.f32 0.0, %v706
      %v708 = vpop.f32.mrb[0].mxu0
      %v709 = vpop.f32.mrb[0].mxu0
      %v710 = vadd.f32 0.0, %v709
      %v711 = vpop.f32.mrb[0].mxu0
      %712 = vmatprep.mubr.bf16.mxu0 0
      %713 = vmatmul.mubr.bf16.gmra.mrb[0].mxu0 %v584
      %v714 = vpop.f32.mrb[0].mxu0
      %v715 = vadd.f32 0.0, %v714
      %v716 = vpop.f32.mrb[0].mxu0
      %v717 = vpop.f32.mrb[0].mxu0
      %v718 = vadd.f32 0.0, %v717
      %v719 = vpop.f32.mrb[0].mxu0
      %720 = vmatprep.mubr.bf16.mxu0 0
      %721 = vmatmul.mubr.bf16.gmra.mrb[0].mxu0 %v587
      %v722 = vpop.f32.mrb[0].mxu0
      %v723 = vadd.f32 0.0, %v722
      %v724 = vpop.f32.mrb[0].mxu0
      %v725 = vpop.f32.mrb[0].mxu0
      %v726 = vadd.f32 0.0, %v725
      %v727 = vpop.f32.mrb[0].mxu0
      %728 = vmatprep.mubr.bf16.mxu0 0
      %729 = vmatmul.mubr.bf16.gmra.mrb[0].mxu0 %v590
      %v730 = vpop.f32.mrb[0].mxu0
      %v731 = vadd.f32 0.0, %v730
      %v732 = vpop.f32.mrb[0].mxu0
      %v733 = vpop.f32.mrb[0].mxu0
      %v734 = vadd.f32 0.0, %v733
      %v735 = vpop.f32.mrb[0].mxu0
      %736 = vmatprep.mubr.bf16.mxu0 0
      %737 = vmatmul.mubr.bf16.gmra.mrb[0].mxu0 %v593
      %v738 = vpop.f32.mrb[0].mxu0
      %v739 = vadd.f32 0.0, %v738
      %v740 = vpop.f32.mrb[0].mxu0
      %v741 = vpop.f32.mrb[0].mxu0
      %v742 = vadd.f32 0.0, %v741
      %v743 = vpop.f32.mrb[0].mxu0
      %744 = vmatprep.mubr.bf16.mxu0 0
      %745 = vmatmul.mubr.bf16.gmra.mrb[0].mxu0 %v596
      %v746 = vpop.f32.mrb[0].mxu0
      %v747 = vadd.f32 0.0, %v746
      %v748 = vpop.f32.mrb[0].mxu0
      %v749 = vpop.f32.mrb[0].mxu0
      %v750 = vadd.f32 0.0, %v749
      %v751 = vpop.f32.mrb[0].mxu0
      %752 = vmatprep.mubr.bf16.mxu0 0
      %753 = vmatmul.mubr.bf16.gmra.mrb[0].mxu0 %v599
      %v754 = vpop.f32.mrb[0].mxu0
      %v755 = vadd.f32 0.0, %v754
      %v756 = vpop.f32.mrb[0].mxu0
      %v757 = vpop.f32.mrb[0].mxu0
      %v758 = vadd.f32 0.0, %v757
      %v759 = vpop.f32.mrb[0].mxu0
      %760 = vmatprep.mubr.bf16.mxu0 0
      %761 = vmatmul.mubr.bf16.gmra.mrb[0].mxu0 %v602
      %v762 = vpop.f32.mrb[0].mxu0
      %v763 = vadd.f32 0.0, %v762
      %v764 = vpop.f32.mrb[0].mxu0
      %v765 = vpop.f32.mrb[0].mxu0
      %v766 = vadd.f32 0.0, %v765
      %v767 = vpop.f32.mrb[0].mxu0
      %768 = vdwg.mxu0
      %v769 = vadd.f32 %v524, %v643
      %v770 = vadd.f32 %v525, %v646
      %v771 = vadd.f32 %v526, %v651
      %v772 = vadd.f32 %v527, %v654
      %v773 = vadd.f32 %v528, %v659
      %v774 = vadd.f32 %v529, %v662
      %v775 = vadd.f32 %v530, %v667
      %v776 = vadd.f32 %v531, %v670
      %v777 = vadd.f32 %v532, %v675
      %v778 = vadd.f32 %v533, %v678
      %v779 = vadd.f32 %v534, %v683
      %v780 = vadd.f32 %v535, %v686
      %v781 = vadd.f32 %v536, %v691
      %v782 = vadd.f32 %v537, %v694
      %v783 = vadd.f32 %v538, %v699
      %v784 = vadd.f32 %v539, %v702
      %v785 = vadd.f32 %v540, %v707
      %v786 = vadd.f32 %v541, %v710
      %v787 = vadd.f32 %v542, %v715
      %v788 = vadd.f32 %v543, %v718
      %v789 = vadd.f32 %v544, %v723
      %v790 = vadd.f32 %v545, %v726
      %v791 = vadd.f32 %v546, %v731
      %v792 = vadd.f32 %v547, %v734
      %v793 = vadd.f32 %v548, %v739
      %v794 = vadd.f32 %v549, %v742
      %v795 = vadd.f32 %v550, %v747
      %v796 = vadd.f32 %v551, %v750
      %v797 = vadd.f32 %v552, %v755
      %v798 = vadd.f32 %v553, %v758
      %v799 = vadd.f32 %v554, %v763
      %v800 = vadd.f32 %v555, %v766
      %801 = vst.msk [vmem:[#allocation3] sm:$0xff] %vm322, %v769
      %802 = vst.msk [vmem:[#allocation3 + $0x8] sm:$0xff] %vm322, %v770
      %803 = vst.msk [vmem:[#allocation3 + $0x10] sm:$0xff] %vm322, %v771
      %804 = vst.msk [vmem:[#allocation3 + $0x18] sm:$0xff] %vm322, %v772
      %805 = vst.msk [vmem:[#allocation3 + $0x20] sm:$0xff] %vm322, %v773
      %806 = vst.msk [vmem:[#allocation3 + $0x28] sm:$0xff] %vm322, %v774
      %807 = vst.msk [vmem:[#allocation3 + $0x30] sm:$0xff] %vm322, %v775
      %808 = vst.msk [vmem:[#allocation3 + $0x38] sm:$0xff] %vm322, %v776
      %809 = vst.msk [vmem:[#allocation3 + $0x40] sm:$0xff] %vm322, %v777
      %810 = vst.msk [vmem:[#allocation3 + $0x48] sm:$0xff] %vm322, %v778
      %811 = vst.msk [vmem:[#allocation3 + $0x50] sm:$0xff] %vm322, %v779
      %812 = vst.msk [vmem:[#allocation3 + $0x58] sm:$0xff] %vm322, %v780
      %813 = vst.msk [vmem:[#allocation3 + $0x60] sm:$0xff] %vm322, %v781
      %814 = vst.msk [vmem:[#allocation3 + $0x68] sm:$0xff] %vm322, %v782
      %815 = vst.msk [vmem:[#allocation3 + $0x70] sm:$0xff] %vm322, %v783
      %816 = vst.msk [vmem:[#allocation3 + $0x78] sm:$0xff] %vm322, %v784
      %817 = vst.msk [vmem:[#allocation3 + $0x80] sm:$0xff] %vm322, %v785
      %818 = vst.msk [vmem:[#allocation3 + $0x88] sm:$0xff] %vm322, %v786
      %819 = vst.msk [vmem:[#allocation3 + $0x90] sm:$0xff] %vm322, %v787
      %820 = vst.msk [vmem:[#allocation3 + $0x98] sm:$0xff] %vm322, %v788
      %821 = vst.msk [vmem:[#allocation3 + $0xa0] sm:$0xff] %vm322, %v789
      %822 = vst.msk [vmem:[#allocation3 + $0xa8] sm:$0xff] %vm322, %v790
      %823 = vst.msk [vmem:[#allocation3 + $0xb0] sm:$0xff] %vm322, %v791
      %824 = vst.msk [vmem:[#allocation3 + $0xb8] sm:$0xff] %vm322, %v792
      %825 = vst.msk [vmem:[#allocation3 + $0xc0] sm:$0xff] %vm322, %v793
      %826 = vst.msk [vmem:[#allocation3 + $0xc8] sm:$0xff] %vm322, %v794
      %827 = vst.msk [vmem:[#allocation3 + $0xd0] sm:$0xff] %vm322, %v795
      %828 = vst.msk [vmem:[#allocation3 + $0xd8] sm:$0xff] %vm322, %v796
      %829 = vst.msk [vmem:[#allocation3 + $0xe0] sm:$0xff] %vm322, %v797
      %830 = vst.msk [vmem:[#allocation3 + $0xe8] sm:$0xff] %vm322, %v798
      %831 = vst.msk [vmem:[#allocation3 + $0xf0] sm:$0xff] %vm322, %v799
      %832 = vst.msk [vmem:[#allocation3 + $0xf8] sm:$0xff] %vm322, %v800
      %v833 = vld [vmem:[#allocation2 + $0x1] sm:$0xff]
      %v834 = vld [vmem:[#allocation2 + $0x9] sm:$0xff]
      %v835 = vld [vmem:[#allocation2 + $0x19] sm:$0xff]
      %v836 = vld [vmem:[#allocation2 + $0x21] sm:$0xff]
      %v837 = vld [vmem:[#allocation2 + $0x31] sm:$0xff]
      %v838 = vld [vmem:[#allocation2 + $0x39] sm:$0xff]
      %v839 = vld [vmem:[#allocation2 + $0x49] sm:$0xff]
      %v840 = vld [vmem:[#allocation2 + $0x51] sm:$0xff]
      %v841 = vld [vmem:[#allocation2 + $0x61] sm:$0xff]
      %v842 = vld [vmem:[#allocation2 + $0x69] sm:$0xff]
      %v843 = vld [vmem:[#allocation2 + $0x79] sm:$0xff]
      %v844 = vld [vmem:[#allocation2 + $0x81] sm:$0xff]
      %v845 = vld [vmem:[#allocation2 + $0x91] sm:$0xff]
      %v846 = vld [vmem:[#allocation2 + $0x99] sm:$0xff]
      %v847 = vld [vmem:[#allocation2 + $0xa9] sm:$0xff]
      %v848 = vld [vmem:[#allocation2 + $0xb1] sm:$0xff]
      %v849 = vld [vmem:[#allocation2 + $0xc1] sm:$0xff]
      %v850 = vld [vmem:[#allocation2 + $0xc9] sm:$0xff]
      %v851 = vld [vmem:[#allocation2 + $0xd9] sm:$0xff]
      %v852 = vld [vmem:[#allocation2 + $0xe1] sm:$0xff]
      %v853 = vld [vmem:[#allocation2 + $0xf1] sm:$0xff]
      %v854 = vld [vmem:[#allocation2 + $0xf9] sm:$0xff]
      %v855 = vld [vmem:[#allocation2 + $0x109] sm:$0xff]
      %v856 = vld [vmem:[#allocation2 + $0x111] sm:$0xff]
      %v857 = vld [vmem:[#allocation2 + $0x121] sm:$0xff]
      %v858 = vld [vmem:[#allocation2 + $0x129] sm:$0xff]
      %v859 = vld [vmem:[#allocation2 + $0x139] sm:$0xff]
      %v860 = vld [vmem:[#allocation2 + $0x141] sm:$0xff]
      %v861 = vld [vmem:[#allocation2 + $0x151] sm:$0xff]
      %v862 = vld [vmem:[#allocation2 + $0x159] sm:$0xff]
      %v863 = vld [vmem:[#allocation2 + $0x169] sm:$0xff]
      %v864 = vld [vmem:[#allocation2 + $0x171] sm:$0xff]
      %v865 = vpack.c.bf16 %v834, %v833
      %v866 = vpack.c.bf16 %v836, %v835
      %v867 = vpack.c.bf16 %v838, %v837
      %v868 = vpack.c.bf16 %v840, %v839
      %v869 = vpack.c.bf16 %v842, %v841
      %v870 = vpack.c.bf16 %v844, %v843
      %v871 = vpack.c.bf16 %v846, %v845
      %v872 = vpack.c.bf16 %v848, %v847
      %v873 = vpack.c.bf16 %v850, %v849
      %v874 = vpack.c.bf16 %v852, %v851
      %v875 = vpack.c.bf16 %v854, %v853
      %v876 = vpack.c.bf16 %v856, %v855
      %v877 = vpack.c.bf16 %v858, %v857
      %v878 = vpack.c.bf16 %v860, %v859
      %v879 = vpack.c.bf16 %v862, %v861
      %v880 = vpack.c.bf16 %v864, %v863
      %v881 = vld [vmem:[%s298 + $0x4] sm:$0xf]
      %v882 = vld [vmem:[#allocation3] sm:$0xff]
      %v883 = vld [vmem:[#allocation3 + $0x8] sm:$0xff]
      %v884 = vld [vmem:[#allocation3 + $0x10] sm:$0xff]
      %v885 = vld [vmem:[#allocation3 + $0x18] sm:$0xff]
      %v886 = vld [vmem:[#allocation3 + $0x20] sm:$0xff]
      %v887 = vld [vmem:[#allocation3 + $0x28] sm:$0xff]
      %v888 = vld [vmem:[#allocation3 + $0x30] sm:$0xff]
      %v889 = vld [vmem:[#allocation3 + $0x38] sm:$0xff]
      %v890 = vld [vmem:[#allocation3 + $0x40] sm:$0xff]
      %v891 = vld [vmem:[#allocation3 + $0x48] sm:$0xff]
      %v892 = vld [vmem:[#allocation3 + $0x50] sm:$0xff]
      %v893 = vld [vmem:[#allocation3 + $0x58] sm:$0xff]
      %v894 = vld [vmem:[#allocation3 + $0x60] sm:$0xff]
      %v895 = vld [vmem:[#allocation3 + $0x68] sm:$0xff]
      %v896 = vld [vmem:[#allocation3 + $0x70] sm:$0xff]
      %v897 = vld [vmem:[#allocation3 + $0x78] sm:$0xff]
      %v898 = vld [vmem:[#allocation3 + $0x80] sm:$0xff]
      %v899 = vld [vmem:[#allocation3 + $0x88] sm:$0xff]
      %v900 = vld [vmem:[#allocation3 + $0x90] sm:$0xff]
      %v901 = vld [vmem:[#allocation3 + $0x98] sm:$0xff]
      %v902 = vld [vmem:[#allocation3 + $0xa0] sm:$0xff]
      %v903 = vld [vmem:[#allocation3 + $0xa8] sm:$0xff]
      %v904 = vld [vmem:[#allocation3 + $0xb0] sm:$0xff]
      %v905 = vld [vmem:[#allocation3 + $0xb8] sm:$0xff]
      %v906 = vld [vmem:[#allocation3 + $0xc0] sm:$0xff]
      %v907 = vld [vmem:[#allocation3 + $0xc8] sm:$0xff]
      %v908 = vld [vmem:[#allocation3 + $0xd0] sm:$0xff]
      %v909 = vld [vmem:[#allocation3 + $0xd8] sm:$0xff]
      %v910 = vld [vmem:[#allocation3 + $0xe0] sm:$0xff]
      %v911 = vld [vmem:[#allocation3 + $0xe8] sm:$0xff]
      %v912 = vld [vmem:[#allocation3 + $0xf0] sm:$0xff]
      %v913 = vld [vmem:[#allocation3 + $0xf8] sm:$0xff]
      %v915 = vsel %vm322, %v865, 0
      %v918 = vsel %vm322, %v866, 0
      %v921 = vsel %vm322, %v867, 0
      %v924 = vsel %vm322, %v868, 0
      %v927 = vsel %vm322, %v869, 0
      %v930 = vsel %vm322, %v870, 0
      %v933 = vsel %vm322, %v871, 0
      %v936 = vsel %vm322, %v872, 0
      %v939 = vsel %vm322, %v873, 0
      %v942 = vsel %vm322, %v874, 0
      %v945 = vsel %vm322, %v875, 0
      %v948 = vsel %vm322, %v876, 0
      %v951 = vsel %vm322, %v877, 0
      %v954 = vsel %vm322, %v878, 0
      %v957 = vsel %vm322, %v879, 0
      %v960 = vsel %vm322, %v880, 0
      %v963 = vsel %vm604, %v881, 0
      %965 = vmatprep.subr.bf16.mxu0 0
      %966 = vmatpush1.bf16.msra.mxu0 %v963
      %967 = vmatprep.subr.bf16.mxu0 0
      %968 = vmatpush1.bf16.msra.mxu0 0
      %969 = vmatprep.subr.bf16.mxu0 0
      %970 = vmatpush1.bf16.msra.mxu0 0
      %971 = vmatprep.subr.bf16.mxu0 0
      %972 = vmatpush1.bf16.msra.mxu0 0
      %973 = vmatprep.subr.bf16.mxu0 0
      %974 = vmatpush1.bf16.msra.mxu0 0
      %975 = vmatprep.subr.bf16.mxu0 0
      %976 = vmatpush1.bf16.msra.mxu0 0
      %977 = vmatprep.subr.bf16.mxu0 0
      %978 = vmatpush1.bf16.msra.mxu0 0
      %979 = vmatprep.subr.bf16.mxu0 0
      %980 = vmatpush1.bf16.msra.mxu0 0
      %981 = vmatprep.subr.bf16.mxu0 0
      %982 = vmatpush1.bf16.msra.mxu0 0
      %983 = vmatprep.subr.bf16.mxu0 0
      %984 = vmatpush1.bf16.msra.mxu0 0
      %985 = vmatprep.subr.bf16.mxu0 0
      %986 = vmatpush1.bf16.msra.mxu0 0
      %987 = vmatprep.subr.bf16.mxu0 0
      %988 = vmatpush1.bf16.msra.mxu0 0
      %989 = vmatprep.subr.bf16.mxu0 0
      %990 = vmatpush1.bf16.msra.mxu0 0
      %991 = vmatprep.subr.bf16.mxu0 0
      %992 = vmatpush1.bf16.msra.mxu0 0
      %993 = vmatprep.subr.bf16.mxu0 0
      %994 = vmatpush1.bf16.msra.mxu0 0
      %995 = vmatprep.subr.bf16.mxu0 0
      %996 = vmatpush1.bf16.msra.mxu0 0
      %997 = vmatprep.mubr.bf16.mxu0 0
      %998 = vmatmul.mubr.bf16.gmra.mrb[0].mxu0 %v915
      %v999 = vpop.f32.mrb[0].mxu0
      %v1000 = vadd.f32 0.0, %v999
      %v1001 = vpop.f32.mrb[0].mxu0
      %v1002 = vpop.f32.mrb[0].mxu0
      %v1003 = vadd.f32 0.0, %v1002
      %v1004 = vpop.f32.mrb[0].mxu0
      %1005 = vmatprep.mubr.bf16.mxu0 0
      %1006 = vmatmul.mubr.bf16.gmra.mrb[0].mxu0 %v918
      %v1007 = vpop.f32.mrb[0].mxu0
      %v1008 = vadd.f32 0.0, %v1007
      %v1009 = vpop.f32.mrb[0].mxu0
      %v1010 = vpop.f32.mrb[0].mxu0
      %v1011 = vadd.f32 0.0, %v1010
      %v1012 = vpop.f32.mrb[0].mxu0
      %1013 = vmatprep.mubr.bf16.mxu0 0
      %1014 = vmatmul.mubr.bf16.gmra.mrb[0].mxu0 %v921
      %v1015 = vpop.f32.mrb[0].mxu0
      %v1016 = vadd.f32 0.0, %v1015
      %v1017 = vpop.f32.mrb[0].mxu0
      %v1018 = vpop.f32.mrb[0].mxu0
      %v1019 = vadd.f32 0.0, %v1018
      %v1020 = vpop.f32.mrb[0].mxu0
      %1021 = vmatprep.mubr.bf16.mxu0 0
      %1022 = vmatmul.mubr.bf16.gmra.mrb[0].mxu0 %v924
      %v1023 = vpop.f32.mrb[0].mxu0
      %v1024 = vadd.f32 0.0, %v1023
      %v1025 = vpop.f32.mrb[0].mxu0
      %v1026 = vpop.f32.mrb[0].mxu0
      %v1027 = vadd.f32 0.0, %v1026
      %v1028 = vpop.f32.mrb[0].mxu0
      %1029 = vmatprep.mubr.bf16.mxu0 0
      %1030 = vmatmul.mubr.bf16.gmra.mrb[0].mxu0 %v927
      %v1031 = vpop.f32.mrb[0].mxu0
      %v1032 = vadd.f32 0.0, %v1031
      %v1033 = vpop.f32.mrb[0].mxu0
      %v1034 = vpop.f32.mrb[0].mxu0
      %v1035 = vadd.f32 0.0, %v1034
      %v1036 = vpop.f32.mrb[0].mxu0
      %1037 = vmatprep.mubr.bf16.mxu0 0
      %1038 = vmatmul.mubr.bf16.gmra.mrb[0].mxu0 %v930
      %v1039 = vpop.f32.mrb[0].mxu0
      %v1040 = vadd.f32 0.0, %v1039
      %v1041 = vpop.f32.mrb[0].mxu0
      %v1042 = vpop.f32.mrb[0].mxu0
      %v1043 = vadd.f32 0.0, %v1042
      %v1044 = vpop.f32.mrb[0].mxu0
      %1045 = vmatprep.mubr.bf16.mxu0 0
      %1046 = vmatmul.mubr.bf16.gmra.mrb[0].mxu0 %v933
      %v1047 = vpop.f32.mrb[0].mxu0
      %v1048 = vadd.f32 0.0, %v1047
      %v1049 = vpop.f32.mrb[0].mxu0
      %v1050 = vpop.f32.mrb[0].mxu0
      %v1051 = vadd.f32 0.0, %v1050
      %v1052 = vpop.f32.mrb[0].mxu0
      %1053 = vmatprep.mubr.bf16.mxu0 0
      %1054 = vmatmul.mubr.bf16.gmra.mrb[0].mxu0 %v936
      %v1055 = vpop.f32.mrb[0].mxu0
      %v1056 = vadd.f32 0.0, %v1055
      %v1057 = vpop.f32.mrb[0].mxu0
      %v1058 = vpop.f32.mrb[0].mxu0
      %v1059 = vadd.f32 0.0, %v1058
      %v1060 = vpop.f32.mrb[0].mxu0
      %1061 = vmatprep.mubr.bf16.mxu0 0
      %1062 = vmatmul.mubr.bf16.gmra.mrb[0].mxu0 %v939
      %v1063 = vpop.f32.mrb[0].mxu0
      %v1064 = vadd.f32 0.0, %v1063
      %v1065 = vpop.f32.mrb[0].mxu0
      %v1066 = vpop.f32.mrb[0].mxu0
      %v1067 = vadd.f32 0.0, %v1066
      %v1068 = vpop.f32.mrb[0].mxu0
      %1069 = vmatprep.mubr.bf16.mxu0 0
      %1070 = vmatmul.mubr.bf16.gmra.mrb[0].mxu0 %v942
      %v1071 = vpop.f32.mrb[0].mxu0
      %v1072 = vadd.f32 0.0, %v1071
      %v1073 = vpop.f32.mrb[0].mxu0
      %v1074 = vpop.f32.mrb[0].mxu0
      %v1075 = vadd.f32 0.0, %v1074
      %v1076 = vpop.f32.mrb[0].mxu0
      %1077 = vmatprep.mubr.bf16.mxu0 0
      %1078 = vmatmul.mubr.bf16.gmra.mrb[0].mxu0 %v945
      %v1079 = vpop.f32.mrb[0].mxu0
      %v1080 = vadd.f32 0.0, %v1079
      %v1081 = vpop.f32.mrb[0].mxu0
      %v1082 = vpop.f32.mrb[0].mxu0
      %v1083 = vadd.f32 0.0, %v1082
      %v1084 = vpop.f32.mrb[0].mxu0
      %1085 = vmatprep.mubr.bf16.mxu0 0
      %1086 = vmatmul.mubr.bf16.gmra.mrb[0].mxu0 %v948
      %v1087 = vpop.f32.mrb[0].mxu0
      %v1088 = vadd.f32 0.0, %v1087
      %v1089 = vpop.f32.mrb[0].mxu0
      %v1090 = vpop.f32.mrb[0].mxu0
      %v1091 = vadd.f32 0.0, %v1090
      %v1092 = vpop.f32.mrb[0].mxu0
      %1093 = vmatprep.mubr.bf16.mxu0 0
      %1094 = vmatmul.mubr.bf16.gmra.mrb[0].mxu0 %v951
      %v1095 = vpop.f32.mrb[0].mxu0
      %v1096 = vadd.f32 0.0, %v1095
      %v1097 = vpop.f32.mrb[0].mxu0
      %v1098 = vpop.f32.mrb[0].mxu0
      %v1099 = vadd.f32 0.0, %v1098
      %v1100 = vpop.f32.mrb[0].mxu0
      %1101 = vmatprep.mubr.bf16.mxu0 0
      %1102 = vmatmul.mubr.bf16.gmra.mrb[0].mxu0 %v954
      %v1103 = vpop.f32.mrb[0].mxu0
      %v1104 = vadd.f32 0.0, %v1103
      %v1105 = vpop.f32.mrb[0].mxu0
      %v1106 = vpop.f32.mrb[0].mxu0
      %v1107 = vadd.f32 0.0, %v1106
      %v1108 = vpop.f32.mrb[0].mxu0
      %1109 = vmatprep.mubr.bf16.mxu0 0
      %1110 = vmatmul.mubr.bf16.gmra.mrb[0].mxu0 %v957
      %v1111 = vpop.f32.mrb[0].mxu0
      %v1112 = vadd.f32 0.0, %v1111
      %v1113 = vpop.f32.mrb[0].mxu0
      %v1114 = vpop.f32.mrb[0].mxu0
      %v1115 = vadd.f32 0.0, %v1114
      %v1116 = vpop.f32.mrb[0].mxu0
      %1117 = vmatprep.mubr.bf16.mxu0 0
      %1118 = vmatmul.mubr.bf16.gmra.mrb[0].mxu0 %v960
      %v1119 = vpop.f32.mrb[0].mxu0
      %v1120 = vadd.f32 0.0, %v1119
      %v1121 = vpop.f32.mrb[0].mxu0
      %v1122 = vpop.f32.mrb[0].mxu0
      %v1123 = vadd.f32 0.0, %v1122
      %v1124 = vpop.f32.mrb[0].mxu0
      %1125 = vdwg.mxu0
      %v1126 = vadd.f32 %v882, %v1000
      %v1127 = vadd.f32 %v883, %v1003
      %v1128 = vadd.f32 %v884, %v1008
      %v1129 = vadd.f32 %v885, %v1011
      %v1130 = vadd.f32 %v886, %v1016
      %v1131 = vadd.f32 %v887, %v1019
      %v1132 = vadd.f32 %v888, %v1024
      %v1133 = vadd.f32 %v889, %v1027
      %v1134 = vadd.f32 %v890, %v1032
      %v1135 = vadd.f32 %v891, %v1035
      %v1136 = vadd.f32 %v892, %v1040
      %v1137 = vadd.f32 %v893, %v1043
      %v1138 = vadd.f32 %v894, %v1048
      %v1139 = vadd.f32 %v895, %v1051
      %v1140 = vadd.f32 %v896, %v1056
      %v1141 = vadd.f32 %v897, %v1059
      %v1142 = vadd.f32 %v898, %v1064
      %v1143 = vadd.f32 %v899, %v1067
      %v1144 = vadd.f32 %v900, %v1072
      %v1145 = vadd.f32 %v901, %v1075
      %v1146 = vadd.f32 %v902, %v1080
      %v1147 = vadd.f32 %v903, %v1083
      %v1148 = vadd.f32 %v904, %v1088
      %v1149 = vadd.f32 %v905, %v1091
      %v1150 = vadd.f32 %v906, %v1096
      %v1151 = vadd.f32 %v907, %v1099
      %v1152 = vadd.f32 %v908, %v1104
      %v1153 = vadd.f32 %v909, %v1107
      %v1154 = vadd.f32 %v910, %v1112
      %v1155 = vadd.f32 %v911, %v1115
      %v1156 = vadd.f32 %v912, %v1120
      %v1157 = vadd.f32 %v913, %v1123
      %1158 = vst.msk [vmem:[#allocation3] sm:$0xff] %vm322, %v1126
      %1159 = vst.msk [vmem:[#allocation3 + $0x8] sm:$0xff] %vm322, %v1127
      %1160 = vst.msk [vmem:[#allocation3 + $0x10] sm:$0xff] %vm322, %v1128
      %1161 = vst.msk [vmem:[#allocation3 + $0x18] sm:$0xff] %vm322, %v1129
      %1162 = vst.msk [vmem:[#allocation3 + $0x20] sm:$0xff] %vm322, %v1130
      %1163 = vst.msk [vmem:[#allocation3 + $0x28] sm:$0xff] %vm322, %v1131
      %1164 = vst.msk [vmem:[#allocation3 + $0x30] sm:$0xff] %vm322, %v1132
      %1165 = vst.msk [vmem:[#allocation3 + $0x38] sm:$0xff] %vm322, %v1133
      %1166 = vst.msk [vmem:[#allocation3 + $0x40] sm:$0xff] %vm322, %v1134
      %1167 = vst.msk [vmem:[#allocation3 + $0x48] sm:$0xff] %vm322, %v1135
      %1168 = vst.msk [vmem:[#allocation3 + $0x50] sm:$0xff] %vm322, %v1136
      %1169 = vst.msk [vmem:[#allocation3 + $0x58] sm:$0xff] %vm322, %v1137
      %1170 = vst.msk [vmem:[#allocation3 + $0x60] sm:$0xff] %vm322, %v1138
      %1171 = vst.msk [vmem:[#allocation3 + $0x68] sm:$0xff] %vm322, %v1139
      %1172 = vst.msk [vmem:[#allocation3 + $0x70] sm:$0xff] %vm322, %v1140
      %1173 = vst.msk [vmem:[#allocation3 + $0x78] sm:$0xff] %vm322, %v1141
      %1174 = vst.msk [vmem:[#allocation3 + $0x80] sm:$0xff] %vm322, %v1142
      %1175 = vst.msk [vmem:[#allocation3 + $0x88] sm:$0xff] %vm322, %v1143
      %1176 = vst.msk [vmem:[#allocation3 + $0x90] sm:$0xff] %vm322, %v1144
      %1177 = vst.msk [vmem:[#allocation3 + $0x98] sm:$0xff] %vm322, %v1145
      %1178 = vst.msk [vmem:[#allocation3 + $0xa0] sm:$0xff] %vm322, %v1146
      %1179 = vst.msk [vmem:[#allocation3 + $0xa8] sm:$0xff] %vm322, %v1147
      %1180 = vst.msk [vmem:[#allocation3 + $0xb0] sm:$0xff] %vm322, %v1148
      %1181 = vst.msk [vmem:[#allocation3 + $0xb8] sm:$0xff] %vm322, %v1149
      %1182 = vst.msk [vmem:[#allocation3 + $0xc0] sm:$0xff] %vm322, %v1150
      %1183 = vst.msk [vmem:[#allocation3 + $0xc8] sm:$0xff] %vm322, %v1151
      %1184 = vst.msk [vmem:[#allocation3 + $0xd0] sm:$0xff] %vm322, %v1152
      %1185 = vst.msk [vmem:[#allocation3 + $0xd8] sm:$0xff] %vm322, %v1153
      %1186 = vst.msk [vmem:[#allocation3 + $0xe0] sm:$0xff] %vm322, %v1154
      %1187 = vst.msk [vmem:[#allocation3 + $0xe8] sm:$0xff] %vm322, %v1155
      %1188 = vst.msk [vmem:[#allocation3 + $0xf0] sm:$0xff] %vm322, %v1156
      %1189 = vst.msk [vmem:[#allocation3 + $0xf8] sm:$0xff] %vm322, %v1157
      %v1190 = vld [vmem:[#allocation2 + $0x2] sm:$0xff]
      %v1191 = vld [vmem:[#allocation2 + $0xa] sm:$0xff]
      %v1192 = vld [vmem:[#allocation2 + $0x1a] sm:$0xff]
      %v1193 = vld [vmem:[#allocation2 + $0x22] sm:$0xff]
      %v1194 = vld [vmem:[#allocation2 + $0x32] sm:$0xff]
      %v1195 = vld [vmem:[#allocation2 + $0x3a] sm:$0xff]
      %v1196 = vld [vmem:[#allocation2 + $0x4a] sm:$0xff]
      %v1197 = vld [vmem:[#allocation2 + $0x52] sm:$0xff]
      %v1198 = vld [vmem:[#allocation2 + $0x62] sm:$0xff]
      %v1199 = vld [vmem:[#allocation2 + $0x6a] sm:$0xff]
      %v1200 = vld [vmem:[#allocation2 + $0x7a] sm:$0xff]
      %v1201 = vld [vmem:[#allocation2 + $0x82] sm:$0xff]
      %v1202 = vld [vmem:[#allocation2 + $0x92] sm:$0xff]
      %v1203 = vld [vmem:[#allocation2 + $0x9a] sm:$0xff]
      %v1204 = vld [vmem:[#allocation2 + $0xaa] sm:$0xff]
      %v1205 = vld [vmem:[#allocation2 + $0xb2] sm:$0xff]
      %v1206 = vld [vmem:[#allocation2 + $0xc2] sm:$0xff]
      %v1207 = vld [vmem:[#allocation2 + $0xca] sm:$0xff]
      %v1208 = vld [vmem:[#allocation2 + $0xda] sm:$0xff]
      %v1209 = vld [vmem:[#allocation2 + $0xe2] sm:$0xff]
      %v1210 = vld [vmem:[#allocation2 + $0xf2] sm:$0xff]
      %v1211 = vld [vmem:[#allocation2 + $0xfa] sm:$0xff]
      %v1212 = vld [vmem:[#allocation2 + $0x10a] sm:$0xff]
      %v1213 = vld [vmem:[#allocation2 + $0x112] sm:$0xff]
      %v1214 = vld [vmem:[#allocation2 + $0x122] sm:$0xff]
      %v1215 = vld [vmem:[#allocation2 + $0x12a] sm:$0xff]
      %v1216 = vld [vmem:[#allocation2 + $0x13a] sm:$0xff]
      %v1217 = vld [vmem:[#allocation2 + $0x142] sm:$0xff]
      %v1218 = vld [vmem:[#allocation2 + $0x152] sm:$0xff]
      %v1219 = vld [vmem:[#allocation2 + $0x15a] sm:$0xff]
      %v1220 = vld [vmem:[#allocation2 + $0x16a] sm:$0xff]
      %v1221 = vld [vmem:[#allocation2 + $0x172] sm:$0xff]
      %v1222 = vpack.c.bf16 %v1191, %v1190
      %v1223 = vpack.c.bf16 %v1193, %v1192
      %v1224 = vpack.c.bf16 %v1195, %v1194
      %v1225 = vpack.c.bf16 %v1197, %v1196
      %v1226 = vpack.c.bf16 %v1199, %v1198
      %v1227 = vpack.c.bf16 %v1201, %v1200
      %v1228 = vpack.c.bf16 %v1203, %v1202
      %v1229 = vpack.c.bf16 %v1205, %v1204
      %v1230 = vpack.c.bf16 %v1207, %v1206
      %v1231 = vpack.c.bf16 %v1209, %v1208
      %v1232 = vpack.c.bf16 %v1211, %v1210
      %v1233 = vpack.c.bf16 %v1213, %v1212
      %v1234 = vpack.c.bf16 %v1215, %v1214
      %v1235 = vpack.c.bf16 %v1217, %v1216
      %v1236 = vpack.c.bf16 %v1219, %v1218
      %v1237 = vpack.c.bf16 %v1221, %v1220
      %v1238 = vld [vmem:[%s298 + $0x8] sm:$0xf]
      %v1239 = vld [vmem:[#allocation3] sm:$0xff]
      %v1240 = vld [vmem:[#allocation3 + $0x8] sm:$0xff]
      %v1241 = vld [vmem:[#allocation3 + $0x10] sm:$0xff]
      %v1242 = vld [vmem:[#allocation3 + $0x18] sm:$0xff]
      %v1243 = vld [vmem:[#allocation3 + $0x20] sm:$0xff]
      %v1244 = vld [vmem:[#allocation3 + $0x28] sm:$0xff]
      %v1245 = vld [vmem:[#allocation3 + $0x30] sm:$0xff]
      %v1246 = vld [vmem:[#allocation3 + $0x38] sm:$0xff]
      %v1247 = vld [vmem:[#allocation3 + $0x40] sm:$0xff]
      %v1248 = vld [vmem:[#allocation3 + $0x48] sm:$0xff]
      %v1249 = vld [vmem:[#allocation3 + $0x50] sm:$0xff]
      %v1250 = vld [vmem:[#allocation3 + $0x58] sm:$0xff]
      %v1251 = vld [vmem:[#allocation3 + $0x60] sm:$0xff]
      %v1252 = vld [vmem:[#allocation3 + $0x68] sm:$0xff]
      %v1253 = vld [vmem:[#allocation3 + $0x70] sm:$0xff]
      %v1254 = vld [vmem:[#allocation3 + $0x78] sm:$0xff]
      %v1255 = vld [vmem:[#allocation3 + $0x80] sm:$0xff]
      %v1256 = vld [vmem:[#allocation3 + $0x88] sm:$0xff]
      %v1257 = vld [vmem:[#allocation3 + $0x90] sm:$0xff]
      %v1258 = vld [vmem:[#allocation3 + $0x98] sm:$0xff]
      %v1259 = vld [vmem:[#allocation3 + $0xa0] sm:$0xff]
      %v1260 = vld [vmem:[#allocation3 + $0xa8] sm:$0xff]
      %v1261 = vld [vmem:[#allocation3 + $0xb0] sm:$0xff]
      %v1262 = vld [vmem:[#allocation3 + $0xb8] sm:$0xff]
      %v1263 = vld [vmem:[#allocation3 + $0xc0] sm:$0xff]
      %v1264 = vld [vmem:[#allocation3 + $0xc8] sm:$0xff]
      %v1265 = vld [vmem:[#allocation3 + $0xd0] sm:$0xff]
      %v1266 = vld [vmem:[#allocation3 + $0xd8] sm:$0xff]
      %v1267 = vld [vmem:[#allocation3 + $0xe0] sm:$0xff]
      %v1268 = vld [vmem:[#allocation3 + $0xe8] sm:$0xff]
      %v1269 = vld [vmem:[#allocation3 + $0xf0] sm:$0xff]
      %v1270 = vld [vmem:[#allocation3 + $0xf8] sm:$0xff]
      %v1272 = vsel %vm322, %v1222, 0
      %v1275 = vsel %vm322, %v1223, 0
      %v1278 = vsel %vm322, %v1224, 0
      %v1281 = vsel %vm322, %v1225, 0
      %v1284 = vsel %vm322, %v1226, 0
      %v1287 = vsel %vm322, %v1227, 0
      %v1290 = vsel %vm322, %v1228, 0
      %v1293 = vsel %vm322, %v1229, 0
      %v1296 = vsel %vm322, %v1230, 0
      %v1299 = vsel %vm322, %v1231, 0
      %v1302 = vsel %vm322, %v1232, 0
      %v1305 = vsel %vm322, %v1233, 0
      %v1308 = vsel %vm322, %v1234, 0
      %v1311 = vsel %vm322, %v1235, 0
      %v1314 = vsel %vm322, %v1236, 0
      %v1317 = vsel %vm322, %v1237, 0
      %v1320 = vsel %vm604, %v1238, 0
      %1322 = vmatprep.subr.bf16.mxu0 0
      %1323 = vmatpush1.bf16.msra.mxu0 %v1320
      %1324 = vmatprep.subr.bf16.mxu0 0
      %1325 = vmatpush1.bf16.msra.mxu0 0
      %1326 = vmatprep.subr.bf16.mxu0 0
      %1327 = vmatpush1.bf16.msra.mxu0 0
      %1328 = vmatprep.subr.bf16.mxu0 0
      %1329 = vmatpush1.bf16.msra.mxu0 0
      %1330 = vmatprep.subr.bf16.mxu0 0
      %1331 = vmatpush1.bf16.msra.mxu0 0
      %1332 = vmatprep.subr.bf16.mxu0 0
      %1333 = vmatpush1.bf16.msra.mxu0 0
      %1334 = vmatprep.subr.bf16.mxu0 0
      %1335 = vmatpush1.bf16.msra.mxu0 0
      %1336 = vmatprep.subr.bf16.mxu0 0
      %1337 = vmatpush1.bf16.msra.mxu0 0
      %1338 = vmatprep.subr.bf16.mxu0 0
      %1339 = vmatpush1.bf16.msra.mxu0 0
      %1340 = vmatprep.subr.bf16.mxu0 0
      %1341 = vmatpush1.bf16.msra.mxu0 0
      %1342 = vmatprep.subr.bf16.mxu0 0
      %1343 = vmatpush1.bf16.msra.mxu0 0
      %1344 = vmatprep.subr.bf16.mxu0 0
      %1345 = vmatpush1.bf16.msra.mxu0 0
      %1346 = vmatprep.subr.bf16.mxu0 0
      %1347 = vmatpush1.bf16.msra.mxu0 0
      %1348 = vmatprep.subr.bf16.mxu0 0
      %1349 = vmatpush1.bf16.msra.mxu0 0
      %1350 = vmatprep.subr.bf16.mxu0 0
      %1351 = vmatpush1.bf16.msra.mxu0 0
      %1352 = vmatprep.subr.bf16.mxu0 0
      %1353 = vmatpush1.bf16.msra.mxu0 0
      %1354 = vmatprep.mubr.bf16.mxu0 0
      %1355 = vmatmul.mubr.bf16.gmra.mrb[0].mxu0 %v1272
      %v1356 = vpop.f32.mrb[0].mxu0
      %v1357 = vadd.f32 0.0, %v1356
      %v1358 = vpop.f32.mrb[0].mxu0
      %v1359 = vpop.f32.mrb[0].mxu0
      %v1360 = vadd.f32 0.0, %v1359
      %v1361 = vpop.f32.mrb[0].mxu0
      %1362 = vmatprep.mubr.bf16.mxu0 0
      %1363 = vmatmul.mubr.bf16.gmra.mrb[0].mxu0 %v1275
      %v1364 = vpop.f32.mrb[0].mxu0
      %v1365 = vadd.f32 0.0, %v1364
      %v1366 = vpop.f32.mrb[0].mxu0
      %v1367 = vpop.f32.mrb[0].mxu0
      %v1368 = vadd.f32 0.0, %v1367
      %v1369 = vpop.f32.mrb[0].mxu0
      %1370 = vmatprep.mubr.bf16.mxu0 0
      %1371 = vmatmul.mubr.bf16.gmra.mrb[0].mxu0 %v1278
      %v1372 = vpop.f32.mrb[0].mxu0
      %v1373 = vadd.f32 0.0, %v1372
      %v1374 = vpop.f32.mrb[0].mxu0
      %v1375 = vpop.f32.mrb[0].mxu0
      %v1376 = vadd.f32 0.0, %v1375
      %v1377 = vpop.f32.mrb[0].mxu0
      %1378 = vmatprep.mubr.bf16.mxu0 0
      %1379 = vmatmul.mubr.bf16.gmra.mrb[0].mxu0 %v1281
      %v1380 = vpop.f32.mrb[0].mxu0
      %v1381 = vadd.f32 0.0, %v1380
      %v1382 = vpop.f32.mrb[0].mxu0
      %v1383 = vpop.f32.mrb[0].mxu0
      %v1384 = vadd.f32 0.0, %v1383
      %v1385 = vpop.f32.mrb[0].mxu0
      %1386 = vmatprep.mubr.bf16.mxu0 0
      %1387 = vmatmul.mubr.bf16.gmra.mrb[0].mxu0 %v1284
      %v1388 = vpop.f32.mrb[0].mxu0
      %v1389 = vadd.f32 0.0, %v1388
      %v1390 = vpop.f32.mrb[0].mxu0
      %v1391 = vpop.f32.mrb[0].mxu0
      %v1392 = vadd.f32 0.0, %v1391
      %v1393 = vpop.f32.mrb[0].mxu0
      %1394 = vmatprep.mubr.bf16.mxu0 0
      %1395 = vmatmul.mubr.bf16.gmra.mrb[0].mxu0 %v1287
      %v1396 = vpop.f32.mrb[0].mxu0
      %v1397 = vadd.f32 0.0, %v1396
      %v1398 = vpop.f32.mrb[0].mxu0
      %v1399 = vpop.f32.mrb[0].mxu0
      %v1400 = vadd.f32 0.0, %v1399
      %v1401 = vpop.f32.mrb[0].mxu0
      %1402 = vmatprep.mubr.bf16.mxu0 0
      %1403 = vmatmul.mubr.bf16.gmra.mrb[0].mxu0 %v1290
      %v1404 = vpop.f32.mrb[0].mxu0
      %v1405 = vadd.f32 0.0, %v1404
      %v1406 = vpop.f32.mrb[0].mxu0
      %v1407 = vpop.f32.mrb[0].mxu0
      %v1408 = vadd.f32 0.0, %v1407
      %v1409 = vpop.f32.mrb[0].mxu0
      %1410 = vmatprep.mubr.bf16.mxu0 0
      %1411 = vmatmul.mubr.bf16.gmra.mrb[0].mxu0 %v1293
      %v1412 = vpop.f32.mrb[0].mxu0
      %v1413 = vadd.f32 0.0, %v1412
      %v1414 = vpop.f32.mrb[0].mxu0
      %v1415 = vpop.f32.mrb[0].mxu0
      %v1416 = vadd.f32 0.0, %v1415
      %v1417 = vpop.f32.mrb[0].mxu0
      %1418 = vmatprep.mubr.bf16.mxu0 0
      %1419 = vmatmul.mubr.bf16.gmra.mrb[0].mxu0 %v1296
      %v1420 = vpop.f32.mrb[0].mxu0
      %v1421 = vadd.f32 0.0, %v1420
      %v1422 = vpop.f32.mrb[0].mxu0
      %v1423 = vpop.f32.mrb[0].mxu0
      %v1424 = vadd.f32 0.0, %v1423
      %v1425 = vpop.f32.mrb[0].mxu0
      %1426 = vmatprep.mubr.bf16.mxu0 0
      %1427 = vmatmul.mubr.bf16.gmra.mrb[0].mxu0 %v1299
      %v1428 = vpop.f32.mrb[0].mxu0
      %v1429 = vadd.f32 0.0, %v1428
      %v1430 = vpop.f32.mrb[0].mxu0
      %v1431 = vpop.f32.mrb[0].mxu0
      %v1432 = vadd.f32 0.0, %v1431
      %v1433 = vpop.f32.mrb[0].mxu0
      %1434 = vmatprep.mubr.bf16.mxu0 0
      %1435 = vmatmul.mubr.bf16.gmra.mrb[0].mxu0 %v1302
      %v1436 = vpop.f32.mrb[0].mxu0
      %v1437 = vadd.f32 0.0, %v1436
      %v1438 = vpop.f32.mrb[0].mxu0
      %v1439 = vpop.f32.mrb[0].mxu0
      %v1440 = vadd.f32 0.0, %v1439
      %v1441 = vpop.f32.mrb[0].mxu0
      %1442 = vmatprep.mubr.bf16.mxu0 0
      %1443 = vmatmul.mubr.bf16.gmra.mrb[0].mxu0 %v1305
      %v1444 = vpop.f32.mrb[0].mxu0
      %v1445 = vadd.f32 0.0, %v1444
      %v1446 = vpop.f32.mrb[0].mxu0
      %v1447 = vpop.f32.mrb[0].mxu0
      %v1448 = vadd.f32 0.0, %v1447
      %v1449 = vpop.f32.mrb[0].mxu0
      %1450 = vmatprep.mubr.bf16.mxu0 0
      %1451 = vmatmul.mubr.bf16.gmra.mrb[0].mxu0 %v1308
      %v1452 = vpop.f32.mrb[0].mxu0
      %v1453 = vadd.f32 0.0, %v1452
      %v1454 = vpop.f32.mrb[0].mxu0
      %v1455 = vpop.f32.mrb[0].mxu0
      %v1456 = vadd.f32 0.0, %v1455
      %v1457 = vpop.f32.mrb[0].mxu0
      %1458 = vmatprep.mubr.bf16.mxu0 0
      %1459 = vmatmul.mubr.bf16.gmra.mrb[0].mxu0 %v1311
      %v1460 = vpop.f32.mrb[0].mxu0
      %v1461 = vadd.f32 0.0, %v1460
      %v1462 = vpop.f32.mrb[0].mxu0
      %v1463 = vpop.f32.mrb[0].mxu0
      %v1464 = vadd.f32 0.0, %v1463
      %v1465 = vpop.f32.mrb[0].mxu0
      %1466 = vmatprep.mubr.bf16.mxu0 0
      %1467 = vmatmul.mubr.bf16.gmra.mrb[0].mxu0 %v1314
      %v1468 = vpop.f32.mrb[0].mxu0
      %v1469 = vadd.f32 0.0, %v1468
      %v1470 = vpop.f32.mrb[0].mxu0
      %v1471 = vpop.f32.mrb[0].mxu0
      %v1472 = vadd.f32 0.0, %v1471
      %v1473 = vpop.f32.mrb[0].mxu0
      %1474 = vmatprep.mubr.bf16.mxu0 0
      %1475 = vmatmul.mubr.bf16.gmra.mrb[0].mxu0 %v1317
      %v1476 = vpop.f32.mrb[0].mxu0
      %v1477 = vadd.f32 0.0, %v1476
      %v1478 = vpop.f32.mrb[0].mxu0
      %v1479 = vpop.f32.mrb[0].mxu0
      %v1480 = vadd.f32 0.0, %v1479
      %v1481 = vpop.f32.mrb[0].mxu0
      %1482 = vdwg.mxu0
      %v1483 = vadd.f32 %v1239, %v1357
      %v1484 = vadd.f32 %v1240, %v1360
      %v1485 = vadd.f32 %v1241, %v1365
      %v1486 = vadd.f32 %v1242, %v1368
      %v1487 = vadd.f32 %v1243, %v1373
      %v1488 = vadd.f32 %v1244, %v1376
      %v1489 = vadd.f32 %v1245, %v1381
      %v1490 = vadd.f32 %v1246, %v1384
      %v1491 = vadd.f32 %v1247, %v1389
      %v1492 = vadd.f32 %v1248, %v1392
      %v1493 = vadd.f32 %v1249, %v1397
      %v1494 = vadd.f32 %v1250, %v1400
      %v1495 = vadd.f32 %v1251, %v1405
      %v1496 = vadd.f32 %v1252, %v1408
      %v1497 = vadd.f32 %v1253, %v1413
      %v1498 = vadd.f32 %v1254, %v1416
      %v1499 = vadd.f32 %v1255, %v1421
      %v1500 = vadd.f32 %v1256, %v1424
      %v1501 = vadd.f32 %v1257, %v1429
      %v1502 = vadd.f32 %v1258, %v1432
      %v1503 = vadd.f32 %v1259, %v1437
      %v1504 = vadd.f32 %v1260, %v1440
      %v1505 = vadd.f32 %v1261, %v1445
      %v1506 = vadd.f32 %v1262, %v1448
      %v1507 = vadd.f32 %v1263, %v1453
      %v1508 = vadd.f32 %v1264, %v1456
      %v1509 = vadd.f32 %v1265, %v1461
      %v1510 = vadd.f32 %v1266, %v1464
      %v1511 = vadd.f32 %v1267, %v1469
      %v1512 = vadd.f32 %v1268, %v1472
      %v1513 = vadd.f32 %v1269, %v1477
      %v1514 = vadd.f32 %v1270, %v1480
      %1515 = vst.msk [vmem:[#allocation3] sm:$0xff] %vm322, %v1483
      %1516 = vst.msk [vmem:[#allocation3 + $0x8] sm:$0xff] %vm322, %v1484
      %1517 = vst.msk [vmem:[#allocation3 + $0x10] sm:$0xff] %vm322, %v1485
      %1518 = vst.msk [vmem:[#allocation3 + $0x18] sm:$0xff] %vm322, %v1486
      %1519 = vst.msk [vmem:[#allocation3 + $0x20] sm:$0xff] %vm322, %v1487
      %1520 = vst.msk [vmem:[#allocation3 + $0x28] sm:$0xff] %vm322, %v1488
      %1521 = vst.msk [vmem:[#allocation3 + $0x30] sm:$0xff] %vm322, %v1489
      %1522 = vst.msk [vmem:[#allocation3 + $0x38] sm:$0xff] %vm322, %v1490
      %1523 = vst.msk [vmem:[#allocation3 + $0x40] sm:$0xff] %vm322, %v1491
      %1524 = vst.msk [vmem:[#allocation3 + $0x48] sm:$0xff] %vm322, %v1492
      %1525 = vst.msk [vmem:[#allocation3 + $0x50] sm:$0xff] %vm322, %v1493
      %1526 = vst.msk [vmem:[#allocation3 + $0x58] sm:$0xff] %vm322, %v1494
      %1527 = vst.msk [vmem:[#allocation3 + $0x60] sm:$0xff] %vm322, %v1495
      %1528 = vst.msk [vmem:[#allocation3 + $0x68] sm:$0xff] %vm322, %v1496
      %1529 = vst.msk [vmem:[#allocation3 + $0x70] sm:$0xff] %vm322, %v1497
      %1530 = vst.msk [vmem:[#allocation3 + $0x78] sm:$0xff] %vm322, %v1498
      %1531 = vst.msk [vmem:[#allocation3 + $0x80] sm:$0xff] %vm322, %v1499
      %1532 = vst.msk [vmem:[#allocation3 + $0x88] sm:$0xff] %vm322, %v1500
      %1533 = vst.msk [vmem:[#allocation3 + $0x90] sm:$0xff] %vm322, %v1501
      %1534 = vst.msk [vmem:[#allocation3 + $0x98] sm:$0xff] %vm322, %v1502
      %1535 = vst.msk [vmem:[#allocation3 + $0xa0] sm:$0xff] %vm322, %v1503
      %1536 = vst.msk [vmem:[#allocation3 + $0xa8] sm:$0xff] %vm322, %v1504
      %1537 = vst.msk [vmem:[#allocation3 + $0xb0] sm:$0xff] %vm322, %v1505
      %1538 = vst.msk [vmem:[#allocation3 + $0xb8] sm:$0xff] %vm322, %v1506
      %1539 = vst.msk [vmem:[#allocation3 + $0xc0] sm:$0xff] %vm322, %v1507
      %1540 = vst.msk [vmem:[#allocation3 + $0xc8] sm:$0xff] %vm322, %v1508
      %1541 = vst.msk [vmem:[#allocation3 + $0xd0] sm:$0xff] %vm322, %v1509
      %1542 = vst.msk [vmem:[#allocation3 + $0xd8] sm:$0xff] %vm322, %v1510
      %1543 = vst.msk [vmem:[#allocation3 + $0xe0] sm:$0xff] %vm322, %v1511
      %1544 = vst.msk [vmem:[#allocation3 + $0xe8] sm:$0xff] %vm322, %v1512
      %1545 = vst.msk [vmem:[#allocation3 + $0xf0] sm:$0xff] %vm322, %v1513
      %1546 = vst.msk [vmem:[#allocation3 + $0xf8] sm:$0xff] %vm322, %v1514
      %v1547 = vld [vmem:[%s410] sm:$0xff]
      %v1548 = vld [vmem:[%s410 + $0x8] sm:$0xff]
      %v1549 = vld [vmem:[%s410 + $0x18] sm:$0xff]
      %v1550 = vld [vmem:[%s410 + $0x20] sm:$0xff]
      %v1551 = vld [vmem:[%s410 + $0x30] sm:$0xff]
      %v1552 = vld [vmem:[%s410 + $0x38] sm:$0xff]
      %v1553 = vld [vmem:[%s410 + $0x48] sm:$0xff]
      %v1554 = vld [vmem:[%s410 + $0x50] sm:$0xff]
      %v1555 = vld [vmem:[%s410 + $0x60] sm:$0xff]
      %v1556 = vld [vmem:[%s410 + $0x68] sm:$0xff]
      %v1557 = vld [vmem:[%s410 + $0x78] sm:$0xff]
      %v1558 = vld [vmem:[%s410 + $0x80] sm:$0xff]
      %v1559 = vld [vmem:[%s410 + $0x90] sm:$0xff]
      %v1560 = vld [vmem:[%s410 + $0x98] sm:$0xff]
      %v1561 = vld [vmem:[%s410 + $0xa8] sm:$0xff]
      %v1562 = vld [vmem:[%s410 + $0xb0] sm:$0xff]
      %v1563 = vld [vmem:[%s410 + $0xc0] sm:$0xff]
      %v1564 = vld [vmem:[%s410 + $0xc8] sm:$0xff]
      %v1565 = vld [vmem:[%s410 + $0xd8] sm:$0xff]
      %v1566 = vld [vmem:[%s410 + $0xe0] sm:$0xff]
      %v1567 = vld [vmem:[%s410 + $0xf0] sm:$0xff]
      %v1568 = vld [vmem:[%s410 + $0xf8] sm:$0xff]
      %v1569 = vld [vmem:[%s410 + $0x108] sm:$0xff]
      %v1570 = vld [vmem:[%s410 + $0x110] sm:$0xff]
      %v1571 = vld [vmem:[%s410 + $0x120] sm:$0xff]
      %v1572 = vld [vmem:[%s410 + $0x128] sm:$0xff]
      %v1573 = vld [vmem:[%s410 + $0x138] sm:$0xff]
      %v1574 = vld [vmem:[%s410 + $0x140] sm:$0xff]
      %v1575 = vld [vmem:[%s410 + $0x150] sm:$0xff]
      %v1576 = vld [vmem:[%s410 + $0x158] sm:$0xff]
      %v1577 = vld [vmem:[%s410 + $0x168] sm:$0xff]
      %v1578 = vld [vmem:[%s410 + $0x170] sm:$0xff]
      %v1579 = vpack.c.bf16 %v1548, %v1547
      %v1580 = vpack.c.bf16 %v1550, %v1549
      %v1581 = vpack.c.bf16 %v1552, %v1551
      %v1582 = vpack.c.bf16 %v1554, %v1553
      %v1583 = vpack.c.bf16 %v1556, %v1555
      %v1584 = vpack.c.bf16 %v1558, %v1557
      %v1585 = vpack.c.bf16 %v1560, %v1559
      %v1586 = vpack.c.bf16 %v1562, %v1561
      %v1587 = vpack.c.bf16 %v1564, %v1563
      %v1588 = vpack.c.bf16 %v1566, %v1565
      %v1589 = vpack.c.bf16 %v1568, %v1567
      %v1590 = vpack.c.bf16 %v1570, %v1569
      %v1591 = vpack.c.bf16 %v1572, %v1571
      %v1592 = vpack.c.bf16 %v1574, %v1573
      %v1593 = vpack.c.bf16 %v1576, %v1575
      %v1594 = vpack.c.bf16 %v1578, %v1577
      %v1595 = vld [vmem:[%s298 + $0xc] sm:$0xf]
      %v1596 = vld [vmem:[#allocation3] sm:$0xff]
      %v1597 = vld [vmem:[#allocation3 + $0x8] sm:$0xff]
      %v1598 = vld [vmem:[#allocation3 + $0x10] sm:$0xff]
      %v1599 = vld [vmem:[#allocation3 + $0x18] sm:$0xff]
      %v1600 = vld [vmem:[#allocation3 + $0x20] sm:$0xff]
      %v1601 = vld [vmem:[#allocation3 + $0x28] sm:$0xff]
      %v1602 = vld [vmem:[#allocation3 + $0x30] sm:$0xff]
      %v1603 = vld [vmem:[#allocation3 + $0x38] sm:$0xff]
      %v1604 = vld [vmem:[#allocation3 + $0x40] sm:$0xff]
      %v1605 = vld [vmem:[#allocation3 + $0x48] sm:$0xff]
      %v1606 = vld [vmem:[#allocation3 + $0x50] sm:$0xff]
      %v1607 = vld [vmem:[#allocation3 + $0x58] sm:$0xff]
      %v1608 = vld [vmem:[#allocation3 + $0x60] sm:$0xff]
      %v1609 = vld [vmem:[#allocation3 + $0x68] sm:$0xff]
      %v1610 = vld [vmem:[#allocation3 + $0x70] sm:$0xff]
      %v1611 = vld [vmem:[#allocation3 + $0x78] sm:$0xff]
      %v1612 = vld [vmem:[#allocation3 + $0x80] sm:$0xff]
      %v1613 = vld [vmem:[#allocation3 + $0x88] sm:$0xff]
      %v1614 = vld [vmem:[#allocation3 + $0x90] sm:$0xff]
      %v1615 = vld [vmem:[#allocation3 + $0x98] sm:$0xff]
      %v1616 = vld [vmem:[#allocation3 + $0xa0] sm:$0xff]
      %v1617 = vld [vmem:[#allocation3 + $0xa8] sm:$0xff]
      %v1618 = vld [vmem:[#allocation3 + $0xb0] sm:$0xff]
      %v1619 = vld [vmem:[#allocation3 + $0xb8] sm:$0xff]
      %v1620 = vld [vmem:[#allocation3 + $0xc0] sm:$0xff]
      %v1621 = vld [vmem:[#allocation3 + $0xc8] sm:$0xff]
      %v1622 = vld [vmem:[#allocation3 + $0xd0] sm:$0xff]
      %v1623 = vld [vmem:[#allocation3 + $0xd8] sm:$0xff]
      %v1624 = vld [vmem:[#allocation3 + $0xe0] sm:$0xff]
      %v1625 = vld [vmem:[#allocation3 + $0xe8] sm:$0xff]
      %v1626 = vld [vmem:[#allocation3 + $0xf0] sm:$0xff]
      %v1627 = vld [vmem:[#allocation3 + $0xf8] sm:$0xff]
      %v1629 = vsel %vm322, %v1579, 0
      %v1632 = vsel %vm322, %v1580, 0
      %v1635 = vsel %vm322, %v1581, 0
      %v1638 = vsel %vm322, %v1582, 0
      %v1641 = vsel %vm322, %v1583, 0
      %v1644 = vsel %vm322, %v1584, 0
      %v1647 = vsel %vm322, %v1585, 0
      %v1650 = vsel %vm322, %v1586, 0
      %v1653 = vsel %vm322, %v1587, 0
      %v1656 = vsel %vm322, %v1588, 0
      %v1659 = vsel %vm322, %v1589, 0
      %v1662 = vsel %vm322, %v1590, 0
      %v1665 = vsel %vm322, %v1591, 0
      %v1668 = vsel %vm322, %v1592, 0
      %v1671 = vsel %vm322, %v1593, 0
      %v1674 = vsel %vm322, %v1594, 0
      %v1677 = vsel %vm604, %v1595, 0
      %1679 = vmatprep.subr.bf16.mxu0 0
      %1680 = vmatpush1.bf16.msra.mxu0 %v1677
      %1681 = vmatprep.subr.bf16.mxu0 0
      %1682 = vmatpush1.bf16.msra.mxu0 0
      %1683 = vmatprep.subr.bf16.mxu0 0
      %1684 = vmatpush1.bf16.msra.mxu0 0
      %1685 = vmatprep.subr.bf16.mxu0 0
      %1686 = vmatpush1.bf16.msra.mxu0 0
      %1687 = vmatprep.subr.bf16.mxu0 0
      %1688 = vmatpush1.bf16.msra.mxu0 0
      %1689 = vmatprep.subr.bf16.mxu0 0
      %1690 = vmatpush1.bf16.msra.mxu0 0
      %1691 = vmatprep.subr.bf16.mxu0 0
      %1692 = vmatpush1.bf16.msra.mxu0 0
      %1693 = vmatprep.subr.bf16.mxu0 0
      %1694 = vmatpush1.bf16.msra.mxu0 0
      %1695 = vmatprep.subr.bf16.mxu0 0
      %1696 = vmatpush1.bf16.msra.mxu0 0
      %1697 = vmatprep.subr.bf16.mxu0 0
      %1698 = vmatpush1.bf16.msra.mxu0 0
      %1699 = vmatprep.subr.bf16.mxu0 0
      %1700 = vmatpush1.bf16.msra.mxu0 0
      %1701 = vmatprep.subr.bf16.mxu0 0
      %1702 = vmatpush1.bf16.msra.mxu0 0
      %1703 = vmatprep.subr.bf16.mxu0 0
      %1704 = vmatpush1.bf16.msra.mxu0 0
      %1705 = vmatprep.subr.bf16.mxu0 0
      %1706 = vmatpush1.bf16.msra.mxu0 0
      %1707 = vmatprep.subr.bf16.mxu0 0
      %1708 = vmatpush1.bf16.msra.mxu0 0
      %1709 = vmatprep.subr.bf16.mxu0 0
      %1710 = vmatpush1.bf16.msra.mxu0 0
      %1711 = vmatprep.mubr.bf16.mxu0 0
      %1712 = vmatmul.mubr.bf16.gmra.mrb[0].mxu0 %v1629
      %v1713 = vpop.f32.mrb[0].mxu0
      %v1714 = vadd.f32 0.0, %v1713
      %v1715 = vpop.f32.mrb[0].mxu0
      %v1716 = vpop.f32.mrb[0].mxu0
      %v1717 = vadd.f32 0.0, %v1716
      %v1718 = vpop.f32.mrb[0].mxu0
      %1719 = vmatprep.mubr.bf16.mxu0 0
      %1720 = vmatmul.mubr.bf16.gmra.mrb[0].mxu0 %v1632
      %v1721 = vpop.f32.mrb[0].mxu0
      %v1722 = vadd.f32 0.0, %v1721
      %v1723 = vpop.f32.mrb[0].mxu0
      %v1724 = vpop.f32.mrb[0].mxu0
      %v1725 = vadd.f32 0.0, %v1724
      %v1726 = vpop.f32.mrb[0].mxu0
      %1727 = vmatprep.mubr.bf16.mxu0 0
      %1728 = vmatmul.mubr.bf16.gmra.mrb[0].mxu0 %v1635
      %v1729 = vpop.f32.mrb[0].mxu0
      %v1730 = vadd.f32 0.0, %v1729
      %v1731 = vpop.f32.mrb[0].mxu0
      %v1732 = vpop.f32.mrb[0].mxu0
      %v1733 = vadd.f32 0.0, %v1732
      %v1734 = vpop.f32.mrb[0].mxu0
      %1735 = vmatprep.mubr.bf16.mxu0 0
      %1736 = vmatmul.mubr.bf16.gmra.mrb[0].mxu0 %v1638
      %v1737 = vpop.f32.mrb[0].mxu0
      %v1738 = vadd.f32 0.0, %v1737
      %v1739 = vpop.f32.mrb[0].mxu0
      %v1740 = vpop.f32.mrb[0].mxu0
      %v1741 = vadd.f32 0.0, %v1740
      %v1742 = vpop.f32.mrb[0].mxu0
      %1743 = vmatprep.mubr.bf16.mxu0 0
      %1744 = vmatmul.mubr.bf16.gmra.mrb[0].mxu0 %v1641
      %v1745 = vpop.f32.mrb[0].mxu0
      %v1746 = vadd.f32 0.0, %v1745
      %v1747 = vpop.f32.mrb[0].mxu0
      %v1748 = vpop.f32.mrb[0].mxu0
      %v1749 = vadd.f32 0.0, %v1748
      %v1750 = vpop.f32.mrb[0].mxu0
      %1751 = vmatprep.mubr.bf16.mxu0 0
      %1752 = vmatmul.mubr.bf16.gmra.mrb[0].mxu0 %v1644
      %v1753 = vpop.f32.mrb[0].mxu0
      %v1754 = vadd.f32 0.0, %v1753
      %v1755 = vpop.f32.mrb[0].mxu0
      %v1756 = vpop.f32.mrb[0].mxu0
      %v1757 = vadd.f32 0.0, %v1756
      %v1758 = vpop.f32.mrb[0].mxu0
      %1759 = vmatprep.mubr.bf16.mxu0 0
      %1760 = vmatmul.mubr.bf16.gmra.mrb[0].mxu0 %v1647
      %v1761 = vpop.f32.mrb[0].mxu0
      %v1762 = vadd.f32 0.0, %v1761
      %v1763 = vpop.f32.mrb[0].mxu0
      %v1764 = vpop.f32.mrb[0].mxu0
      %v1765 = vadd.f32 0.0, %v1764
      %v1766 = vpop.f32.mrb[0].mxu0
      %1767 = vmatprep.mubr.bf16.mxu0 0
      %1768 = vmatmul.mubr.bf16.gmra.mrb[0].mxu0 %v1650
      %v1769 = vpop.f32.mrb[0].mxu0
      %v1770 = vadd.f32 0.0, %v1769
      %v1771 = vpop.f32.mrb[0].mxu0
      %v1772 = vpop.f32.mrb[0].mxu0
      %v1773 = vadd.f32 0.0, %v1772
      %v1774 = vpop.f32.mrb[0].mxu0
      %1775 = vmatprep.mubr.bf16.mxu0 0
      %1776 = vmatmul.mubr.bf16.gmra.mrb[0].mxu0 %v1653
      %v1777 = vpop.f32.mrb[0].mxu0
      %v1778 = vadd.f32 0.0, %v1777
      %v1779 = vpop.f32.mrb[0].mxu0
      %v1780 = vpop.f32.mrb[0].mxu0
      %v1781 = vadd.f32 0.0, %v1780
      %v1782 = vpop.f32.mrb[0].mxu0
      %1783 = vmatprep.mubr.bf16.mxu0 0
      %1784 = vmatmul.mubr.bf16.gmra.mrb[0].mxu0 %v1656
      %v1785 = vpop.f32.mrb[0].mxu0
      %v1786 = vadd.f32 0.0, %v1785
      %v1787 = vpop.f32.mrb[0].mxu0
      %v1788 = vpop.f32.mrb[0].mxu0
      %v1789 = vadd.f32 0.0, %v1788
      %v1790 = vpop.f32.mrb[0].mxu0
      %1791 = vmatprep.mubr.bf16.mxu0 0
      %1792 = vmatmul.mubr.bf16.gmra.mrb[0].mxu0 %v1659
      %v1793 = vpop.f32.mrb[0].mxu0
      %v1794 = vadd.f32 0.0, %v1793
      %v1795 = vpop.f32.mrb[0].mxu0
      %v1796 = vpop.f32.mrb[0].mxu0
      %v1797 = vadd.f32 0.0, %v1796
      %v1798 = vpop.f32.mrb[0].mxu0
      %1799 = vmatprep.mubr.bf16.mxu0 0
      %1800 = vmatmul.mubr.bf16.gmra.mrb[0].mxu0 %v1662
      %v1801 = vpop.f32.mrb[0].mxu0
      %v1802 = vadd.f32 0.0, %v1801
      %v1803 = vpop.f32.mrb[0].mxu0
      %v1804 = vpop.f32.mrb[0].mxu0
      %v1805 = vadd.f32 0.0, %v1804
      %v1806 = vpop.f32.mrb[0].mxu0
      %1807 = vmatprep.mubr.bf16.mxu0 0
      %1808 = vmatmul.mubr.bf16.gmra.mrb[0].mxu0 %v1665
      %v1809 = vpop.f32.mrb[0].mxu0
      %v1810 = vadd.f32 0.0, %v1809
      %v1811 = vpop.f32.mrb[0].mxu0
      %v1812 = vpop.f32.mrb[0].mxu0
      %v1813 = vadd.f32 0.0, %v1812
      %v1814 = vpop.f32.mrb[0].mxu0
      %1815 = vmatprep.mubr.bf16.mxu0 0
      %1816 = vmatmul.mubr.bf16.gmra.mrb[0].mxu0 %v1668
      %v1817 = vpop.f32.mrb[0].mxu0
      %v1818 = vadd.f32 0.0, %v1817
      %v1819 = vpop.f32.mrb[0].mxu0
      %v1820 = vpop.f32.mrb[0].mxu0
      %v1821 = vadd.f32 0.0, %v1820
      %v1822 = vpop.f32.mrb[0].mxu0
      %1823 = vmatprep.mubr.bf16.mxu0 0
      %1824 = vmatmul.mubr.bf16.gmra.mrb[0].mxu0 %v1671
      %v1825 = vpop.f32.mrb[0].mxu0
      %v1826 = vadd.f32 0.0, %v1825
      %v1827 = vpop.f32.mrb[0].mxu0
      %v1828 = vpop.f32.mrb[0].mxu0
      %v1829 = vadd.f32 0.0, %v1828
      %v1830 = vpop.f32.mrb[0].mxu0
      %1831 = vmatprep.mubr.bf16.mxu0 0
      %1832 = vmatmul.mubr.bf16.gmra.mrb[0].mxu0 %v1674
      %v1833 = vpop.f32.mrb[0].mxu0
      %v1834 = vadd.f32 0.0, %v1833
      %v1835 = vpop.f32.mrb[0].mxu0
      %v1836 = vpop.f32.mrb[0].mxu0
      %v1837 = vadd.f32 0.0, %v1836
      %v1838 = vpop.f32.mrb[0].mxu0
      %1839 = vdwg.mxu0
      %v1840 = vadd.f32 %v1596, %v1714
      %v1841 = vadd.f32 %v1597, %v1717
      %v1842 = vadd.f32 %v1598, %v1722
      %v1843 = vadd.f32 %v1599, %v1725
      %v1844 = vadd.f32 %v1600, %v1730
      %v1845 = vadd.f32 %v1601, %v1733
      %v1846 = vadd.f32 %v1602, %v1738
      %v1847 = vadd.f32 %v1603, %v1741
      %v1848 = vadd.f32 %v1604, %v1746
      %v1849 = vadd.f32 %v1605, %v1749
      %v1850 = vadd.f32 %v1606, %v1754
      %v1851 = vadd.f32 %v1607, %v1757
      %v1852 = vadd.f32 %v1608, %v1762
      %v1853 = vadd.f32 %v1609, %v1765
      %v1854 = vadd.f32 %v1610, %v1770
      %v1855 = vadd.f32 %v1611, %v1773
      %v1856 = vadd.f32 %v1612, %v1778
      %v1857 = vadd.f32 %v1613, %v1781
      %v1858 = vadd.f32 %v1614, %v1786
      %v1859 = vadd.f32 %v1615, %v1789
      %v1860 = vadd.f32 %v1616, %v1794
      %v1861 = vadd.f32 %v1617, %v1797
      %v1862 = vadd.f32 %v1618, %v1802
      %v1863 = vadd.f32 %v1619, %v1805
      %v1864 = vadd.f32 %v1620, %v1810
      %v1865 = vadd.f32 %v1621, %v1813
      %v1866 = vadd.f32 %v1622, %v1818
      %v1867 = vadd.f32 %v1623, %v1821
      %v1868 = vadd.f32 %v1624, %v1826
      %v1869 = vadd.f32 %v1625, %v1829
      %v1870 = vadd.f32 %v1626, %v1834
      %v1871 = vadd.f32 %v1627, %v1837
      %1872 = vst.msk [vmem:[#allocation3] sm:$0xff] %vm322, %v1840
      %1873 = vst.msk [vmem:[#allocation3 + $0x8] sm:$0xff] %vm322, %v1841
      %1874 = vst.msk [vmem:[#allocation3 + $0x10] sm:$0xff] %vm322, %v1842
      %1875 = vst.msk [vmem:[#allocation3 + $0x18] sm:$0xff] %vm322, %v1843
      %1876 = vst.msk [vmem:[#allocation3 + $0x20] sm:$0xff] %vm322, %v1844
      %1877 = vst.msk [vmem:[#allocation3 + $0x28] sm:$0xff] %vm322, %v1845
      %1878 = vst.msk [vmem:[#allocation3 + $0x30] sm:$0xff] %vm322, %v1846
      %1879 = vst.msk [vmem:[#allocation3 + $0x38] sm:$0xff] %vm322, %v1847
      %1880 = vst.msk [vmem:[#allocation3 + $0x40] sm:$0xff] %vm322, %v1848
      %1881 = vst.msk [vmem:[#allocation3 + $0x48] sm:$0xff] %vm322, %v1849
      %1882 = vst.msk [vmem:[#allocation3 + $0x50] sm:$0xff] %vm322, %v1850
      %1883 = vst.msk [vmem:[#allocation3 + $0x58] sm:$0xff] %vm322, %v1851
      %1884 = vst.msk [vmem:[#allocation3 + $0x60] sm:$0xff] %vm322, %v1852
      %1885 = vst.msk [vmem:[#allocation3 + $0x68] sm:$0xff] %vm322, %v1853
      %1886 = vst.msk [vmem:[#allocation3 + $0x70] sm:$0xff] %vm322, %v1854
      %1887 = vst.msk [vmem:[#allocation3 + $0x78] sm:$0xff] %vm322, %v1855
      %1888 = vst.msk [vmem:[#allocation3 + $0x80] sm:$0xff] %vm322, %v1856
      %1889 = vst.msk [vmem:[#allocation3 + $0x88] sm:$0xff] %vm322, %v1857
      %1890 = vst.msk [vmem:[#allocation3 + $0x90] sm:$0xff] %vm322, %v1858
      %1891 = vst.msk [vmem:[#allocation3 + $0x98] sm:$0xff] %vm322, %v1859
      %1892 = vst.msk [vmem:[#allocation3 + $0xa0] sm:$0xff] %vm322, %v1860
      %1893 = vst.msk [vmem:[#allocation3 + $0xa8] sm:$0xff] %vm322, %v1861
      %1894 = vst.msk [vmem:[#allocation3 + $0xb0] sm:$0xff] %vm322, %v1862
      %1895 = vst.msk [vmem:[#allocation3 + $0xb8] sm:$0xff] %vm322, %v1863
      %1896 = vst.msk [vmem:[#allocation3 + $0xc0] sm:$0xff] %vm322, %v1864
      %1897 = vst.msk [vmem:[#allocation3 + $0xc8] sm:$0xff] %vm322, %v1865
      %1898 = vst.msk [vmem:[#allocation3 + $0xd0] sm:$0xff] %vm322, %v1866
      %1899 = vst.msk [vmem:[#allocation3 + $0xd8] sm:$0xff] %vm322, %v1867
      %1900 = vst.msk [vmem:[#allocation3 + $0xe0] sm:$0xff] %vm322, %v1868
      %1901 = vst.msk [vmem:[#allocation3 + $0xe8] sm:$0xff] %vm322, %v1869
      %1902 = vst.msk [vmem:[#allocation3 + $0xf0] sm:$0xff] %vm322, %v1870
      %1903 = vst.msk [vmem:[#allocation3 + $0xf8] sm:$0xff] %vm322, %v1871
      %v1904 = vld [vmem:[%s410 + $0x1] sm:$0xff]
      %v1905 = vld [vmem:[%s410 + $0x9] sm:$0xff]
      %v1906 = vld [vmem:[%s410 + $0x19] sm:$0xff]
      %v1907 = vld [vmem:[%s410 + $0x21] sm:$0xff]
      %v1908 = vld [vmem:[%s410 + $0x31] sm:$0xff]
      %v1909 = vld [vmem:[%s410 + $0x39] sm:$0xff]
      %v1910 = vld [vmem:[%s410 + $0x49] sm:$0xff]
      %v1911 = vld [vmem:[%s410 + $0x51] sm:$0xff]
      %v1912 = vld [vmem:[%s410 + $0x61] sm:$0xff]
      %v1913 = vld [vmem:[%s410 + $0x69] sm:$0xff]
      %v1914 = vld [vmem:[%s410 + $0x79] sm:$0xff]
      %v1915 = vld [vmem:[%s410 + $0x81] sm:$0xff]
      %v1916 = vld [vmem:[%s410 + $0x91] sm:$0xff]
      %v1917 = vld [vmem:[%s410 + $0x99] sm:$0xff]
      %v1918 = vld [vmem:[%s410 + $0xa9] sm:$0xff]
      %v1919 = vld [vmem:[%s410 + $0xb1] sm:$0xff]
      %v1920 = vld [vmem:[%s410 + $0xc1] sm:$0xff]
      %v1921 = vld [vmem:[%s410 + $0xc9] sm:$0xff]
      %v1922 = vld [vmem:[%s410 + $0xd9] sm:$0xff]
      %v1923 = vld [vmem:[%s410 + $0xe1] sm:$0xff]
      %v1924 = vld [vmem:[%s410 + $0xf1] sm:$0xff]
      %v1925 = vld [vmem:[%s410 + $0xf9] sm:$0xff]
      %v1926 = vld [vmem:[%s410 + $0x109] sm:$0xff]
      %v1927 = vld [vmem:[%s410 + $0x111] sm:$0xff]
      %v1928 = vld [vmem:[%s410 + $0x121] sm:$0xff]
      %v1929 = vld [vmem:[%s410 + $0x129] sm:$0xff]
      %v1930 = vld [vmem:[%s410 + $0x139] sm:$0xff]
      %v1931 = vld [vmem:[%s410 + $0x141] sm:$0xff]
      %v1932 = vld [vmem:[%s410 + $0x151] sm:$0xff]
      %v1933 = vld [vmem:[%s410 + $0x159] sm:$0xff]
      %v1934 = vld [vmem:[%s410 + $0x169] sm:$0xff]
      %v1935 = vld [vmem:[%s410 + $0x171] sm:$0xff]
      %v1936 = vpack.c.bf16 %v1905, %v1904
      %v1937 = vpack.c.bf16 %v1907, %v1906
      %v1938 = vpack.c.bf16 %v1909, %v1908
      %v1939 = vpack.c.bf16 %v1911, %v1910
      %v1940 = vpack.c.bf16 %v1913, %v1912
      %v1941 = vpack.c.bf16 %v1915, %v1914
      %v1942 = vpack.c.bf16 %v1917, %v1916
      %v1943 = vpack.c.bf16 %v1919, %v1918
      %v1944 = vpack.c.bf16 %v1921, %v1920
      %v1945 = vpack.c.bf16 %v1923, %v1922
      %v1946 = vpack.c.bf16 %v1925, %v1924
      %v1947 = vpack.c.bf16 %v1927, %v1926
      %v1948 = vpack.c.bf16 %v1929, %v1928
      %v1949 = vpack.c.bf16 %v1931, %v1930
      %v1950 = vpack.c.bf16 %v1933, %v1932
      %v1951 = vpack.c.bf16 %v1935, %v1934
      %v1952 = vld [vmem:[%s298 + $0x10] sm:$0xf]
      %v1953 = vld [vmem:[#allocation3] sm:$0xff]
      %v1954 = vld [vmem:[#allocation3 + $0x8] sm:$0xff]
      %v1955 = vld [vmem:[#allocation3 + $0x10] sm:$0xff]
      %v1956 = vld [vmem:[#allocation3 + $0x18] sm:$0xff]
      %v1957 = vld [vmem:[#allocation3 + $0x20] sm:$0xff]
      %v1958 = vld [vmem:[#allocation3 + $0x28] sm:$0xff]
      %v1959 = vld [vmem:[#allocation3 + $0x30] sm:$0xff]
      %v1960 = vld [vmem:[#allocation3 + $0x38] sm:$0xff]
      %v1961 = vld [vmem:[#allocation3 + $0x40] sm:$0xff]
      %v1962 = vld [vmem:[#allocation3 + $0x48] sm:$0xff]
      %v1963 = vld [vmem:[#allocation3 + $0x50] sm:$0xff]
      %v1964 = vld [vmem:[#allocation3 + $0x58] sm:$0xff]
      %v1965 = vld [vmem:[#allocation3 + $0x60] sm:$0xff]
      %v1966 = vld [vmem:[#allocation3 + $0x68] sm:$0xff]
      %v1967 = vld [vmem:[#allocation3 + $0x70] sm:$0xff]
      %v1968 = vld [vmem:[#allocation3 + $0x78] sm:$0xff]
      %v1969 = vld [vmem:[#allocation3 + $0x80] sm:$0xff]
      %v1970 = vld [vmem:[#allocation3 + $0x88] sm:$0xff]
      %v1971 = vld [vmem:[#allocation3 + $0x90] sm:$0xff]
      %v1972 = vld [vmem:[#allocation3 + $0x98] sm:$0xff]
      %v1973 = vld [vmem:[#allocation3 + $0xa0] sm:$0xff]
      %v1974 = vld [vmem:[#allocation3 + $0xa8] sm:$0xff]
      %v1975 = vld [vmem:[#allocation3 + $0xb0] sm:$0xff]
      %v1976 = vld [vmem:[#allocation3 + $0xb8] sm:$0xff]
      %v1977 = vld [vmem:[#allocation3 + $0xc0] sm:$0xff]
      %v1978 = vld [vmem:[#allocation3 + $0xc8] sm:$0xff]
      %v1979 = vld [vmem:[#allocation3 + $0xd0] sm:$0xff]
      %v1980 = vld [vmem:[#allocation3 + $0xd8] sm:$0xff]
      %v1981 = vld [vmem:[#allocation3 + $0xe0] sm:$0xff]
      %v1982 = vld [vmem:[#allocation3 + $0xe8] sm:$0xff]
      %v1983 = vld [vmem:[#allocation3 + $0xf0] sm:$0xff]
      %v1984 = vld [vmem:[#allocation3 + $0xf8] sm:$0xff]
      %v1986 = vsel %vm322, %v1936, 0
      %v1989 = vsel %vm322, %v1937, 0
      %v1992 = vsel %vm322, %v1938, 0
      %v1995 = vsel %vm322, %v1939, 0
      %v1998 = vsel %vm322, %v1940, 0
      %v2001 = vsel %vm322, %v1941, 0
      %v2004 = vsel %vm322, %v1942, 0
      %v2007 = vsel %vm322, %v1943, 0
      %v2010 = vsel %vm322, %v1944, 0
      %v2013 = vsel %vm322, %v1945, 0
      %v2016 = vsel %vm322, %v1946, 0
      %v2019 = vsel %vm322, %v1947, 0
      %v2022 = vsel %vm322, %v1948, 0
      %v2025 = vsel %vm322, %v1949, 0
      %v2028 = vsel %vm322, %v1950, 0
      %v2031 = vsel %vm322, %v1951, 0
      %v2034 = vsel %vm604, %v1952, 0
      %2036 = vmatprep.subr.bf16.mxu0 0
      %2037 = vmatpush1.bf16.msra.mxu0 %v2034
      %2038 = vmatprep.subr.bf16.mxu0 0
      %2039 = vmatpush1.bf16.msra.mxu0 0
      %2040 = vmatprep.subr.bf16.mxu0 0
      %2041 = vmatpush1.bf16.msra.mxu0 0
      %2042 = vmatprep.subr.bf16.mxu0 0
      %2043 = vmatpush1.bf16.msra.mxu0 0
      %2044 = vmatprep.subr.bf16.mxu0 0
      %2045 = vmatpush1.bf16.msra.mxu0 0
      %2046 = vmatprep.subr.bf16.mxu0 0
      %2047 = vmatpush1.bf16.msra.mxu0 0
      %2048 = vmatprep.subr.bf16.mxu0 0
      %2049 = vmatpush1.bf16.msra.mxu0 0
      %2050 = vmatprep.subr.bf16.mxu0 0
      %2051 = vmatpush1.bf16.msra.mxu0 0
      %2052 = vmatprep.subr.bf16.mxu0 0
      %2053 = vmatpush1.bf16.msra.mxu0 0
      %2054 = vmatprep.subr.bf16.mxu0 0
      %2055 = vmatpush1.bf16.msra.mxu0 0
      %2056 = vmatprep.subr.bf16.mxu0 0
      %2057 = vmatpush1.bf16.msra.mxu0 0
      %2058 = vmatprep.subr.bf16.mxu0 0
      %2059 = vmatpush1.bf16.msra.mxu0 0
      %2060 = vmatprep.subr.bf16.mxu0 0
      %2061 = vmatpush1.bf16.msra.mxu0 0
      %2062 = vmatprep.subr.bf16.mxu0 0
      %2063 = vmatpush1.bf16.msra.mxu0 0
      %2064 = vmatprep.subr.bf16.mxu0 0
      %2065 = vmatpush1.bf16.msra.mxu0 0
      %2066 = vmatprep.subr.bf16.mxu0 0
      %2067 = vmatpush1.bf16.msra.mxu0 0
      %2068 = vmatprep.mubr.bf16.mxu0 0
      %2069 = vmatmul.mubr.bf16.gmra.mrb[0].mxu0 %v1986
      %v2070 = vpop.f32.mrb[0].mxu0
      %v2071 = vadd.f32 0.0, %v2070
      %v2072 = vpop.f32.mrb[0].mxu0
      %v2073 = vpop.f32.mrb[0].mxu0
      %v2074 = vadd.f32 0.0, %v2073
      %v2075 = vpop.f32.mrb[0].mxu0
      %2076 = vmatprep.mubr.bf16.mxu0 0
      %2077 = vmatmul.mubr.bf16.gmra.mrb[0].mxu0 %v1989
      %v2078 = vpop.f32.mrb[0].mxu0
      %v2079 = vadd.f32 0.0, %v2078
      %v2080 = vpop.f32.mrb[0].mxu0
      %v2081 = vpop.f32.mrb[0].mxu0
      %v2082 = vadd.f32 0.0, %v2081
      %v2083 = vpop.f32.mrb[0].mxu0
      %2084 = vmatprep.mubr.bf16.mxu0 0
      %2085 = vmatmul.mubr.bf16.gmra.mrb[0].mxu0 %v1992
      %v2086 = vpop.f32.mrb[0].mxu0
      %v2087 = vadd.f32 0.0, %v2086
      %v2088 = vpop.f32.mrb[0].mxu0
      %v2089 = vpop.f32.mrb[0].mxu0
      %v2090 = vadd.f32 0.0, %v2089
      %v2091 = vpop.f32.mrb[0].mxu0
      %2092 = vmatprep.mubr.bf16.mxu0 0
      %2093 = vmatmul.mubr.bf16.gmra.mrb[0].mxu0 %v1995
      %v2094 = vpop.f32.mrb[0].mxu0
      %v2095 = vadd.f32 0.0, %v2094
      %v2096 = vpop.f32.mrb[0].mxu0
      %v2097 = vpop.f32.mrb[0].mxu0
      %v2098 = vadd.f32 0.0, %v2097
      %v2099 = vpop.f32.mrb[0].mxu0
      %2100 = vmatprep.mubr.bf16.mxu0 0
      %2101 = vmatmul.mubr.bf16.gmra.mrb[0].mxu0 %v1998
      %v2102 = vpop.f32.mrb[0].mxu0
      %v2103 = vadd.f32 0.0, %v2102
      %v2104 = vpop.f32.mrb[0].mxu0
      %v2105 = vpop.f32.mrb[0].mxu0
      %v2106 = vadd.f32 0.0, %v2105
      %v2107 = vpop.f32.mrb[0].mxu0
      %2108 = vmatprep.mubr.bf16.mxu0 0
      %2109 = vmatmul.mubr.bf16.gmra.mrb[0].mxu0 %v2001
      %v2110 = vpop.f32.mrb[0].mxu0
      %v2111 = vadd.f32 0.0, %v2110
      %v2112 = vpop.f32.mrb[0].mxu0
      %v2113 = vpop.f32.mrb[0].mxu0
      %v2114 = vadd.f32 0.0, %v2113
      %v2115 = vpop.f32.mrb[0].mxu0
      %2116 = vmatprep.mubr.bf16.mxu0 0
      %2117 = vmatmul.mubr.bf16.gmra.mrb[0].mxu0 %v2004
      %v2118 = vpop.f32.mrb[0].mxu0
      %v2119 = vadd.f32 0.0, %v2118
      %v2120 = vpop.f32.mrb[0].mxu0
      %v2121 = vpop.f32.mrb[0].mxu0
      %v2122 = vadd.f32 0.0, %v2121
      %v2123 = vpop.f32.mrb[0].mxu0
      %2124 = vmatprep.mubr.bf16.mxu0 0
      %2125 = vmatmul.mubr.bf16.gmra.mrb[0].mxu0 %v2007
      %v2126 = vpop.f32.mrb[0].mxu0
      %v2127 = vadd.f32 0.0, %v2126
      %v2128 = vpop.f32.mrb[0].mxu0
      %v2129 = vpop.f32.mrb[0].mxu0
      %v2130 = vadd.f32 0.0, %v2129
      %v2131 = vpop.f32.mrb[0].mxu0
      %2132 = vmatprep.mubr.bf16.mxu0 0
      %2133 = vmatmul.mubr.bf16.gmra.mrb[0].mxu0 %v2010
      %v2134 = vpop.f32.mrb[0].mxu0
      %v2135 = vadd.f32 0.0, %v2134
      %v2136 = vpop.f32.mrb[0].mxu0
      %v2137 = vpop.f32.mrb[0].mxu0
      %v2138 = vadd.f32 0.0, %v2137
      %v2139 = vpop.f32.mrb[0].mxu0
      %2140 = vmatprep.mubr.bf16.mxu0 0
      %2141 = vmatmul.mubr.bf16.gmra.mrb[0].mxu0 %v2013
      %v2142 = vpop.f32.mrb[0].mxu0
      %v2143 = vadd.f32 0.0, %v2142
      %v2144 = vpop.f32.mrb[0].mxu0
      %v2145 = vpop.f32.mrb[0].mxu0
      %v2146 = vadd.f32 0.0, %v2145
      %v2147 = vpop.f32.mrb[0].mxu0
      %2148 = vmatprep.mubr.bf16.mxu0 0
      %2149 = vmatmul.mubr.bf16.gmra.mrb[0].mxu0 %v2016
      %v2150 = vpop.f32.mrb[0].mxu0
      %v2151 = vadd.f32 0.0, %v2150
      %v2152 = vpop.f32.mrb[0].mxu0
      %v2153 = vpop.f32.mrb[0].mxu0
      %v2154 = vadd.f32 0.0, %v2153
      %v2155 = vpop.f32.mrb[0].mxu0
      %2156 = vmatprep.mubr.bf16.mxu0 0
      %2157 = vmatmul.mubr.bf16.gmra.mrb[0].mxu0 %v2019
      %v2158 = vpop.f32.mrb[0].mxu0
      %v2159 = vadd.f32 0.0, %v2158
      %v2160 = vpop.f32.mrb[0].mxu0
      %v2161 = vpop.f32.mrb[0].mxu0
      %v2162 = vadd.f32 0.0, %v2161
      %v2163 = vpop.f32.mrb[0].mxu0
      %2164 = vmatprep.mubr.bf16.mxu0 0
      %2165 = vmatmul.mubr.bf16.gmra.mrb[0].mxu0 %v2022
      %v2166 = vpop.f32.mrb[0].mxu0
      %v2167 = vadd.f32 0.0, %v2166
      %v2168 = vpop.f32.mrb[0].mxu0
      %v2169 = vpop.f32.mrb[0].mxu0
      %v2170 = vadd.f32 0.0, %v2169
      %v2171 = vpop.f32.mrb[0].mxu0
      %2172 = vmatprep.mubr.bf16.mxu0 0
      %2173 = vmatmul.mubr.bf16.gmra.mrb[0].mxu0 %v2025
      %v2174 = vpop.f32.mrb[0].mxu0
      %v2175 = vadd.f32 0.0, %v2174
      %v2176 = vpop.f32.mrb[0].mxu0
      %v2177 = vpop.f32.mrb[0].mxu0
      %v2178 = vadd.f32 0.0, %v2177
      %v2179 = vpop.f32.mrb[0].mxu0
      %2180 = vmatprep.mubr.bf16.mxu0 0
      %2181 = vmatmul.mubr.bf16.gmra.mrb[0].mxu0 %v2028
      %v2182 = vpop.f32.mrb[0].mxu0
      %v2183 = vadd.f32 0.0, %v2182
      %v2184 = vpop.f32.mrb[0].mxu0
      %v2185 = vpop.f32.mrb[0].mxu0
      %v2186 = vadd.f32 0.0, %v2185
      %v2187 = vpop.f32.mrb[0].mxu0
      %2188 = vmatprep.mubr.bf16.mxu0 0
      %2189 = vmatmul.mubr.bf16.gmra.mrb[0].mxu0 %v2031
      %v2190 = vpop.f32.mrb[0].mxu0
      %v2191 = vadd.f32 0.0, %v2190
      %v2192 = vpop.f32.mrb[0].mxu0
      %v2193 = vpop.f32.mrb[0].mxu0
      %v2194 = vadd.f32 0.0, %v2193
      %v2195 = vpop.f32.mrb[0].mxu0
      %2196 = vdwg.mxu0
      %v2197 = vadd.f32 %v1953, %v2071
      %v2198 = vadd.f32 %v1954, %v2074
      %v2199 = vadd.f32 %v1955, %v2079
      %v2200 = vadd.f32 %v1956, %v2082
      %v2201 = vadd.f32 %v1957, %v2087
      %v2202 = vadd.f32 %v1958, %v2090
      %v2203 = vadd.f32 %v1959, %v2095
      %v2204 = vadd.f32 %v1960, %v2098
      %v2205 = vadd.f32 %v1961, %v2103
      %v2206 = vadd.f32 %v1962, %v2106
      %v2207 = vadd.f32 %v1963, %v2111
      %v2208 = vadd.f32 %v1964, %v2114
      %v2209 = vadd.f32 %v1965, %v2119
      %v2210 = vadd.f32 %v1966, %v2122
      %v2211 = vadd.f32 %v1967, %v2127
      %v2212 = vadd.f32 %v1968, %v2130
      %v2213 = vadd.f32 %v1969, %v2135
      %v2214 = vadd.f32 %v1970, %v2138
      %v2215 = vadd.f32 %v1971, %v2143
      %v2216 = vadd.f32 %v1972, %v2146
      %v2217 = vadd.f32 %v1973, %v2151
      %v2218 = vadd.f32 %v1974, %v2154
      %v2219 = vadd.f32 %v1975, %v2159
      %v2220 = vadd.f32 %v1976, %v2162
      %v2221 = vadd.f32 %v1977, %v2167
      %v2222 = vadd.f32 %v1978, %v2170
      %v2223 = vadd.f32 %v1979, %v2175
      %v2224 = vadd.f32 %v1980, %v2178
      %v2225 = vadd.f32 %v1981, %v2183
      %v2226 = vadd.f32 %v1982, %v2186
      %v2227 = vadd.f32 %v1983, %v2191
      %v2228 = vadd.f32 %v1984, %v2194
      %2229 = vst.msk [vmem:[#allocation3] sm:$0xff] %vm322, %v2197
      %2230 = vst.msk [vmem:[#allocation3 + $0x8] sm:$0xff] %vm322, %v2198
      %2231 = vst.msk [vmem:[#allocation3 + $0x10] sm:$0xff] %vm322, %v2199
      %2232 = vst.msk [vmem:[#allocation3 + $0x18] sm:$0xff] %vm322, %v2200
      %2233 = vst.msk [vmem:[#allocation3 + $0x20] sm:$0xff] %vm322, %v2201
      %2234 = vst.msk [vmem:[#allocation3 + $0x28] sm:$0xff] %vm322, %v2202
      %2235 = vst.msk [vmem:[#allocation3 + $0x30] sm:$0xff] %vm322, %v2203
      %2236 = vst.msk [vmem:[#allocation3 + $0x38] sm:$0xff] %vm322, %v2204
      %2237 = vst.msk [vmem:[#allocation3 + $0x40] sm:$0xff] %vm322, %v2205
      %2238 = vst.msk [vmem:[#allocation3 + $0x48] sm:$0xff] %vm322, %v2206
      %2239 = vst.msk [vmem:[#allocation3 + $0x50] sm:$0xff] %vm322, %v2207
      %2240 = vst.msk [vmem:[#allocation3 + $0x58] sm:$0xff] %vm322, %v2208
      %2241 = vst.msk [vmem:[#allocation3 + $0x60] sm:$0xff] %vm322, %v2209
      %2242 = vst.msk [vmem:[#allocation3 + $0x68] sm:$0xff] %vm322, %v2210
      %2243 = vst.msk [vmem:[#allocation3 + $0x70] sm:$0xff] %vm322, %v2211
      %2244 = vst.msk [vmem:[#allocation3 + $0x78] sm:$0xff] %vm322, %v2212
      %2245 = vst.msk [vmem:[#allocation3 + $0x80] sm:$0xff] %vm322, %v2213
      %2246 = vst.msk [vmem:[#allocation3 + $0x88] sm:$0xff] %vm322, %v2214
      %2247 = vst.msk [vmem:[#allocation3 + $0x90] sm:$0xff] %vm322, %v2215
      %2248 = vst.msk [vmem:[#allocation3 + $0x98] sm:$0xff] %vm322, %v2216
      %2249 = vst.msk [vmem:[#allocation3 + $0xa0] sm:$0xff] %vm322, %v2217
      %2250 = vst.msk [vmem:[#allocation3 + $0xa8] sm:$0xff] %vm322, %v2218
      %2251 = vst.msk [vmem:[#allocation3 + $0xb0] sm:$0xff] %vm322, %v2219
      %2252 = vst.msk [vmem:[#allocation3 + $0xb8] sm:$0xff] %vm322, %v2220
      %2253 = vst.msk [vmem:[#allocation3 + $0xc0] sm:$0xff] %vm322, %v2221
      %2254 = vst.msk [vmem:[#allocation3 + $0xc8] sm:$0xff] %vm322, %v2222
      %2255 = vst.msk [vmem:[#allocation3 + $0xd0] sm:$0xff] %vm322, %v2223
      %2256 = vst.msk [vmem:[#allocation3 + $0xd8] sm:$0xff] %vm322, %v2224
      %2257 = vst.msk [vmem:[#allocation3 + $0xe0] sm:$0xff] %vm322, %v2225
      %2258 = vst.msk [vmem:[#allocation3 + $0xe8] sm:$0xff] %vm322, %v2226
      %2259 = vst.msk [vmem:[#allocation3 + $0xf0] sm:$0xff] %vm322, %v2227
      %2260 = vst.msk [vmem:[#allocation3 + $0xf8] sm:$0xff] %vm322, %v2228
      %v2261 = vld [vmem:[%s410 + $0x2] sm:$0xff]
      %v2262 = vld [vmem:[%s410 + $0xa] sm:$0xff]
      %v2263 = vld [vmem:[%s410 + $0x1a] sm:$0xff]
      %v2264 = vld [vmem:[%s410 + $0x22] sm:$0xff]
      %v2265 = vld [vmem:[%s410 + $0x32] sm:$0xff]
      %v2266 = vld [vmem:[%s410 + $0x3a] sm:$0xff]
      %v2267 = vld [vmem:[%s410 + $0x4a] sm:$0xff]
      %v2268 = vld [vmem:[%s410 + $0x52] sm:$0xff]
      %v2269 = vld [vmem:[%s410 + $0x62] sm:$0xff]
      %v2270 = vld [vmem:[%s410 + $0x6a] sm:$0xff]
      %v2271 = vld [vmem:[%s410 + $0x7a] sm:$0xff]
      %v2272 = vld [vmem:[%s410 + $0x82] sm:$0xff]
      %v2273 = vld [vmem:[%s410 + $0x92] sm:$0xff]
      %v2274 = vld [vmem:[%s410 + $0x9a] sm:$0xff]
      %v2275 = vld [vmem:[%s410 + $0xaa] sm:$0xff]
      %v2276 = vld [vmem:[%s410 + $0xb2] sm:$0xff]
      %v2277 = vld [vmem:[%s410 + $0xc2] sm:$0xff]
      %v2278 = vld [vmem:[%s410 + $0xca] sm:$0xff]
      %v2279 = vld [vmem:[%s410 + $0xda] sm:$0xff]
      %v2280 = vld [vmem:[%s410 + $0xe2] sm:$0xff]
      %v2281 = vld [vmem:[%s410 + $0xf2] sm:$0xff]
      %v2282 = vld [vmem:[%s410 + $0xfa] sm:$0xff]
      %v2283 = vld [vmem:[%s410 + $0x10a] sm:$0xff]
      %v2284 = vld [vmem:[%s410 + $0x112] sm:$0xff]
      %v2285 = vld [vmem:[%s410 + $0x122] sm:$0xff]
      %v2286 = vld [vmem:[%s410 + $0x12a] sm:$0xff]
      %v2287 = vld [vmem:[%s410 + $0x13a] sm:$0xff]
      %v2288 = vld [vmem:[%s410 + $0x142] sm:$0xff]
      %v2289 = vld [vmem:[%s410 + $0x152] sm:$0xff]
      %v2290 = vld [vmem:[%s410 + $0x15a] sm:$0xff]
      %v2291 = vld [vmem:[%s410 + $0x16a] sm:$0xff]
      %v2292 = vld [vmem:[%s410 + $0x172] sm:$0xff]
      %v2293 = vpack.c.bf16 %v2262, %v2261
      %v2294 = vpack.c.bf16 %v2264, %v2263
      %v2295 = vpack.c.bf16 %v2266, %v2265
      %v2296 = vpack.c.bf16 %v2268, %v2267
      %v2297 = vpack.c.bf16 %v2270, %v2269
      %v2298 = vpack.c.bf16 %v2272, %v2271
      %v2299 = vpack.c.bf16 %v2274, %v2273
      %v2300 = vpack.c.bf16 %v2276, %v2275
      %v2301 = vpack.c.bf16 %v2278, %v2277
      %v2302 = vpack.c.bf16 %v2280, %v2279
      %v2303 = vpack.c.bf16 %v2282, %v2281
      %v2304 = vpack.c.bf16 %v2284, %v2283
      %v2305 = vpack.c.bf16 %v2286, %v2285
      %v2306 = vpack.c.bf16 %v2288, %v2287
      %v2307 = vpack.c.bf16 %v2290, %v2289
      %v2308 = vpack.c.bf16 %v2292, %v2291
      %v2309 = vld [vmem:[%s298 + $0x14] sm:$0xf]
      %v2310 = vld [vmem:[#allocation3] sm:$0xff]
      %v2311 = vld [vmem:[#allocation3 + $0x8] sm:$0xff]
      %v2312 = vld [vmem:[#allocation3 + $0x10] sm:$0xff]
      %v2313 = vld [vmem:[#allocation3 + $0x18] sm:$0xff]
      %v2314 = vld [vmem:[#allocation3 + $0x20] sm:$0xff]
      %v2315 = vld [vmem:[#allocation3 + $0x28] sm:$0xff]
      %v2316 = vld [vmem:[#allocation3 + $0x30] sm:$0xff]
      %v2317 = vld [vmem:[#allocation3 + $0x38] sm:$0xff]
      %v2318 = vld [vmem:[#allocation3 + $0x40] sm:$0xff]
      %v2319 = vld [vmem:[#allocation3 + $0x48] sm:$0xff]
      %v2320 = vld [vmem:[#allocation3 + $0x50] sm:$0xff]
      %v2321 = vld [vmem:[#allocation3 + $0x58] sm:$0xff]
      %v2322 = vld [vmem:[#allocation3 + $0x60] sm:$0xff]
      %v2323 = vld [vmem:[#allocation3 + $0x68] sm:$0xff]
      %v2324 = vld [vmem:[#allocation3 + $0x70] sm:$0xff]
      %v2325 = vld [vmem:[#allocation3 + $0x78] sm:$0xff]
      %v2326 = vld [vmem:[#allocation3 + $0x80] sm:$0xff]
      %v2327 = vld [vmem:[#allocation3 + $0x88] sm:$0xff]
      %v2328 = vld [vmem:[#allocation3 + $0x90] sm:$0xff]
      %v2329 = vld [vmem:[#allocation3 + $0x98] sm:$0xff]
      %v2330 = vld [vmem:[#allocation3 + $0xa0] sm:$0xff]
      %v2331 = vld [vmem:[#allocation3 + $0xa8] sm:$0xff]
      %v2332 = vld [vmem:[#allocation3 + $0xb0] sm:$0xff]
      %v2333 = vld [vmem:[#allocation3 + $0xb8] sm:$0xff]
      %v2334 = vld [vmem:[#allocation3 + $0xc0] sm:$0xff]
      %v2335 = vld [vmem:[#allocation3 + $0xc8] sm:$0xff]
      %v2336 = vld [vmem:[#allocation3 + $0xd0] sm:$0xff]
      %v2337 = vld [vmem:[#allocation3 + $0xd8] sm:$0xff]
      %v2338 = vld [vmem:[#allocation3 + $0xe0] sm:$0xff]
      %v2339 = vld [vmem:[#allocation3 + $0xe8] sm:$0xff]
      %v2340 = vld [vmem:[#allocation3 + $0xf0] sm:$0xff]
      %v2341 = vld [vmem:[#allocation3 + $0xf8] sm:$0xff]
      %v2343 = vsel %vm322, %v2293, 0
      %v2346 = vsel %vm322, %v2294, 0
      %v2349 = vsel %vm322, %v2295, 0
      %v2352 = vsel %vm322, %v2296, 0
      %v2355 = vsel %vm322, %v2297, 0
      %v2358 = vsel %vm322, %v2298, 0
      %v2361 = vsel %vm322, %v2299, 0
      %v2364 = vsel %vm322, %v2300, 0
      %v2367 = vsel %vm322, %v2301, 0
      %v2370 = vsel %vm322, %v2302, 0
      %v2373 = vsel %vm322, %v2303, 0
      %v2376 = vsel %vm322, %v2304, 0
      %v2379 = vsel %vm322, %v2305, 0
      %v2382 = vsel %vm322, %v2306, 0
      %v2385 = vsel %vm322, %v2307, 0
      %v2388 = vsel %vm322, %v2308, 0
      %v2391 = vsel %vm604, %v2309, 0
      %2393 = vmatprep.subr.bf16.mxu0 0
      %2394 = vmatpush1.bf16.msra.mxu0 %v2391
      %2395 = vmatprep.subr.bf16.mxu0 0
      %2396 = vmatpush1.bf16.msra.mxu0 0
      %2397 = vmatprep.subr.bf16.mxu0 0
      %2398 = vmatpush1.bf16.msra.mxu0 0
      %2399 = vmatprep.subr.bf16.mxu0 0
      %2400 = vmatpush1.bf16.msra.mxu0 0
      %2401 = vmatprep.subr.bf16.mxu0 0
      %2402 = vmatpush1.bf16.msra.mxu0 0
      %2403 = vmatprep.subr.bf16.mxu0 0
      %2404 = vmatpush1.bf16.msra.mxu0 0
      %2405 = vmatprep.subr.bf16.mxu0 0
      %2406 = vmatpush1.bf16.msra.mxu0 0
      %2407 = vmatprep.subr.bf16.mxu0 0
      %2408 = vmatpush1.bf16.msra.mxu0 0
      %2409 = vmatprep.subr.bf16.mxu0 0
      %2410 = vmatpush1.bf16.msra.mxu0 0
      %2411 = vmatprep.subr.bf16.mxu0 0
      %2412 = vmatpush1.bf16.msra.mxu0 0
      %2413 = vmatprep.subr.bf16.mxu0 0
      %2414 = vmatpush1.bf16.msra.mxu0 0
      %2415 = vmatprep.subr.bf16.mxu0 0
      %2416 = vmatpush1.bf16.msra.mxu0 0
      %2417 = vmatprep.subr.bf16.mxu0 0
      %2418 = vmatpush1.bf16.msra.mxu0 0
      %2419 = vmatprep.subr.bf16.mxu0 0
      %2420 = vmatpush1.bf16.msra.mxu0 0
      %2421 = vmatprep.subr.bf16.mxu0 0
      %2422 = vmatpush1.bf16.msra.mxu0 0
      %2423 = vmatprep.subr.bf16.mxu0 0
      %2424 = vmatpush1.bf16.msra.mxu0 0
      %2425 = vmatprep.mubr.bf16.mxu0 0
      %2426 = vmatmul.mubr.bf16.gmra.mrb[0].mxu0 %v2343
      %v2427 = vpop.f32.mrb[0].mxu0
      %v2428 = vadd.f32 0.0, %v2427
      %v2429 = vpop.f32.mrb[0].mxu0
      %v2430 = vpop.f32.mrb[0].mxu0
      %v2431 = vadd.f32 0.0, %v2430
      %v2432 = vpop.f32.mrb[0].mxu0
      %2433 = vmatprep.mubr.bf16.mxu0 0
      %2434 = vmatmul.mubr.bf16.gmra.mrb[0].mxu0 %v2346
      %v2435 = vpop.f32.mrb[0].mxu0
      %v2436 = vadd.f32 0.0, %v2435
      %v2437 = vpop.f32.mrb[0].mxu0
      %v2438 = vpop.f32.mrb[0].mxu0
      %v2439 = vadd.f32 0.0, %v2438
      %v2440 = vpop.f32.mrb[0].mxu0
      %2441 = vmatprep.mubr.bf16.mxu0 0
      %2442 = vmatmul.mubr.bf16.gmra.mrb[0].mxu0 %v2349
      %v2443 = vpop.f32.mrb[0].mxu0
      %v2444 = vadd.f32 0.0, %v2443
      %v2445 = vpop.f32.mrb[0].mxu0
      %v2446 = vpop.f32.mrb[0].mxu0
      %v2447 = vadd.f32 0.0, %v2446
      %v2448 = vpop.f32.mrb[0].mxu0
      %2449 = vmatprep.mubr.bf16.mxu0 0
      %2450 = vmatmul.mubr.bf16.gmra.mrb[0].mxu0 %v2352
      %v2451 = vpop.f32.mrb[0].mxu0
      %v2452 = vadd.f32 0.0, %v2451
      %v2453 = vpop.f32.mrb[0].mxu0
      %v2454 = vpop.f32.mrb[0].mxu0
      %v2455 = vadd.f32 0.0, %v2454
      %v2456 = vpop.f32.mrb[0].mxu0
      %2457 = vmatprep.mubr.bf16.mxu0 0
      %2458 = vmatmul.mubr.bf16.gmra.mrb[0].mxu0 %v2355
      %v2459 = vpop.f32.mrb[0].mxu0
      %v2460 = vadd.f32 0.0, %v2459
      %v2461 = vpop.f32.mrb[0].mxu0
      %v2462 = vpop.f32.mrb[0].mxu0
      %v2463 = vadd.f32 0.0, %v2462
      %v2464 = vpop.f32.mrb[0].mxu0
      %2465 = vmatprep.mubr.bf16.mxu0 0
      %2466 = vmatmul.mubr.bf16.gmra.mrb[0].mxu0 %v2358
      %v2467 = vpop.f32.mrb[0].mxu0
      %v2468 = vadd.f32 0.0, %v2467
      %v2469 = vpop.f32.mrb[0].mxu0
      %v2470 = vpop.f32.mrb[0].mxu0
      %v2471 = vadd.f32 0.0, %v2470
      %v2472 = vpop.f32.mrb[0].mxu0
      %2473 = vmatprep.mubr.bf16.mxu0 0
      %2474 = vmatmul.mubr.bf16.gmra.mrb[0].mxu0 %v2361
      %v2475 = vpop.f32.mrb[0].mxu0
      %v2476 = vadd.f32 0.0, %v2475
      %v2477 = vpop.f32.mrb[0].mxu0
      %v2478 = vpop.f32.mrb[0].mxu0
      %v2479 = vadd.f32 0.0, %v2478
      %v2480 = vpop.f32.mrb[0].mxu0
      %2481 = vmatprep.mubr.bf16.mxu0 0
      %2482 = vmatmul.mubr.bf16.gmra.mrb[0].mxu0 %v2364
      %v2483 = vpop.f32.mrb[0].mxu0
      %v2484 = vadd.f32 0.0, %v2483
      %v2485 = vpop.f32.mrb[0].mxu0
      %v2486 = vpop.f32.mrb[0].mxu0
      %v2487 = vadd.f32 0.0, %v2486
      %v2488 = vpop.f32.mrb[0].mxu0
      %2489 = vmatprep.mubr.bf16.mxu0 0
      %2490 = vmatmul.mubr.bf16.gmra.mrb[0].mxu0 %v2367
      %v2491 = vpop.f32.mrb[0].mxu0
      %v2492 = vadd.f32 0.0, %v2491
      %v2493 = vpop.f32.mrb[0].mxu0
      %v2494 = vpop.f32.mrb[0].mxu0
      %v2495 = vadd.f32 0.0, %v2494
      %v2496 = vpop.f32.mrb[0].mxu0
      %2497 = vmatprep.mubr.bf16.mxu0 0
      %2498 = vmatmul.mubr.bf16.gmra.mrb[0].mxu0 %v2370
      %v2499 = vpop.f32.mrb[0].mxu0
      %v2500 = vadd.f32 0.0, %v2499
      %v2501 = vpop.f32.mrb[0].mxu0
      %v2502 = vpop.f32.mrb[0].mxu0
      %v2503 = vadd.f32 0.0, %v2502
      %v2504 = vpop.f32.mrb[0].mxu0
      %2505 = vmatprep.mubr.bf16.mxu0 0
      %2506 = vmatmul.mubr.bf16.gmra.mrb[0].mxu0 %v2373
      %v2507 = vpop.f32.mrb[0].mxu0
      %v2508 = vadd.f32 0.0, %v2507
      %v2509 = vpop.f32.mrb[0].mxu0
      %v2510 = vpop.f32.mrb[0].mxu0
      %v2511 = vadd.f32 0.0, %v2510
      %v2512 = vpop.f32.mrb[0].mxu0
      %2513 = vmatprep.mubr.bf16.mxu0 0
      %2514 = vmatmul.mubr.bf16.gmra.mrb[0].mxu0 %v2376
      %v2515 = vpop.f32.mrb[0].mxu0
      %v2516 = vadd.f32 0.0, %v2515
      %v2517 = vpop.f32.mrb[0].mxu0
      %v2518 = vpop.f32.mrb[0].mxu0
      %v2519 = vadd.f32 0.0, %v2518
      %v2520 = vpop.f32.mrb[0].mxu0
      %2521 = vmatprep.mubr.bf16.mxu0 0
      %2522 = vmatmul.mubr.bf16.gmra.mrb[0].mxu0 %v2379
      %v2523 = vpop.f32.mrb[0].mxu0
      %v2524 = vadd.f32 0.0, %v2523
      %v2525 = vpop.f32.mrb[0].mxu0
      %v2526 = vpop.f32.mrb[0].mxu0
      %v2527 = vadd.f32 0.0, %v2526
      %v2528 = vpop.f32.mrb[0].mxu0
      %2529 = vmatprep.mubr.bf16.mxu0 0
      %2530 = vmatmul.mubr.bf16.gmra.mrb[0].mxu0 %v2382
      %v2531 = vpop.f32.mrb[0].mxu0
      %v2532 = vadd.f32 0.0, %v2531
      %v2533 = vpop.f32.mrb[0].mxu0
      %v2534 = vpop.f32.mrb[0].mxu0
      %v2535 = vadd.f32 0.0, %v2534
      %v2536 = vpop.f32.mrb[0].mxu0
      %2537 = vmatprep.mubr.bf16.mxu0 0
      %2538 = vmatmul.mubr.bf16.gmra.mrb[0].mxu0 %v2385
      %v2539 = vpop.f32.mrb[0].mxu0
      %v2540 = vadd.f32 0.0, %v2539
      %v2541 = vpop.f32.mrb[0].mxu0
      %v2542 = vpop.f32.mrb[0].mxu0
      %v2543 = vadd.f32 0.0, %v2542
      %v2544 = vpop.f32.mrb[0].mxu0
      %2545 = vmatprep.mubr.bf16.mxu0 0
      %2546 = vmatmul.mubr.bf16.gmra.mrb[0].mxu0 %v2388
      %v2547 = vpop.f32.mrb[0].mxu0
      %v2548 = vadd.f32 0.0, %v2547
      %v2549 = vpop.f32.mrb[0].mxu0
      %v2550 = vpop.f32.mrb[0].mxu0
      %v2551 = vadd.f32 0.0, %v2550
      %v2552 = vpop.f32.mrb[0].mxu0
      %2553 = vdwg.mxu0
      %v2554 = vadd.f32 %v2310, %v2428
      %v2555 = vadd.f32 %v2311, %v2431
      %v2556 = vadd.f32 %v2312, %v2436
      %v2557 = vadd.f32 %v2313, %v2439
      %v2558 = vadd.f32 %v2314, %v2444
      %v2559 = vadd.f32 %v2315, %v2447
      %v2560 = vadd.f32 %v2316, %v2452
      %v2561 = vadd.f32 %v2317, %v2455
      %v2562 = vadd.f32 %v2318, %v2460
      %v2563 = vadd.f32 %v2319, %v2463
      %v2564 = vadd.f32 %v2320, %v2468
      %v2565 = vadd.f32 %v2321, %v2471
      %v2566 = vadd.f32 %v2322, %v2476
      %v2567 = vadd.f32 %v2323, %v2479
      %v2568 = vadd.f32 %v2324, %v2484
      %v2569 = vadd.f32 %v2325, %v2487
      %v2570 = vadd.f32 %v2326, %v2492
      %v2571 = vadd.f32 %v2327, %v2495
      %v2572 = vadd.f32 %v2328, %v2500
      %v2573 = vadd.f32 %v2329, %v2503
      %v2574 = vadd.f32 %v2330, %v2508
      %v2575 = vadd.f32 %v2331, %v2511
      %v2576 = vadd.f32 %v2332, %v2516
      %v2577 = vadd.f32 %v2333, %v2519
      %v2578 = vadd.f32 %v2334, %v2524
      %v2579 = vadd.f32 %v2335, %v2527
      %v2580 = vadd.f32 %v2336, %v2532
      %v2581 = vadd.f32 %v2337, %v2535
      %v2582 = vadd.f32 %v2338, %v2540
      %v2583 = vadd.f32 %v2339, %v2543
      %v2584 = vadd.f32 %v2340, %v2548
      %v2585 = vadd.f32 %v2341, %v2551
      %2586 = vst.msk [vmem:[#allocation3] sm:$0xff] %vm322, %v2554
      %2587 = vst.msk [vmem:[#allocation3 + $0x8] sm:$0xff] %vm322, %v2555
      %2588 = vst.msk [vmem:[#allocation3 + $0x10] sm:$0xff] %vm322, %v2556
      %2589 = vst.msk [vmem:[#allocation3 + $0x18] sm:$0xff] %vm322, %v2557
      %2590 = vst.msk [vmem:[#allocation3 + $0x20] sm:$0xff] %vm322, %v2558
      %2591 = vst.msk [vmem:[#allocation3 + $0x28] sm:$0xff] %vm322, %v2559
      %2592 = vst.msk [vmem:[#allocation3 + $0x30] sm:$0xff] %vm322, %v2560
      %2593 = vst.msk [vmem:[#allocation3 + $0x38] sm:$0xff] %vm322, %v2561
      %2594 = vst.msk [vmem:[#allocation3 + $0x40] sm:$0xff] %vm322, %v2562
      %2595 = vst.msk [vmem:[#allocation3 + $0x48] sm:$0xff] %vm322, %v2563
      %2596 = vst.msk [vmem:[#allocation3 + $0x50] sm:$0xff] %vm322, %v2564
      %2597 = vst.msk [vmem:[#allocation3 + $0x58] sm:$0xff] %vm322, %v2565
      %2598 = vst.msk [vmem:[#allocation3 + $0x60] sm:$0xff] %vm322, %v2566
      %2599 = vst.msk [vmem:[#allocation3 + $0x68] sm:$0xff] %vm322, %v2567
      %2600 = vst.msk [vmem:[#allocation3 + $0x70] sm:$0xff] %vm322, %v2568
      %2601 = vst.msk [vmem:[#allocation3 + $0x78] sm:$0xff] %vm322, %v2569
      %2602 = vst.msk [vmem:[#allocation3 + $0x80] sm:$0xff] %vm322, %v2570
      %2603 = vst.msk [vmem:[#allocation3 + $0x88] sm:$0xff] %vm322, %v2571
      %2604 = vst.msk [vmem:[#allocation3 + $0x90] sm:$0xff] %vm322, %v2572
      %2605 = vst.msk [vmem:[#allocation3 + $0x98] sm:$0xff] %vm322, %v2573
      %2606 = vst.msk [vmem:[#allocation3 + $0xa0] sm:$0xff] %vm322, %v2574
      %2607 = vst.msk [vmem:[#allocation3 + $0xa8] sm:$0xff] %vm322, %v2575
      %2608 = vst.msk [vmem:[#allocation3 + $0xb0] sm:$0xff] %vm322, %v2576
      %2609 = vst.msk [vmem:[#allocation3 + $0xb8] sm:$0xff] %vm322, %v2577
      %2610 = vst.msk [vmem:[#allocation3 + $0xc0] sm:$0xff] %vm322, %v2578
      %2611 = vst.msk [vmem:[#allocation3 + $0xc8] sm:$0xff] %vm322, %v2579
      %2612 = vst.msk [vmem:[#allocation3 + $0xd0] sm:$0xff] %vm322, %v2580
      %2613 = vst.msk [vmem:[#allocation3 + $0xd8] sm:$0xff] %vm322, %v2581
      %2614 = vst.msk [vmem:[#allocation3 + $0xe0] sm:$0xff] %vm322, %v2582
      %2615 = vst.msk [vmem:[#allocation3 + $0xe8] sm:$0xff] %vm322, %v2583
      %2616 = vst.msk [vmem:[#allocation3 + $0xf0] sm:$0xff] %vm322, %v2584
      %2617 = vst.msk [vmem:[#allocation3 + $0xf8] sm:$0xff] %vm322, %v2585
      %s2618 = scalar_lea.vmem [#allocation2], 48
      %v2619 = vld [vmem:[%s2618] sm:$0xff]
      %v2620 = vld [vmem:[%s2618 + $0x8] sm:$0xff]
      %v2621 = vld [vmem:[%s2618 + $0x18] sm:$0xff]
      %v2622 = vld [vmem:[%s2618 + $0x20] sm:$0xff]
      %v2623 = vld [vmem:[%s2618 + $0x30] sm:$0xff]
      %v2624 = vld [vmem:[%s2618 + $0x38] sm:$0xff]
      %v2625 = vld [vmem:[%s2618 + $0x48] sm:$0xff]
      %v2626 = vld [vmem:[%s2618 + $0x50] sm:$0xff]
      %v2627 = vld [vmem:[%s2618 + $0x60] sm:$0xff]
      %v2628 = vld [vmem:[%s2618 + $0x68] sm:$0xff]
      %v2629 = vld [vmem:[%s2618 + $0x78] sm:$0xff]
      %v2630 = vld [vmem:[%s2618 + $0x80] sm:$0xff]
      %v2631 = vld [vmem:[%s2618 + $0x90] sm:$0xff]
      %v2632 = vld [vmem:[%s2618 + $0x98] sm:$0xff]
      %v2633 = vld [vmem:[%s2618 + $0xa8] sm:$0xff]
      %v2634 = vld [vmem:[%s2618 + $0xb0] sm:$0xff]
      %v2635 = vld [vmem:[%s2618 + $0xc0] sm:$0xff]
      %v2636 = vld [vmem:[%s2618 + $0xc8] sm:$0xff]
      %v2637 = vld [vmem:[%s2618 + $0xd8] sm:$0xff]
      %v2638 = vld [vmem:[%s2618 + $0xe0] sm:$0xff]
      %v2639 = vld [vmem:[%s2618 + $0xf0] sm:$0xff]
      %v2640 = vld [vmem:[%s2618 + $0xf8] sm:$0xff]
      %v2641 = vld [vmem:[%s2618 + $0x108] sm:$0xff]
      %v2642 = vld [vmem:[%s2618 + $0x110] sm:$0xff]
      %v2643 = vld [vmem:[%s2618 + $0x120] sm:$0xff]
      %v2644 = vld [vmem:[%s2618 + $0x128] sm:$0xff]
      %v2645 = vld [vmem:[%s2618 + $0x138] sm:$0xff]
      %v2646 = vld [vmem:[%s2618 + $0x140] sm:$0xff]
      %v2647 = vld [vmem:[%s2618 + $0x150] sm:$0xff]
      %v2648 = vld [vmem:[%s2618 + $0x158] sm:$0xff]
      %v2649 = vld [vmem:[%s2618 + $0x168] sm:$0xff]
      %v2650 = vld [vmem:[%s2618 + $0x170] sm:$0xff]
      %v2651 = vpack.c.bf16 %v2620, %v2619
      %v2652 = vpack.c.bf16 %v2622, %v2621
      %v2653 = vpack.c.bf16 %v2624, %v2623
      %v2654 = vpack.c.bf16 %v2626, %v2625
      %v2655 = vpack.c.bf16 %v2628, %v2627
      %v2656 = vpack.c.bf16 %v2630, %v2629
      %v2657 = vpack.c.bf16 %v2632, %v2631
      %v2658 = vpack.c.bf16 %v2634, %v2633
      %v2659 = vpack.c.bf16 %v2636, %v2635
      %v2660 = vpack.c.bf16 %v2638, %v2637
      %v2661 = vpack.c.bf16 %v2640, %v2639
      %v2662 = vpack.c.bf16 %v2642, %v2641
      %v2663 = vpack.c.bf16 %v2644, %v2643
      %v2664 = vpack.c.bf16 %v2646, %v2645
      %v2665 = vpack.c.bf16 %v2648, %v2647
      %v2666 = vpack.c.bf16 %v2650, %v2649
      %v2667 = vld [vmem:[%s298 + $0x18] sm:$0xf]
      %v2668 = vld [vmem:[#allocation3] sm:$0xff]
      %v2669 = vld [vmem:[#allocation3 + $0x8] sm:$0xff]
      %v2670 = vld [vmem:[#allocation3 + $0x10] sm:$0xff]
      %v2671 = vld [vmem:[#allocation3 + $0x18] sm:$0xff]
      %v2672 = vld [vmem:[#allocation3 + $0x20] sm:$0xff]
      %v2673 = vld [vmem:[#allocation3 + $0x28] sm:$0xff]
      %v2674 = vld [vmem:[#allocation3 + $0x30] sm:$0xff]
      %v2675 = vld [vmem:[#allocation3 + $0x38] sm:$0xff]
      %v2676 = vld [vmem:[#allocation3 + $0x40] sm:$0xff]
      %v2677 = vld [vmem:[#allocation3 + $0x48] sm:$0xff]
      %v2678 = vld [vmem:[#allocation3 + $0x50] sm:$0xff]
      %v2679 = vld [vmem:[#allocation3 + $0x58] sm:$0xff]
      %v2680 = vld [vmem:[#allocation3 + $0x60] sm:$0xff]
      %v2681 = vld [vmem:[#allocation3 + $0x68] sm:$0xff]
      %v2682 = vld [vmem:[#allocation3 + $0x70] sm:$0xff]
      %v2683 = vld [vmem:[#allocation3 + $0x78] sm:$0xff]
      %v2684 = vld [vmem:[#allocation3 + $0x80] sm:$0xff]
      %v2685 = vld [vmem:[#allocation3 + $0x88] sm:$0xff]
      %v2686 = vld [vmem:[#allocation3 + $0x90] sm:$0xff]
      %v2687 = vld [vmem:[#allocation3 + $0x98] sm:$0xff]
      %v2688 = vld [vmem:[#allocation3 + $0xa0] sm:$0xff]
      %v2689 = vld [vmem:[#allocation3 + $0xa8] sm:$0xff]
      %v2690 = vld [vmem:[#allocation3 + $0xb0] sm:$0xff]
      %v2691 = vld [vmem:[#allocation3 + $0xb8] sm:$0xff]
      %v2692 = vld [vmem:[#allocation3 + $0xc0] sm:$0xff]
      %v2693 = vld [vmem:[#allocation3 + $0xc8] sm:$0xff]
      %v2694 = vld [vmem:[#allocation3 + $0xd0] sm:$0xff]
      %v2695 = vld [vmem:[#allocation3 + $0xd8] sm:$0xff]
      %v2696 = vld [vmem:[#allocation3 + $0xe0] sm:$0xff]
      %v2697 = vld [vmem:[#allocation3 + $0xe8] sm:$0xff]
      %v2698 = vld [vmem:[#allocation3 + $0xf0] sm:$0xff]
      %v2699 = vld [vmem:[#allocation3 + $0xf8] sm:$0xff]
      %v2701 = vsel %vm322, %v2651, 0
      %v2704 = vsel %vm322, %v2652, 0
      %v2707 = vsel %vm322, %v2653, 0
      %v2710 = vsel %vm322, %v2654, 0
      %v2713 = vsel %vm322, %v2655, 0
      %v2716 = vsel %vm322, %v2656, 0
      %v2719 = vsel %vm322, %v2657, 0
      %v2722 = vsel %vm322, %v2658, 0
      %v2725 = vsel %vm322, %v2659, 0
      %v2728 = vsel %vm322, %v2660, 0
      %v2731 = vsel %vm322, %v2661, 0
      %v2734 = vsel %vm322, %v2662, 0
      %v2737 = vsel %vm322, %v2663, 0
      %v2740 = vsel %vm322, %v2664, 0
      %v2743 = vsel %vm322, %v2665, 0
      %v2746 = vsel %vm322, %v2666, 0
      %v2749 = vsel %vm604, %v2667, 0
      %2751 = vmatprep.subr.bf16.mxu0 0
      %2752 = vmatpush1.bf16.msra.mxu0 %v2749
      %2753 = vmatprep.subr.bf16.mxu0 0
      %2754 = vmatpush1.bf16.msra.mxu0 0
      %2755 = vmatprep.subr.bf16.mxu0 0
      %2756 = vmatpush1.bf16.msra.mxu0 0
      %2757 = vmatprep.subr.bf16.mxu0 0
      %2758 = vmatpush1.bf16.msra.mxu0 0
      %2759 = vmatprep.subr.bf16.mxu0 0
      %2760 = vmatpush1.bf16.msra.mxu0 0
      %2761 = vmatprep.subr.bf16.mxu0 0
      %2762 = vmatpush1.bf16.msra.mxu0 0
      %2763 = vmatprep.subr.bf16.mxu0 0
      %2764 = vmatpush1.bf16.msra.mxu0 0
      %2765 = vmatprep.subr.bf16.mxu0 0
      %2766 = vmatpush1.bf16.msra.mxu0 0
      %2767 = vmatprep.subr.bf16.mxu0 0
      %2768 = vmatpush1.bf16.msra.mxu0 0
      %2769 = vmatprep.subr.bf16.mxu0 0
      %2770 = vmatpush1.bf16.msra.mxu0 0
      %2771 = vmatprep.subr.bf16.mxu0 0
      %2772 = vmatpush1.bf16.msra.mxu0 0
      %2773 = vmatprep.subr.bf16.mxu0 0
      %2774 = vmatpush1.bf16.msra.mxu0 0
      %2775 = vmatprep.subr.bf16.mxu0 0
      %2776 = vmatpush1.bf16.msra.mxu0 0
      %2777 = vmatprep.subr.bf16.mxu0 0
      %2778 = vmatpush1.bf16.msra.mxu0 0
      %2779 = vmatprep.subr.bf16.mxu0 0
      %2780 = vmatpush1.bf16.msra.mxu0 0
      %2781 = vmatprep.subr.bf16.mxu0 0
      %2782 = vmatpush1.bf16.msra.mxu0 0
      %2783 = vmatprep.mubr.bf16.mxu0 0
      %2784 = vmatmul.mubr.bf16.gmra.mrb[0].mxu0 %v2701
      %v2785 = vpop.f32.mrb[0].mxu0
      %v2786 = vadd.f32 0.0, %v2785
      %v2787 = vpop.f32.mrb[0].mxu0
      %v2788 = vpop.f32.mrb[0].mxu0
      %v2789 = vadd.f32 0.0, %v2788
      %v2790 = vpop.f32.mrb[0].mxu0
      %2791 = vmatprep.mubr.bf16.mxu0 0
      %2792 = vmatmul.mubr.bf16.gmra.mrb[0].mxu0 %v2704
      %v2793 = vpop.f32.mrb[0].mxu0
      %v2794 = vadd.f32 0.0, %v2793
      %v2795 = vpop.f32.mrb[0].mxu0
      %v2796 = vpop.f32.mrb[0].mxu0
      %v2797 = vadd.f32 0.0, %v2796
      %v2798 = vpop.f32.mrb[0].mxu0
      %2799 = vmatprep.mubr.bf16.mxu0 0
      %2800 = vmatmul.mubr.bf16.gmra.mrb[0].mxu0 %v2707
      %v2801 = vpop.f32.mrb[0].mxu0
      %v2802 = vadd.f32 0.0, %v2801
      %v2803 = vpop.f32.mrb[0].mxu0
      %v2804 = vpop.f32.mrb[0].mxu0
      %v2805 = vadd.f32 0.0, %v2804
      %v2806 = vpop.f32.mrb[0].mxu0
      %2807 = vmatprep.mubr.bf16.mxu0 0
      %2808 = vmatmul.mubr.bf16.gmra.mrb[0].mxu0 %v2710
      %v2809 = vpop.f32.mrb[0].mxu0
      %v2810 = vadd.f32 0.0, %v2809
      %v2811 = vpop.f32.mrb[0].mxu0
      %v2812 = vpop.f32.mrb[0].mxu0
      %v2813 = vadd.f32 0.0, %v2812
      %v2814 = vpop.f32.mrb[0].mxu0
      %2815 = vmatprep.mubr.bf16.mxu0 0
      %2816 = vmatmul.mubr.bf16.gmra.mrb[0].mxu0 %v2713
      %v2817 = vpop.f32.mrb[0].mxu0
      %v2818 = vadd.f32 0.0, %v2817
      %v2819 = vpop.f32.mrb[0].mxu0
      %v2820 = vpop.f32.mrb[0].mxu0
      %v2821 = vadd.f32 0.0, %v2820
      %v2822 = vpop.f32.mrb[0].mxu0
      %2823 = vmatprep.mubr.bf16.mxu0 0
      %2824 = vmatmul.mubr.bf16.gmra.mrb[0].mxu0 %v2716
      %v2825 = vpop.f32.mrb[0].mxu0
      %v2826 = vadd.f32 0.0, %v2825
      %v2827 = vpop.f32.mrb[0].mxu0
      %v2828 = vpop.f32.mrb[0].mxu0
      %v2829 = vadd.f32 0.0, %v2828
      %v2830 = vpop.f32.mrb[0].mxu0
      %2831 = vmatprep.mubr.bf16.mxu0 0
      %2832 = vmatmul.mubr.bf16.gmra.mrb[0].mxu0 %v2719
      %v2833 = vpop.f32.mrb[0].mxu0
      %v2834 = vadd.f32 0.0, %v2833
      %v2835 = vpop.f32.mrb[0].mxu0
      %v2836 = vpop.f32.mrb[0].mxu0
      %v2837 = vadd.f32 0.0, %v2836
      %v2838 = vpop.f32.mrb[0].mxu0
      %2839 = vmatprep.mubr.bf16.mxu0 0
      %2840 = vmatmul.mubr.bf16.gmra.mrb[0].mxu0 %v2722
      %v2841 = vpop.f32.mrb[0].mxu0
      %v2842 = vadd.f32 0.0, %v2841
      %v2843 = vpop.f32.mrb[0].mxu0
      %v2844 = vpop.f32.mrb[0].mxu0
      %v2845 = vadd.f32 0.0, %v2844
      %v2846 = vpop.f32.mrb[0].mxu0
      %2847 = vmatprep.mubr.bf16.mxu0 0
      %2848 = vmatmul.mubr.bf16.gmra.mrb[0].mxu0 %v2725
      %v2849 = vpop.f32.mrb[0].mxu0
      %v2850 = vadd.f32 0.0, %v2849
      %v2851 = vpop.f32.mrb[0].mxu0
      %v2852 = vpop.f32.mrb[0].mxu0
      %v2853 = vadd.f32 0.0, %v2852
      %v2854 = vpop.f32.mrb[0].mxu0
      %2855 = vmatprep.mubr.bf16.mxu0 0
      %2856 = vmatmul.mubr.bf16.gmra.mrb[0].mxu0 %v2728
      %v2857 = vpop.f32.mrb[0].mxu0
      %v2858 = vadd.f32 0.0, %v2857
      %v2859 = vpop.f32.mrb[0].mxu0
      %v2860 = vpop.f32.mrb[0].mxu0
      %v2861 = vadd.f32 0.0, %v2860
      %v2862 = vpop.f32.mrb[0].mxu0
      %2863 = vmatprep.mubr.bf16.mxu0 0
      %2864 = vmatmul.mubr.bf16.gmra.mrb[0].mxu0 %v2731
      %v2865 = vpop.f32.mrb[0].mxu0
      %v2866 = vadd.f32 0.0, %v2865
      %v2867 = vpop.f32.mrb[0].mxu0
      %v2868 = vpop.f32.mrb[0].mxu0
      %v2869 = vadd.f32 0.0, %v2868
      %v2870 = vpop.f32.mrb[0].mxu0
      %2871 = vmatprep.mubr.bf16.mxu0 0
      %2872 = vmatmul.mubr.bf16.gmra.mrb[0].mxu0 %v2734
      %v2873 = vpop.f32.mrb[0].mxu0
      %v2874 = vadd.f32 0.0, %v2873
      %v2875 = vpop.f32.mrb[0].mxu0
      %v2876 = vpop.f32.mrb[0].mxu0
      %v2877 = vadd.f32 0.0, %v2876
      %v2878 = vpop.f32.mrb[0].mxu0
      %2879 = vmatprep.mubr.bf16.mxu0 0
      %2880 = vmatmul.mubr.bf16.gmra.mrb[0].mxu0 %v2737
      %v2881 = vpop.f32.mrb[0].mxu0
      %v2882 = vadd.f32 0.0, %v2881
      %v2883 = vpop.f32.mrb[0].mxu0
      %v2884 = vpop.f32.mrb[0].mxu0
      %v2885 = vadd.f32 0.0, %v2884
      %v2886 = vpop.f32.mrb[0].mxu0
      %2887 = vmatprep.mubr.bf16.mxu0 0
      %2888 = vmatmul.mubr.bf16.gmra.mrb[0].mxu0 %v2740
      %v2889 = vpop.f32.mrb[0].mxu0
      %v2890 = vadd.f32 0.0, %v2889
      %v2891 = vpop.f32.mrb[0].mxu0
      %v2892 = vpop.f32.mrb[0].mxu0
      %v2893 = vadd.f32 0.0, %v2892
      %v2894 = vpop.f32.mrb[0].mxu0
      %2895 = vmatprep.mubr.bf16.mxu0 0
      %2896 = vmatmul.mubr.bf16.gmra.mrb[0].mxu0 %v2743
      %v2897 = vpop.f32.mrb[0].mxu0
      %v2898 = vadd.f32 0.0, %v2897
      %v2899 = vpop.f32.mrb[0].mxu0
      %v2900 = vpop.f32.mrb[0].mxu0
      %v2901 = vadd.f32 0.0, %v2900
      %v2902 = vpop.f32.mrb[0].mxu0
      %2903 = vmatprep.mubr.bf16.mxu0 0
      %2904 = vmatmul.mubr.bf16.gmra.mrb[0].mxu0 %v2746
      %v2905 = vpop.f32.mrb[0].mxu0
      %v2906 = vadd.f32 0.0, %v2905
      %v2907 = vpop.f32.mrb[0].mxu0
      %v2908 = vpop.f32.mrb[0].mxu0
      %v2909 = vadd.f32 0.0, %v2908
      %v2910 = vpop.f32.mrb[0].mxu0
      %2911 = vdwg.mxu0
      %v2912 = vadd.f32 %v2668, %v2786
      %v2913 = vadd.f32 %v2669, %v2789
      %v2914 = vadd.f32 %v2670, %v2794
      %v2915 = vadd.f32 %v2671, %v2797
      %v2916 = vadd.f32 %v2672, %v2802
      %v2917 = vadd.f32 %v2673, %v2805
      %v2918 = vadd.f32 %v2674, %v2810
      %v2919 = vadd.f32 %v2675, %v2813
      %v2920 = vadd.f32 %v2676, %v2818
      %v2921 = vadd.f32 %v2677, %v2821
      %v2922 = vadd.f32 %v2678, %v2826
      %v2923 = vadd.f32 %v2679, %v2829
      %v2924 = vadd.f32 %v2680, %v2834
      %v2925 = vadd.f32 %v2681, %v2837
      %v2926 = vadd.f32 %v2682, %v2842
      %v2927 = vadd.f32 %v2683, %v2845
      %v2928 = vadd.f32 %v2684, %v2850
      %v2929 = vadd.f32 %v2685, %v2853
      %v2930 = vadd.f32 %v2686, %v2858
      %v2931 = vadd.f32 %v2687, %v2861
      %v2932 = vadd.f32 %v2688, %v2866
      %v2933 = vadd.f32 %v2689, %v2869
      %v2934 = vadd.f32 %v2690, %v2874
      %v2935 = vadd.f32 %v2691, %v2877
      %v2936 = vadd.f32 %v2692, %v2882
      %v2937 = vadd.f32 %v2693, %v2885
      %v2938 = vadd.f32 %v2694, %v2890
      %v2939 = vadd.f32 %v2695, %v2893
      %v2940 = vadd.f32 %v2696, %v2898
      %v2941 = vadd.f32 %v2697, %v2901
      %v2942 = vadd.f32 %v2698, %v2906
      %v2943 = vadd.f32 %v2699, %v2909
      %2944 = vst.msk [vmem:[#allocation3] sm:$0xff] %vm322, %v2912
      %2945 = vst.msk [vmem:[#allocation3 + $0x8] sm:$0xff] %vm322, %v2913
      %2946 = vst.msk [vmem:[#allocation3 + $0x10] sm:$0xff] %vm322, %v2914
      %2947 = vst.msk [vmem:[#allocation3 + $0x18] sm:$0xff] %vm322, %v2915
      %2948 = vst.msk [vmem:[#allocation3 + $0x20] sm:$0xff] %vm322, %v2916
      %2949 = vst.msk [vmem:[#allocation3 + $0x28] sm:$0xff] %vm322, %v2917
      %2950 = vst.msk [vmem:[#allocation3 + $0x30] sm:$0xff] %vm322, %v2918
      %2951 = vst.msk [vmem:[#allocation3 + $0x38] sm:$0xff] %vm322, %v2919
      %2952 = vst.msk [vmem:[#allocation3 + $0x40] sm:$0xff] %vm322, %v2920
      %2953 = vst.msk [vmem:[#allocation3 + $0x48] sm:$0xff] %vm322, %v2921
      %2954 = vst.msk [vmem:[#allocation3 + $0x50] sm:$0xff] %vm322, %v2922
      %2955 = vst.msk [vmem:[#allocation3 + $0x58] sm:$0xff] %vm322, %v2923
      %2956 = vst.msk [vmem:[#allocation3 + $0x60] sm:$0xff] %vm322, %v2924
      %2957 = vst.msk [vmem:[#allocation3 + $0x68] sm:$0xff] %vm322, %v2925
      %2958 = vst.msk [vmem:[#allocation3 + $0x70] sm:$0xff] %vm322, %v2926
      %2959 = vst.msk [vmem:[#allocation3 + $0x78] sm:$0xff] %vm322, %v2927
      %2960 = vst.msk [vmem:[#allocation3 + $0x80] sm:$0xff] %vm322, %v2928
      %2961 = vst.msk [vmem:[#allocation3 + $0x88] sm:$0xff] %vm322, %v2929
      %2962 = vst.msk [vmem:[#allocation3 + $0x90] sm:$0xff] %vm322, %v2930
      %2963 = vst.msk [vmem:[#allocation3 + $0x98] sm:$0xff] %vm322, %v2931
      %2964 = vst.msk [vmem:[#allocation3 + $0xa0] sm:$0xff] %vm322, %v2932
      %2965 = vst.msk [vmem:[#allocation3 + $0xa8] sm:$0xff] %vm322, %v2933
      %2966 = vst.msk [vmem:[#allocation3 + $0xb0] sm:$0xff] %vm322, %v2934
      %2967 = vst.msk [vmem:[#allocation3 + $0xb8] sm:$0xff] %vm322, %v2935
      %2968 = vst.msk [vmem:[#allocation3 + $0xc0] sm:$0xff] %vm322, %v2936
      %2969 = vst.msk [vmem:[#allocation3 + $0xc8] sm:$0xff] %vm322, %v2937
      %2970 = vst.msk [vmem:[#allocation3 + $0xd0] sm:$0xff] %vm322, %v2938
      %2971 = vst.msk [vmem:[#allocation3 + $0xd8] sm:$0xff] %vm322, %v2939
      %2972 = vst.msk [vmem:[#allocation3 + $0xe0] sm:$0xff] %vm322, %v2940
      %2973 = vst.msk [vmem:[#allocation3 + $0xe8] sm:$0xff] %vm322, %v2941
      %2974 = vst.msk [vmem:[#allocation3 + $0xf0] sm:$0xff] %vm322, %v2942
      %2975 = vst.msk [vmem:[#allocation3 + $0xf8] sm:$0xff] %vm322, %v2943
      %v2976 = vld [vmem:[%s2618 + $0x1] sm:$0xff]
      %v2977 = vld [vmem:[%s2618 + $0x9] sm:$0xff]
      %v2978 = vld [vmem:[%s2618 + $0x19] sm:$0xff]
      %v2979 = vld [vmem:[%s2618 + $0x21] sm:$0xff]
      %v2980 = vld [vmem:[%s2618 + $0x31] sm:$0xff]
      %v2981 = vld [vmem:[%s2618 + $0x39] sm:$0xff]
      %v2982 = vld [vmem:[%s2618 + $0x49] sm:$0xff]
      %v2983 = vld [vmem:[%s2618 + $0x51] sm:$0xff]
      %v2984 = vld [vmem:[%s2618 + $0x61] sm:$0xff]
      %v2985 = vld [vmem:[%s2618 + $0x69] sm:$0xff]
      %v2986 = vld [vmem:[%s2618 + $0x79] sm:$0xff]
      %v2987 = vld [vmem:[%s2618 + $0x81] sm:$0xff]
      %v2988 = vld [vmem:[%s2618 + $0x91] sm:$0xff]
      %v2989 = vld [vmem:[%s2618 + $0x99] sm:$0xff]
      %v2990 = vld [vmem:[%s2618 + $0xa9] sm:$0xff]
      %v2991 = vld [vmem:[%s2618 + $0xb1] sm:$0xff]
      %v2992 = vld [vmem:[%s2618 + $0xc1] sm:$0xff]
      %v2993 = vld [vmem:[%s2618 + $0xc9] sm:$0xff]
      %v2994 = vld [vmem:[%s2618 + $0xd9] sm:$0xff]
      %v2995 = vld [vmem:[%s2618 + $0xe1] sm:$0xff]
      %v2996 = vld [vmem:[%s2618 + $0xf1] sm:$0xff]
      %v2997 = vld [vmem:[%s2618 + $0xf9] sm:$0xff]
      %v2998 = vld [vmem:[%s2618 + $0x109] sm:$0xff]
      %v2999 = vld [vmem:[%s2618 + $0x111] sm:$0xff]
      %v3000 = vld [vmem:[%s2618 + $0x121] sm:$0xff]
      %v3001 = vld [vmem:[%s2618 + $0x129] sm:$0xff]
      %v3002 = vld [vmem:[%s2618 + $0x139] sm:$0xff]
      %v3003 = vld [vmem:[%s2618 + $0x141] sm:$0xff]
      %v3004 = vld [vmem:[%s2618 + $0x151] sm:$0xff]
      %v3005 = vld [vmem:[%s2618 + $0x159] sm:$0xff]
      %v3006 = vld [vmem:[%s2618 + $0x169] sm:$0xff]
      %v3007 = vld [vmem:[%s2618 + $0x171] sm:$0xff]
      %v3008 = vpack.c.bf16 %v2977, %v2976
      %v3009 = vpack.c.bf16 %v2979, %v2978
      %v3010 = vpack.c.bf16 %v2981, %v2980
      %v3011 = vpack.c.bf16 %v2983, %v2982
      %v3012 = vpack.c.bf16 %v2985, %v2984
      %v3013 = vpack.c.bf16 %v2987, %v2986
      %v3014 = vpack.c.bf16 %v2989, %v2988
      %v3015 = vpack.c.bf16 %v2991, %v2990
      %v3016 = vpack.c.bf16 %v2993, %v2992
      %v3017 = vpack.c.bf16 %v2995, %v2994
      %v3018 = vpack.c.bf16 %v2997, %v2996
      %v3019 = vpack.c.bf16 %v2999, %v2998
      %v3020 = vpack.c.bf16 %v3001, %v3000
      %v3021 = vpack.c.bf16 %v3003, %v3002
      %v3022 = vpack.c.bf16 %v3005, %v3004
      %v3023 = vpack.c.bf16 %v3007, %v3006
      %v3024 = vld [vmem:[%s298 + $0x1c] sm:$0xf]
      %v3025 = vld [vmem:[#allocation3] sm:$0xff]
      %v3026 = vld [vmem:[#allocation3 + $0x8] sm:$0xff]
      %v3027 = vld [vmem:[#allocation3 + $0x10] sm:$0xff]
      %v3028 = vld [vmem:[#allocation3 + $0x18] sm:$0xff]
      %v3029 = vld [vmem:[#allocation3 + $0x20] sm:$0xff]
      %v3030 = vld [vmem:[#allocation3 + $0x28] sm:$0xff]
      %v3031 = vld [vmem:[#allocation3 + $0x30] sm:$0xff]
      %v3032 = vld [vmem:[#allocation3 + $0x38] sm:$0xff]
      %v3033 = vld [vmem:[#allocation3 + $0x40] sm:$0xff]
      %v3034 = vld [vmem:[#allocation3 + $0x48] sm:$0xff]
      %v3035 = vld [vmem:[#allocation3 + $0x50] sm:$0xff]
      %v3036 = vld [vmem:[#allocation3 + $0x58] sm:$0xff]
      %v3037 = vld [vmem:[#allocation3 + $0x60] sm:$0xff]
      %v3038 = vld [vmem:[#allocation3 + $0x68] sm:$0xff]
      %v3039 = vld [vmem:[#allocation3 + $0x70] sm:$0xff]
      %v3040 = vld [vmem:[#allocation3 + $0x78] sm:$0xff]
      %v3041 = vld [vmem:[#allocation3 + $0x80] sm:$0xff]
      %v3042 = vld [vmem:[#allocation3 + $0x88] sm:$0xff]
      %v3043 = vld [vmem:[#allocation3 + $0x90] sm:$0xff]
      %v3044 = vld [vmem:[#allocation3 + $0x98] sm:$0xff]
      %v3045 = vld [vmem:[#allocation3 + $0xa0] sm:$0xff]
      %v3046 = vld [vmem:[#allocation3 + $0xa8] sm:$0xff]
      %v3047 = vld [vmem:[#allocation3 + $0xb0] sm:$0xff]
      %v3048 = vld [vmem:[#allocation3 + $0xb8] sm:$0xff]
      %v3049 = vld [vmem:[#allocation3 + $0xc0] sm:$0xff]
      %v3050 = vld [vmem:[#allocation3 + $0xc8] sm:$0xff]
      %v3051 = vld [vmem:[#allocation3 + $0xd0] sm:$0xff]
      %v3052 = vld [vmem:[#allocation3 + $0xd8] sm:$0xff]
      %v3053 = vld [vmem:[#allocation3 + $0xe0] sm:$0xff]
      %v3054 = vld [vmem:[#allocation3 + $0xe8] sm:$0xff]
      %v3055 = vld [vmem:[#allocation3 + $0xf0] sm:$0xff]
      %v3056 = vld [vmem:[#allocation3 + $0xf8] sm:$0xff]
      %v3058 = vsel %vm322, %v3008, 0
      %v3061 = vsel %vm322, %v3009, 0
      %v3064 = vsel %vm322, %v3010, 0
      %v3067 = vsel %vm322, %v3011, 0
      %v3070 = vsel %vm322, %v3012, 0
      %v3073 = vsel %vm322, %v3013, 0
      %v3076 = vsel %vm322, %v3014, 0
      %v3079 = vsel %vm322, %v3015, 0
      %v3082 = vsel %vm322, %v3016, 0
      %v3085 = vsel %vm322, %v3017, 0
      %v3088 = vsel %vm322, %v3018, 0
      %v3091 = vsel %vm322, %v3019, 0
      %v3094 = vsel %vm322, %v3020, 0
      %v3097 = vsel %vm322, %v3021, 0
      %v3100 = vsel %vm322, %v3022, 0
      %v3103 = vsel %vm322, %v3023, 0
      %v3106 = vsel %vm604, %v3024, 0
      %3108 = vmatprep.subr.bf16.mxu0 0
      %3109 = vmatpush1.bf16.msra.mxu0 %v3106
      %3110 = vmatprep.subr.bf16.mxu0 0
      %3111 = vmatpush1.bf16.msra.mxu0 0
      %3112 = vmatprep.subr.bf16.mxu0 0
      %3113 = vmatpush1.bf16.msra.mxu0 0
      %3114 = vmatprep.subr.bf16.mxu0 0
      %3115 = vmatpush1.bf16.msra.mxu0 0
      %3116 = vmatprep.subr.bf16.mxu0 0
      %3117 = vmatpush1.bf16.msra.mxu0 0
      %3118 = vmatprep.subr.bf16.mxu0 0
      %3119 = vmatpush1.bf16.msra.mxu0 0
      %3120 = vmatprep.subr.bf16.mxu0 0
      %3121 = vmatpush1.bf16.msra.mxu0 0
      %3122 = vmatprep.subr.bf16.mxu0 0
      %3123 = vmatpush1.bf16.msra.mxu0 0
      %3124 = vmatprep.subr.bf16.mxu0 0
      %3125 = vmatpush1.bf16.msra.mxu0 0
      %3126 = vmatprep.subr.bf16.mxu0 0
      %3127 = vmatpush1.bf16.msra.mxu0 0
      %3128 = vmatprep.subr.bf16.mxu0 0
      %3129 = vmatpush1.bf16.msra.mxu0 0
      %3130 = vmatprep.subr.bf16.mxu0 0
      %3131 = vmatpush1.bf16.msra.mxu0 0
      %3132 = vmatprep.subr.bf16.mxu0 0
      %3133 = vmatpush1.bf16.msra.mxu0 0
      %3134 = vmatprep.subr.bf16.mxu0 0
      %3135 = vmatpush1.bf16.msra.mxu0 0
      %3136 = vmatprep.subr.bf16.mxu0 0
      %3137 = vmatpush1.bf16.msra.mxu0 0
      %3138 = vmatprep.subr.bf16.mxu0 0
      %3139 = vmatpush1.bf16.msra.mxu0 0
      %3140 = vmatprep.mubr.bf16.mxu0 0
      %3141 = vmatmul.mubr.bf16.gmra.mrb[0].mxu0 %v3058
      %v3142 = vpop.f32.mrb[0].mxu0
      %v3143 = vadd.f32 0.0, %v3142
      %v3144 = vpop.f32.mrb[0].mxu0
      %v3145 = vpop.f32.mrb[0].mxu0
      %v3146 = vadd.f32 0.0, %v3145
      %v3147 = vpop.f32.mrb[0].mxu0
      %3148 = vmatprep.mubr.bf16.mxu0 0
      %3149 = vmatmul.mubr.bf16.gmra.mrb[0].mxu0 %v3061
      %v3150 = vpop.f32.mrb[0].mxu0
      %v3151 = vadd.f32 0.0, %v3150
      %v3152 = vpop.f32.mrb[0].mxu0
      %v3153 = vpop.f32.mrb[0].mxu0
      %v3154 = vadd.f32 0.0, %v3153
      %v3155 = vpop.f32.mrb[0].mxu0
      %3156 = vmatprep.mubr.bf16.mxu0 0
      %3157 = vmatmul.mubr.bf16.gmra.mrb[0].mxu0 %v3064
      %v3158 = vpop.f32.mrb[0].mxu0
      %v3159 = vadd.f32 0.0, %v3158
      %v3160 = vpop.f32.mrb[0].mxu0
      %v3161 = vpop.f32.mrb[0].mxu0
      %v3162 = vadd.f32 0.0, %v3161
      %v3163 = vpop.f32.mrb[0].mxu0
      %3164 = vmatprep.mubr.bf16.mxu0 0
      %3165 = vmatmul.mubr.bf16.gmra.mrb[0].mxu0 %v3067
      %v3166 = vpop.f32.mrb[0].mxu0
      %v3167 = vadd.f32 0.0, %v3166
      %v3168 = vpop.f32.mrb[0].mxu0
      %v3169 = vpop.f32.mrb[0].mxu0
      %v3170 = vadd.f32 0.0, %v3169
      %v3171 = vpop.f32.mrb[0].mxu0
      %3172 = vmatprep.mubr.bf16.mxu0 0
      %3173 = vmatmul.mubr.bf16.gmra.mrb[0].mxu0 %v3070
      %v3174 = vpop.f32.mrb[0].mxu0
      %v3175 = vadd.f32 0.0, %v3174
      %v3176 = vpop.f32.mrb[0].mxu0
      %v3177 = vpop.f32.mrb[0].mxu0
      %v3178 = vadd.f32 0.0, %v3177
      %v3179 = vpop.f32.mrb[0].mxu0
      %3180 = vmatprep.mubr.bf16.mxu0 0
      %3181 = vmatmul.mubr.bf16.gmra.mrb[0].mxu0 %v3073
      %v3182 = vpop.f32.mrb[0].mxu0
      %v3183 = vadd.f32 0.0, %v3182
      %v3184 = vpop.f32.mrb[0].mxu0
      %v3185 = vpop.f32.mrb[0].mxu0
      %v3186 = vadd.f32 0.0, %v3185
      %v3187 = vpop.f32.mrb[0].mxu0
      %3188 = vmatprep.mubr.bf16.mxu0 0
      %3189 = vmatmul.mubr.bf16.gmra.mrb[0].mxu0 %v3076
      %v3190 = vpop.f32.mrb[0].mxu0
      %v3191 = vadd.f32 0.0, %v3190
      %v3192 = vpop.f32.mrb[0].mxu0
      %v3193 = vpop.f32.mrb[0].mxu0
      %v3194 = vadd.f32 0.0, %v3193
      %v3195 = vpop.f32.mrb[0].mxu0
      %3196 = vmatprep.mubr.bf16.mxu0 0
      %3197 = vmatmul.mubr.bf16.gmra.mrb[0].mxu0 %v3079
      %v3198 = vpop.f32.mrb[0].mxu0
      %v3199 = vadd.f32 0.0, %v3198
      %v3200 = vpop.f32.mrb[0].mxu0
      %v3201 = vpop.f32.mrb[0].mxu0
      %v3202 = vadd.f32 0.0, %v3201
      %v3203 = vpop.f32.mrb[0].mxu0
      %3204 = vmatprep.mubr.bf16.mxu0 0
      %3205 = vmatmul.mubr.bf16.gmra.mrb[0].mxu0 %v3082
      %v3206 = vpop.f32.mrb[0].mxu0
      %v3207 = vadd.f32 0.0, %v3206
      %v3208 = vpop.f32.mrb[0].mxu0
      %v3209 = vpop.f32.mrb[0].mxu0
      %v3210 = vadd.f32 0.0, %v3209
      %v3211 = vpop.f32.mrb[0].mxu0
      %3212 = vmatprep.mubr.bf16.mxu0 0
      %3213 = vmatmul.mubr.bf16.gmra.mrb[0].mxu0 %v3085
      %v3214 = vpop.f32.mrb[0].mxu0
      %v3215 = vadd.f32 0.0, %v3214
      %v3216 = vpop.f32.mrb[0].mxu0
      %v3217 = vpop.f32.mrb[0].mxu0
      %v3218 = vadd.f32 0.0, %v3217
      %v3219 = vpop.f32.mrb[0].mxu0
      %3220 = vmatprep.mubr.bf16.mxu0 0
      %3221 = vmatmul.mubr.bf16.gmra.mrb[0].mxu0 %v3088
      %v3222 = vpop.f32.mrb[0].mxu0
      %v3223 = vadd.f32 0.0, %v3222
      %v3224 = vpop.f32.mrb[0].mxu0
      %v3225 = vpop.f32.mrb[0].mxu0
      %v3226 = vadd.f32 0.0, %v3225
      %v3227 = vpop.f32.mrb[0].mxu0
      %3228 = vmatprep.mubr.bf16.mxu0 0
      %3229 = vmatmul.mubr.bf16.gmra.mrb[0].mxu0 %v3091
      %v3230 = vpop.f32.mrb[0].mxu0
      %v3231 = vadd.f32 0.0, %v3230
      %v3232 = vpop.f32.mrb[0].mxu0
      %v3233 = vpop.f32.mrb[0].mxu0
      %v3234 = vadd.f32 0.0, %v3233
      %v3235 = vpop.f32.mrb[0].mxu0
      %3236 = vmatprep.mubr.bf16.mxu0 0
      %3237 = vmatmul.mubr.bf16.gmra.mrb[0].mxu0 %v3094
      %v3238 = vpop.f32.mrb[0].mxu0
      %v3239 = vadd.f32 0.0, %v3238
      %v3240 = vpop.f32.mrb[0].mxu0
      %v3241 = vpop.f32.mrb[0].mxu0
      %v3242 = vadd.f32 0.0, %v3241
      %v3243 = vpop.f32.mrb[0].mxu0
      %3244 = vmatprep.mubr.bf16.mxu0 0
      %3245 = vmatmul.mubr.bf16.gmra.mrb[0].mxu0 %v3097
      %v3246 = vpop.f32.mrb[0].mxu0
      %v3247 = vadd.f32 0.0, %v3246
      %v3248 = vpop.f32.mrb[0].mxu0
      %v3249 = vpop.f32.mrb[0].mxu0
      %v3250 = vadd.f32 0.0, %v3249
      %v3251 = vpop.f32.mrb[0].mxu0
      %3252 = vmatprep.mubr.bf16.mxu0 0
      %3253 = vmatmul.mubr.bf16.gmra.mrb[0].mxu0 %v3100
      %v3254 = vpop.f32.mrb[0].mxu0
      %v3255 = vadd.f32 0.0, %v3254
      %v3256 = vpop.f32.mrb[0].mxu0
      %v3257 = vpop.f32.mrb[0].mxu0
      %v3258 = vadd.f32 0.0, %v3257
      %v3259 = vpop.f32.mrb[0].mxu0
      %3260 = vmatprep.mubr.bf16.mxu0 0
      %3261 = vmatmul.mubr.bf16.gmra.mrb[0].mxu0 %v3103
      %v3262 = vpop.f32.mrb[0].mxu0
      %v3263 = vadd.f32 0.0, %v3262
      %v3264 = vpop.f32.mrb[0].mxu0
      %v3265 = vpop.f32.mrb[0].mxu0
      %v3266 = vadd.f32 0.0, %v3265
      %v3267 = vpop.f32.mrb[0].mxu0
      %3268 = vdwg.mxu0
      %v3269 = vadd.f32 %v3025, %v3143
      %v3270 = vadd.f32 %v3026, %v3146
      %v3271 = vadd.f32 %v3027, %v3151
      %v3272 = vadd.f32 %v3028, %v3154
      %v3273 = vadd.f32 %v3029, %v3159
      %v3274 = vadd.f32 %v3030, %v3162
      %v3275 = vadd.f32 %v3031, %v3167
      %v3276 = vadd.f32 %v3032, %v3170
      %v3277 = vadd.f32 %v3033, %v3175
      %v3278 = vadd.f32 %v3034, %v3178
      %v3279 = vadd.f32 %v3035, %v3183
      %v3280 = vadd.f32 %v3036, %v3186
      %v3281 = vadd.f32 %v3037, %v3191
      %v3282 = vadd.f32 %v3038, %v3194
      %v3283 = vadd.f32 %v3039, %v3199
      %v3284 = vadd.f32 %v3040, %v3202
      %v3285 = vadd.f32 %v3041, %v3207
      %v3286 = vadd.f32 %v3042, %v3210
      %v3287 = vadd.f32 %v3043, %v3215
      %v3288 = vadd.f32 %v3044, %v3218
      %v3289 = vadd.f32 %v3045, %v3223
      %v3290 = vadd.f32 %v3046, %v3226
      %v3291 = vadd.f32 %v3047, %v3231
      %v3292 = vadd.f32 %v3048, %v3234
      %v3293 = vadd.f32 %v3049, %v3239
      %v3294 = vadd.f32 %v3050, %v3242
      %v3295 = vadd.f32 %v3051, %v3247
      %v3296 = vadd.f32 %v3052, %v3250
      %v3297 = vadd.f32 %v3053, %v3255
      %v3298 = vadd.f32 %v3054, %v3258
      %v3299 = vadd.f32 %v3055, %v3263
      %v3300 = vadd.f32 %v3056, %v3266
      %3301 = vst.msk [vmem:[#allocation3] sm:$0xff] %vm322, %v3269
      %3302 = vst.msk [vmem:[#allocation3 + $0x8] sm:$0xff] %vm322, %v3270
      %3303 = vst.msk [vmem:[#allocation3 + $0x10] sm:$0xff] %vm322, %v3271
      %3304 = vst.msk [vmem:[#allocation3 + $0x18] sm:$0xff] %vm322, %v3272
      %3305 = vst.msk [vmem:[#allocation3 + $0x20] sm:$0xff] %vm322, %v3273
      %3306 = vst.msk [vmem:[#allocation3 + $0x28] sm:$0xff] %vm322, %v3274
      %3307 = vst.msk [vmem:[#allocation3 + $0x30] sm:$0xff] %vm322, %v3275
      %3308 = vst.msk [vmem:[#allocation3 + $0x38] sm:$0xff] %vm322, %v3276
      %3309 = vst.msk [vmem:[#allocation3 + $0x40] sm:$0xff] %vm322, %v3277
      %3310 = vst.msk [vmem:[#allocation3 + $0x48] sm:$0xff] %vm322, %v3278
      %3311 = vst.msk [vmem:[#allocation3 + $0x50] sm:$0xff] %vm322, %v3279
      %3312 = vst.msk [vmem:[#allocation3 + $0x58] sm:$0xff] %vm322, %v3280
      %3313 = vst.msk [vmem:[#allocation3 + $0x60] sm:$0xff] %vm322, %v3281
      %3314 = vst.msk [vmem:[#allocation3 + $0x68] sm:$0xff] %vm322, %v3282
      %3315 = vst.msk [vmem:[#allocation3 + $0x70] sm:$0xff] %vm322, %v3283
      %3316 = vst.msk [vmem:[#allocation3 + $0x78] sm:$0xff] %vm322, %v3284
      %3317 = vst.msk [vmem:[#allocation3 + $0x80] sm:$0xff] %vm322, %v3285
      %3318 = vst.msk [vmem:[#allocation3 + $0x88] sm:$0xff] %vm322, %v3286
      %3319 = vst.msk [vmem:[#allocation3 + $0x90] sm:$0xff] %vm322, %v3287
      %3320 = vst.msk [vmem:[#allocation3 + $0x98] sm:$0xff] %vm322, %v3288
      %3321 = vst.msk [vmem:[#allocation3 + $0xa0] sm:$0xff] %vm322, %v3289
      %3322 = vst.msk [vmem:[#allocation3 + $0xa8] sm:$0xff] %vm322, %v3290
      %3323 = vst.msk [vmem:[#allocation3 + $0xb0] sm:$0xff] %vm322, %v3291
      %3324 = vst.msk [vmem:[#allocation3 + $0xb8] sm:$0xff] %vm322, %v3292
      %3325 = vst.msk [vmem:[#allocation3 + $0xc0] sm:$0xff] %vm322, %v3293
      %3326 = vst.msk [vmem:[#allocation3 + $0xc8] sm:$0xff] %vm322, %v3294
      %3327 = vst.msk [vmem:[#allocation3 + $0xd0] sm:$0xff] %vm322, %v3295
      %3328 = vst.msk [vmem:[#allocation3 + $0xd8] sm:$0xff] %vm322, %v3296
      %3329 = vst.msk [vmem:[#allocation3 + $0xe0] sm:$0xff] %vm322, %v3297
      %3330 = vst.msk [vmem:[#allocation3 + $0xe8] sm:$0xff] %vm322, %v3298
      %3331 = vst.msk [vmem:[#allocation3 + $0xf0] sm:$0xff] %vm322, %v3299
      %3332 = vst.msk [vmem:[#allocation3 + $0xf8] sm:$0xff] %vm322, %v3300
      %v3333 = vld [vmem:[%s2618 + $0x2] sm:$0xff]
      %v3334 = vld [vmem:[%s2618 + $0xa] sm:$0xff]
      %v3335 = vld [vmem:[%s2618 + $0x1a] sm:$0xff]
      %v3336 = vld [vmem:[%s2618 + $0x22] sm:$0xff]
      %v3337 = vld [vmem:[%s2618 + $0x32] sm:$0xff]
      %v3338 = vld [vmem:[%s2618 + $0x3a] sm:$0xff]
      %v3339 = vld [vmem:[%s2618 + $0x4a] sm:$0xff]
      %v3340 = vld [vmem:[%s2618 + $0x52] sm:$0xff]
      %v3341 = vld [vmem:[%s2618 + $0x62] sm:$0xff]
      %v3342 = vld [vmem:[%s2618 + $0x6a] sm:$0xff]
      %v3343 = vld [vmem:[%s2618 + $0x7a] sm:$0xff]
      %v3344 = vld [vmem:[%s2618 + $0x82] sm:$0xff]
      %v3345 = vld [vmem:[%s2618 + $0x92] sm:$0xff]
      %v3346 = vld [vmem:[%s2618 + $0x9a] sm:$0xff]
      %v3347 = vld [vmem:[%s2618 + $0xaa] sm:$0xff]
      %v3348 = vld [vmem:[%s2618 + $0xb2] sm:$0xff]
      %v3349 = vld [vmem:[%s2618 + $0xc2] sm:$0xff]
      %v3350 = vld [vmem:[%s2618 + $0xca] sm:$0xff]
      %v3351 = vld [vmem:[%s2618 + $0xda] sm:$0xff]
      %v3352 = vld [vmem:[%s2618 + $0xe2] sm:$0xff]
      %v3353 = vld [vmem:[%s2618 + $0xf2] sm:$0xff]
      %v3354 = vld [vmem:[%s2618 + $0xfa] sm:$0xff]
      %v3355 = vld [vmem:[%s2618 + $0x10a] sm:$0xff]
      %v3356 = vld [vmem:[%s2618 + $0x112] sm:$0xff]
      %v3357 = vld [vmem:[%s2618 + $0x122] sm:$0xff]
      %v3358 = vld [vmem:[%s2618 + $0x12a] sm:$0xff]
      %v3359 = vld [vmem:[%s2618 + $0x13a] sm:$0xff]
      %v3360 = vld [vmem:[%s2618 + $0x142] sm:$0xff]
      %v3361 = vld [vmem:[%s2618 + $0x152] sm:$0xff]
      %v3362 = vld [vmem:[%s2618 + $0x15a] sm:$0xff]
      %v3363 = vld [vmem:[%s2618 + $0x16a] sm:$0xff]
      %v3364 = vld [vmem:[%s2618 + $0x172] sm:$0xff]
      %v3365 = vpack.c.bf16 %v3334, %v3333
      %v3366 = vpack.c.bf16 %v3336, %v3335
      %v3367 = vpack.c.bf16 %v3338, %v3337
      %v3368 = vpack.c.bf16 %v3340, %v3339
      %v3369 = vpack.c.bf16 %v3342, %v3341
      %v3370 = vpack.c.bf16 %v3344, %v3343
      %v3371 = vpack.c.bf16 %v3346, %v3345
      %v3372 = vpack.c.bf16 %v3348, %v3347
      %v3373 = vpack.c.bf16 %v3350, %v3349
      %v3374 = vpack.c.bf16 %v3352, %v3351
      %v3375 = vpack.c.bf16 %v3354, %v3353
      %v3376 = vpack.c.bf16 %v3356, %v3355
      %v3377 = vpack.c.bf16 %v3358, %v3357
      %v3378 = vpack.c.bf16 %v3360, %v3359
      %v3379 = vpack.c.bf16 %v3362, %v3361
      %v3380 = vpack.c.bf16 %v3364, %v3363
      %v3381 = vld [vmem:[%s298 + $0x20] sm:$0xf]
      %v3382 = vld [vmem:[#allocation3] sm:$0xff]
      %v3383 = vld [vmem:[#allocation3 + $0x8] sm:$0xff]
      %v3384 = vld [vmem:[#allocation3 + $0x10] sm:$0xff]
      %v3385 = vld [vmem:[#allocation3 + $0x18] sm:$0xff]
      %v3386 = vld [vmem:[#allocation3 + $0x20] sm:$0xff]
      %v3387 = vld [vmem:[#allocation3 + $0x28] sm:$0xff]
      %v3388 = vld [vmem:[#allocation3 + $0x30] sm:$0xff]
      %v3389 = vld [vmem:[#allocation3 + $0x38] sm:$0xff]
      %v3390 = vld [vmem:[#allocation3 + $0x40] sm:$0xff]
      %v3391 = vld [vmem:[#allocation3 + $0x48] sm:$0xff]
      %v3392 = vld [vmem:[#allocation3 + $0x50] sm:$0xff]
      %v3393 = vld [vmem:[#allocation3 + $0x58] sm:$0xff]
      %v3394 = vld [vmem:[#allocation3 + $0x60] sm:$0xff]
      %v3395 = vld [vmem:[#allocation3 + $0x68] sm:$0xff]
      %v3396 = vld [vmem:[#allocation3 + $0x70] sm:$0xff]
      %v3397 = vld [vmem:[#allocation3 + $0x78] sm:$0xff]
      %v3398 = vld [vmem:[#allocation3 + $0x80] sm:$0xff]
      %v3399 = vld [vmem:[#allocation3 + $0x88] sm:$0xff]
      %v3400 = vld [vmem:[#allocation3 + $0x90] sm:$0xff]
      %v3401 = vld [vmem:[#allocation3 + $0x98] sm:$0xff]
      %v3402 = vld [vmem:[#allocation3 + $0xa0] sm:$0xff]
      %v3403 = vld [vmem:[#allocation3 + $0xa8] sm:$0xff]
      %v3404 = vld [vmem:[#allocation3 + $0xb0] sm:$0xff]
      %v3405 = vld [vmem:[#allocation3 + $0xb8] sm:$0xff]
      %v3406 = vld [vmem:[#allocation3 + $0xc0] sm:$0xff]
      %v3407 = vld [vmem:[#allocation3 + $0xc8] sm:$0xff]
      %v3408 = vld [vmem:[#allocation3 + $0xd0] sm:$0xff]
      %v3409 = vld [vmem:[#allocation3 + $0xd8] sm:$0xff]
      %v3410 = vld [vmem:[#allocation3 + $0xe0] sm:$0xff]
      %v3411 = vld [vmem:[#allocation3 + $0xe8] sm:$0xff]
      %v3412 = vld [vmem:[#allocation3 + $0xf0] sm:$0xff]
      %v3413 = vld [vmem:[#allocation3 + $0xf8] sm:$0xff]
      %v3415 = vsel %vm322, %v3365, 0
      %v3418 = vsel %vm322, %v3366, 0
      %v3421 = vsel %vm322, %v3367, 0
      %v3424 = vsel %vm322, %v3368, 0
      %v3427 = vsel %vm322, %v3369, 0
      %v3430 = vsel %vm322, %v3370, 0
      %v3433 = vsel %vm322, %v3371, 0
      %v3436 = vsel %vm322, %v3372, 0
      %v3439 = vsel %vm322, %v3373, 0
      %v3442 = vsel %vm322, %v3374, 0
      %v3445 = vsel %vm322, %v3375, 0
      %v3448 = vsel %vm322, %v3376, 0
      %v3451 = vsel %vm322, %v3377, 0
      %v3454 = vsel %vm322, %v3378, 0
      %v3457 = vsel %vm322, %v3379, 0
      %v3460 = vsel %vm322, %v3380, 0
      %v3463 = vsel %vm604, %v3381, 0
      %3465 = vmatprep.subr.bf16.mxu0 0
      %3466 = vmatpush1.bf16.msra.mxu0 %v3463
      %3467 = vmatprep.subr.bf16.mxu0 0
      %3468 = vmatpush1.bf16.msra.mxu0 0
      %3469 = vmatprep.subr.bf16.mxu0 0
      %3470 = vmatpush1.bf16.msra.mxu0 0
      %3471 = vmatprep.subr.bf16.mxu0 0
      %3472 = vmatpush1.bf16.msra.mxu0 0
      %3473 = vmatprep.subr.bf16.mxu0 0
      %3474 = vmatpush1.bf16.msra.mxu0 0
      %3475 = vmatprep.subr.bf16.mxu0 0
      %3476 = vmatpush1.bf16.msra.mxu0 0
      %3477 = vmatprep.subr.bf16.mxu0 0
      %3478 = vmatpush1.bf16.msra.mxu0 0
      %3479 = vmatprep.subr.bf16.mxu0 0
      %3480 = vmatpush1.bf16.msra.mxu0 0
      %3481 = vmatprep.subr.bf16.mxu0 0
      %3482 = vmatpush1.bf16.msra.mxu0 0
      %3483 = vmatprep.subr.bf16.mxu0 0
      %3484 = vmatpush1.bf16.msra.mxu0 0
      %3485 = vmatprep.subr.bf16.mxu0 0
      %3486 = vmatpush1.bf16.msra.mxu0 0
      %3487 = vmatprep.subr.bf16.mxu0 0
      %3488 = vmatpush1.bf16.msra.mxu0 0
      %3489 = vmatprep.subr.bf16.mxu0 0
      %3490 = vmatpush1.bf16.msra.mxu0 0
      %3491 = vmatprep.subr.bf16.mxu0 0
      %3492 = vmatpush1.bf16.msra.mxu0 0
      %3493 = vmatprep.subr.bf16.mxu0 0
      %3494 = vmatpush1.bf16.msra.mxu0 0
      %3495 = vmatprep.subr.bf16.mxu0 0
      %3496 = vmatpush1.bf16.msra.mxu0 0
      %3497 = vmatprep.mubr.bf16.mxu0 0
      %3498 = vmatmul.mubr.bf16.gmra.mrb[0].mxu0 %v3415
      %v3499 = vpop.f32.mrb[0].mxu0
      %v3500 = vadd.f32 0.0, %v3499
      %v3501 = vpop.f32.mrb[0].mxu0
      %v3502 = vpop.f32.mrb[0].mxu0
      %v3503 = vadd.f32 0.0, %v3502
      %v3504 = vpop.f32.mrb[0].mxu0
      %3505 = vmatprep.mubr.bf16.mxu0 0
      %3506 = vmatmul.mubr.bf16.gmra.mrb[0].mxu0 %v3418
      %v3507 = vpop.f32.mrb[0].mxu0
      %v3508 = vadd.f32 0.0, %v3507
      %v3509 = vpop.f32.mrb[0].mxu0
      %v3510 = vpop.f32.mrb[0].mxu0
      %v3511 = vadd.f32 0.0, %v3510
      %v3512 = vpop.f32.mrb[0].mxu0
      %3513 = vmatprep.mubr.bf16.mxu0 0
      %3514 = vmatmul.mubr.bf16.gmra.mrb[0].mxu0 %v3421
      %v3515 = vpop.f32.mrb[0].mxu0
      %v3516 = vadd.f32 0.0, %v3515
      %v3517 = vpop.f32.mrb[0].mxu0
      %v3518 = vpop.f32.mrb[0].mxu0
      %v3519 = vadd.f32 0.0, %v3518
      %v3520 = vpop.f32.mrb[0].mxu0
      %3521 = vmatprep.mubr.bf16.mxu0 0
      %3522 = vmatmul.mubr.bf16.gmra.mrb[0].mxu0 %v3424
      %v3523 = vpop.f32.mrb[0].mxu0
      %v3524 = vadd.f32 0.0, %v3523
      %v3525 = vpop.f32.mrb[0].mxu0
      %v3526 = vpop.f32.mrb[0].mxu0
      %v3527 = vadd.f32 0.0, %v3526
      %v3528 = vpop.f32.mrb[0].mxu0
      %3529 = vmatprep.mubr.bf16.mxu0 0
      %3530 = vmatmul.mubr.bf16.gmra.mrb[0].mxu0 %v3427
      %v3531 = vpop.f32.mrb[0].mxu0
      %v3532 = vadd.f32 0.0, %v3531
      %v3533 = vpop.f32.mrb[0].mxu0
      %v3534 = vpop.f32.mrb[0].mxu0
      %v3535 = vadd.f32 0.0, %v3534
      %v3536 = vpop.f32.mrb[0].mxu0
      %3537 = vmatprep.mubr.bf16.mxu0 0
      %3538 = vmatmul.mubr.bf16.gmra.mrb[0].mxu0 %v3430
      %v3539 = vpop.f32.mrb[0].mxu0
      %v3540 = vadd.f32 0.0, %v3539
      %v3541 = vpop.f32.mrb[0].mxu0
      %v3542 = vpop.f32.mrb[0].mxu0
      %v3543 = vadd.f32 0.0, %v3542
      %v3544 = vpop.f32.mrb[0].mxu0
      %3545 = vmatprep.mubr.bf16.mxu0 0
      %3546 = vmatmul.mubr.bf16.gmra.mrb[0].mxu0 %v3433
      %v3547 = vpop.f32.mrb[0].mxu0
      %v3548 = vadd.f32 0.0, %v3547
      %v3549 = vpop.f32.mrb[0].mxu0
      %v3550 = vpop.f32.mrb[0].mxu0
      %v3551 = vadd.f32 0.0, %v3550
      %v3552 = vpop.f32.mrb[0].mxu0
      %3553 = vmatprep.mubr.bf16.mxu0 0
      %3554 = vmatmul.mubr.bf16.gmra.mrb[0].mxu0 %v3436
      %v3555 = vpop.f32.mrb[0].mxu0
      %v3556 = vadd.f32 0.0, %v3555
      %v3557 = vpop.f32.mrb[0].mxu0
      %v3558 = vpop.f32.mrb[0].mxu0
      %v3559 = vadd.f32 0.0, %v3558
      %v3560 = vpop.f32.mrb[0].mxu0
      %3561 = vmatprep.mubr.bf16.mxu0 0
      %3562 = vmatmul.mubr.bf16.gmra.mrb[0].mxu0 %v3439
      %v3563 = vpop.f32.mrb[0].mxu0
      %v3564 = vadd.f32 0.0, %v3563
      %v3565 = vpop.f32.mrb[0].mxu0
      %v3566 = vpop.f32.mrb[0].mxu0
      %v3567 = vadd.f32 0.0, %v3566
      %v3568 = vpop.f32.mrb[0].mxu0
      %3569 = vmatprep.mubr.bf16.mxu0 0
      %3570 = vmatmul.mubr.bf16.gmra.mrb[0].mxu0 %v3442
      %v3571 = vpop.f32.mrb[0].mxu0
      %v3572 = vadd.f32 0.0, %v3571
      %v3573 = vpop.f32.mrb[0].mxu0
      %v3574 = vpop.f32.mrb[0].mxu0
      %v3575 = vadd.f32 0.0, %v3574
      %v3576 = vpop.f32.mrb[0].mxu0
      %3577 = vmatprep.mubr.bf16.mxu0 0
      %3578 = vmatmul.mubr.bf16.gmra.mrb[0].mxu0 %v3445
      %v3579 = vpop.f32.mrb[0].mxu0
      %v3580 = vadd.f32 0.0, %v3579
      %v3581 = vpop.f32.mrb[0].mxu0
      %v3582 = vpop.f32.mrb[0].mxu0
      %v3583 = vadd.f32 0.0, %v3582
      %v3584 = vpop.f32.mrb[0].mxu0
      %3585 = vmatprep.mubr.bf16.mxu0 0
      %3586 = vmatmul.mubr.bf16.gmra.mrb[0].mxu0 %v3448
      %v3587 = vpop.f32.mrb[0].mxu0
      %v3588 = vadd.f32 0.0, %v3587
      %v3589 = vpop.f32.mrb[0].mxu0
      %v3590 = vpop.f32.mrb[0].mxu0
      %v3591 = vadd.f32 0.0, %v3590
      %v3592 = vpop.f32.mrb[0].mxu0
      %3593 = vmatprep.mubr.bf16.mxu0 0
      %3594 = vmatmul.mubr.bf16.gmra.mrb[0].mxu0 %v3451
      %v3595 = vpop.f32.mrb[0].mxu0
      %v3596 = vadd.f32 0.0, %v3595
      %v3597 = vpop.f32.mrb[0].mxu0
      %v3598 = vpop.f32.mrb[0].mxu0
      %v3599 = vadd.f32 0.0, %v3598
      %v3600 = vpop.f32.mrb[0].mxu0
      %3601 = vmatprep.mubr.bf16.mxu0 0
      %3602 = vmatmul.mubr.bf16.gmra.mrb[0].mxu0 %v3454
      %v3603 = vpop.f32.mrb[0].mxu0
      %v3604 = vadd.f32 0.0, %v3603
      %v3605 = vpop.f32.mrb[0].mxu0
      %v3606 = vpop.f32.mrb[0].mxu0
      %v3607 = vadd.f32 0.0, %v3606
      %v3608 = vpop.f32.mrb[0].mxu0
      %3609 = vmatprep.mubr.bf16.mxu0 0
      %3610 = vmatmul.mubr.bf16.gmra.mrb[0].mxu0 %v3457
      %v3611 = vpop.f32.mrb[0].mxu0
      %v3612 = vadd.f32 0.0, %v3611
      %v3613 = vpop.f32.mrb[0].mxu0
      %v3614 = vpop.f32.mrb[0].mxu0
      %v3615 = vadd.f32 0.0, %v3614
      %v3616 = vpop.f32.mrb[0].mxu0
      %3617 = vmatprep.mubr.bf16.mxu0 0
      %3618 = vmatmul.mubr.bf16.gmra.mrb[0].mxu0 %v3460
      %v3619 = vpop.f32.mrb[0].mxu0
      %v3620 = vadd.f32 0.0, %v3619
      %v3621 = vpop.f32.mrb[0].mxu0
      %v3622 = vpop.f32.mrb[0].mxu0
      %v3623 = vadd.f32 0.0, %v3622
      %v3624 = vpop.f32.mrb[0].mxu0
      %3625 = vdwg.mxu0
      %v3626 = vadd.f32 %v3382, %v3500
      %v3627 = vadd.f32 %v3383, %v3503
      %v3628 = vadd.f32 %v3384, %v3508
      %v3629 = vadd.f32 %v3385, %v3511
      %v3630 = vadd.f32 %v3386, %v3516
      %v3631 = vadd.f32 %v3387, %v3519
      %v3632 = vadd.f32 %v3388, %v3524
      %v3633 = vadd.f32 %v3389, %v3527
      %v3634 = vadd.f32 %v3390, %v3532
      %v3635 = vadd.f32 %v3391, %v3535
      %v3636 = vadd.f32 %v3392, %v3540
      %v3637 = vadd.f32 %v3393, %v3543
      %v3638 = vadd.f32 %v3394, %v3548
      %v3639 = vadd.f32 %v3395, %v3551
      %v3640 = vadd.f32 %v3396, %v3556
      %v3641 = vadd.f32 %v3397, %v3559
      %v3642 = vadd.f32 %v3398, %v3564
      %v3643 = vadd.f32 %v3399, %v3567
      %v3644 = vadd.f32 %v3400, %v3572
      %v3645 = vadd.f32 %v3401, %v3575
      %v3646 = vadd.f32 %v3402, %v3580
      %v3647 = vadd.f32 %v3403, %v3583
      %v3648 = vadd.f32 %v3404, %v3588
      %v3649 = vadd.f32 %v3405, %v3591
      %v3650 = vadd.f32 %v3406, %v3596
      %v3651 = vadd.f32 %v3407, %v3599
      %v3652 = vadd.f32 %v3408, %v3604
      %v3653 = vadd.f32 %v3409, %v3607
      %v3654 = vadd.f32 %v3410, %v3612
      %v3655 = vadd.f32 %v3411, %v3615
      %v3656 = vadd.f32 %v3412, %v3620
      %v3657 = vadd.f32 %v3413, %v3623
      %3658 = vst.msk [vmem:[#allocation3] sm:$0xff] %vm322, %v3626
      %3659 = vst.msk [vmem:[#allocation3 + $0x8] sm:$0xff] %vm322, %v3627
      %3660 = vst.msk [vmem:[#allocation3 + $0x10] sm:$0xff] %vm322, %v3628
      %3661 = vst.msk [vmem:[#allocation3 + $0x18] sm:$0xff] %vm322, %v3629
      %3662 = vst.msk [vmem:[#allocation3 + $0x20] sm:$0xff] %vm322, %v3630
      %3663 = vst.msk [vmem:[#allocation3 + $0x28] sm:$0xff] %vm322, %v3631
      %3664 = vst.msk [vmem:[#allocation3 + $0x30] sm:$0xff] %vm322, %v3632
      %3665 = vst.msk [vmem:[#allocation3 + $0x38] sm:$0xff] %vm322, %v3633
      %3666 = vst.msk [vmem:[#allocation3 + $0x40] sm:$0xff] %vm322, %v3634
      %3667 = vst.msk [vmem:[#allocation3 + $0x48] sm:$0xff] %vm322, %v3635
      %3668 = vst.msk [vmem:[#allocation3 + $0x50] sm:$0xff] %vm322, %v3636
      %3669 = vst.msk [vmem:[#allocation3 + $0x58] sm:$0xff] %vm322, %v3637
      %3670 = vst.msk [vmem:[#allocation3 + $0x60] sm:$0xff] %vm322, %v3638
      %3671 = vst.msk [vmem:[#allocation3 + $0x68] sm:$0xff] %vm322, %v3639
      %3672 = vst.msk [vmem:[#allocation3 + $0x70] sm:$0xff] %vm322, %v3640
      %3673 = vst.msk [vmem:[#allocation3 + $0x78] sm:$0xff] %vm322, %v3641
      %3674 = vst.msk [vmem:[#allocation3 + $0x80] sm:$0xff] %vm322, %v3642
      %3675 = vst.msk [vmem:[#allocation3 + $0x88] sm:$0xff] %vm322, %v3643
      %3676 = vst.msk [vmem:[#allocation3 + $0x90] sm:$0xff] %vm322, %v3644
      %3677 = vst.msk [vmem:[#allocation3 + $0x98] sm:$0xff] %vm322, %v3645
      %3678 = vst.msk [vmem:[#allocation3 + $0xa0] sm:$0xff] %vm322, %v3646
      %3679 = vst.msk [vmem:[#allocation3 + $0xa8] sm:$0xff] %vm322, %v3647
      %3680 = vst.msk [vmem:[#allocation3 + $0xb0] sm:$0xff] %vm322, %v3648
      %3681 = vst.msk [vmem:[#allocation3 + $0xb8] sm:$0xff] %vm322, %v3649
      %3682 = vst.msk [vmem:[#allocation3 + $0xc0] sm:$0xff] %vm322, %v3650
      %3683 = vst.msk [vmem:[#allocation3 + $0xc8] sm:$0xff] %vm322, %v3651
      %3684 = vst.msk [vmem:[#allocation3 + $0xd0] sm:$0xff] %vm322, %v3652
      %3685 = vst.msk [vmem:[#allocation3 + $0xd8] sm:$0xff] %vm322, %v3653
      %3686 = vst.msk [vmem:[#allocation3 + $0xe0] sm:$0xff] %vm322, %v3654
      %3687 = vst.msk [vmem:[#allocation3 + $0xe8] sm:$0xff] %vm322, %v3655
      %3688 = vst.msk [vmem:[#allocation3 + $0xf0] sm:$0xff] %vm322, %v3656
      %3689 = vst.msk [vmem:[#allocation3 + $0xf8] sm:$0xff] %vm322, %v3657
      %v3690 = vld [vmem:[#allocation3] sm:$0xff]
      %v3691 = vld [vmem:[#allocation3 + $0x8] sm:$0xff]
      %v3692 = vld [vmem:[#allocation3 + $0x10] sm:$0xff]
      %v3693 = vld [vmem:[#allocation3 + $0x18] sm:$0xff]
      %v3694 = vld [vmem:[#allocation3 + $0x20] sm:$0xff]
      %v3695 = vld [vmem:[#allocation3 + $0x28] sm:$0xff]
      %v3696 = vld [vmem:[#allocation3 + $0x30] sm:$0xff]
      %v3697 = vld [vmem:[#allocation3 + $0x38] sm:$0xff]
      %v3698 = vld [vmem:[#allocation3 + $0x40] sm:$0xff]
      %v3699 = vld [vmem:[#allocation3 + $0x48] sm:$0xff]
      %v3700 = vld [vmem:[#allocation3 + $0x50] sm:$0xff]
      %v3701 = vld [vmem:[#allocation3 + $0x58] sm:$0xff]
      %v3702 = vld [vmem:[#allocation3 + $0x60] sm:$0xff]
      %v3703 = vld [vmem:[#allocation3 + $0x68] sm:$0xff]
      %v3704 = vld [vmem:[#allocation3 + $0x70] sm:$0xff]
      %v3705 = vld [vmem:[#allocation3 + $0x78] sm:$0xff]
      %v3706 = vld [vmem:[#allocation3 + $0x80] sm:$0xff]
      %v3707 = vld [vmem:[#allocation3 + $0x88] sm:$0xff]
      %v3708 = vld [vmem:[#allocation3 + $0x90] sm:$0xff]
      %v3709 = vld [vmem:[#allocation3 + $0x98] sm:$0xff]
      %v3710 = vld [vmem:[#allocation3 + $0xa0] sm:$0xff]
      %v3711 = vld [vmem:[#allocation3 + $0xa8] sm:$0xff]
      %v3712 = vld [vmem:[#allocation3 + $0xb0] sm:$0xff]
      %v3713 = vld [vmem:[#allocation3 + $0xb8] sm:$0xff]
      %v3714 = vld [vmem:[#allocation3 + $0xc0] sm:$0xff]
      %v3715 = vld [vmem:[#allocation3 + $0xc8] sm:$0xff]
      %v3716 = vld [vmem:[#allocation3 + $0xd0] sm:$0xff]
      %v3717 = vld [vmem:[#allocation3 + $0xd8] sm:$0xff]
      %v3718 = vld [vmem:[#allocation3 + $0xe0] sm:$0xff]
      %v3719 = vld [vmem:[#allocation3 + $0xe8] sm:$0xff]
      %v3720 = vld [vmem:[#allocation3 + $0xf0] sm:$0xff]
      %v3721 = vld [vmem:[#allocation3 + $0xf8] sm:$0xff]
      %v3722 = vld [vmem:[%s301] sm:$0x1]
      %v3724 = vlaneseq
      %v3725 = vshrl.u32 %v3724, 7
      %v3726 = vsub.s32 0, %v3725
      %v3727 = vrot.slane %v3722, %v3726
      %v3729 = vmul.f32 %v3690, %v3727
      %v3730 = vmul.f32 %v3691, %v3727
      %v3731 = vmul.f32 %v3692, %v3727
      %v3732 = vmul.f32 %v3693, %v3727
      %v3733 = vmul.f32 %v3694, %v3727
      %v3734 = vmul.f32 %v3695, %v3727
      %v3735 = vmul.f32 %v3696, %v3727
      %v3736 = vmul.f32 %v3697, %v3727
      %v3737 = vmul.f32 %v3698, %v3727
      %v3738 = vmul.f32 %v3699, %v3727
      %v3739 = vmul.f32 %v3700, %v3727
      %v3740 = vmul.f32 %v3701, %v3727
      %v3741 = vmul.f32 %v3702, %v3727
      %v3742 = vmul.f32 %v3703, %v3727
      %v3743 = vmul.f32 %v3704, %v3727
      %v3744 = vmul.f32 %v3705, %v3727
      %v3745 = vmul.f32 %v3706, %v3727
      %v3746 = vmul.f32 %v3707, %v3727
      %v3747 = vmul.f32 %v3708, %v3727
      %v3748 = vmul.f32 %v3709, %v3727
      %v3749 = vmul.f32 %v3710, %v3727
      %v3750 = vmul.f32 %v3711, %v3727
      %v3751 = vmul.f32 %v3712, %v3727
      %v3752 = vmul.f32 %v3713, %v3727
      %v3753 = vmul.f32 %v3714, %v3727
      %v3754 = vmul.f32 %v3715, %v3727
      %v3755 = vmul.f32 %v3716, %v3727
      %v3756 = vmul.f32 %v3717, %v3727
      %v3757 = vmul.f32 %v3718, %v3727
      %v3758 = vmul.f32 %v3719, %v3727
      %v3759 = vmul.f32 %v3720, %v3727
      %v3760 = vmul.f32 %v3721, %v3727
      %v3761 = vld [vmem:[%s304] sm:$0x1]
      %v3763 = vlaneseq
      %v3764 = vshrl.u32 %v3763, 7
      %v3765 = vsub.s32 0, %v3764
      %v3766 = vrot.slane %v3761, %v3765
      %v3768 = vadd.f32 %v3729, %v3766
      %v3769 = vadd.f32 %v3730, %v3766
      %v3770 = vadd.f32 %v3731, %v3766
      %v3771 = vadd.f32 %v3732, %v3766
      %v3772 = vadd.f32 %v3733, %v3766
      %v3773 = vadd.f32 %v3734, %v3766
      %v3774 = vadd.f32 %v3735, %v3766
      %v3775 = vadd.f32 %v3736, %v3766
      %v3776 = vadd.f32 %v3737, %v3766
      %v3777 = vadd.f32 %v3738, %v3766
      %v3778 = vadd.f32 %v3739, %v3766
      %v3779 = vadd.f32 %v3740, %v3766
      %v3780 = vadd.f32 %v3741, %v3766
      %v3781 = vadd.f32 %v3742, %v3766
      %v3782 = vadd.f32 %v3743, %v3766
      %v3783 = vadd.f32 %v3744, %v3766
      %v3784 = vadd.f32 %v3745, %v3766
      %v3785 = vadd.f32 %v3746, %v3766
      %v3786 = vadd.f32 %v3747, %v3766
      %v3787 = vadd.f32 %v3748, %v3766
      %v3788 = vadd.f32 %v3749, %v3766
      %v3789 = vadd.f32 %v3750, %v3766
      %v3790 = vadd.f32 %v3751, %v3766
      %v3791 = vadd.f32 %v3752, %v3766
      %v3792 = vadd.f32 %v3753, %v3766
      %v3793 = vadd.f32 %v3754, %v3766
      %v3794 = vadd.f32 %v3755, %v3766
      %v3795 = vadd.f32 %v3756, %v3766
      %v3796 = vadd.f32 %v3757, %v3766
      %v3797 = vadd.f32 %v3758, %v3766
      %v3798 = vadd.f32 %v3759, %v3766
      %v3799 = vadd.f32 %v3760, %v3766
      %v3800 = vmax.f32 %v3768, 0.0
      %v3801 = vmax.f32 %v3769, 0.0
      %v3802 = vmax.f32 %v3770, 0.0
      %v3803 = vmax.f32 %v3771, 0.0
      %v3804 = vmax.f32 %v3772, 0.0
      %v3805 = vmax.f32 %v3773, 0.0
      %v3806 = vmax.f32 %v3774, 0.0
      %v3807 = vmax.f32 %v3775, 0.0
      %v3808 = vmax.f32 %v3776, 0.0
      %v3809 = vmax.f32 %v3777, 0.0
      %v3810 = vmax.f32 %v3778, 0.0
      %v3811 = vmax.f32 %v3779, 0.0
      %v3812 = vmax.f32 %v3780, 0.0
      %v3813 = vmax.f32 %v3781, 0.0
      %v3814 = vmax.f32 %v3782, 0.0
      %v3815 = vmax.f32 %v3783, 0.0
      %v3816 = vmax.f32 %v3784, 0.0
      %v3817 = vmax.f32 %v3785, 0.0
      %v3818 = vmax.f32 %v3786, 0.0
      %v3819 = vmax.f32 %v3787, 0.0
      %v3820 = vmax.f32 %v3788, 0.0
      %v3821 = vmax.f32 %v3789, 0.0
      %v3822 = vmax.f32 %v3790, 0.0
      %v3823 = vmax.f32 %v3791, 0.0
      %v3824 = vmax.f32 %v3792, 0.0
      %v3825 = vmax.f32 %v3793, 0.0
      %v3826 = vmax.f32 %v3794, 0.0
      %v3827 = vmax.f32 %v3795, 0.0
      %v3828 = vmax.f32 %v3796, 0.0
      %v3829 = vmax.f32 %v3797, 0.0
      %v3830 = vmax.f32 %v3798, 0.0
      %v3831 = vmax.f32 %v3799, 0.0
      %v3832 = vld [vmem:[%s312] sm:$0xff]
      %v3833 = vld [vmem:[%s312 + $0x8] sm:$0xff]
      %v3834 = vld [vmem:[%s312 + $0x10] sm:$0xff]
      %v3835 = vld [vmem:[%s312 + $0x18] sm:$0xff]
      %v3836 = vld [vmem:[%s312 + $0x20] sm:$0xff]
      %v3837 = vld [vmem:[%s312 + $0x28] sm:$0xff]
      %v3838 = vld [vmem:[%s312 + $0x30] sm:$0xff]
      %v3839 = vld [vmem:[%s312 + $0x38] sm:$0xff]
      %v3840 = vld [vmem:[%s312 + $0x40] sm:$0xff]
      %v3841 = vld [vmem:[%s312 + $0x48] sm:$0xff]
      %v3842 = vld [vmem:[%s312 + $0x50] sm:$0xff]
      %v3843 = vld [vmem:[%s312 + $0x58] sm:$0xff]
      %v3844 = vld [vmem:[%s312 + $0x60] sm:$0xff]
      %v3845 = vld [vmem:[%s312 + $0x68] sm:$0xff]
      %v3846 = vld [vmem:[%s312 + $0x70] sm:$0xff]
      %v3847 = vld [vmem:[%s312 + $0x78] sm:$0xff]
      %v3848 = vld [vmem:[%s312 + $0x80] sm:$0xff]
      %v3849 = vld [vmem:[%s312 + $0x88] sm:$0xff]
      %v3850 = vld [vmem:[%s312 + $0x90] sm:$0xff]
      %v3851 = vld [vmem:[%s312 + $0x98] sm:$0xff]
      %v3852 = vld [vmem:[%s312 + $0xa0] sm:$0xff]
      %v3853 = vld [vmem:[%s312 + $0xa8] sm:$0xff]
      %v3854 = vld [vmem:[%s312 + $0xb0] sm:$0xff]
      %v3855 = vld [vmem:[%s312 + $0xb8] sm:$0xff]
      %v3856 = vld [vmem:[%s312 + $0xc0] sm:$0xff]
      %v3857 = vld [vmem:[%s312 + $0xc8] sm:$0xff]
      %v3858 = vld [vmem:[%s312 + $0xd0] sm:$0xff]
      %v3859 = vld [vmem:[%s312 + $0xd8] sm:$0xff]
      %v3860 = vld [vmem:[%s312 + $0xe0] sm:$0xff]
      %v3861 = vld [vmem:[%s312 + $0xe8] sm:$0xff]
      %v3862 = vld [vmem:[%s312 + $0xf0] sm:$0xff]
      %v3863 = vld [vmem:[%s312 + $0xf8] sm:$0xff]
      %v3864 = vadd.f32 %v3800, %v3832
      %v3865 = vadd.f32 %v3801, %v3833
      %v3866 = vadd.f32 %v3802, %v3834
      %v3867 = vadd.f32 %v3803, %v3835
      %v3868 = vadd.f32 %v3804, %v3836
      %v3869 = vadd.f32 %v3805, %v3837
      %v3870 = vadd.f32 %v3806, %v3838
      %v3871 = vadd.f32 %v3807, %v3839
      %v3872 = vadd.f32 %v3808, %v3840
      %v3873 = vadd.f32 %v3809, %v3841
      %v3874 = vadd.f32 %v3810, %v3842
      %v3875 = vadd.f32 %v3811, %v3843
      %v3876 = vadd.f32 %v3812, %v3844
      %v3877 = vadd.f32 %v3813, %v3845
      %v3878 = vadd.f32 %v3814, %v3846
      %v3879 = vadd.f32 %v3815, %v3847
      %v3880 = vadd.f32 %v3816, %v3848
      %v3881 = vadd.f32 %v3817, %v3849
      %v3882 = vadd.f32 %v3818, %v3850
      %v3883 = vadd.f32 %v3819, %v3851
      %v3884 = vadd.f32 %v3820, %v3852
      %v3885 = vadd.f32 %v3821, %v3853
      %v3886 = vadd.f32 %v3822, %v3854
      %v3887 = vadd.f32 %v3823, %v3855
      %v3888 = vadd.f32 %v3824, %v3856
      %v3889 = vadd.f32 %v3825, %v3857
      %v3890 = vadd.f32 %v3826, %v3858
      %v3891 = vadd.f32 %v3827, %v3859
      %v3892 = vadd.f32 %v3828, %v3860
      %v3893 = vadd.f32 %v3829, %v3861
      %v3894 = vadd.f32 %v3830, %v3862
      %v3895 = vadd.f32 %v3831, %v3863
      %v3896 = vmax.f32 %v3864, 0.0
      %v3897 = vmax.f32 %v3865, 0.0
      %v3898 = vmax.f32 %v3866, 0.0
      %v3899 = vmax.f32 %v3867, 0.0
      %v3900 = vmax.f32 %v3868, 0.0
      %v3901 = vmax.f32 %v3869, 0.0
      %v3902 = vmax.f32 %v3870, 0.0
      %v3903 = vmax.f32 %v3871, 0.0
      %v3904 = vmax.f32 %v3872, 0.0
      %v3905 = vmax.f32 %v3873, 0.0
      %v3906 = vmax.f32 %v3874, 0.0
      %v3907 = vmax.f32 %v3875, 0.0
      %v3908 = vmax.f32 %v3876, 0.0
      %v3909 = vmax.f32 %v3877, 0.0
      %v3910 = vmax.f32 %v3878, 0.0
      %v3911 = vmax.f32 %v3879, 0.0
      %v3912 = vmax.f32 %v3880, 0.0
      %v3913 = vmax.f32 %v3881, 0.0
      %v3914 = vmax.f32 %v3882, 0.0
      %v3915 = vmax.f32 %v3883, 0.0
      %v3916 = vmax.f32 %v3884, 0.0
      %v3917 = vmax.f32 %v3885, 0.0
      %v3918 = vmax.f32 %v3886, 0.0
      %v3919 = vmax.f32 %v3887, 0.0
      %v3920 = vmax.f32 %v3888, 0.0
      %v3921 = vmax.f32 %v3889, 0.0
      %v3922 = vmax.f32 %v3890, 0.0
      %v3923 = vmax.f32 %v3891, 0.0
      %v3924 = vmax.f32 %v3892, 0.0
      %v3925 = vmax.f32 %v3893, 0.0
      %v3926 = vmax.f32 %v3894, 0.0
      %v3927 = vmax.f32 %v3895, 0.0
      %3928 = vst.msk [vmem:[%s320] sm:$0xff] %vm322, %v3896
      %3929 = vst.msk [vmem:[%s320 + $0x8] sm:$0xff] %vm322, %v3897
      %3930 = vst.msk [vmem:[%s320 + $0x10] sm:$0xff] %vm322, %v3898
      %3931 = vst.msk [vmem:[%s320 + $0x18] sm:$0xff] %vm322, %v3899
      %3932 = vst.msk [vmem:[%s320 + $0x20] sm:$0xff] %vm322, %v3900
      %3933 = vst.msk [vmem:[%s320 + $0x28] sm:$0xff] %vm322, %v3901
      %3934 = vst.msk [vmem:[%s320 + $0x30] sm:$0xff] %vm322, %v3902
      %3935 = vst.msk [vmem:[%s320 + $0x38] sm:$0xff] %vm322, %v3903
      %3936 = vst.msk [vmem:[%s320 + $0x40] sm:$0xff] %vm322, %v3904
      %3937 = vst.msk [vmem:[%s320 + $0x48] sm:$0xff] %vm322, %v3905
      %3938 = vst.msk [vmem:[%s320 + $0x50] sm:$0xff] %vm322, %v3906
      %3939 = vst.msk [vmem:[%s320 + $0x58] sm:$0xff] %vm322, %v3907
      %3940 = vst.msk [vmem:[%s320 + $0x60] sm:$0xff] %vm322, %v3908
      %3941 = vst.msk [vmem:[%s320 + $0x68] sm:$0xff] %vm322, %v3909
      %3942 = vst.msk [vmem:[%s320 + $0x70] sm:$0xff] %vm322, %v3910
      %3943 = vst.msk [vmem:[%s320 + $0x78] sm:$0xff] %vm322, %v3911
      %3944 = vst.msk [vmem:[%s320 + $0x80] sm:$0xff] %vm322, %v3912
      %3945 = vst.msk [vmem:[%s320 + $0x88] sm:$0xff] %vm322, %v3913
      %3946 = vst.msk [vmem:[%s320 + $0x90] sm:$0xff] %vm322, %v3914
      %3947 = vst.msk [vmem:[%s320 + $0x98] sm:$0xff] %vm322, %v3915
      %3948 = vst.msk [vmem:[%s320 + $0xa0] sm:$0xff] %vm322, %v3916
      %3949 = vst.msk [vmem:[%s320 + $0xa8] sm:$0xff] %vm322, %v3917
      %3950 = vst.msk [vmem:[%s320 + $0xb0] sm:$0xff] %vm322, %v3918
      %3951 = vst.msk [vmem:[%s320 + $0xb8] sm:$0xff] %vm322, %v3919
      %3952 = vst.msk [vmem:[%s320 + $0xc0] sm:$0xff] %vm322, %v3920
      %3953 = vst.msk [vmem:[%s320 + $0xc8] sm:$0xff] %vm322, %v3921
      %3954 = vst.msk [vmem:[%s320 + $0xd0] sm:$0xff] %vm322, %v3922
      %3955 = vst.msk [vmem:[%s320 + $0xd8] sm:$0xff] %vm322, %v3923
      %3956 = vst.msk [vmem:[%s320 + $0xe0] sm:$0xff] %vm322, %v3924
      %3957 = vst.msk [vmem:[%s320 + $0xe8] sm:$0xff] %vm322, %v3925
      %3958 = vst.msk [vmem:[%s320 + $0xf0] sm:$0xff] %vm322, %v3926
      %3959 = vst.msk [vmem:[%s320 + $0xf8] sm:$0xff] %vm322, %v3927
      %p3960 = scmp.lt.s32.totalorder %s20, 1
      %s3961 = scalar_select %p3960, %s20, 1
      %p3962 = scmp.lt.s32.totalorder %s21, 0
      %s3963 = scalar_select %p3962, %s21, 0
      %s3964 = smul.addr %s3961, 32
      %s3965 = sadd.s32 %s3963, %s3964
      %s3966 = smul.addr %s3965, 8
      %s3967 = scalar_lea.vmem %s5, %s3966
      // Predicated region
      $region41: #{basic_block_forward.5} parent=39 // pred_check
        %p3968 = pneg %p180
      $region42: #{basic_block_forward.5} parent=39 // pred_check_branch
        %3970 = sbr.rel (%p3968) target = $region44
      $region43: #{basic_block_forward.5} parent=39 // pred_region
        _
      $region44: #{basic_block_forward.5} parent=39 // pred_fallthru
        _
    $region40: #{basic_block_forward.5} parent=5 // pred_fallthru
      _
    %p3971 = scmp.le.s32.totalorder 2, %s11
    // Predicated region
    $region45: #{basic_block_forward.5} parent=5 // pred_check
      %p3972 = pneg %p3971
    $region46: #{basic_block_forward.5} parent=5 // pred_check_branch
      %3974 = sbr.rel (%p3972) target = $region48
    $region47: #{basic_block_forward.5} parent=5 // pred_region
      %s3975 = ssub.s32 %s11, 2
      // Predicated region
      $region49: #{basic_block_forward.5} parent=47 // pred_check
        %p3976 = pneg %p186
      $region50: #{basic_block_forward.5} parent=47 // pred_check_branch
        %3978 = sbr.rel (%p3976) target = $region52
      $region51: #{basic_block_forward.5} parent=47 // pred_region
        %p3979 = scmp.lt.s32.totalorder %s22, 1
        %s3980 = scalar_select %p3979, %s22, 1
        %p3981 = scmp.lt.s32.totalorder %s23, 0
        %s3982 = scalar_select %p3981, %s23, 0
        %s3983 = smul.addr %s3980, 32
        %s3984 = sadd.s32 %s3982, %s3983
        %s3985 = smul.addr %s3984, 8
        %s3986 = scalar_lea.vmem %s5, %s3985
      $region52: #{basic_block_forward.5} parent=47 // pred_fallthru
        _
    $region48: #{basic_block_forward.5} parent=5 // pred_fallthru
      _
  $region6: #{basic_block_forward.5} parent=0 // loop_footer
    %s15 = sadd.s32 1, %s11
  $region7: #{basic_block_forward.5} parent=0 // loop_footer_branch
    %10 = sbr.rel target = $region3
  $region8: #{basic_block_forward.5} parent=0 // loop_exit
    _

</llo_original>
